<compile_context>
chip_gen: v7x
topology: tpu7x:2x2x1
jax: 0.10.0
libtpu: 0.0.40
codegen_flags: <defaults>
</compile_context>

<pallas_src>
import functools

import jax
import jax.numpy as jnp
from jax.experimental import pallas as pl
from jax.experimental.pallas import tpu as pltpu


def _round_up(x, m):
    return ((x + m - 1) // m) * m


def _pick_tm(mp):
    """Largest 128-multiple lane tile that still leaves >=2 blocks (megacore)."""
    for tm in (2048, 1024, 512, 256, 128):
        if mp % tm == 0 and mp // tm >= 2:
            return tm
    return mp


# ----------------------------- Pallas kernels -------------------------------

def _conv_mm_kernel(w_ref, a_ref, bias_ref, o_ref, sum_ref, sq_ref, *,
                    m_real, tm, act, masked):
    """W @ A + bias on the MXU (bf16 in, f32 acc), fused per-channel sum and
    sum-of-squares (for the following BatchNorm) and optional fused activation."""
    y = jnp.dot(w_ref[...], a_ref[...],
                preferred_element_type=jnp.float32) + bias_ref[...]
    if masked:  # zero padded M columns so they do not pollute the statistics
        limit = m_real - pl.program_id(1) * tm
        col = jax.lax.broadcasted_iota(jnp.int32, y.shape, 1)
        y = jnp.where(col < limit, y, 0.0)
    s = jnp.sum(y, axis=1, keepdims=True)
    sq = jnp.sum(y * y, axis=1, keepdims=True)
    sum_ref[...] = jnp.broadcast_to(s, sum_ref.shape)
    sq_ref[...] = jnp.broadcast_to(sq, sq_ref.shape)
    if act == "sigmoid":
        y = jax.nn.sigmoid(y)
    elif act == "leaky":
        y = jnp.where(y >= 0.0, y, 0.2 * y)
    o_ref[...] = y.astype(o_ref.dtype)


def _affine_act_kernel(x_ref, scale_ref, shift_ref, o_ref, *, act):
    """Per-channel affine (BN normalize) + activation, channels on sublanes."""
    y = x_ref[...].astype(jnp.float32) * scale_ref[...] + shift_ref[...]
    if act == "leaky":
        y = jnp.where(y >= 0.0, y, 0.2 * y)
    elif act == "sigmoid":
        y = jax.nn.sigmoid(y)
    o_ref[...] = y.astype(o_ref.dtype)


def _bn_stats_kernel(x_ref, sum_ref, sq_ref, *, m_real, tm, masked):
    """Standalone per-channel sum / sum-of-squares (used for the concat BN)."""
    x = x_ref[...].astype(jnp.float32)
    if masked:
        limit = m_real - pl.program_id(1) * tm
        col = jax.lax.broadcasted_iota(jnp.int32, x.shape, 1)
        x = jnp.where(col < limit, x, 0.0)
    sum_ref[...] = jnp.broadcast_to(jnp.sum(x, axis=1, keepdims=True), sum_ref.shape)
    sq_ref[...] = jnp.broadcast_to(jnp.sum(x * x, axis=1, keepdims=True), sq_ref.shape)


# ----------------------------- kernel wrappers -------------------------------

def _reduce_partials(p, nblk):
    nets, c_p, _ = p.shape
    return jnp.sum(p.reshape(nets, c_p, nblk, 128)[:, :, :, 0], axis=2)


def conv_mm(wm, a, bias, m_real, act="none"):
    """wm: (B, Co_p, K) bf16, a: (B, K, Mp) bf16, bias: (B, Co_p, 1) f32.
    Returns bf16 output (B, Co_p, Mp) plus per-channel sum / sumsq (B, Co_p) f32."""
    nets, co_p, kd = wm.shape
    mp = a.shape[2]
    tm = _pick_tm(mp)
    nblk = mp // tm
    out, ps, pq = pl.pallas_call(
        functools.partial(_conv_mm_kernel, m_real=m_real, tm=tm, act=act,
                          masked=(mp != m_real)),
        out_shape=(jax.ShapeDtypeStruct((nets, co_p, mp), jnp.bfloat16),
                   jax.ShapeDtypeStruct((nets, co_p, nblk * 128), jnp.float32),
                   jax.ShapeDtypeStruct((nets, co_p, nblk * 128), jnp.float32)),
        grid=(nets, nblk),
        in_specs=[pl.BlockSpec((None, co_p, kd), lambda b, i: (b, 0, 0)),
                  pl.BlockSpec((None, kd, tm), lambda b, i: (b, 0, i)),
                  pl.BlockSpec((None, co_p, 1), lambda b, i: (b, 0, 0))],
        out_specs=(pl.BlockSpec((None, co_p, tm), lambda b, i: (b, 0, i)),
                   pl.BlockSpec((None, co_p, 128), lambda b, i: (b, 0, i)),
                   pl.BlockSpec((None, co_p, 128), lambda b, i: (b, 0, i))),
        compiler_params=pltpu.CompilerParams(
            dimension_semantics=("parallel", "parallel")),
    )(wm, a, bias)
    return out, _reduce_partials(ps, nblk), _reduce_partials(pq, nblk)


def affine_act(x, scale, shift, act):
    """x: (B, C_p, Mp) bf16, scale/shift: (B, C_p) f32 -> bf16 (B, C_p, Mp)."""
    nets, c_p, mp = x.shape
    tm = _pick_tm(mp)
    return pl.pallas_call(
        functools.partial(_affine_act_kernel, act=act),
        out_shape=jax.ShapeDtypeStruct((nets, c_p, mp), jnp.bfloat16),
        grid=(nets, mp // tm),
        in_specs=[pl.BlockSpec((None, c_p, tm), lambda b, i: (b, 0, i)),
                  pl.BlockSpec((None, c_p, 1), lambda b, i: (b, 0, 0)),
                  pl.BlockSpec((None, c_p, 1), lambda b, i: (b, 0, 0))],
        out_specs=pl.BlockSpec((None, c_p, tm), lambda b, i: (b, 0, i)),
        compiler_params=pltpu.CompilerParams(
            dimension_semantics=("parallel", "parallel")),
    )(x, scale[:, :, None], shift[:, :, None])


def bn_stats(x, m_real):
    nets, c_p, mp = x.shape
    tm = _pick_tm(mp)
    nblk = mp // tm
    ps, pq = pl.pallas_call(
        functools.partial(_bn_stats_kernel, m_real=m_real, tm=tm,
                          masked=(mp != m_real)),
        out_shape=(jax.ShapeDtypeStruct((nets, c_p, nblk * 128), jnp.float32),
                   jax.ShapeDtypeStruct((nets, c_p, nblk * 128), jnp.float32)),
        grid=(nets, nblk),
        in_specs=[pl.BlockSpec((None, c_p, tm), lambda b, i: (b, 0, i))],
        out_specs=(pl.BlockSpec((None, c_p, 128), lambda b, i: (b, 0, i)),
                   pl.BlockSpec((None, c_p, 128), lambda b, i: (b, 0, i))),
        compiler_params=pltpu.CompilerParams(
            dimension_semantics=("parallel", "parallel")),
    )(x)
    return _reduce_partials(ps, nblk), _reduce_partials(pq, nblk)


# ------------------------------- layers (glue) ------------------------------

def _im2col(x, k, stride, pad_mode):
    """x: (B, C_p, N, H, W) bf16 -> A: (B, C_p*k*k, N*OH*OW) bf16 (K rows (c,i,j))."""
    nets, c, n, h, w = x.shape
    if k == 1 and stride == 1:
        return x.reshape(nets, c, n * h * w), (n, h, w)
    p = (k - 1) // 2
    if p > 0:
        mode = "constant" if pad_mode == "zero" else "reflect"
        x = jnp.pad(x, ((0, 0), (0, 0), (0, 0), (p, p), (p, p)), mode=mode)
    oh = (h + 2 * p - k) // stride + 1
    ow = (w + 2 * p - k) // stride + 1
    taps = [x[:, :, :, i:i + stride * oh:stride, j:j + stride * ow:stride]
            for i in range(k) for j in range(k)]
    a = jnp.stack(taps, axis=2)                         # (B, C_p, k*k, N, OH, OW)
    return a.reshape(nets, c * k * k, n * oh * ow), (n, oh, ow)


def _pad_m(a, m):
    mp = _round_up(m, 128)
    if mp != m:
        a = jnp.pad(a, ((0, 0), (0, 0), (0, mp - m)))
    return a, mp


def _bn_scale_shift(s, sq, m, gamma, beta, eps=1e-5):
    # One-pass E[x^2]-mean^2 (training-mode biased variance, like PyTorch BN);
    # clamp guards against cancellation — fine for ~zero-mean DIP activations.
    mean = s / m
    var = jnp.maximum(sq / m - mean * mean, 0.0)
    scale = gamma / jnp.sqrt(var + eps)
    shift = beta - mean * scale
    return scale, shift


def conv_bn_act(x, cp, bnp, act, *, k, stride, pad_mode):
    nets = x.shape[0]
    a, (n, oh, ow) = _im2col(x, k, stride, pad_mode)
    m = n * oh * ow
    a, mp = _pad_m(a, m)
    y, s, sq = conv_mm(cp["wm"], a, cp["b"], m)            # stats fused in the matmul
    scale, shift = _bn_scale_shift(s, sq, m, bnp["gamma"], bnp["beta"])
    y = affine_act(y, scale, shift, act)
    if mp != m:
        y = y[:, :, :m]
    co_p = cp["wm"].shape[1]
    return y.reshape(nets, co_p, n, oh, ow)


def conv_act(x, cp, act, *, k, pad_mode):
    nets = x.shape[0]
    a, (n, oh, ow) = _im2col(x, k, 1, pad_mode)
    m = n * oh * ow
    a, mp = _pad_m(a, m)
    y, _, _ = conv_mm(cp["wm"], a, cp["b"], m, act=act)    # activation fused in-kernel
    if mp != m:
        y = y[:, :, :m]
    co_p = cp["wm"].shape[1]
    return y.reshape(nets, co_p, n, oh, ow)


def bn_act(x, bnp, act):
    nets, c_p, n, h, w = x.shape
    m = n * h * w
    x2, mp = _pad_m(x.reshape(nets, c_p, m), m)
    s, sq = bn_stats(x2, m)
    scale, shift = _bn_scale_shift(s, sq, m, bnp["gamma"], bnp["beta"])
    y = affine_act(x2, scale, shift, act)
    if mp != m:
        y = y[:, :, :m]
    return y.reshape(nets, c_p, n, h, w)


def upsample2x(x, mode):
    if mode == "nearest":
        return jnp.repeat(jnp.repeat(x, 2, axis=3), 2, axis=4)
    nets, c, n, h, w = x.shape
    # TODO(synk): jax.image.resize bilinear matches PyTorch align_corners=False only approximately.
    return jax.image.resize(x, (nets, c, n, 2 * h, 2 * w), method="bilinear")


def concat_skip_deep(s, c_s, d, c_d):
    """concat(skip, deeper) on channels, zero-padded up to a multiple of 8."""
    nets, _, n, h, w = s.shape
    cat_c = c_s + c_d
    cat_cp = _round_up(cat_c, 8)
    parts = [s[:, :c_s], d[:, :c_d]]
    if cat_cp > cat_c:
        parts.append(jnp.zeros((nets, cat_cp - cat_c, n, h, w), s.dtype))
    return jnp.concatenate(parts, axis=1)


# --------------------------- parameters / network ---------------------------

def init_conv(key, in_c, out_c, k):
    kw_, kb = jax.random.split(key)
    fan_in = in_c * k * k
    w = jax.random.normal(kw_, (out_c, in_c, k, k), jnp.float32) / jnp.sqrt(float(fan_in))
    b = jax.random.normal(kb, (out_c,), jnp.float32) * 0.01
    return w, b


def prep_conv(w, b, cin_p):
    """PyTorch-layout (O, I, kh, kw) -> channel-padded lane-friendly (O_p, I_p*kh*kw) bf16."""
    out_c, in_c, kh, kw = w.shape
    cout_p = _round_up(out_c, 8)
    wm = jnp.zeros((cout_p, cin_p, kh, kw), jnp.float32).at[:out_c, :in_c].set(w)
    wm = wm.reshape(cout_p, cin_p * kh * kw).astype(jnp.bfloat16)
    bb = jnp.zeros((cout_p, 1), jnp.float32).at[:out_c, 0].set(b)
    return {"wm": wm, "b": bb}


def prep_bn(c, c_p):
    return {"gamma": jnp.zeros((c_p,), jnp.float32).at[:c].set(1.0),
            "beta": jnp.zeros((c_p,), jnp.float32)}


def init_skip_params(key, input_depth, n33d, n33u, n11, num_scales, out_channels=3):
    in_c = input_depth
    in_cp = _round_up(in_c, 8)
    keys = jax.random.split(key, num_scales + 1)
    scales = []
    for i in range(num_scales):
        ks = jax.random.split(keys[i], 5)
        deep_c = n33u if i < num_scales - 1 else n33d
        cat_c = n11 + deep_c
        scales.append({
            "skip_conv": prep_conv(*init_conv(ks[0], in_c, n11, 1), in_cp),
            "skip_bn": prep_bn(n11, _round_up(n11, 8)),
            "down_conv1": prep_conv(*init_conv(ks[1], in_c, n33d, 3), in_cp),
            "down_bn1": prep_bn(n33d, _round_up(n33d, 8)),
            "down_conv2": prep_conv(*init_conv(ks[2], n33d, n33d, 3), _round_up(n33d, 8)),
            "down_bn2": prep_bn(n33d, _round_up(n33d, 8)),
            "cat_bn": prep_bn(cat_c, _round_up(cat_c, 8)),
            "up_conv1": prep_conv(*init_conv(ks[3], cat_c, n33u, 3), _round_up(cat_c, 8)),
            "up_bn1": prep_bn(n33u, _round_up(n33u, 8)),
            "up_conv2": prep_conv(*init_conv(ks[4], n33u, n33u, 1), _round_up(n33u, 8)),
            "up_bn2": prep_bn(n33u, _round_up(n33u, 8)),
        })
        in_c = n33d
        in_cp = _round_up(n33d, 8)
    out_conv = prep_conv(*init_conv(keys[-1], n33u, out_channels, 1), _round_up(n33u, 8))
    return {"scales": scales, "out_conv": out_conv}


def stack_params(p1, p2):
    """Stack the two independent nets on a leading axis (processed jointly per pallas_call)."""
    return jax.tree_util.tree_map(lambda a, b: jnp.stack([a, b], axis=0), p1, p2)


def skip_forward(params, x, *, n11, n33d, n33u, num_scales, upsample_mode, pad_mode):
    def scale_fn(i, xi):
        sp = params["scales"][i]
        deep_c = n33u if i < num_scales - 1 else n33d
        # skip branch: 1x1 conv -> BN -> LeakyReLU
        s = conv_bn_act(xi, sp["skip_conv"], sp["skip_bn"], "leaky",
                        k=1, stride=1, pad_mode=pad_mode)
        # deeper branch: strided conv -> BN -> LReLU -> conv -> BN -> LReLU
        d = conv_bn_act(xi, sp["down_conv1"], sp["down_bn1"], "leaky",
                        k=3, stride=2, pad_mode=pad_mode)
        d = conv_bn_act(d, sp["down_conv2"], sp["down_bn2"], "leaky",
                        k=3, stride=1, pad_mode=pad_mode)
        if i < num_scales - 1:
            d = scale_fn(i + 1, d)
        d = upsample2x(d, upsample_mode)
        # concat -> BN -> conv3x3 -> BN -> LReLU -> conv1x1 -> BN -> LReLU
        y = concat_skip_deep(s, n11, d, deep_c)
        y = bn_act(y, sp["cat_bn"], "none")
        y = conv_bn_act(y, sp["up_conv1"], sp["up_bn1"], "leaky",
                        k=3, stride=1, pad_mode=pad_mode)
        y = conv_bn_act(y, sp["up_conv2"], sp["up_bn2"], "leaky",
                        k=1, stride=1, pad_mode=pad_mode)
        return y

    y = scale_fn(0, x)
    return conv_act(y, params["out_conv"], "sigmoid", k=1, pad_mode=pad_mode)


def skip2net_forward(params, input1, input2, *, n11, n33d, n33u, num_scales,
                     out_channels, upsample_mode, pad_mode):
    """Matches Skip2Net.forward: two independent skip nets, NCHW in / NCHW out."""
    n, c, h, w = input1.shape
    c_p = _round_up(c, 8)
    x = jnp.stack([input1, input2], axis=0).astype(jnp.bfloat16)   # (2, N, C, H, W)
    x = jnp.transpose(x, (0, 2, 1, 3, 4))                          # (2, C, N, H, W)
    xp = jnp.zeros((2, c_p, n, h, w), jnp.bfloat16).at[:, :c].set(x)
    y = skip_forward(params, xp, n11=n11, n33d=n33d, n33u=n33u,
                     num_scales=num_scales, upsample_mode=upsample_mode,
                     pad_mode=pad_mode)
    y = y[:, :out_channels].astype(jnp.float32)                    # (2, C_out, N, H, W)
    out1 = jnp.transpose(y[0], (1, 0, 2, 3))                       # -> NCHW
    out2 = jnp.transpose(y[1], (1, 0, 2, 3))
    return out1, out2


# ---------------------------------- main -------------------------------------

if __name__ == "__main__":
    INPUT_DEPTH = 4
    PAD = "zero"
    SKIP_N33D = 8
    SKIP_N33U = 8
    SKIP_N11 = 4
    NUM_SCALES = 2
    UPSAMPLE_MODE = "nearest"
    OUT_CHANNELS = 3

    key = jax.random.PRNGKey(0)
    kp1, kp2, kx1, kx2 = jax.random.split(key, 4)
    p1 = init_skip_params(kp1, INPUT_DEPTH, SKIP_N33D, SKIP_N33U, SKIP_N11,
                          NUM_SCALES, OUT_CHANNELS)
    p2 = init_skip_params(kp2, INPUT_DEPTH, SKIP_N33D, SKIP_N33U, SKIP_N11,
                          NUM_SCALES, OUT_CHANNELS)
    params = stack_params(p1, p2)

    input1 = jax.random.normal(kx1, (2, INPUT_DEPTH, 16, 16), jnp.float32)
    input2 = jax.random.normal(kx2, (2, INPUT_DEPTH, 16, 16), jnp.float32)

    fwd = jax.jit(functools.partial(
        skip2net_forward, n11=SKIP_N11, n33d=SKIP_N33D, n33u=SKIP_N33U,
        num_scales=NUM_SCALES, out_channels=OUT_CHANNELS,
        upsample_mode=UPSAMPLE_MODE, pad_mode=PAD))
    out1, out2 = fwd(params, input1, input2)
    jax.block_until_ready((out1, out2))

    assert out1.shape == (2, OUT_CHANNELS, 16, 16), out1.shape
    assert out2.shape == (2, OUT_CHANNELS, 16, 16), out2.shape
    assert bool(jnp.all(jnp.isfinite(out1))) and bool(jnp.all(jnp.isfinite(out2)))
    assert bool(jnp.all((out1 >= 0) & (out1 <= 1)))  # sigmoid output range
    assert bool(jnp.all((out2 >= 0) & (out2 <= 1)))
    print("KERNEL_OK")
</pallas_src>

<mosaic_0001>
module attributes {stable_mosaic.version = 11 : i64} {
  func.func @_conv_mm_kernel(%arg0: i32, %arg1: i32, %arg2: memref<1x8x72xbf16, #tpu.memory_space<vmem>>, %arg3: memref<1x72x128xbf16, #tpu.memory_space<vmem>>, %arg4: memref<1x8x1xf32, #tpu.memory_space<vmem>>, %arg5: memref<1x8x128xbf16, #tpu.memory_space<vmem>>, %arg6: memref<1x8x128xf32, #tpu.memory_space<vmem>>, %arg7: memref<1x8x128xf32, #tpu.memory_space<vmem>>) attributes {dimension_semantics = [#tpu.dimension_semantics<parallel>, #tpu.dimension_semantics<parallel>], iteration_bounds = array<i64: 2, 1>, scalar_prefetch = 0 : i64, scratch_operands = 0 : i64, tpu.core_type = #tpu.core_type<tc>, window_params = [{transform_indices = @transform_0, window_bounds = array<i64: 1, 8, 72>}, {transform_indices = @transform_1, window_bounds = array<i64: 1, 72, 128>}, {transform_indices = @transform_2, window_bounds = array<i64: 1, 8, 1>}, {transform_indices = @transform_3, window_bounds = array<i64: 1, 8, 128>}, {transform_indices = @transform_4, window_bounds = array<i64: 1, 8, 128>}, {transform_indices = @transform_5, window_bounds = array<i64: 1, 8, 128>}]} {
    %c0 = arith.constant 0 : index
    %c0_0 = arith.constant 0 : index
    %c0_1 = arith.constant 0 : index
    %0 = vector.load %arg2[%c0, %c0_0, %c0_1] : memref<1x8x72xbf16, #tpu.memory_space<vmem>>, vector<1x8x72xbf16>
    %1 = vector.shape_cast %0 : vector<1x8x72xbf16> to vector<8x72xbf16>
    %c0_2 = arith.constant 0 : index
    %c0_3 = arith.constant 0 : index
    %c0_4 = arith.constant 0 : index
    %2 = vector.load %arg3[%c0_2, %c0_3, %c0_4] : memref<1x72x128xbf16, #tpu.memory_space<vmem>>, vector<1x72x128xbf16>
    %3 = vector.shape_cast %2 : vector<1x72x128xbf16> to vector<72x128xbf16>
    %cst = arith.constant dense<0.000000e+00> : vector<8x128xf32>
    %4 = tpu.matmul %1, %3, %cst {dimension_numbers = #tpu.dot_dimension_numbers<[1], [0], [0], [1], [0, 0, 1, 1], [], []>} : vector<8x72xbf16>, vector<72x128xbf16>, vector<8x128xf32> -> vector<8x128xf32>
    %c0_5 = arith.constant 0 : index
    %c0_6 = arith.constant 0 : index
    %c0_7 = arith.constant 0 : index
    %5 = vector.load %arg4[%c0_5, %c0_6, %c0_7] : memref<1x8x1xf32, #tpu.memory_space<vmem>>, vector<1x8x1xf32>
    %6 = vector.shape_cast %5 : vector<1x8x1xf32> to vector<8x1xf32>
    %7 = vector.broadcast %6 : vector<8x1xf32> to vector<8x128xf32>
    %8 = arith.addf %4, %7 : vector<8x128xf32>
    %cst_8 = arith.constant dense<0.000000e+00> : vector<8xf32>
    %9 = vector.multi_reduction <add>, %8, %cst_8 [1] : vector<8x128xf32> to vector<8xf32>
    %10 = vector.shape_cast %9 : vector<8xf32> to vector<8x1xf32>
    %11 = arith.mulf %8, %8 : vector<8x128xf32>
    %cst_9 = arith.constant dense<0.000000e+00> : vector<8xf32>
    %12 = vector.multi_reduction <add>, %11, %cst_9 [1] : vector<8x128xf32> to vector<8xf32>
    %13 = vector.shape_cast %12 : vector<8xf32> to vector<8x1xf32>
    %14 = vector.shape_cast %10 : vector<8x1xf32> to vector<8x1xf32>
    %15 = vector.broadcast %14 : vector<8x1xf32> to vector<8x128xf32>
    %c0_10 = arith.constant 0 : index
    %c0_11 = arith.constant 0 : index
    %c0_12 = arith.constant 0 : index
    %16 = vector.load %arg6[%c0_10, %c0_11, %c0_12] : memref<1x8x128xf32, #tpu.memory_space<vmem>>, vector<1x8x128xf32>
    %17 = vector.shape_cast %16 : vector<1x8x128xf32> to vector<8x128xf32>
    %18 = vector.shape_cast %15 : vector<8x128xf32> to vector<1x8x128xf32>
    tpu.vector_store %arg6[%c0_10, %c0_11, %c0_12], %18 {strides = array<i32>} : memref<1x8x128xf32, #tpu.memory_space<vmem>>, vector<1x8x128xf32>,
    %19 = vector.shape_cast %13 : vector<8x1xf32> to vector<8x1xf32>
    %20 = vector.broadcast %19 : vector<8x1xf32> to vector<8x128xf32>
    %c0_13 = arith.constant 0 : index
    %c0_14 = arith.constant 0 : index
    %c0_15 = arith.constant 0 : index
    %21 = vector.load %arg7[%c0_13, %c0_14, %c0_15] : memref<1x8x128xf32, #tpu.memory_space<vmem>>, vector<1x8x128xf32>
    %22 = vector.shape_cast %21 : vector<1x8x128xf32> to vector<8x128xf32>
    %23 = vector.shape_cast %20 : vector<8x128xf32> to vector<1x8x128xf32>
    tpu.vector_store %arg7[%c0_13, %c0_14, %c0_15], %23 {strides = array<i32>} : memref<1x8x128xf32, #tpu.memory_space<vmem>>, vector<1x8x128xf32>,
    %24 = arith.truncf %8 : vector<8x128xf32> to vector<8x128xbf16>
    %c0_16 = arith.constant 0 : index
    %c0_17 = arith.constant 0 : index
    %c0_18 = arith.constant 0 : index
    %25 = vector.load %arg5[%c0_16, %c0_17, %c0_18] : memref<1x8x128xbf16, #tpu.memory_space<vmem>>, vector<1x8x128xbf16>
    %26 = vector.shape_cast %25 : vector<1x8x128xbf16> to vector<8x128xbf16>
    %27 = vector.shape_cast %24 : vector<8x128xbf16> to vector<1x8x128xbf16>
    tpu.vector_store %arg5[%c0_16, %c0_17, %c0_18], %27 {strides = array<i32>} : memref<1x8x128xbf16, #tpu.memory_space<vmem>>, vector<1x8x128xbf16>,
    return
  }
  func.func @transform_0(%arg0: i32, %arg1: i32) -> (i32, i32, i32) {
    %c0_i32 = arith.constant 0 : i32
    %c0_i32_0 = arith.constant 0 : i32
    %c0_i32_1 = arith.constant 0 : i32
    return %arg0, %c0_i32, %c0_i32_0 : i32, i32, i32
  }
  func.func @transform_1(%arg0: i32, %arg1: i32) -> (i32, i32, i32) {
    %c0_i32 = arith.constant 0 : i32
    %c0_i32_0 = arith.constant 0 : i32
    return %arg0, %c0_i32, %arg1 : i32, i32, i32
  }
  func.func @transform_2(%arg0: i32, %arg1: i32) -> (i32, i32, i32) {
    %c0_i32 = arith.constant 0 : i32
    %c0_i32_0 = arith.constant 0 : i32
    %c0_i32_1 = arith.constant 0 : i32
    return %arg0, %c0_i32, %c0_i32_0 : i32, i32, i32
  }
  func.func @transform_3(%arg0: i32, %arg1: i32) -> (i32, i32, i32) {
    %c0_i32 = arith.constant 0 : i32
    %c0_i32_0 = arith.constant 0 : i32
    return %arg0, %c0_i32, %arg1 : i32, i32, i32
  }
  func.func @transform_4(%arg0: i32, %arg1: i32) -> (i32, i32, i32) {
    %c0_i32 = arith.constant 0 : i32
    %c0_i32_0 = arith.constant 0 : i32
    return %arg0, %c0_i32, %arg1 : i32, i32, i32
  }
  func.func @transform_5(%arg0: i32, %arg1: i32) -> (i32, i32, i32) {
    %c0_i32 = arith.constant 0 : i32
    %c0_i32_0 = arith.constant 0 : i32
    return %arg0, %c0_i32, %arg1 : i32, i32, i32
  }
}

module attributes {stable_mosaic.version = 11 : i64} {
  func.func @_affine_act_kernel(%arg0: i32, %arg1: i32, %arg2: memref<1x8x128xbf16, #tpu.memory_space<vmem>>, %arg3: memref<1x8x1xf32, #tpu.memory_space<vmem>>, %arg4: memref<1x8x1xf32, #tpu.memory_space<vmem>>, %arg5: memref<1x8x128xbf16, #tpu.memory_space<vmem>>) attributes {dimension_semantics = [#tpu.dimension_semantics<parallel>, #tpu.dimension_semantics<parallel>], iteration_bounds = array<i64: 2, 1>, scalar_prefetch = 0 : i64, scratch_operands = 0 : i64, tpu.core_type = #tpu.core_type<tc>, window_params = [{transform_indices = @transform_0, window_bounds = array<i64: 1, 8, 128>}, {transform_indices = @transform_1, window_bounds = array<i64: 1, 8, 1>}, {transform_indices = @transform_2, window_bounds = array<i64: 1, 8, 1>}, {transform_indices = @transform_3, window_bounds = array<i64: 1, 8, 128>}]} {
    %c0 = arith.constant 0 : index
    %c0_0 = arith.constant 0 : index
    %c0_1 = arith.constant 0 : index
    %0 = vector.load %arg2[%c0, %c0_0, %c0_1] : memref<1x8x128xbf16, #tpu.memory_space<vmem>>, vector<1x8x128xbf16>
    %1 = vector.shape_cast %0 : vector<1x8x128xbf16> to vector<8x128xbf16>
    %2 = arith.extf %1 : vector<8x128xbf16> to vector<8x128xf32>
    %c0_2 = arith.constant 0 : index
    %c0_3 = arith.constant 0 : index
    %c0_4 = arith.constant 0 : index
    %3 = vector.load %arg3[%c0_2, %c0_3, %c0_4] : memref<1x8x1xf32, #tpu.memory_space<vmem>>, vector<1x8x1xf32>
    %4 = vector.shape_cast %3 : vector<1x8x1xf32> to vector<8x1xf32>
    %5 = vector.broadcast %4 : vector<8x1xf32> to vector<8x128xf32>
    %6 = arith.mulf %2, %5 : vector<8x128xf32>
    %c0_5 = arith.constant 0 : index
    %c0_6 = arith.constant 0 : index
    %c0_7 = arith.constant 0 : index
    %7 = vector.load %arg4[%c0_5, %c0_6, %c0_7] : memref<1x8x1xf32, #tpu.memory_space<vmem>>, vector<1x8x1xf32>
    %8 = vector.shape_cast %7 : vector<1x8x1xf32> to vector<8x1xf32>
    %9 = vector.broadcast %8 : vector<8x1xf32> to vector<8x128xf32>
    %10 = arith.addf %6, %9 : vector<8x128xf32>
    %cst = arith.constant 0.000000e+00 : f32
    %11 = vector.broadcast %cst : f32 to vector<8x128xf32>
    %12 = arith.cmpf oge, %10, %11 : vector<8x128xf32>
    %cst_8 = arith.constant 2.000000e-01 : f32
    %13 = vector.broadcast %cst_8 : f32 to vector<8x128xf32>
    %14 = arith.mulf %13, %10 : vector<8x128xf32>
    %15 = arith.select %12, %10, %14 : vector<8x128xi1>, vector<8x128xf32>
    %16 = arith.truncf %15 : vector<8x128xf32> to vector<8x128xbf16>
    %c0_9 = arith.constant 0 : index
    %c0_10 = arith.constant 0 : index
    %c0_11 = arith.constant 0 : index
    %17 = vector.load %arg5[%c0_9, %c0_10, %c0_11] : memref<1x8x128xbf16, #tpu.memory_space<vmem>>, vector<1x8x128xbf16>
    %18 = vector.shape_cast %17 : vector<1x8x128xbf16> to vector<8x128xbf16>
    %19 = vector.shape_cast %16 : vector<8x128xbf16> to vector<1x8x128xbf16>
    tpu.vector_store %arg5[%c0_9, %c0_10, %c0_11], %19 {strides = array<i32>} : memref<1x8x128xbf16, #tpu.memory_space<vmem>>, vector<1x8x128xbf16>,
    return
  }
  func.func @transform_0(%arg0: i32, %arg1: i32) -> (i32, i32, i32) {
    %c0_i32 = arith.constant 0 : i32
    %c0_i32_0 = arith.constant 0 : i32
    return %arg0, %c0_i32, %arg1 : i32, i32, i32
  }
  func.func @transform_1(%arg0: i32, %arg1: i32) -> (i32, i32, i32) {
    %c0_i32 = arith.constant 0 : i32
    %c0_i32_0 = arith.constant 0 : i32
    %c0_i32_1 = arith.constant 0 : i32
    return %arg0, %c0_i32, %c0_i32_0 : i32, i32, i32
  }
  func.func @transform_2(%arg0: i32, %arg1: i32) -> (i32, i32, i32) {
    %c0_i32 = arith.constant 0 : i32
    %c0_i32_0 = arith.constant 0 : i32
    %c0_i32_1 = arith.constant 0 : i32
    return %arg0, %c0_i32, %c0_i32_0 : i32, i32, i32
  }
  func.func @transform_3(%arg0: i32, %arg1: i32) -> (i32, i32, i32) {
    %c0_i32 = arith.constant 0 : i32
    %c0_i32_0 = arith.constant 0 : i32
    return %arg0, %c0_i32, %arg1 : i32, i32, i32
  }
}

module attributes {stable_mosaic.version = 11 : i64} {
  func.func @_conv_mm_kernel(%arg0: i32, %arg1: i32, %arg2: memref<1x8x8xbf16, #tpu.memory_space<vmem>>, %arg3: memref<1x8x128xbf16, #tpu.memory_space<vmem>>, %arg4: memref<1x8x1xf32, #tpu.memory_space<vmem>>, %arg5: memref<1x8x128xbf16, #tpu.memory_space<vmem>>, %arg6: memref<1x8x128xf32, #tpu.memory_space<vmem>>, %arg7: memref<1x8x128xf32, #tpu.memory_space<vmem>>) attributes {dimension_semantics = [#tpu.dimension_semantics<parallel>, #tpu.dimension_semantics<parallel>], iteration_bounds = array<i64: 2, 1>, scalar_prefetch = 0 : i64, scratch_operands = 0 : i64, tpu.core_type = #tpu.core_type<tc>, window_params = [{transform_indices = @transform_0, window_bounds = array<i64: 1, 8, 8>}, {transform_indices = @transform_1, window_bounds = array<i64: 1, 8, 128>}, {transform_indices = @transform_2, window_bounds = array<i64: 1, 8, 1>}, {transform_indices = @transform_3, window_bounds = array<i64: 1, 8, 128>}, {transform_indices = @transform_4, window_bounds = array<i64: 1, 8, 128>}, {transform_indices = @transform_5, window_bounds = array<i64: 1, 8, 128>}]} {
    %c0 = arith.constant 0 : index
    %c0_0 = arith.constant 0 : index
    %c0_1 = arith.constant 0 : index
    %0 = vector.load %arg2[%c0, %c0_0, %c0_1] : memref<1x8x8xbf16, #tpu.memory_space<vmem>>, vector<1x8x8xbf16>
    %1 = vector.shape_cast %0 : vector<1x8x8xbf16> to vector<8x8xbf16>
    %c0_2 = arith.constant 0 : index
    %c0_3 = arith.constant 0 : index
    %c0_4 = arith.constant 0 : index
    %2 = vector.load %arg3[%c0_2, %c0_3, %c0_4] : memref<1x8x128xbf16, #tpu.memory_space<vmem>>, vector<1x8x128xbf16>
    %3 = vector.shape_cast %2 : vector<1x8x128xbf16> to vector<8x128xbf16>
    %cst = arith.constant dense<0.000000e+00> : vector<8x128xf32>
    %4 = tpu.matmul %1, %3, %cst {dimension_numbers = #tpu.dot_dimension_numbers<[1], [0], [0], [1], [0, 0, 1, 1], [], []>} : vector<8x8xbf16>, vector<8x128xbf16>, vector<8x128xf32> -> vector<8x128xf32>
    %c0_5 = arith.constant 0 : index
    %c0_6 = arith.constant 0 : index
    %c0_7 = arith.constant 0 : index
    %5 = vector.load %arg4[%c0_5, %c0_6, %c0_7] : memref<1x8x1xf32, #tpu.memory_space<vmem>>, vector<1x8x1xf32>
    %6 = vector.shape_cast %5 : vector<1x8x1xf32> to vector<8x1xf32>
    %7 = vector.broadcast %6 : vector<8x1xf32> to vector<8x128xf32>
    %8 = arith.addf %4, %7 : vector<8x128xf32>
    %cst_8 = arith.constant dense<0.000000e+00> : vector<8xf32>
    %9 = vector.multi_reduction <add>, %8, %cst_8 [1] : vector<8x128xf32> to vector<8xf32>
    %10 = vector.shape_cast %9 : vector<8xf32> to vector<8x1xf32>
    %11 = arith.mulf %8, %8 : vector<8x128xf32>
    %cst_9 = arith.constant dense<0.000000e+00> : vector<8xf32>
    %12 = vector.multi_reduction <add>, %11, %cst_9 [1] : vector<8x128xf32> to vector<8xf32>
    %13 = vector.shape_cast %12 : vector<8xf32> to vector<8x1xf32>
    %14 = vector.shape_cast %10 : vector<8x1xf32> to vector<8x1xf32>
    %15 = vector.broadcast %14 : vector<8x1xf32> to vector<8x128xf32>
    %c0_10 = arith.constant 0 : index
    %c0_11 = arith.constant 0 : index
    %c0_12 = arith.constant 0 : index
    %16 = vector.load %arg6[%c0_10, %c0_11, %c0_12] : memref<1x8x128xf32, #tpu.memory_space<vmem>>, vector<1x8x128xf32>
    %17 = vector.shape_cast %16 : vector<1x8x128xf32> to vector<8x128xf32>
    %18 = vector.shape_cast %15 : vector<8x128xf32> to vector<1x8x128xf32>
    tpu.vector_store %arg6[%c0_10, %c0_11, %c0_12], %18 {strides = array<i32>} : memref<1x8x128xf32, #tpu.memory_space<vmem>>, vector<1x8x128xf32>,
    %19 = vector.shape_cast %13 : vector<8x1xf32> to vector<8x1xf32>
    %20 = vector.broadcast %19 : vector<8x1xf32> to vector<8x128xf32>
    %c0_13 = arith.constant 0 : index
    %c0_14 = arith.constant 0 : index
    %c0_15 = arith.constant 0 : index
    %21 = vector.load %arg7[%c0_13, %c0_14, %c0_15] : memref<1x8x128xf32, #tpu.memory_space<vmem>>, vector<1x8x128xf32>
    %22 = vector.shape_cast %21 : vector<1x8x128xf32> to vector<8x128xf32>
    %23 = vector.shape_cast %20 : vector<8x128xf32> to vector<1x8x128xf32>
    tpu.vector_store %arg7[%c0_13, %c0_14, %c0_15], %23 {strides = array<i32>} : memref<1x8x128xf32, #tpu.memory_space<vmem>>, vector<1x8x128xf32>,
    %24 = arith.truncf %8 : vector<8x128xf32> to vector<8x128xbf16>
    %c0_16 = arith.constant 0 : index
    %c0_17 = arith.constant 0 : index
    %c0_18 = arith.constant 0 : index
    %25 = vector.load %arg5[%c0_16, %c0_17, %c0_18] : memref<1x8x128xbf16, #tpu.memory_space<vmem>>, vector<1x8x128xbf16>
    %26 = vector.shape_cast %25 : vector<1x8x128xbf16> to vector<8x128xbf16>
    %27 = vector.shape_cast %24 : vector<8x128xbf16> to vector<1x8x128xbf16>
    tpu.vector_store %arg5[%c0_16, %c0_17, %c0_18], %27 {strides = array<i32>} : memref<1x8x128xbf16, #tpu.memory_space<vmem>>, vector<1x8x128xbf16>,
    return
  }
  func.func @transform_0(%arg0: i32, %arg1: i32) -> (i32, i32, i32) {
    %c0_i32 = arith.constant 0 : i32
    %c0_i32_0 = arith.constant 0 : i32
    %c0_i32_1 = arith.constant 0 : i32
    return %arg0, %c0_i32, %c0_i32_0 : i32, i32, i32
  }
  func.func @transform_1(%arg0: i32, %arg1: i32) -> (i32, i32, i32) {
    %c0_i32 = arith.constant 0 : i32
    %c0_i32_0 = arith.constant 0 : i32
    return %arg0, %c0_i32, %arg1 : i32, i32, i32
  }
  func.func @transform_2(%arg0: i32, %arg1: i32) -> (i32, i32, i32) {
    %c0_i32 = arith.constant 0 : i32
    %c0_i32_0 = arith.constant 0 : i32
    %c0_i32_1 = arith.constant 0 : i32
    return %arg0, %c0_i32, %c0_i32_0 : i32, i32, i32
  }
  func.func @transform_3(%arg0: i32, %arg1: i32) -> (i32, i32, i32) {
    %c0_i32 = arith.constant 0 : i32
    %c0_i32_0 = arith.constant 0 : i32
    return %arg0, %c0_i32, %arg1 : i32, i32, i32
  }
  func.func @transform_4(%arg0: i32, %arg1: i32) -> (i32, i32, i32) {
    %c0_i32 = arith.constant 0 : i32
    %c0_i32_0 = arith.constant 0 : i32
    return %arg0, %c0_i32, %arg1 : i32, i32, i32
  }
  func.func @transform_5(%arg0: i32, %arg1: i32) -> (i32, i32, i32) {
    %c0_i32 = arith.constant 0 : i32
    %c0_i32_0 = arith.constant 0 : i32
    return %arg0, %c0_i32, %arg1 : i32, i32, i32
  }
}

module attributes {stable_mosaic.version = 11 : i64} {
  func.func @_conv_mm_kernel(%arg0: i32, %arg1: i32, %arg2: memref<1x8x72xbf16, #tpu.memory_space<vmem>>, %arg3: memref<1x72x128xbf16, #tpu.memory_space<vmem>>, %arg4: memref<1x8x1xf32, #tpu.memory_space<vmem>>, %arg5: memref<1x8x128xbf16, #tpu.memory_space<vmem>>, %arg6: memref<1x8x128xf32, #tpu.memory_space<vmem>>, %arg7: memref<1x8x128xf32, #tpu.memory_space<vmem>>) attributes {dimension_semantics = [#tpu.dimension_semantics<parallel>, #tpu.dimension_semantics<parallel>], iteration_bounds = array<i64: 2, 1>, scalar_prefetch = 0 : i64, scratch_operands = 0 : i64, tpu.core_type = #tpu.core_type<tc>, window_params = [{transform_indices = @transform_0, window_bounds = array<i64: 1, 8, 72>}, {transform_indices = @transform_1, window_bounds = array<i64: 1, 72, 128>}, {transform_indices = @transform_2, window_bounds = array<i64: 1, 8, 1>}, {transform_indices = @transform_3, window_bounds = array<i64: 1, 8, 128>}, {transform_indices = @transform_4, window_bounds = array<i64: 1, 8, 128>}, {transform_indices = @transform_5, window_bounds = array<i64: 1, 8, 128>}]} {
    %c0 = arith.constant 0 : index
    %c0_0 = arith.constant 0 : index
    %c0_1 = arith.constant 0 : index
    %0 = vector.load %arg2[%c0, %c0_0, %c0_1] : memref<1x8x72xbf16, #tpu.memory_space<vmem>>, vector<1x8x72xbf16>
    %1 = vector.shape_cast %0 : vector<1x8x72xbf16> to vector<8x72xbf16>
    %c0_2 = arith.constant 0 : index
    %c0_3 = arith.constant 0 : index
    %c0_4 = arith.constant 0 : index
    %2 = vector.load %arg3[%c0_2, %c0_3, %c0_4] : memref<1x72x128xbf16, #tpu.memory_space<vmem>>, vector<1x72x128xbf16>
    %3 = vector.shape_cast %2 : vector<1x72x128xbf16> to vector<72x128xbf16>
    %cst = arith.constant dense<0.000000e+00> : vector<8x128xf32>
    %4 = tpu.matmul %1, %3, %cst {dimension_numbers = #tpu.dot_dimension_numbers<[1], [0], [0], [1], [0, 0, 1, 1], [], []>} : vector<8x72xbf16>, vector<72x128xbf16>, vector<8x128xf32> -> vector<8x128xf32>
    %c0_5 = arith.constant 0 : index
    %c0_6 = arith.constant 0 : index
    %c0_7 = arith.constant 0 : index
    %5 = vector.load %arg4[%c0_5, %c0_6, %c0_7] : memref<1x8x1xf32, #tpu.memory_space<vmem>>, vector<1x8x1xf32>
    %6 = vector.shape_cast %5 : vector<1x8x1xf32> to vector<8x1xf32>
    %7 = vector.broadcast %6 : vector<8x1xf32> to vector<8x128xf32>
    %8 = arith.addf %4, %7 : vector<8x128xf32>
    %c128_i32 = arith.constant 128 : i32
    %9 = arith.muli %arg1, %c128_i32 : i32
    %c32_i32 = arith.constant 32 : i32
    %10 = arith.subi %c32_i32, %9 : i32
    %11 = tpu.iota {dimensions = array<i32: 1>} : vector<8x128xi32>
    %12 = vector.broadcast %10 : i32 to vector<8x128xi32>
    %13 = arith.cmpi slt, %11, %12 : vector<8x128xi32>
    %cst_8 = arith.constant 0.000000e+00 : f32
    %14 = vector.broadcast %cst_8 : f32 to vector<8x128xf32>
    %15 = arith.select %13, %8, %14 : vector<8x128xi1>, vector<8x128xf32>
    %cst_9 = arith.constant dense<0.000000e+00> : vector<8xf32>
    %16 = vector.multi_reduction <add>, %15, %cst_9 [1] : vector<8x128xf32> to vector<8xf32>
    %17 = vector.shape_cast %16 : vector<8xf32> to vector<8x1xf32>
    %18 = arith.mulf %15, %15 : vector<8x128xf32>
    %cst_10 = arith.constant dense<0.000000e+00> : vector<8xf32>
    %19 = vector.multi_reduction <add>, %18, %cst_10 [1] : vector<8x128xf32> to vector<8xf32>
    %20 = vector.shape_cast %19 : vector<8xf32> to vector<8x1xf32>
    %21 = vector.shape_cast %17 : vector<8x1xf32> to vector<8x1xf32>
    %22 = vector.broadcast %21 : vector<8x1xf32> to vector<8x128xf32>
    %c0_11 = arith.constant 0 : index
    %c0_12 = arith.constant 0 : index
    %c0_13 = arith.constant 0 : index
    %23 = vector.load %arg6[%c0_11, %c0_12, %c0_13] : memref<1x8x128xf32, #tpu.memory_space<vmem>>, vector<1x8x128xf32>
    %24 = vector.shape_cast %23 : vector<1x8x128xf32> to vector<8x128xf32>
    %25 = vector.shape_cast %22 : vector<8x128xf32> to vector<1x8x128xf32>
    tpu.vector_store %arg6[%c0_11, %c0_12, %c0_13], %25 {strides = array<i32>} : memref<1x8x128xf32, #tpu.memory_space<vmem>>, vector<1x8x128xf32>,
    %26 = vector.shape_cast %20 : vector<8x1xf32> to vector<8x1xf32>
    %27 = vector.broadcast %26 : vector<8x1xf32> to vector<8x128xf32>
    %c0_14 = arith.constant 0 : index
    %c0_15 = arith.constant 0 : index
    %c0_16 = arith.constant 0 : index
    %28 = vector.load %arg7[%c0_14, %c0_15, %c0_16] : memref<1x8x128xf32, #tpu.memory_space<vmem>>, vector<1x8x128xf32>
    %29 = vector.shape_cast %28 : vector<1x8x128xf32> to vector<8x128xf32>
    %30 = vector.shape_cast %27 : vector<8x128xf32> to vector<1x8x128xf32>
    tpu.vector_store %arg7[%c0_14, %c0_15, %c0_16], %30 {strides = array<i32>} : memref<1x8x128xf32, #tpu.memory_space<vmem>>, vector<1x8x128xf32>,
    %31 = arith.truncf %15 : vector<8x128xf32> to vector<8x128xbf16>
    %c0_17 = arith.constant 0 : index
    %c0_18 = arith.constant 0 : index
    %c0_19 = arith.constant 0 : index
    %32 = vector.load %arg5[%c0_17, %c0_18, %c0_19] : memref<1x8x128xbf16, #tpu.memory_space<vmem>>, vector<1x8x128xbf16>
    %33 = vector.shape_cast %32 : vector<1x8x128xbf16> to vector<8x128xbf16>
    %34 = vector.shape_cast %31 : vector<8x128xbf16> to vector<1x8x128xbf16>
    tpu.vector_store %arg5[%c0_17, %c0_18, %c0_19], %34 {strides = array<i32>} : memref<1x8x128xbf16, #tpu.memory_space<vmem>>, vector<1x8x128xbf16>,
    return
  }
  func.func @transform_0(%arg0: i32, %arg1: i32) -> (i32, i32, i32) {
    %c0_i32 = arith.constant 0 : i32
    %c0_i32_0 = arith.constant 0 : i32
    %c0_i32_1 = arith.constant 0 : i32
    return %arg0, %c0_i32, %c0_i32_0 : i32, i32, i32
  }
  func.func @transform_1(%arg0: i32, %arg1: i32) -> (i32, i32, i32) {
    %c0_i32 = arith.constant 0 : i32
    %c0_i32_0 = arith.constant 0 : i32
    return %arg0, %c0_i32, %arg1 : i32, i32, i32
  }
  func.func @transform_2(%arg0: i32, %arg1: i32) -> (i32, i32, i32) {
    %c0_i32 = arith.constant 0 : i32
    %c0_i32_0 = arith.constant 0 : i32
    %c0_i32_1 = arith.constant 0 : i32
    return %arg0, %c0_i32, %c0_i32_0 : i32, i32, i32
  }
  func.func @transform_3(%arg0: i32, %arg1: i32) -> (i32, i32, i32) {
    %c0_i32 = arith.constant 0 : i32
    %c0_i32_0 = arith.constant 0 : i32
    return %arg0, %c0_i32, %arg1 : i32, i32, i32
  }
  func.func @transform_4(%arg0: i32, %arg1: i32) -> (i32, i32, i32) {
    %c0_i32 = arith.constant 0 : i32
    %c0_i32_0 = arith.constant 0 : i32
    return %arg0, %c0_i32, %arg1 : i32, i32, i32
  }
  func.func @transform_5(%arg0: i32, %arg1: i32) -> (i32, i32, i32) {
    %c0_i32 = arith.constant 0 : i32
    %c0_i32_0 = arith.constant 0 : i32
    return %arg0, %c0_i32, %arg1 : i32, i32, i32
  }
}

module attributes {stable_mosaic.version = 11 : i64} {
  func.func @_affine_act_kernel(%arg0: i32, %arg1: i32, %arg2: memref<1x16x128xbf16, #tpu.memory_space<vmem>>, %arg3: memref<1x16x1xf32, #tpu.memory_space<vmem>>, %arg4: memref<1x16x1xf32, #tpu.memory_space<vmem>>, %arg5: memref<1x16x128xbf16, #tpu.memory_space<vmem>>) attributes {dimension_semantics = [#tpu.dimension_semantics<parallel>, #tpu.dimension_semantics<parallel>], iteration_bounds = array<i64: 2, 1>, scalar_prefetch = 0 : i64, scratch_operands = 0 : i64, tpu.core_type = #tpu.core_type<tc>, window_params = [{transform_indices = @transform_0, window_bounds = array<i64: 1, 16, 128>}, {transform_indices = @transform_1, window_bounds = array<i64: 1, 16, 1>}, {transform_indices = @transform_2, window_bounds = array<i64: 1, 16, 1>}, {transform_indices = @transform_3, window_bounds = array<i64: 1, 16, 128>}]} {
    %c0 = arith.constant 0 : index
    %c0_0 = arith.constant 0 : index
    %c0_1 = arith.constant 0 : index
    %0 = vector.load %arg2[%c0, %c0_0, %c0_1] : memref<1x16x128xbf16, #tpu.memory_space<vmem>>, vector<1x16x128xbf16>
    %1 = vector.shape_cast %0 : vector<1x16x128xbf16> to vector<16x128xbf16>
    %2 = arith.extf %1 : vector<16x128xbf16> to vector<16x128xf32>
    %c0_2 = arith.constant 0 : index
    %c0_3 = arith.constant 0 : index
    %c0_4 = arith.constant 0 : index
    %3 = vector.load %arg3[%c0_2, %c0_3, %c0_4] : memref<1x16x1xf32, #tpu.memory_space<vmem>>, vector<1x16x1xf32>
    %4 = vector.shape_cast %3 : vector<1x16x1xf32> to vector<16x1xf32>
    %5 = vector.broadcast %4 : vector<16x1xf32> to vector<16x128xf32>
    %6 = arith.mulf %2, %5 : vector<16x128xf32>
    %c0_5 = arith.constant 0 : index
    %c0_6 = arith.constant 0 : index
    %c0_7 = arith.constant 0 : index
    %7 = vector.load %arg4[%c0_5, %c0_6, %c0_7] : memref<1x16x1xf32, #tpu.memory_space<vmem>>, vector<1x16x1xf32>
    %8 = vector.shape_cast %7 : vector<1x16x1xf32> to vector<16x1xf32>
    %9 = vector.broadcast %8 : vector<16x1xf32> to vector<16x128xf32>
    %10 = arith.addf %6, %9 : vector<16x128xf32>
    %11 = arith.truncf %10 : vector<16x128xf32> to vector<16x128xbf16>
    %c0_8 = arith.constant 0 : index
    %c0_9 = arith.constant 0 : index
    %c0_10 = arith.constant 0 : index
    %12 = vector.load %arg5[%c0_8, %c0_9, %c0_10] : memref<1x16x128xbf16, #tpu.memory_space<vmem>>, vector<1x16x128xbf16>
    %13 = vector.shape_cast %12 : vector<1x16x128xbf16> to vector<16x128xbf16>
    %14 = vector.shape_cast %11 : vector<16x128xbf16> to vector<1x16x128xbf16>
    tpu.vector_store %arg5[%c0_8, %c0_9, %c0_10], %14 {strides = array<i32>} : memref<1x16x128xbf16, #tpu.memory_space<vmem>>, vector<1x16x128xbf16>,
    return
  }
  func.func @transform_0(%arg0: i32, %arg1: i32) -> (i32, i32, i32) {
    %c0_i32 = arith.constant 0 : i32
    %c0_i32_0 = arith.constant 0 : i32
    return %arg0, %c0_i32, %arg1 : i32, i32, i32
  }
  func.func @transform_1(%arg0: i32, %arg1: i32) -> (i32, i32, i32) {
    %c0_i32 = arith.constant 0 : i32
    %c0_i32_0 = arith.constant 0 : i32
    %c0_i32_1 = arith.constant 0 : i32
    return %arg0, %c0_i32, %c0_i32_0 : i32, i32, i32
  }
  func.func @transform_2(%arg0: i32, %arg1: i32) -> (i32, i32, i32) {
    %c0_i32 = arith.constant 0 : i32
    %c0_i32_0 = arith.constant 0 : i32
    %c0_i32_1 = arith.constant 0 : i32
    return %arg0, %c0_i32, %c0_i32_0 : i32, i32, i32
  }
  func.func @transform_3(%arg0: i32, %arg1: i32) -> (i32, i32, i32) {
    %c0_i32 = arith.constant 0 : i32
    %c0_i32_0 = arith.constant 0 : i32
    return %arg0, %c0_i32, %arg1 : i32, i32, i32
  }
}

module attributes {stable_mosaic.version = 11 : i64} {
  func.func @_bn_stats_kernel(%arg0: i32, %arg1: i32, %arg2: memref<1x16x128xbf16, #tpu.memory_space<vmem>>, %arg3: memref<1x16x128xf32, #tpu.memory_space<vmem>>, %arg4: memref<1x16x128xf32, #tpu.memory_space<vmem>>) attributes {dimension_semantics = [#tpu.dimension_semantics<parallel>, #tpu.dimension_semantics<parallel>], iteration_bounds = array<i64: 2, 1>, scalar_prefetch = 0 : i64, scratch_operands = 0 : i64, tpu.core_type = #tpu.core_type<tc>, window_params = [{transform_indices = @transform_0, window_bounds = array<i64: 1, 16, 128>}, {transform_indices = @transform_1, window_bounds = array<i64: 1, 16, 128>}, {transform_indices = @transform_2, window_bounds = array<i64: 1, 16, 128>}]} {
    %c0 = arith.constant 0 : index
    %c0_0 = arith.constant 0 : index
    %c0_1 = arith.constant 0 : index
    %0 = vector.load %arg2[%c0, %c0_0, %c0_1] : memref<1x16x128xbf16, #tpu.memory_space<vmem>>, vector<1x16x128xbf16>
    %1 = vector.shape_cast %0 : vector<1x16x128xbf16> to vector<16x128xbf16>
    %2 = arith.extf %1 : vector<16x128xbf16> to vector<16x128xf32>
    %cst = arith.constant dense<0.000000e+00> : vector<16xf32>
    %3 = vector.multi_reduction <add>, %2, %cst [1] : vector<16x128xf32> to vector<16xf32>
    %4 = vector.shape_cast %3 : vector<16xf32> to vector<16x1xf32>
    %5 = vector.shape_cast %4 : vector<16x1xf32> to vector<16x1xf32>
    %6 = vector.broadcast %5 : vector<16x1xf32> to vector<16x128xf32>
    %c0_2 = arith.constant 0 : index
    %c0_3 = arith.constant 0 : index
    %c0_4 = arith.constant 0 : index
    %7 = vector.load %arg3[%c0_2, %c0_3, %c0_4] : memref<1x16x128xf32, #tpu.memory_space<vmem>>, vector<1x16x128xf32>
    %8 = vector.shape_cast %7 : vector<1x16x128xf32> to vector<16x128xf32>
    %9 = vector.shape_cast %6 : vector<16x128xf32> to vector<1x16x128xf32>
    tpu.vector_store %arg3[%c0_2, %c0_3, %c0_4], %9 {strides = array<i32>} : memref<1x16x128xf32, #tpu.memory_space<vmem>>, vector<1x16x128xf32>,
    %10 = arith.mulf %2, %2 : vector<16x128xf32>
    %cst_5 = arith.constant dense<0.000000e+00> : vector<16xf32>
    %11 = vector.multi_reduction <add>, %10, %cst_5 [1] : vector<16x128xf32> to vector<16xf32>
    %12 = vector.shape_cast %11 : vector<16xf32> to vector<16x1xf32>
    %13 = vector.shape_cast %12 : vector<16x1xf32> to vector<16x1xf32>
    %14 = vector.broadcast %13 : vector<16x1xf32> to vector<16x128xf32>
    %c0_6 = arith.constant 0 : index
    %c0_7 = arith.constant 0 : index
    %c0_8 = arith.constant 0 : index
    %15 = vector.load %arg4[%c0_6, %c0_7, %c0_8] : memref<1x16x128xf32, #tpu.memory_space<vmem>>, vector<1x16x128xf32>
    %16 = vector.shape_cast %15 : vector<1x16x128xf32> to vector<16x128xf32>
    %17 = vector.shape_cast %14 : vector<16x128xf32> to vector<1x16x128xf32>
    tpu.vector_store %arg4[%c0_6, %c0_7, %c0_8], %17 {strides = array<i32>} : memref<1x16x128xf32, #tpu.memory_space<vmem>>, vector<1x16x128xf32>,
    return
  }
  func.func @transform_0(%arg0: i32, %arg1: i32) -> (i32, i32, i32) {
    %c0_i32 = arith.constant 0 : i32
    %c0_i32_0 = arith.constant 0 : i32
    return %arg0, %c0_i32, %arg1 : i32, i32, i32
  }
  func.func @transform_1(%arg0: i32, %arg1: i32) -> (i32, i32, i32) {
    %c0_i32 = arith.constant 0 : i32
    %c0_i32_0 = arith.constant 0 : i32
    return %arg0, %c0_i32, %arg1 : i32, i32, i32
  }
  func.func @transform_2(%arg0: i32, %arg1: i32) -> (i32, i32, i32) {
    %c0_i32 = arith.constant 0 : i32
    %c0_i32_0 = arith.constant 0 : i32
    return %arg0, %c0_i32, %arg1 : i32, i32, i32
  }
}

module attributes {stable_mosaic.version = 11 : i64} {
  func.func @_conv_mm_kernel(%arg0: i32, %arg1: i32, %arg2: memref<1x8x144xbf16, #tpu.memory_space<vmem>>, %arg3: memref<1x144x128xbf16, #tpu.memory_space<vmem>>, %arg4: memref<1x8x1xf32, #tpu.memory_space<vmem>>, %arg5: memref<1x8x128xbf16, #tpu.memory_space<vmem>>, %arg6: memref<1x8x128xf32, #tpu.memory_space<vmem>>, %arg7: memref<1x8x128xf32, #tpu.memory_space<vmem>>) attributes {dimension_semantics = [#tpu.dimension_semantics<parallel>, #tpu.dimension_semantics<parallel>], iteration_bounds = array<i64: 2, 1>, scalar_prefetch = 0 : i64, scratch_operands = 0 : i64, tpu.core_type = #tpu.core_type<tc>, window_params = [{transform_indices = @transform_0, window_bounds = array<i64: 1, 8, 144>}, {transform_indices = @transform_1, window_bounds = array<i64: 1, 144, 128>}, {transform_indices = @transform_2, window_bounds = array<i64: 1, 8, 1>}, {transform_indices = @transform_3, window_bounds = array<i64: 1, 8, 128>}, {transform_indices = @transform_4, window_bounds = array<i64: 1, 8, 128>}, {transform_indices = @transform_5, window_bounds = array<i64: 1, 8, 128>}]} {
    %c0 = arith.constant 0 : index
    %c0_0 = arith.constant 0 : index
    %c0_1 = arith.constant 0 : index
    %0 = vector.load %arg2[%c0, %c0_0, %c0_1] : memref<1x8x144xbf16, #tpu.memory_space<vmem>>, vector<1x8x144xbf16>
    %1 = vector.shape_cast %0 : vector<1x8x144xbf16> to vector<8x144xbf16>
    %c0_2 = arith.constant 0 : index
    %c0_3 = arith.constant 0 : index
    %c0_4 = arith.constant 0 : index
    %2 = vector.load %arg3[%c0_2, %c0_3, %c0_4] : memref<1x144x128xbf16, #tpu.memory_space<vmem>>, vector<1x144x128xbf16>
    %3 = vector.shape_cast %2 : vector<1x144x128xbf16> to vector<144x128xbf16>
    %cst = arith.constant dense<0.000000e+00> : vector<8x128xf32>
    %4 = tpu.matmul %1, %3, %cst {dimension_numbers = #tpu.dot_dimension_numbers<[1], [0], [0], [1], [0, 0, 1, 1], [], []>} : vector<8x144xbf16>, vector<144x128xbf16>, vector<8x128xf32> -> vector<8x128xf32>
    %c0_5 = arith.constant 0 : index
    %c0_6 = arith.constant 0 : index
    %c0_7 = arith.constant 0 : index
    %5 = vector.load %arg4[%c0_5, %c0_6, %c0_7] : memref<1x8x1xf32, #tpu.memory_space<vmem>>, vector<1x8x1xf32>
    %6 = vector.shape_cast %5 : vector<1x8x1xf32> to vector<8x1xf32>
    %7 = vector.broadcast %6 : vector<8x1xf32> to vector<8x128xf32>
    %8 = arith.addf %4, %7 : vector<8x128xf32>
    %cst_8 = arith.constant dense<0.000000e+00> : vector<8xf32>
    %9 = vector.multi_reduction <add>, %8, %cst_8 [1] : vector<8x128xf32> to vector<8xf32>
    %10 = vector.shape_cast %9 : vector<8xf32> to vector<8x1xf32>
    %11 = arith.mulf %8, %8 : vector<8x128xf32>
    %cst_9 = arith.constant dense<0.000000e+00> : vector<8xf32>
    %12 = vector.multi_reduction <add>, %11, %cst_9 [1] : vector<8x128xf32> to vector<8xf32>
    %13 = vector.shape_cast %12 : vector<8xf32> to vector<8x1xf32>
    %14 = vector.shape_cast %10 : vector<8x1xf32> to vector<8x1xf32>
    %15 = vector.broadcast %14 : vector<8x1xf32> to vector<8x128xf32>
    %c0_10 = arith.constant 0 : index
    %c0_11 = arith.constant 0 : index
    %c0_12 = arith.constant 0 : index
    %16 = vector.load %arg6[%c0_10, %c0_11, %c0_12] : memref<1x8x128xf32, #tpu.memory_space<vmem>>, vector<1x8x128xf32>
    %17 = vector.shape_cast %16 : vector<1x8x128xf32> to vector<8x128xf32>
    %18 = vector.shape_cast %15 : vector<8x128xf32> to vector<1x8x128xf32>
    tpu.vector_store %arg6[%c0_10, %c0_11, %c0_12], %18 {strides = array<i32>} : memref<1x8x128xf32, #tpu.memory_space<vmem>>, vector<1x8x128xf32>,
    %19 = vector.shape_cast %13 : vector<8x1xf32> to vector<8x1xf32>
    %20 = vector.broadcast %19 : vector<8x1xf32> to vector<8x128xf32>
    %c0_13 = arith.constant 0 : index
    %c0_14 = arith.constant 0 : index
    %c0_15 = arith.constant 0 : index
    %21 = vector.load %arg7[%c0_13, %c0_14, %c0_15] : memref<1x8x128xf32, #tpu.memory_space<vmem>>, vector<1x8x128xf32>
    %22 = vector.shape_cast %21 : vector<1x8x128xf32> to vector<8x128xf32>
    %23 = vector.shape_cast %20 : vector<8x128xf32> to vector<1x8x128xf32>
    tpu.vector_store %arg7[%c0_13, %c0_14, %c0_15], %23 {strides = array<i32>} : memref<1x8x128xf32, #tpu.memory_space<vmem>>, vector<1x8x128xf32>,
    %24 = arith.truncf %8 : vector<8x128xf32> to vector<8x128xbf16>
    %c0_16 = arith.constant 0 : index
    %c0_17 = arith.constant 0 : index
    %c0_18 = arith.constant 0 : index
    %25 = vector.load %arg5[%c0_16, %c0_17, %c0_18] : memref<1x8x128xbf16, #tpu.memory_space<vmem>>, vector<1x8x128xbf16>
    %26 = vector.shape_cast %25 : vector<1x8x128xbf16> to vector<8x128xbf16>
    %27 = vector.shape_cast %24 : vector<8x128xbf16> to vector<1x8x128xbf16>
    tpu.vector_store %arg5[%c0_16, %c0_17, %c0_18], %27 {strides = array<i32>} : memref<1x8x128xbf16, #tpu.memory_space<vmem>>, vector<1x8x128xbf16>,
    return
  }
  func.func @transform_0(%arg0: i32, %arg1: i32) -> (i32, i32, i32) {
    %c0_i32 = arith.constant 0 : i32
    %c0_i32_0 = arith.constant 0 : i32
    %c0_i32_1 = arith.constant 0 : i32
    return %arg0, %c0_i32, %c0_i32_0 : i32, i32, i32
  }
  func.func @transform_1(%arg0: i32, %arg1: i32) -> (i32, i32, i32) {
    %c0_i32 = arith.constant 0 : i32
    %c0_i32_0 = arith.constant 0 : i32
    return %arg0, %c0_i32, %arg1 : i32, i32, i32
  }
  func.func @transform_2(%arg0: i32, %arg1: i32) -> (i32, i32, i32) {
    %c0_i32 = arith.constant 0 : i32
    %c0_i32_0 = arith.constant 0 : i32
    %c0_i32_1 = arith.constant 0 : i32
    return %arg0, %c0_i32, %c0_i32_0 : i32, i32, i32
  }
  func.func @transform_3(%arg0: i32, %arg1: i32) -> (i32, i32, i32) {
    %c0_i32 = arith.constant 0 : i32
    %c0_i32_0 = arith.constant 0 : i32
    return %arg0, %c0_i32, %arg1 : i32, i32, i32
  }
  func.func @transform_4(%arg0: i32, %arg1: i32) -> (i32, i32, i32) {
    %c0_i32 = arith.constant 0 : i32
    %c0_i32_0 = arith.constant 0 : i32
    return %arg0, %c0_i32, %arg1 : i32, i32, i32
  }
  func.func @transform_5(%arg0: i32, %arg1: i32) -> (i32, i32, i32) {
    %c0_i32 = arith.constant 0 : i32
    %c0_i32_0 = arith.constant 0 : i32
    return %arg0, %c0_i32, %arg1 : i32, i32, i32
  }
}

module attributes {stable_mosaic.version = 11 : i64} {
  func.func @_conv_mm_kernel(%arg0: i32, %arg1: i32, %arg2: memref<1x8x8xbf16, #tpu.memory_space<vmem>>, %arg3: memref<1x8x256xbf16, #tpu.memory_space<vmem>>, %arg4: memref<1x8x1xf32, #tpu.memory_space<vmem>>, %arg5: memref<1x8x256xbf16, #tpu.memory_space<vmem>>, %arg6: memref<1x8x128xf32, #tpu.memory_space<vmem>>, %arg7: memref<1x8x128xf32, #tpu.memory_space<vmem>>) attributes {dimension_semantics = [#tpu.dimension_semantics<parallel>, #tpu.dimension_semantics<parallel>], iteration_bounds = array<i64: 2, 2>, scalar_prefetch = 0 : i64, scratch_operands = 0 : i64, tpu.core_type = #tpu.core_type<tc>, window_params = [{transform_indices = @transform_0, window_bounds = array<i64: 1, 8, 8>}, {transform_indices = @transform_1, window_bounds = array<i64: 1, 8, 256>}, {transform_indices = @transform_2, window_bounds = array<i64: 1, 8, 1>}, {transform_indices = @transform_3, window_bounds = array<i64: 1, 8, 256>}, {transform_indices = @transform_4, window_bounds = array<i64: 1, 8, 128>}, {transform_indices = @transform_5, window_bounds = array<i64: 1, 8, 128>}]} {
    %c0 = arith.constant 0 : index
    %c0_0 = arith.constant 0 : index
    %c0_1 = arith.constant 0 : index
    %0 = vector.load %arg2[%c0, %c0_0, %c0_1] : memref<1x8x8xbf16, #tpu.memory_space<vmem>>, vector<1x8x8xbf16>
    %1 = vector.shape_cast %0 : vector<1x8x8xbf16> to vector<8x8xbf16>
    %c0_2 = arith.constant 0 : index
    %c0_3 = arith.constant 0 : index
    %c0_4 = arith.constant 0 : index
    %2 = vector.load %arg3[%c0_2, %c0_3, %c0_4] : memref<1x8x256xbf16, #tpu.memory_space<vmem>>, vector<1x8x256xbf16>
    %3 = vector.shape_cast %2 : vector<1x8x256xbf16> to vector<8x256xbf16>
    %cst = arith.constant dense<0.000000e+00> : vector<8x256xf32>
    %4 = tpu.matmul %1, %3, %cst {dimension_numbers = #tpu.dot_dimension_numbers<[1], [0], [0], [1], [0, 0, 1, 1], [], []>} : vector<8x8xbf16>, vector<8x256xbf16>, vector<8x256xf32> -> vector<8x256xf32>
    %c0_5 = arith.constant 0 : index
    %c0_6 = arith.constant 0 : index
    %c0_7 = arith.constant 0 : index
    %5 = vector.load %arg4[%c0_5, %c0_6, %c0_7] : memref<1x8x1xf32, #tpu.memory_space<vmem>>, vector<1x8x1xf32>
    %6 = vector.shape_cast %5 : vector<1x8x1xf32> to vector<8x1xf32>
    %7 = vector.broadcast %6 : vector<8x1xf32> to vector<8x256xf32>
    %8 = arith.addf %4, %7 : vector<8x256xf32>
    %cst_8 = arith.constant dense<0.000000e+00> : vector<8xf32>
    %9 = vector.multi_reduction <add>, %8, %cst_8 [1] : vector<8x256xf32> to vector<8xf32>
    %10 = vector.shape_cast %9 : vector<8xf32> to vector<8x1xf32>
    %11 = arith.mulf %8, %8 : vector<8x256xf32>
    %cst_9 = arith.constant dense<0.000000e+00> : vector<8xf32>
    %12 = vector.multi_reduction <add>, %11, %cst_9 [1] : vector<8x256xf32> to vector<8xf32>
    %13 = vector.shape_cast %12 : vector<8xf32> to vector<8x1xf32>
    %14 = vector.shape_cast %10 : vector<8x1xf32> to vector<8x1xf32>
    %15 = vector.broadcast %14 : vector<8x1xf32> to vector<8x128xf32>
    %c0_10 = arith.constant 0 : index
    %c0_11 = arith.constant 0 : index
    %c0_12 = arith.constant 0 : index
    %16 = vector.load %arg6[%c0_10, %c0_11, %c0_12] : memref<1x8x128xf32, #tpu.memory_space<vmem>>, vector<1x8x128xf32>
    %17 = vector.shape_cast %16 : vector<1x8x128xf32> to vector<8x128xf32>
    %18 = vector.shape_cast %15 : vector<8x128xf32> to vector<1x8x128xf32>
    tpu.vector_store %arg6[%c0_10, %c0_11, %c0_12], %18 {strides = array<i32>} : memref<1x8x128xf32, #tpu.memory_space<vmem>>, vector<1x8x128xf32>,
    %19 = vector.shape_cast %13 : vector<8x1xf32> to vector<8x1xf32>
    %20 = vector.broadcast %19 : vector<8x1xf32> to vector<8x128xf32>
    %c0_13 = arith.constant 0 : index
    %c0_14 = arith.constant 0 : index
    %c0_15 = arith.constant 0 : index
    %21 = vector.load %arg7[%c0_13, %c0_14, %c0_15] : memref<1x8x128xf32, #tpu.memory_space<vmem>>, vector<1x8x128xf32>
    %22 = vector.shape_cast %21 : vector<1x8x128xf32> to vector<8x128xf32>
    %23 = vector.shape_cast %20 : vector<8x128xf32> to vector<1x8x128xf32>
    tpu.vector_store %arg7[%c0_13, %c0_14, %c0_15], %23 {strides = array<i32>} : memref<1x8x128xf32, #tpu.memory_space<vmem>>, vector<1x8x128xf32>,
    %24 = arith.truncf %8 : vector<8x256xf32> to vector<8x256xbf16>
    %c0_16 = arith.constant 0 : index
    %c0_17 = arith.constant 0 : index
    %c0_18 = arith.constant 0 : index
    %25 = vector.load %arg5[%c0_16, %c0_17, %c0_18] : memref<1x8x256xbf16, #tpu.memory_space<vmem>>, vector<1x8x256xbf16>
    %26 = vector.shape_cast %25 : vector<1x8x256xbf16> to vector<8x256xbf16>
    %27 = vector.shape_cast %24 : vector<8x256xbf16> to vector<1x8x256xbf16>
    tpu.vector_store %arg5[%c0_16, %c0_17, %c0_18], %27 {strides = array<i32>} : memref<1x8x256xbf16, #tpu.memory_space<vmem>>, vector<1x8x256xbf16>,
    return
  }
  func.func @transform_0(%arg0: i32, %arg1: i32) -> (i32, i32, i32) {
    %c0_i32 = arith.constant 0 : i32
    %c0_i32_0 = arith.constant 0 : i32
    %c0_i32_1 = arith.constant 0 : i32
    return %arg0, %c0_i32, %c0_i32_0 : i32, i32, i32
  }
  func.func @transform_1(%arg0: i32, %arg1: i32) -> (i32, i32, i32) {
    %c0_i32 = arith.constant 0 : i32
    %c0_i32_0 = arith.constant 0 : i32
    return %arg0, %c0_i32, %arg1 : i32, i32, i32
  }
  func.func @transform_2(%arg0: i32, %arg1: i32) -> (i32, i32, i32) {
    %c0_i32 = arith.constant 0 : i32
    %c0_i32_0 = arith.constant 0 : i32
    %c0_i32_1 = arith.constant 0 : i32
    return %arg0, %c0_i32, %c0_i32_0 : i32, i32, i32
  }
  func.func @transform_3(%arg0: i32, %arg1: i32) -> (i32, i32, i32) {
    %c0_i32 = arith.constant 0 : i32
    %c0_i32_0 = arith.constant 0 : i32
    return %arg0, %c0_i32, %arg1 : i32, i32, i32
  }
  func.func @transform_4(%arg0: i32, %arg1: i32) -> (i32, i32, i32) {
    %c0_i32 = arith.constant 0 : i32
    %c0_i32_0 = arith.constant 0 : i32
    return %arg0, %c0_i32, %arg1 : i32, i32, i32
  }
  func.func @transform_5(%arg0: i32, %arg1: i32) -> (i32, i32, i32) {
    %c0_i32 = arith.constant 0 : i32
    %c0_i32_0 = arith.constant 0 : i32
    return %arg0, %c0_i32, %arg1 : i32, i32, i32
  }
}

module attributes {stable_mosaic.version = 11 : i64} {
  func.func @_affine_act_kernel(%arg0: i32, %arg1: i32, %arg2: memref<1x8x256xbf16, #tpu.memory_space<vmem>>, %arg3: memref<1x8x1xf32, #tpu.memory_space<vmem>>, %arg4: memref<1x8x1xf32, #tpu.memory_space<vmem>>, %arg5: memref<1x8x256xbf16, #tpu.memory_space<vmem>>) attributes {dimension_semantics = [#tpu.dimension_semantics<parallel>, #tpu.dimension_semantics<parallel>], iteration_bounds = array<i64: 2, 2>, scalar_prefetch = 0 : i64, scratch_operands = 0 : i64, tpu.core_type = #tpu.core_type<tc>, window_params = [{transform_indices = @transform_0, window_bounds = array<i64: 1, 8, 256>}, {transform_indices = @transform_1, window_bounds = array<i64: 1, 8, 1>}, {transform_indices = @transform_2, window_bounds = array<i64: 1, 8, 1>}, {transform_indices = @transform_3, window_bounds = array<i64: 1, 8, 256>}]} {
    %c0 = arith.constant 0 : index
    %c0_0 = arith.constant 0 : index
    %c0_1 = arith.constant 0 : index
    %0 = vector.load %arg2[%c0, %c0_0, %c0_1] : memref<1x8x256xbf16, #tpu.memory_space<vmem>>, vector<1x8x256xbf16>
    %1 = vector.shape_cast %0 : vector<1x8x256xbf16> to vector<8x256xbf16>
    %2 = arith.extf %1 : vector<8x256xbf16> to vector<8x256xf32>
    %c0_2 = arith.constant 0 : index
    %c0_3 = arith.constant 0 : index
    %c0_4 = arith.constant 0 : index
    %3 = vector.load %arg3[%c0_2, %c0_3, %c0_4] : memref<1x8x1xf32, #tpu.memory_space<vmem>>, vector<1x8x1xf32>
    %4 = vector.shape_cast %3 : vector<1x8x1xf32> to vector<8x1xf32>
    %5 = vector.broadcast %4 : vector<8x1xf32> to vector<8x256xf32>
    %6 = arith.mulf %2, %5 : vector<8x256xf32>
    %c0_5 = arith.constant 0 : index
    %c0_6 = arith.constant 0 : index
    %c0_7 = arith.constant 0 : index
    %7 = vector.load %arg4[%c0_5, %c0_6, %c0_7] : memref<1x8x1xf32, #tpu.memory_space<vmem>>, vector<1x8x1xf32>
    %8 = vector.shape_cast %7 : vector<1x8x1xf32> to vector<8x1xf32>
    %9 = vector.broadcast %8 : vector<8x1xf32> to vector<8x256xf32>
    %10 = arith.addf %6, %9 : vector<8x256xf32>
    %cst = arith.constant 0.000000e+00 : f32
    %11 = vector.broadcast %cst : f32 to vector<8x256xf32>
    %12 = arith.cmpf oge, %10, %11 : vector<8x256xf32>
    %cst_8 = arith.constant 2.000000e-01 : f32
    %13 = vector.broadcast %cst_8 : f32 to vector<8x256xf32>
    %14 = arith.mulf %13, %10 : vector<8x256xf32>
    %15 = arith.select %12, %10, %14 : vector<8x256xi1>, vector<8x256xf32>
    %16 = arith.truncf %15 : vector<8x256xf32> to vector<8x256xbf16>
    %c0_9 = arith.constant 0 : index
    %c0_10 = arith.constant 0 : index
    %c0_11 = arith.constant 0 : index
    %17 = vector.load %arg5[%c0_9, %c0_10, %c0_11] : memref<1x8x256xbf16, #tpu.memory_space<vmem>>, vector<1x8x256xbf16>
    %18 = vector.shape_cast %17 : vector<1x8x256xbf16> to vector<8x256xbf16>
    %19 = vector.shape_cast %16 : vector<8x256xbf16> to vector<1x8x256xbf16>
    tpu.vector_store %arg5[%c0_9, %c0_10, %c0_11], %19 {strides = array<i32>} : memref<1x8x256xbf16, #tpu.memory_space<vmem>>, vector<1x8x256xbf16>,
    return
  }
  func.func @transform_0(%arg0: i32, %arg1: i32) -> (i32, i32, i32) {
    %c0_i32 = arith.constant 0 : i32
    %c0_i32_0 = arith.constant 0 : i32
    return %arg0, %c0_i32, %arg1 : i32, i32, i32
  }
  func.func @transform_1(%arg0: i32, %arg1: i32) -> (i32, i32, i32) {
    %c0_i32 = arith.constant 0 : i32
    %c0_i32_0 = arith.constant 0 : i32
    %c0_i32_1 = arith.constant 0 : i32
    return %arg0, %c0_i32, %c0_i32_0 : i32, i32, i32
  }
  func.func @transform_2(%arg0: i32, %arg1: i32) -> (i32, i32, i32) {
    %c0_i32 = arith.constant 0 : i32
    %c0_i32_0 = arith.constant 0 : i32
    %c0_i32_1 = arith.constant 0 : i32
    return %arg0, %c0_i32, %c0_i32_0 : i32, i32, i32
  }
  func.func @transform_3(%arg0: i32, %arg1: i32) -> (i32, i32, i32) {
    %c0_i32 = arith.constant 0 : i32
    %c0_i32_0 = arith.constant 0 : i32
    return %arg0, %c0_i32, %arg1 : i32, i32, i32
  }
}

module attributes {stable_mosaic.version = 11 : i64} {
  func.func @_bn_stats_kernel(%arg0: i32, %arg1: i32, %arg2: memref<1x16x256xbf16, #tpu.memory_space<vmem>>, %arg3: memref<1x16x128xf32, #tpu.memory_space<vmem>>, %arg4: memref<1x16x128xf32, #tpu.memory_space<vmem>>) attributes {dimension_semantics = [#tpu.dimension_semantics<parallel>, #tpu.dimension_semantics<parallel>], iteration_bounds = array<i64: 2, 2>, scalar_prefetch = 0 : i64, scratch_operands = 0 : i64, tpu.core_type = #tpu.core_type<tc>, window_params = [{transform_indices = @transform_0, window_bounds = array<i64: 1, 16, 256>}, {transform_indices = @transform_1, window_bounds = array<i64: 1, 16, 128>}, {transform_indices = @transform_2, window_bounds = array<i64: 1, 16, 128>}]} {
    %c0 = arith.constant 0 : index
    %c0_0 = arith.constant 0 : index
    %c0_1 = arith.constant 0 : index
    %0 = vector.load %arg2[%c0, %c0_0, %c0_1] : memref<1x16x256xbf16, #tpu.memory_space<vmem>>, vector<1x16x256xbf16>
    %1 = vector.shape_cast %0 : vector<1x16x256xbf16> to vector<16x256xbf16>
    %2 = arith.extf %1 : vector<16x256xbf16> to vector<16x256xf32>
    %cst = arith.constant dense<0.000000e+00> : vector<16xf32>
    %3 = vector.multi_reduction <add>, %2, %cst [1] : vector<16x256xf32> to vector<16xf32>
    %4 = vector.shape_cast %3 : vector<16xf32> to vector<16x1xf32>
    %5 = vector.shape_cast %4 : vector<16x1xf32> to vector<16x1xf32>
    %6 = vector.broadcast %5 : vector<16x1xf32> to vector<16x128xf32>
    %c0_2 = arith.constant 0 : index
    %c0_3 = arith.constant 0 : index
    %c0_4 = arith.constant 0 : index
    %7 = vector.load %arg3[%c0_2, %c0_3, %c0_4] : memref<1x16x128xf32, #tpu.memory_space<vmem>>, vector<1x16x128xf32>
    %8 = vector.shape_cast %7 : vector<1x16x128xf32> to vector<16x128xf32>
    %9 = vector.shape_cast %6 : vector<16x128xf32> to vector<1x16x128xf32>
    tpu.vector_store %arg3[%c0_2, %c0_3, %c0_4], %9 {strides = array<i32>} : memref<1x16x128xf32, #tpu.memory_space<vmem>>, vector<1x16x128xf32>,
    %10 = arith.mulf %2, %2 : vector<16x256xf32>
    %cst_5 = arith.constant dense<0.000000e+00> : vector<16xf32>
    %11 = vector.multi_reduction <add>, %10, %cst_5 [1] : vector<16x256xf32> to vector<16xf32>
    %12 = vector.shape_cast %11 : vector<16xf32> to vector<16x1xf32>
    %13 = vector.shape_cast %12 : vector<16x1xf32> to vector<16x1xf32>
    %14 = vector.broadcast %13 : vector<16x1xf32> to vector<16x128xf32>
    %c0_6 = arith.constant 0 : index
    %c0_7 = arith.constant 0 : index
    %c0_8 = arith.constant 0 : index
    %15 = vector.load %arg4[%c0_6, %c0_7, %c0_8] : memref<1x16x128xf32, #tpu.memory_space<vmem>>, vector<1x16x128xf32>
    %16 = vector.shape_cast %15 : vector<1x16x128xf32> to vector<16x128xf32>
    %17 = vector.shape_cast %14 : vector<16x128xf32> to vector<1x16x128xf32>
    tpu.vector_store %arg4[%c0_6, %c0_7, %c0_8], %17 {strides = array<i32>} : memref<1x16x128xf32, #tpu.memory_space<vmem>>, vector<1x16x128xf32>,
    return
  }
  func.func @transform_0(%arg0: i32, %arg1: i32) -> (i32, i32, i32) {
    %c0_i32 = arith.constant 0 : i32
    %c0_i32_0 = arith.constant 0 : i32
    return %arg0, %c0_i32, %arg1 : i32, i32, i32
  }
  func.func @transform_1(%arg0: i32, %arg1: i32) -> (i32, i32, i32) {
    %c0_i32 = arith.constant 0 : i32
    %c0_i32_0 = arith.constant 0 : i32
    return %arg0, %c0_i32, %arg1 : i32, i32, i32
  }
  func.func @transform_2(%arg0: i32, %arg1: i32) -> (i32, i32, i32) {
    %c0_i32 = arith.constant 0 : i32
    %c0_i32_0 = arith.constant 0 : i32
    return %arg0, %c0_i32, %arg1 : i32, i32, i32
  }
}

module attributes {stable_mosaic.version = 11 : i64} {
  func.func @_affine_act_kernel(%arg0: i32, %arg1: i32, %arg2: memref<1x16x256xbf16, #tpu.memory_space<vmem>>, %arg3: memref<1x16x1xf32, #tpu.memory_space<vmem>>, %arg4: memref<1x16x1xf32, #tpu.memory_space<vmem>>, %arg5: memref<1x16x256xbf16, #tpu.memory_space<vmem>>) attributes {dimension_semantics = [#tpu.dimension_semantics<parallel>, #tpu.dimension_semantics<parallel>], iteration_bounds = array<i64: 2, 2>, scalar_prefetch = 0 : i64, scratch_operands = 0 : i64, tpu.core_type = #tpu.core_type<tc>, window_params = [{transform_indices = @transform_0, window_bounds = array<i64: 1, 16, 256>}, {transform_indices = @transform_1, window_bounds = array<i64: 1, 16, 1>}, {transform_indices = @transform_2, window_bounds = array<i64: 1, 16, 1>}, {transform_indices = @transform_3, window_bounds = array<i64: 1, 16, 256>}]} {
    %c0 = arith.constant 0 : index
    %c0_0 = arith.constant 0 : index
    %c0_1 = arith.constant 0 : index
    %0 = vector.load %arg2[%c0, %c0_0, %c0_1] : memref<1x16x256xbf16, #tpu.memory_space<vmem>>, vector<1x16x256xbf16>
    %1 = vector.shape_cast %0 : vector<1x16x256xbf16> to vector<16x256xbf16>
    %2 = arith.extf %1 : vector<16x256xbf16> to vector<16x256xf32>
    %c0_2 = arith.constant 0 : index
    %c0_3 = arith.constant 0 : index
    %c0_4 = arith.constant 0 : index
    %3 = vector.load %arg3[%c0_2, %c0_3, %c0_4] : memref<1x16x1xf32, #tpu.memory_space<vmem>>, vector<1x16x1xf32>
    %4 = vector.shape_cast %3 : vector<1x16x1xf32> to vector<16x1xf32>
    %5 = vector.broadcast %4 : vector<16x1xf32> to vector<16x256xf32>
    %6 = arith.mulf %2, %5 : vector<16x256xf32>
    %c0_5 = arith.constant 0 : index
    %c0_6 = arith.constant 0 : index
    %c0_7 = arith.constant 0 : index
    %7 = vector.load %arg4[%c0_5, %c0_6, %c0_7] : memref<1x16x1xf32, #tpu.memory_space<vmem>>, vector<1x16x1xf32>
    %8 = vector.shape_cast %7 : vector<1x16x1xf32> to vector<16x1xf32>
    %9 = vector.broadcast %8 : vector<16x1xf32> to vector<16x256xf32>
    %10 = arith.addf %6, %9 : vector<16x256xf32>
    %11 = arith.truncf %10 : vector<16x256xf32> to vector<16x256xbf16>
    %c0_8 = arith.constant 0 : index
    %c0_9 = arith.constant 0 : index
    %c0_10 = arith.constant 0 : index
    %12 = vector.load %arg5[%c0_8, %c0_9, %c0_10] : memref<1x16x256xbf16, #tpu.memory_space<vmem>>, vector<1x16x256xbf16>
    %13 = vector.shape_cast %12 : vector<1x16x256xbf16> to vector<16x256xbf16>
    %14 = vector.shape_cast %11 : vector<16x256xbf16> to vector<1x16x256xbf16>
    tpu.vector_store %arg5[%c0_8, %c0_9, %c0_10], %14 {strides = array<i32>} : memref<1x16x256xbf16, #tpu.memory_space<vmem>>, vector<1x16x256xbf16>,
    return
  }
  func.func @transform_0(%arg0: i32, %arg1: i32) -> (i32, i32, i32) {
    %c0_i32 = arith.constant 0 : i32
    %c0_i32_0 = arith.constant 0 : i32
    return %arg0, %c0_i32, %arg1 : i32, i32, i32
  }
  func.func @transform_1(%arg0: i32, %arg1: i32) -> (i32, i32, i32) {
    %c0_i32 = arith.constant 0 : i32
    %c0_i32_0 = arith.constant 0 : i32
    %c0_i32_1 = arith.constant 0 : i32
    return %arg0, %c0_i32, %c0_i32_0 : i32, i32, i32
  }
  func.func @transform_2(%arg0: i32, %arg1: i32) -> (i32, i32, i32) {
    %c0_i32 = arith.constant 0 : i32
    %c0_i32_0 = arith.constant 0 : i32
    %c0_i32_1 = arith.constant 0 : i32
    return %arg0, %c0_i32, %c0_i32_0 : i32, i32, i32
  }
  func.func @transform_3(%arg0: i32, %arg1: i32) -> (i32, i32, i32) {
    %c0_i32 = arith.constant 0 : i32
    %c0_i32_0 = arith.constant 0 : i32
    return %arg0, %c0_i32, %arg1 : i32, i32, i32
  }
}

module attributes {stable_mosaic.version = 11 : i64} {
  func.func @_conv_mm_kernel(%arg0: i32, %arg1: i32, %arg2: memref<1x8x144xbf16, #tpu.memory_space<vmem>>, %arg3: memref<1x144x256xbf16, #tpu.memory_space<vmem>>, %arg4: memref<1x8x1xf32, #tpu.memory_space<vmem>>, %arg5: memref<1x8x256xbf16, #tpu.memory_space<vmem>>, %arg6: memref<1x8x128xf32, #tpu.memory_space<vmem>>, %arg7: memref<1x8x128xf32, #tpu.memory_space<vmem>>) attributes {dimension_semantics = [#tpu.dimension_semantics<parallel>, #tpu.dimension_semantics<parallel>], iteration_bounds = array<i64: 2, 2>, scalar_prefetch = 0 : i64, scratch_operands = 0 : i64, tpu.core_type = #tpu.core_type<tc>, window_params = [{transform_indices = @transform_0, window_bounds = array<i64: 1, 8, 144>}, {transform_indices = @transform_1, window_bounds = array<i64: 1, 144, 256>}, {transform_indices = @transform_2, window_bounds = array<i64: 1, 8, 1>}, {transform_indices = @transform_3, window_bounds = array<i64: 1, 8, 256>}, {transform_indices = @transform_4, window_bounds = array<i64: 1, 8, 128>}, {transform_indices = @transform_5, window_bounds = array<i64: 1, 8, 128>}]} {
    %c0 = arith.constant 0 : index
    %c0_0 = arith.constant 0 : index
    %c0_1 = arith.constant 0 : index
    %0 = vector.load %arg2[%c0, %c0_0, %c0_1] : memref<1x8x144xbf16, #tpu.memory_space<vmem>>, vector<1x8x144xbf16>
    %1 = vector.shape_cast %0 : vector<1x8x144xbf16> to vector<8x144xbf16>
    %c0_2 = arith.constant 0 : index
    %c0_3 = arith.constant 0 : index
    %c0_4 = arith.constant 0 : index
    %2 = vector.load %arg3[%c0_2, %c0_3, %c0_4] : memref<1x144x256xbf16, #tpu.memory_space<vmem>>, vector<1x144x256xbf16>
    %3 = vector.shape_cast %2 : vector<1x144x256xbf16> to vector<144x256xbf16>
    %cst = arith.constant dense<0.000000e+00> : vector<8x256xf32>
    %4 = tpu.matmul %1, %3, %cst {dimension_numbers = #tpu.dot_dimension_numbers<[1], [0], [0], [1], [0, 0, 1, 1], [], []>} : vector<8x144xbf16>, vector<144x256xbf16>, vector<8x256xf32> -> vector<8x256xf32>
    %c0_5 = arith.constant 0 : index
    %c0_6 = arith.constant 0 : index
    %c0_7 = arith.constant 0 : index
    %5 = vector.load %arg4[%c0_5, %c0_6, %c0_7] : memref<1x8x1xf32, #tpu.memory_space<vmem>>, vector<1x8x1xf32>
    %6 = vector.shape_cast %5 : vector<1x8x1xf32> to vector<8x1xf32>
    %7 = vector.broadcast %6 : vector<8x1xf32> to vector<8x256xf32>
    %8 = arith.addf %4, %7 : vector<8x256xf32>
    %cst_8 = arith.constant dense<0.000000e+00> : vector<8xf32>
    %9 = vector.multi_reduction <add>, %8, %cst_8 [1] : vector<8x256xf32> to vector<8xf32>
    %10 = vector.shape_cast %9 : vector<8xf32> to vector<8x1xf32>
    %11 = arith.mulf %8, %8 : vector<8x256xf32>
    %cst_9 = arith.constant dense<0.000000e+00> : vector<8xf32>
    %12 = vector.multi_reduction <add>, %11, %cst_9 [1] : vector<8x256xf32> to vector<8xf32>
    %13 = vector.shape_cast %12 : vector<8xf32> to vector<8x1xf32>
    %14 = vector.shape_cast %10 : vector<8x1xf32> to vector<8x1xf32>
    %15 = vector.broadcast %14 : vector<8x1xf32> to vector<8x128xf32>
    %c0_10 = arith.constant 0 : index
    %c0_11 = arith.constant 0 : index
    %c0_12 = arith.constant 0 : index
    %16 = vector.load %arg6[%c0_10, %c0_11, %c0_12] : memref<1x8x128xf32, #tpu.memory_space<vmem>>, vector<1x8x128xf32>
    %17 = vector.shape_cast %16 : vector<1x8x128xf32> to vector<8x128xf32>
    %18 = vector.shape_cast %15 : vector<8x128xf32> to vector<1x8x128xf32>
    tpu.vector_store %arg6[%c0_10, %c0_11, %c0_12], %18 {strides = array<i32>} : memref<1x8x128xf32, #tpu.memory_space<vmem>>, vector<1x8x128xf32>,
    %19 = vector.shape_cast %13 : vector<8x1xf32> to vector<8x1xf32>
    %20 = vector.broadcast %19 : vector<8x1xf32> to vector<8x128xf32>
    %c0_13 = arith.constant 0 : index
    %c0_14 = arith.constant 0 : index
    %c0_15 = arith.constant 0 : index
    %21 = vector.load %arg7[%c0_13, %c0_14, %c0_15] : memref<1x8x128xf32, #tpu.memory_space<vmem>>, vector<1x8x128xf32>
    %22 = vector.shape_cast %21 : vector<1x8x128xf32> to vector<8x128xf32>
    %23 = vector.shape_cast %20 : vector<8x128xf32> to vector<1x8x128xf32>
    tpu.vector_store %arg7[%c0_13, %c0_14, %c0_15], %23 {strides = array<i32>} : memref<1x8x128xf32, #tpu.memory_space<vmem>>, vector<1x8x128xf32>,
    %24 = arith.truncf %8 : vector<8x256xf32> to vector<8x256xbf16>
    %c0_16 = arith.constant 0 : index
    %c0_17 = arith.constant 0 : index
    %c0_18 = arith.constant 0 : index
    %25 = vector.load %arg5[%c0_16, %c0_17, %c0_18] : memref<1x8x256xbf16, #tpu.memory_space<vmem>>, vector<1x8x256xbf16>
    %26 = vector.shape_cast %25 : vector<1x8x256xbf16> to vector<8x256xbf16>
    %27 = vector.shape_cast %24 : vector<8x256xbf16> to vector<1x8x256xbf16>
    tpu.vector_store %arg5[%c0_16, %c0_17, %c0_18], %27 {strides = array<i32>} : memref<1x8x256xbf16, #tpu.memory_space<vmem>>, vector<1x8x256xbf16>,
    return
  }
  func.func @transform_0(%arg0: i32, %arg1: i32) -> (i32, i32, i32) {
    %c0_i32 = arith.constant 0 : i32
    %c0_i32_0 = arith.constant 0 : i32
    %c0_i32_1 = arith.constant 0 : i32
    return %arg0, %c0_i32, %c0_i32_0 : i32, i32, i32
  }
  func.func @transform_1(%arg0: i32, %arg1: i32) -> (i32, i32, i32) {
    %c0_i32 = arith.constant 0 : i32
    %c0_i32_0 = arith.constant 0 : i32
    return %arg0, %c0_i32, %arg1 : i32, i32, i32
  }
  func.func @transform_2(%arg0: i32, %arg1: i32) -> (i32, i32, i32) {
    %c0_i32 = arith.constant 0 : i32
    %c0_i32_0 = arith.constant 0 : i32
    %c0_i32_1 = arith.constant 0 : i32
    return %arg0, %c0_i32, %c0_i32_0 : i32, i32, i32
  }
  func.func @transform_3(%arg0: i32, %arg1: i32) -> (i32, i32, i32) {
    %c0_i32 = arith.constant 0 : i32
    %c0_i32_0 = arith.constant 0 : i32
    return %arg0, %c0_i32, %arg1 : i32, i32, i32
  }
  func.func @transform_4(%arg0: i32, %arg1: i32) -> (i32, i32, i32) {
    %c0_i32 = arith.constant 0 : i32
    %c0_i32_0 = arith.constant 0 : i32
    return %arg0, %c0_i32, %arg1 : i32, i32, i32
  }
  func.func @transform_5(%arg0: i32, %arg1: i32) -> (i32, i32, i32) {
    %c0_i32 = arith.constant 0 : i32
    %c0_i32_0 = arith.constant 0 : i32
    return %arg0, %c0_i32, %arg1 : i32, i32, i32
  }
}

module attributes {stable_mosaic.version = 11 : i64} {
  func.func @_conv_mm_kernel(%arg0: i32, %arg1: i32, %arg2: memref<1x8x8xbf16, #tpu.memory_space<vmem>>, %arg3: memref<1x8x256xbf16, #tpu.memory_space<vmem>>, %arg4: memref<1x8x1xf32, #tpu.memory_space<vmem>>, %arg5: memref<1x8x256xbf16, #tpu.memory_space<vmem>>, %arg6: memref<1x8x128xf32, #tpu.memory_space<vmem>>, %arg7: memref<1x8x128xf32, #tpu.memory_space<vmem>>) attributes {dimension_semantics = [#tpu.dimension_semantics<parallel>, #tpu.dimension_semantics<parallel>], iteration_bounds = array<i64: 2, 2>, scalar_prefetch = 0 : i64, scratch_operands = 0 : i64, tpu.core_type = #tpu.core_type<tc>, window_params = [{transform_indices = @transform_0, window_bounds = array<i64: 1, 8, 8>}, {transform_indices = @transform_1, window_bounds = array<i64: 1, 8, 256>}, {transform_indices = @transform_2, window_bounds = array<i64: 1, 8, 1>}, {transform_indices = @transform_3, window_bounds = array<i64: 1, 8, 256>}, {transform_indices = @transform_4, window_bounds = array<i64: 1, 8, 128>}, {transform_indices = @transform_5, window_bounds = array<i64: 1, 8, 128>}]} {
    %c0 = arith.constant 0 : index
    %c0_0 = arith.constant 0 : index
    %c0_1 = arith.constant 0 : index
    %0 = vector.load %arg2[%c0, %c0_0, %c0_1] : memref<1x8x8xbf16, #tpu.memory_space<vmem>>, vector<1x8x8xbf16>
    %1 = vector.shape_cast %0 : vector<1x8x8xbf16> to vector<8x8xbf16>
    %c0_2 = arith.constant 0 : index
    %c0_3 = arith.constant 0 : index
    %c0_4 = arith.constant 0 : index
    %2 = vector.load %arg3[%c0_2, %c0_3, %c0_4] : memref<1x8x256xbf16, #tpu.memory_space<vmem>>, vector<1x8x256xbf16>
    %3 = vector.shape_cast %2 : vector<1x8x256xbf16> to vector<8x256xbf16>
    %cst = arith.constant dense<0.000000e+00> : vector<8x256xf32>
    %4 = tpu.matmul %1, %3, %cst {dimension_numbers = #tpu.dot_dimension_numbers<[1], [0], [0], [1], [0, 0, 1, 1], [], []>} : vector<8x8xbf16>, vector<8x256xbf16>, vector<8x256xf32> -> vector<8x256xf32>
    %c0_5 = arith.constant 0 : index
    %c0_6 = arith.constant 0 : index
    %c0_7 = arith.constant 0 : index
    %5 = vector.load %arg4[%c0_5, %c0_6, %c0_7] : memref<1x8x1xf32, #tpu.memory_space<vmem>>, vector<1x8x1xf32>
    %6 = vector.shape_cast %5 : vector<1x8x1xf32> to vector<8x1xf32>
    %7 = vector.broadcast %6 : vector<8x1xf32> to vector<8x256xf32>
    %8 = arith.addf %4, %7 : vector<8x256xf32>
    %cst_8 = arith.constant dense<0.000000e+00> : vector<8xf32>
    %9 = vector.multi_reduction <add>, %8, %cst_8 [1] : vector<8x256xf32> to vector<8xf32>
    %10 = vector.shape_cast %9 : vector<8xf32> to vector<8x1xf32>
    %11 = arith.mulf %8, %8 : vector<8x256xf32>
    %cst_9 = arith.constant dense<0.000000e+00> : vector<8xf32>
    %12 = vector.multi_reduction <add>, %11, %cst_9 [1] : vector<8x256xf32> to vector<8xf32>
    %13 = vector.shape_cast %12 : vector<8xf32> to vector<8x1xf32>
    %14 = vector.shape_cast %10 : vector<8x1xf32> to vector<8x1xf32>
    %15 = vector.broadcast %14 : vector<8x1xf32> to vector<8x128xf32>
    %c0_10 = arith.constant 0 : index
    %c0_11 = arith.constant 0 : index
    %c0_12 = arith.constant 0 : index
    %16 = vector.load %arg6[%c0_10, %c0_11, %c0_12] : memref<1x8x128xf32, #tpu.memory_space<vmem>>, vector<1x8x128xf32>
    %17 = vector.shape_cast %16 : vector<1x8x128xf32> to vector<8x128xf32>
    %18 = vector.shape_cast %15 : vector<8x128xf32> to vector<1x8x128xf32>
    tpu.vector_store %arg6[%c0_10, %c0_11, %c0_12], %18 {strides = array<i32>} : memref<1x8x128xf32, #tpu.memory_space<vmem>>, vector<1x8x128xf32>,
    %19 = vector.shape_cast %13 : vector<8x1xf32> to vector<8x1xf32>
    %20 = vector.broadcast %19 : vector<8x1xf32> to vector<8x128xf32>
    %c0_13 = arith.constant 0 : index
    %c0_14 = arith.constant 0 : index
    %c0_15 = arith.constant 0 : index
    %21 = vector.load %arg7[%c0_13, %c0_14, %c0_15] : memref<1x8x128xf32, #tpu.memory_space<vmem>>, vector<1x8x128xf32>
    %22 = vector.shape_cast %21 : vector<1x8x128xf32> to vector<8x128xf32>
    %23 = vector.shape_cast %20 : vector<8x128xf32> to vector<1x8x128xf32>
    tpu.vector_store %arg7[%c0_13, %c0_14, %c0_15], %23 {strides = array<i32>} : memref<1x8x128xf32, #tpu.memory_space<vmem>>, vector<1x8x128xf32>,
    %24 = arith.negf %8 : vector<8x256xf32>
    %25 = math.exp %24 : vector<8x256xf32>
    %cst_16 = arith.constant 1.000000e+00 : f32
    %26 = vector.broadcast %cst_16 : f32 to vector<8x256xf32>
    %27 = arith.addf %26, %25 : vector<8x256xf32>
    %28 = arith.divf %26, %27 : vector<8x256xf32>
    %29 = arith.truncf %28 : vector<8x256xf32> to vector<8x256xbf16>
    %c0_17 = arith.constant 0 : index
    %c0_18 = arith.constant 0 : index
    %c0_19 = arith.constant 0 : index
    %30 = vector.load %arg5[%c0_17, %c0_18, %c0_19] : memref<1x8x256xbf16, #tpu.memory_space<vmem>>, vector<1x8x256xbf16>
    %31 = vector.shape_cast %30 : vector<1x8x256xbf16> to vector<8x256xbf16>
    %32 = vector.shape_cast %29 : vector<8x256xbf16> to vector<1x8x256xbf16>
    tpu.vector_store %arg5[%c0_17, %c0_18, %c0_19], %32 {strides = array<i32>} : memref<1x8x256xbf16, #tpu.memory_space<vmem>>, vector<1x8x256xbf16>,
    return
  }
  func.func @transform_0(%arg0: i32, %arg1: i32) -> (i32, i32, i32) {
    %c0_i32 = arith.constant 0 : i32
    %c0_i32_0 = arith.constant 0 : i32
    %c0_i32_1 = arith.constant 0 : i32
    return %arg0, %c0_i32, %c0_i32_0 : i32, i32, i32
  }
  func.func @transform_1(%arg0: i32, %arg1: i32) -> (i32, i32, i32) {
    %c0_i32 = arith.constant 0 : i32
    %c0_i32_0 = arith.constant 0 : i32
    return %arg0, %c0_i32, %arg1 : i32, i32, i32
  }
  func.func @transform_2(%arg0: i32, %arg1: i32) -> (i32, i32, i32) {
    %c0_i32 = arith.constant 0 : i32
    %c0_i32_0 = arith.constant 0 : i32
    %c0_i32_1 = arith.constant 0 : i32
    return %arg0, %c0_i32, %c0_i32_0 : i32, i32, i32
  }
  func.func @transform_3(%arg0: i32, %arg1: i32) -> (i32, i32, i32) {
    %c0_i32 = arith.constant 0 : i32
    %c0_i32_0 = arith.constant 0 : i32
    return %arg0, %c0_i32, %arg1 : i32, i32, i32
  }
  func.func @transform_4(%arg0: i32, %arg1: i32) -> (i32, i32, i32) {
    %c0_i32 = arith.constant 0 : i32
    %c0_i32_0 = arith.constant 0 : i32
    return %arg0, %c0_i32, %arg1 : i32, i32, i32
  }
  func.func @transform_5(%arg0: i32, %arg1: i32) -> (i32, i32, i32) {
    %c0_i32 = arith.constant 0 : i32
    %c0_i32_0 = arith.constant 0 : i32
    return %arg0, %c0_i32, %arg1 : i32, i32, i32
  }
}

</mosaic_0001>

<llo_original>
// kernel: skip2net_forward.28
$region0: #{skip2net_forward.28}
  #allocation0 [shape = 'u32[]', space=smem, size = 0x4, offset = 0x4, fixed_abs, tag = 'smem constant byte address 0x4 - core index']
  #allocation1 [shape = 'u32[144,128]{1,0:T(1,128)}', space=vmem, size = 0x12000, scoped, tag = 'internal scratch']
  %s0 = inlined_call_operand.vmem [shape: bf16[2,8,128], index: 0, kind: input, shape index: {}]
  %s1 = inlined_call_operand.vmem [shape: f32[2,8,1], index: 1, kind: input, shape index: {}]
  %s2 = inlined_call_operand.vmem [shape: f32[2,8,1], index: 2, kind: input, shape index: {}]
  %s3 = inlined_call_operand.vmem [shape: bf16[2,8,128], index: 3, kind: output, shape index: {}]
  %s4 = sld [smem:[#allocation0]]
  $region45: #{skip2net_forward.28} parent=0
    _
  %s6 = ssub.s32 1, %s4
  %s7 = scalar_select 0, %s6, %s4
  loop: start=0, step=1, limit=4
  $region2: #{skip2net_forward.28} parent=0 // loop_pre_header
    _
  $region3: #{skip2net_forward.28} parent=0 // loop_header
    %s9 = sphi 0, %s13
    %p10 = scmp.ge.s32.totalorder %s9, 4
    %s16 = sphi 0, %s28
    %s17 = sphi 0, %s24
    %s18 = sphi 0, %s16
    %s19 = sphi 0, %s17
    %s20 = sphi 0, %s18
    %s21 = sphi 0, %s19
    %s33 = sphi 0, %s35
    %s36 = sphi 0, %s33
    %s37 = sphi 0, %s36
    %s53 = sphi 0, %s37
    %s59 = sphi 0, %s61
    %s62 = sphi 0, %s59
    %s63 = sphi 0, %s62
    %s79 = sphi 0, %s63
    %s85 = sphi 0, %s87
    %s88 = sphi 0, %s85
    %s89 = sphi 0, %s88
    %s105 = sphi 0, %s89
    %s113 = sphi 0, %s115
    %s116 = sphi 0, %s113
    %s117 = sphi 0, %s116
    %s133 = sphi 0, %s117
  $region4: #{skip2net_forward.28} parent=0 // loop_header_branch
    %12 = sbr.rel (%p10) target = $region8
  $region5: #{skip2net_forward.28} parent=0 // loop_body
    %s14 = ssub.s32 %s9, 1
    %s15 = ssub.s32 %s9, 2
    %s22 = sadd.s32 1, %s17
    %p23 = scmp.ge.s32.totalorder %s22, 1
    %s24 = scalar_select %p23, 0, %s22
    %s25 = sadd.s32 1, %s16
    %s26 = scalar_select %p23, %s25, %s16
    %p27 = scmp.ge.s32.totalorder %s26, 2
    %s28 = scalar_select %p27, 0, %s26
    %s29 = ssub.s32 %s16, %s28
    %s30 = ssub.s32 %s17, %s24
    %s31 = sor.u32 %s29, %s30
    %p32 = scmp.eq.s32.totalorder %s31, 0
    %s34 = sadd.s32 %s33, 1
    %s35 = scalar_select %p32, %s33, %s34
    %p38 = pneg %p32
    %p39 = scmp.eq.s32.totalorder %s9, 1
    %p40 = por %p38, %p39
    %p41 = scmp.ne.s32.totalorder %s33, %s36
    %p42 = scmp.eq.s32.totalorder %s9, 0
    %p43 = por %p41, %p42
    %p44 = scmp.ne.s32.totalorder %s33, %s36
    %p45 = scmp.eq.s32.totalorder %s14, 1
    %p46 = por %p44, %p45
    %p47 = scmp.ne.s32.totalorder %s36, %s37
    %p48 = scmp.eq.s32.totalorder %s14, 0
    %p49 = por %p47, %p48
    %p50 = scmp.ne.s32.totalorder %s36, %s37
    %p51 = scmp.eq.s32.totalorder %s15, 1
    %p52 = por %p50, %p51
    %p54 = scmp.ne.s32.totalorder %s37, %s53
    %p55 = scmp.eq.s32.totalorder %s15, 0
    %p56 = por %p54, %p55
    %s57 = ssub.s32 %s16, %s28
    %p58 = scmp.eq.s32.totalorder %s57, 0
    %s60 = sadd.s32 %s59, 1
    %s61 = scalar_select %p58, %s59, %s60
    %p64 = pneg %p58
    %p65 = scmp.eq.s32.totalorder %s9, 1
    %p66 = por %p64, %p65
    %p67 = scmp.ne.s32.totalorder %s59, %s62
    %p68 = scmp.eq.s32.totalorder %s9, 0
    %p69 = por %p67, %p68
    %p70 = scmp.ne.s32.totalorder %s59, %s62
    %p71 = scmp.eq.s32.totalorder %s14, 1
    %p72 = por %p70, %p71
    %p73 = scmp.ne.s32.totalorder %s62, %s63
    %p74 = scmp.eq.s32.totalorder %s14, 0
    %p75 = por %p73, %p74
    %p76 = scmp.ne.s32.totalorder %s62, %s63
    %p77 = scmp.eq.s32.totalorder %s15, 1
    %p78 = por %p76, %p77
    %p80 = scmp.ne.s32.totalorder %s63, %s79
    %p81 = scmp.eq.s32.totalorder %s15, 0
    %p82 = por %p80, %p81
    %s83 = ssub.s32 %s16, %s28
    %p84 = scmp.eq.s32.totalorder %s83, 0
    %s86 = sadd.s32 %s85, 1
    %s87 = scalar_select %p84, %s85, %s86
    %p90 = pneg %p84
    %p91 = scmp.eq.s32.totalorder %s9, 1
    %p92 = por %p90, %p91
    %p93 = scmp.ne.s32.totalorder %s85, %s88
    %p94 = scmp.eq.s32.totalorder %s9, 0
    %p95 = por %p93, %p94
    %p96 = scmp.ne.s32.totalorder %s85, %s88
    %p97 = scmp.eq.s32.totalorder %s14, 1
    %p98 = por %p96, %p97
    %p99 = scmp.ne.s32.totalorder %s88, %s89
    %p100 = scmp.eq.s32.totalorder %s14, 0
    %p101 = por %p99, %p100
    %p102 = scmp.ne.s32.totalorder %s88, %s89
    %p103 = scmp.eq.s32.totalorder %s15, 1
    %p104 = por %p102, %p103
    %p106 = scmp.ne.s32.totalorder %s89, %s105
    %p107 = scmp.eq.s32.totalorder %s15, 0
    %p108 = por %p106, %p107
    %s109 = ssub.s32 %s16, %s28
    %s110 = ssub.s32 %s17, %s24
    %s111 = sor.u32 %s109, %s110
    %p112 = scmp.eq.s32.totalorder %s111, 0
    %s114 = sadd.s32 %s113, 1
    %s115 = scalar_select %p112, %s113, %s114
    %p118 = pneg %p112
    %p119 = scmp.eq.s32.totalorder %s9, 1
    %p120 = por %p118, %p119
    %p121 = scmp.ne.s32.totalorder %s113, %s116
    %p122 = scmp.eq.s32.totalorder %s9, 0
    %p123 = por %p121, %p122
    %p124 = scmp.ne.s32.totalorder %s113, %s116
    %p125 = scmp.eq.s32.totalorder %s14, 1
    %p126 = por %p124, %p125
    %p127 = scmp.ne.s32.totalorder %s116, %s117
    %p128 = scmp.eq.s32.totalorder %s14, 0
    %p129 = por %p127, %p128
    %p130 = scmp.ne.s32.totalorder %s116, %s117
    %p131 = scmp.eq.s32.totalorder %s15, 1
    %p132 = por %p130, %p131
    %p134 = scmp.ne.s32.totalorder %s117, %s133
    %p135 = scmp.eq.s32.totalorder %s15, 0
    %p136 = por %p134, %p135
    %p137 = scmp.le.s32.totalorder 1, %s9
    %p138 = scmp.lt.s32.totalorder %s9, 3
    %p139 = pnand %p137, %p138
    %p140 = pneg %p139
    // Predicated region
    $region9: #{skip2net_forward.28} parent=5 // pred_check
      _
    $region10: #{skip2net_forward.28} parent=5 // pred_check_branch
      %142 = sbr.rel (%p139) target = $region12
    $region11: #{skip2net_forward.28} parent=5 // pred_region
      %s143 = ssub.s32 %s9, 1
    $region12: #{skip2net_forward.28} parent=5 // pred_fallthru
      _
    %p144 = scmp.lt.s32.totalorder %s9, 2
    // Predicated region
    $region13: #{skip2net_forward.28} parent=5 // pred_check
      %p145 = pneg %p144
    $region14: #{skip2net_forward.28} parent=5 // pred_check_branch
      %147 = sbr.rel (%p145) target = $region16
    $region15: #{skip2net_forward.28} parent=5 // pred_region
      // Predicated region
      $region17: #{skip2net_forward.28} parent=15 // pred_check
        %p148 = pneg %p43
      $region18: #{skip2net_forward.28} parent=15 // pred_check_branch
        %150 = sbr.rel (%p148) target = $region20
      $region19: #{skip2net_forward.28} parent=15 // pred_region
        %p151 = scmp.lt.s32.totalorder %s16, 1
        %s152 = scalar_select %p151, %s16, 1
        %p153 = scmp.lt.s32.totalorder %s17, 0
        %s154 = scalar_select %p153, %s17, 0
        %s155 = sadd.s32 %s154, %s152
        %s156 = smul.addr %s155, 4
        %s157 = scalar_lea.vmem %s0, %s156
      $region20: #{skip2net_forward.28} parent=15 // pred_fallthru
        _
      // Predicated region
      $region21: #{skip2net_forward.28} parent=15 // pred_check
        %p158 = pneg %p69
      $region22: #{skip2net_forward.28} parent=15 // pred_check_branch
        %160 = sbr.rel (%p158) target = $region24
      $region23: #{skip2net_forward.28} parent=15 // pred_region
        %p161 = scmp.lt.s32.totalorder %s16, 1
        %s162 = scalar_select %p161, %s16, 1
        %s163 = smul.addr %s162, 8
        %s164 = scalar_lea.vmem %s1, %s163
      $region24: #{skip2net_forward.28} parent=15 // pred_fallthru
        _
      // Predicated region
      $region25: #{skip2net_forward.28} parent=15 // pred_check
        %p165 = pneg %p95
      $region26: #{skip2net_forward.28} parent=15 // pred_check_branch
        %167 = sbr.rel (%p165) target = $region28
      $region27: #{skip2net_forward.28} parent=15 // pred_region
        %p168 = scmp.lt.s32.totalorder %s16, 1
        %s169 = scalar_select %p168, %s16, 1
        %s170 = smul.addr %s169, 8
        %s171 = scalar_lea.vmem %s2, %s170
      $region28: #{skip2net_forward.28} parent=15 // pred_fallthru
        _
    $region16: #{skip2net_forward.28} parent=5 // pred_fallthru
      _
    %p172 = scmp.le.s32.totalorder 1, %s9
    %p173 = scmp.lt.s32.totalorder %s9, 3
    %p174 = pnand %p172, %p173
    %p175 = pneg %p174
    // Predicated region
    $region29: #{skip2net_forward.28} parent=5 // pred_check
      _
    $region30: #{skip2net_forward.28} parent=5 // pred_check_branch
      %177 = sbr.rel (%p174) target = $region32
    $region31: #{skip2net_forward.28} parent=5 // pred_region
      %s178 = ssub.s32 %s9, 1
      %p179 = scmp.lt.s32.totalorder %s18, 1
      %s180 = scalar_select %p179, %s18, 1
      %p181 = scmp.lt.s32.totalorder %s19, 0
      %s182 = scalar_select %p181, %s19, 0
      %s183 = sadd.s32 %s182, %s180
      %s184 = smul.addr %s183, 4
      %s185 = scalar_lea.vmem %s0, %s184
      %p186 = pneg %p49
      %p187 = pneg %p46
      %p188 = scmp.lt.s32.totalorder %s18, 1
      %s189 = scalar_select %p188, %s18, 1
      %s190 = smul.addr %s189, 8
      %s191 = scalar_lea.vmem %s1, %s190
      %p192 = pneg %p75
      %p193 = pneg %p72
      %p194 = scmp.lt.s32.totalorder %s18, 1
      %s195 = scalar_select %p194, %s18, 1
      %s196 = smul.addr %s195, 8
      %s197 = scalar_lea.vmem %s2, %s196
      %p198 = pneg %p101
      %p199 = pneg %p98
      %p200 = pneg %p129
      %p201 = pneg %p126
      %p202 = scmp.lt.s32.totalorder %s18, 1
      %s203 = scalar_select %p202, %s18, 1
      %p204 = scmp.lt.s32.totalorder %s19, 0
      %s205 = scalar_select %p204, %s19, 0
      %s206 = sadd.s32 %s205, %s203
      %s207 = smul.addr %s206, 4
      %s208 = scalar_lea.vmem %s3, %s207
      %p209 = scmp.lt.s32.totalorder %s18, 1
      %s210 = scalar_select %p209, %s18, 1
      %p211 = scmp.lt.s32.totalorder %s19, 0
      %s212 = scalar_select %p211, %s19, 0
      %s213 = sadd.s32 %s212, %s210
      %s214 = smul.addr %s213, 4
      %s215 = scalar_lea.vmem %s0, %s214
      %p216 = scmp.lt.s32.totalorder %s18, 1
      %s217 = scalar_select %p216, %s18, 1
      %s218 = smul.addr %s217, 8
      %s219 = scalar_lea.vmem %s1, %s218
      %p220 = scmp.lt.s32.totalorder %s18, 1
      %s221 = scalar_select %p220, %s18, 1
      %s222 = smul.addr %s221, 8
      %s223 = scalar_lea.vmem %s2, %s222
      %p224 = scmp.lt.s32.totalorder %s18, 1
      %s225 = scalar_select %p224, %s18, 1
      %p226 = scmp.lt.s32.totalorder %s19, 0
      %s227 = scalar_select %p226, %s19, 0
      %s228 = sadd.s32 %s227, %s225
      %s229 = smul.addr %s228, 4
      %s230 = scalar_lea.vmem %s3, %s229
      %v231 = vld [vmem:[%s215] sm:$0xf]
      %v232 = vunpack.c.l.bf16 %v231
      %v233 = vld [vmem:[%s219] sm:$0xff]
      %235 = vset.pattern.permute.xlu0 0
      %236 = vperm.xlu0 %235, %v233
      %v237 = vpop.permute.xlu0 %236
      %v239 = vmul.f32 %v232, %v237
      %v240 = vld [vmem:[%s223] sm:$0xff]
      %242 = vset.pattern.permute.xlu0 0
      %243 = vperm.xlu0 %242, %v240
      %v244 = vpop.permute.xlu0 %243
      %v246 = vadd.f32 %v239, %v244
      %vm247 = vcmp.ge.f32.partialorder %v246, 0.0
      %v248 = vmul.f32 %v246, 0.2
      %v249 = vsel %vm247, %v246, %v248
      %v250 = vpack.c.bf16 %v249, %v249
      %251 = vst [vmem:[%s230] sm:$0xf] %v250
      %p252 = scmp.lt.s32.totalorder %s18, 1
      %s253 = scalar_select %p252, %s18, 1
      %p254 = scmp.lt.s32.totalorder %s19, 0
      %s255 = scalar_select %p254, %s19, 0
      %s256 = sadd.s32 %s255, %s253
      %s257 = smul.addr %s256, 4
      %s258 = scalar_lea.vmem %s3, %s257
      // Predicated region
      $region33: #{skip2net_forward.28} parent=31 // pred_check
        %p259 = pneg %p126
      $region34: #{skip2net_forward.28} parent=31 // pred_check_branch
        %261 = sbr.rel (%p259) target = $region36
      $region35: #{skip2net_forward.28} parent=31 // pred_region
        _
      $region36: #{skip2net_forward.28} parent=31 // pred_fallthru
        _
    $region32: #{skip2net_forward.28} parent=5 // pred_fallthru
      _
    %p262 = scmp.le.s32.totalorder 2, %s9
    // Predicated region
    $region37: #{skip2net_forward.28} parent=5 // pred_check
      %p263 = pneg %p262
    $region38: #{skip2net_forward.28} parent=5 // pred_check_branch
      %265 = sbr.rel (%p263) target = $region40
    $region39: #{skip2net_forward.28} parent=5 // pred_region
      %s266 = ssub.s32 %s9, 2
      // Predicated region
      $region41: #{skip2net_forward.28} parent=39 // pred_check
        %p267 = pneg %p132
      $region42: #{skip2net_forward.28} parent=39 // pred_check_branch
        %269 = sbr.rel (%p267) target = $region44
      $region43: #{skip2net_forward.28} parent=39 // pred_region
        %p270 = scmp.lt.s32.totalorder %s20, 1
        %s271 = scalar_select %p270, %s20, 1
        %p272 = scmp.lt.s32.totalorder %s21, 0
        %s273 = scalar_select %p272, %s21, 0
        %s274 = sadd.s32 %s273, %s271
        %s275 = smul.addr %s274, 4
        %s276 = scalar_lea.vmem %s3, %s275
      $region44: #{skip2net_forward.28} parent=39 // pred_fallthru
        _
    $region40: #{skip2net_forward.28} parent=5 // pred_fallthru
      _
  $region6: #{skip2net_forward.28} parent=0 // loop_footer
    %s13 = sadd.s32 1, %s9
  $region7: #{skip2net_forward.28} parent=0 // loop_footer_branch
    %8 = sbr.rel target = $region3
  $region8: #{skip2net_forward.28} parent=0 // loop_exit
    _

// kernel: skip2net_forward.27
$region0: #{skip2net_forward.27}
  #allocation0 [shape = 'u32[]', space=smem, size = 0x4, offset = 0x4, fixed_abs, tag = 'smem constant byte address 0x4 - core index']
  #allocation1 [shape = 'u32[144,128]{1,0:T(1,128)}', space=vmem, size = 0x12000, scoped, tag = 'internal scratch']
  %s0 = inlined_call_operand.vmem [shape: bf16[2,8,72], index: 0, kind: input, shape index: {}]
  %s1 = inlined_call_operand.vmem [shape: bf16[2,72,128], index: 1, kind: input, shape index: {}]
  %s2 = inlined_call_operand.vmem [shape: f32[2,8,1], index: 2, kind: input, shape index: {}]
  %s3 = inlined_call_operand.vmem [shape: bf16[2,8,128], index: 3, kind: output, shape index: {0}]
  %s4 = inlined_call_operand.vmem [shape: f32[2,8,128], index: 4, kind: output, shape index: {1}]
  %s5 = inlined_call_operand.vmem [shape: f32[2,8,128], index: 5, kind: output, shape index: {2}]
  %6 = xla_tuple %s3, %s4, %s5
  %s7 = sld [smem:[#allocation0]]
  $region61: #{skip2net_forward.27} parent=0
    _
  %s9 = ssub.s32 1, %s7
  %s10 = scalar_select 0, %s9, %s7
  loop: start=0, step=1, limit=4
  $region2: #{skip2net_forward.27} parent=0 // loop_pre_header
    _
  $region3: #{skip2net_forward.27} parent=0 // loop_header
    %s12 = sphi 0, %s16
    %p13 = scmp.ge.s32.totalorder %s12, 4
    %s19 = sphi 0, %s31
    %s20 = sphi 0, %s27
    %s21 = sphi 0, %s19
    %s22 = sphi 0, %s20
    %s23 = sphi 0, %s21
    %s24 = sphi 0, %s22
    %s34 = sphi 0, %s36
    %s37 = sphi 0, %s34
    %s38 = sphi 0, %s37
    %s54 = sphi 0, %s38
    %s62 = sphi 0, %s64
    %s65 = sphi 0, %s62
    %s66 = sphi 0, %s65
    %s82 = sphi 0, %s66
    %s88 = sphi 0, %s90
    %s91 = sphi 0, %s88
    %s92 = sphi 0, %s91
    %s108 = sphi 0, %s92
    %s116 = sphi 0, %s118
    %s119 = sphi 0, %s116
    %s120 = sphi 0, %s119
    %s136 = sphi 0, %s120
    %s144 = sphi 0, %s146
    %s147 = sphi 0, %s144
    %s148 = sphi 0, %s147
    %s164 = sphi 0, %s148
    %s172 = sphi 0, %s174
    %s175 = sphi 0, %s172
    %s176 = sphi 0, %s175
    %s192 = sphi 0, %s176
  $region4: #{skip2net_forward.27} parent=0 // loop_header_branch
    %15 = sbr.rel (%p13) target = $region8
  $region5: #{skip2net_forward.27} parent=0 // loop_body
    %s17 = ssub.s32 %s12, 1
    %s18 = ssub.s32 %s12, 2
    %s25 = sadd.s32 1, %s20
    %p26 = scmp.ge.s32.totalorder %s25, 1
    %s27 = scalar_select %p26, 0, %s25
    %s28 = sadd.s32 1, %s19
    %s29 = scalar_select %p26, %s28, %s19
    %p30 = scmp.ge.s32.totalorder %s29, 2
    %s31 = scalar_select %p30, 0, %s29
    %s32 = ssub.s32 %s19, %s31
    %p33 = scmp.eq.s32.totalorder %s32, 0
    %s35 = sadd.s32 %s34, 1
    %s36 = scalar_select %p33, %s34, %s35
    %p39 = pneg %p33
    %p40 = scmp.eq.s32.totalorder %s12, 1
    %p41 = por %p39, %p40
    %p42 = scmp.ne.s32.totalorder %s34, %s37
    %p43 = scmp.eq.s32.totalorder %s12, 0
    %p44 = por %p42, %p43
    %p45 = scmp.ne.s32.totalorder %s34, %s37
    %p46 = scmp.eq.s32.totalorder %s17, 1
    %p47 = por %p45, %p46
    %p48 = scmp.ne.s32.totalorder %s37, %s38
    %p49 = scmp.eq.s32.totalorder %s17, 0
    %p50 = por %p48, %p49
    %p51 = scmp.ne.s32.totalorder %s37, %s38
    %p52 = scmp.eq.s32.totalorder %s18, 1
    %p53 = por %p51, %p52
    %p55 = scmp.ne.s32.totalorder %s38, %s54
    %p56 = scmp.eq.s32.totalorder %s18, 0
    %p57 = por %p55, %p56
    %s58 = ssub.s32 %s19, %s31
    %s59 = ssub.s32 %s20, %s27
    %s60 = sor.u32 %s58, %s59
    %p61 = scmp.eq.s32.totalorder %s60, 0
    %s63 = sadd.s32 %s62, 1
    %s64 = scalar_select %p61, %s62, %s63
    %p67 = pneg %p61
    %p68 = scmp.eq.s32.totalorder %s12, 1
    %p69 = por %p67, %p68
    %p70 = scmp.ne.s32.totalorder %s62, %s65
    %p71 = scmp.eq.s32.totalorder %s12, 0
    %p72 = por %p70, %p71
    %p73 = scmp.ne.s32.totalorder %s62, %s65
    %p74 = scmp.eq.s32.totalorder %s17, 1
    %p75 = por %p73, %p74
    %p76 = scmp.ne.s32.totalorder %s65, %s66
    %p77 = scmp.eq.s32.totalorder %s17, 0
    %p78 = por %p76, %p77
    %p79 = scmp.ne.s32.totalorder %s65, %s66
    %p80 = scmp.eq.s32.totalorder %s18, 1
    %p81 = por %p79, %p80
    %p83 = scmp.ne.s32.totalorder %s66, %s82
    %p84 = scmp.eq.s32.totalorder %s18, 0
    %p85 = por %p83, %p84
    %s86 = ssub.s32 %s19, %s31
    %p87 = scmp.eq.s32.totalorder %s86, 0
    %s89 = sadd.s32 %s88, 1
    %s90 = scalar_select %p87, %s88, %s89
    %p93 = pneg %p87
    %p94 = scmp.eq.s32.totalorder %s12, 1
    %p95 = por %p93, %p94
    %p96 = scmp.ne.s32.totalorder %s88, %s91
    %p97 = scmp.eq.s32.totalorder %s12, 0
    %p98 = por %p96, %p97
    %p99 = scmp.ne.s32.totalorder %s88, %s91
    %p100 = scmp.eq.s32.totalorder %s17, 1
    %p101 = por %p99, %p100
    %p102 = scmp.ne.s32.totalorder %s91, %s92
    %p103 = scmp.eq.s32.totalorder %s17, 0
    %p104 = por %p102, %p103
    %p105 = scmp.ne.s32.totalorder %s91, %s92
    %p106 = scmp.eq.s32.totalorder %s18, 1
    %p107 = por %p105, %p106
    %p109 = scmp.ne.s32.totalorder %s92, %s108
    %p110 = scmp.eq.s32.totalorder %s18, 0
    %p111 = por %p109, %p110
    %s112 = ssub.s32 %s19, %s31
    %s113 = ssub.s32 %s20, %s27
    %s114 = sor.u32 %s112, %s113
    %p115 = scmp.eq.s32.totalorder %s114, 0
    %s117 = sadd.s32 %s116, 1
    %s118 = scalar_select %p115, %s116, %s117
    %p121 = pneg %p115
    %p122 = scmp.eq.s32.totalorder %s12, 1
    %p123 = por %p121, %p122
    %p124 = scmp.ne.s32.totalorder %s116, %s119
    %p125 = scmp.eq.s32.totalorder %s12, 0
    %p126 = por %p124, %p125
    %p127 = scmp.ne.s32.totalorder %s116, %s119
    %p128 = scmp.eq.s32.totalorder %s17, 1
    %p129 = por %p127, %p128
    %p130 = scmp.ne.s32.totalorder %s119, %s120
    %p131 = scmp.eq.s32.totalorder %s17, 0
    %p132 = por %p130, %p131
    %p133 = scmp.ne.s32.totalorder %s119, %s120
    %p134 = scmp.eq.s32.totalorder %s18, 1
    %p135 = por %p133, %p134
    %p137 = scmp.ne.s32.totalorder %s120, %s136
    %p138 = scmp.eq.s32.totalorder %s18, 0
    %p139 = por %p137, %p138
    %s140 = ssub.s32 %s19, %s31
    %s141 = ssub.s32 %s20, %s27
    %s142 = sor.u32 %s140, %s141
    %p143 = scmp.eq.s32.totalorder %s142, 0
    %s145 = sadd.s32 %s144, 1
    %s146 = scalar_select %p143, %s144, %s145
    %p149 = pneg %p143
    %p150 = scmp.eq.s32.totalorder %s12, 1
    %p151 = por %p149, %p150
    %p152 = scmp.ne.s32.totalorder %s144, %s147
    %p153 = scmp.eq.s32.totalorder %s12, 0
    %p154 = por %p152, %p153
    %p155 = scmp.ne.s32.totalorder %s144, %s147
    %p156 = scmp.eq.s32.totalorder %s17, 1
    %p157 = por %p155, %p156
    %p158 = scmp.ne.s32.totalorder %s147, %s148
    %p159 = scmp.eq.s32.totalorder %s17, 0
    %p160 = por %p158, %p159
    %p161 = scmp.ne.s32.totalorder %s147, %s148
    %p162 = scmp.eq.s32.totalorder %s18, 1
    %p163 = por %p161, %p162
    %p165 = scmp.ne.s32.totalorder %s148, %s164
    %p166 = scmp.eq.s32.totalorder %s18, 0
    %p167 = por %p165, %p166
    %s168 = ssub.s32 %s19, %s31
    %s169 = ssub.s32 %s20, %s27
    %s170 = sor.u32 %s168, %s169
    %p171 = scmp.eq.s32.totalorder %s170, 0
    %s173 = sadd.s32 %s172, 1
    %s174 = scalar_select %p171, %s172, %s173
    %p177 = pneg %p171
    %p178 = scmp.eq.s32.totalorder %s12, 1
    %p179 = por %p177, %p178
    %p180 = scmp.ne.s32.totalorder %s172, %s175
    %p181 = scmp.eq.s32.totalorder %s12, 0
    %p182 = por %p180, %p181
    %p183 = scmp.ne.s32.totalorder %s172, %s175
    %p184 = scmp.eq.s32.totalorder %s17, 1
    %p185 = por %p183, %p184
    %p186 = scmp.ne.s32.totalorder %s175, %s176
    %p187 = scmp.eq.s32.totalorder %s17, 0
    %p188 = por %p186, %p187
    %p189 = scmp.ne.s32.totalorder %s175, %s176
    %p190 = scmp.eq.s32.totalorder %s18, 1
    %p191 = por %p189, %p190
    %p193 = scmp.ne.s32.totalorder %s176, %s192
    %p194 = scmp.eq.s32.totalorder %s18, 0
    %p195 = por %p193, %p194
    %p196 = scmp.le.s32.totalorder 1, %s12
    %p197 = scmp.lt.s32.totalorder %s12, 3
    %p198 = pnand %p196, %p197
    %p199 = pneg %p198
    // Predicated region
    $region9: #{skip2net_forward.27} parent=5 // pred_check
      _
    $region10: #{skip2net_forward.27} parent=5 // pred_check_branch
      %201 = sbr.rel (%p198) target = $region12
    $region11: #{skip2net_forward.27} parent=5 // pred_region
      %s202 = ssub.s32 %s12, 1
    $region12: #{skip2net_forward.27} parent=5 // pred_fallthru
      _
    %p203 = scmp.lt.s32.totalorder %s12, 2
    // Predicated region
    $region13: #{skip2net_forward.27} parent=5 // pred_check
      %p204 = pneg %p203
    $region14: #{skip2net_forward.27} parent=5 // pred_check_branch
      %206 = sbr.rel (%p204) target = $region16
    $region15: #{skip2net_forward.27} parent=5 // pred_region
      // Predicated region
      $region17: #{skip2net_forward.27} parent=15 // pred_check
        %p207 = pneg %p44
      $region18: #{skip2net_forward.27} parent=15 // pred_check_branch
        %209 = sbr.rel (%p207) target = $region20
      $region19: #{skip2net_forward.27} parent=15 // pred_region
        %p210 = scmp.lt.s32.totalorder %s19, 1
        %s211 = scalar_select %p210, %s19, 1
        %s212 = smul.addr %s211, 4
        %s213 = scalar_lea.vmem %s0, %s212
      $region20: #{skip2net_forward.27} parent=15 // pred_fallthru
        _
      // Predicated region
      $region21: #{skip2net_forward.27} parent=15 // pred_check
        %p214 = pneg %p72
      $region22: #{skip2net_forward.27} parent=15 // pred_check_branch
        %216 = sbr.rel (%p214) target = $region24
      $region23: #{skip2net_forward.27} parent=15 // pred_region
        %p217 = scmp.lt.s32.totalorder %s19, 1
        %s218 = scalar_select %p217, %s19, 1
        %p219 = scmp.lt.s32.totalorder %s20, 0
        %s220 = scalar_select %p219, %s20, 0
        %s221 = smul.addr %s218, 9
        %s222 = sadd.s32 %s220, %s221
        %s223 = smul.addr %s222, 4
        %s224 = scalar_lea.vmem %s1, %s223
      $region24: #{skip2net_forward.27} parent=15 // pred_fallthru
        _
      // Predicated region
      $region25: #{skip2net_forward.27} parent=15 // pred_check
        %p225 = pneg %p98
      $region26: #{skip2net_forward.27} parent=15 // pred_check_branch
        %227 = sbr.rel (%p225) target = $region28
      $region27: #{skip2net_forward.27} parent=15 // pred_region
        %p228 = scmp.lt.s32.totalorder %s19, 1
        %s229 = scalar_select %p228, %s19, 1
        %s230 = smul.addr %s229, 8
        %s231 = scalar_lea.vmem %s2, %s230
      $region28: #{skip2net_forward.27} parent=15 // pred_fallthru
        _
    $region16: #{skip2net_forward.27} parent=5 // pred_fallthru
      _
    %p232 = scmp.le.s32.totalorder 1, %s12
    %p233 = scmp.lt.s32.totalorder %s12, 3
    %p234 = pnand %p232, %p233
    %p235 = pneg %p234
    // Predicated region
    $region29: #{skip2net_forward.27} parent=5 // pred_check
      _
    $region30: #{skip2net_forward.27} parent=5 // pred_check_branch
      %237 = sbr.rel (%p234) target = $region32
    $region31: #{skip2net_forward.27} parent=5 // pred_region
      %s238 = ssub.s32 %s12, 1
      %p239 = scmp.lt.s32.totalorder %s21, 1
      %s240 = scalar_select %p239, %s21, 1
      %s241 = smul.addr %s240, 4
      %s242 = scalar_lea.vmem %s0, %s241
      %p243 = pneg %p50
      %p244 = pneg %p47
      %p245 = scmp.lt.s32.totalorder %s21, 1
      %s246 = scalar_select %p245, %s21, 1
      %p247 = scmp.lt.s32.totalorder %s22, 0
      %s248 = scalar_select %p247, %s22, 0
      %s249 = smul.addr %s246, 9
      %s250 = sadd.s32 %s248, %s249
      %s251 = smul.addr %s250, 4
      %s252 = scalar_lea.vmem %s1, %s251
      %p253 = pneg %p78
      %p254 = pneg %p75
      %p255 = scmp.lt.s32.totalorder %s21, 1
      %s256 = scalar_select %p255, %s21, 1
      %s257 = smul.addr %s256, 8
      %s258 = scalar_lea.vmem %s2, %s257
      %p259 = pneg %p104
      %p260 = pneg %p101
      %p261 = pneg %p132
      %p262 = pneg %p129
      %p263 = scmp.lt.s32.totalorder %s21, 1
      %s264 = scalar_select %p263, %s21, 1
      %p265 = scmp.lt.s32.totalorder %s22, 0
      %s266 = scalar_select %p265, %s22, 0
      %s267 = sadd.s32 %s266, %s264
      %s268 = smul.addr %s267, 4
      %s269 = scalar_lea.vmem %s3, %s268
      %p270 = pneg %p160
      %p271 = pneg %p157
      %p272 = scmp.lt.s32.totalorder %s21, 1
      %s273 = scalar_select %p272, %s21, 1
      %p274 = scmp.lt.s32.totalorder %s22, 0
      %s275 = scalar_select %p274, %s22, 0
      %s276 = sadd.s32 %s275, %s273
      %s277 = smul.addr %s276, 8
      %s278 = scalar_lea.vmem %s4, %s277
      %p279 = pneg %p188
      %p280 = pneg %p185
      %p281 = scmp.lt.s32.totalorder %s21, 1
      %s282 = scalar_select %p281, %s21, 1
      %p283 = scmp.lt.s32.totalorder %s22, 0
      %s284 = scalar_select %p283, %s22, 0
      %s285 = sadd.s32 %s284, %s282
      %s286 = smul.addr %s285, 8
      %s287 = scalar_lea.vmem %s5, %s286
      %p288 = scmp.lt.s32.totalorder %s21, 1
      %s289 = scalar_select %p288, %s21, 1
      %s290 = smul.addr %s289, 4
      %s291 = scalar_lea.vmem %s0, %s290
      %p292 = scmp.lt.s32.totalorder %s21, 1
      %s293 = scalar_select %p292, %s21, 1
      %p294 = scmp.lt.s32.totalorder %s22, 0
      %s295 = scalar_select %p294, %s22, 0
      %s296 = smul.addr %s293, 9
      %s297 = sadd.s32 %s295, %s296
      %s298 = smul.addr %s297, 4
      %s299 = scalar_lea.vmem %s1, %s298
      %p300 = scmp.lt.s32.totalorder %s21, 1
      %s301 = scalar_select %p300, %s21, 1
      %s302 = smul.addr %s301, 8
      %s303 = scalar_lea.vmem %s2, %s302
      %p304 = scmp.lt.s32.totalorder %s21, 1
      %s305 = scalar_select %p304, %s21, 1
      %p306 = scmp.lt.s32.totalorder %s22, 0
      %s307 = scalar_select %p306, %s22, 0
      %s308 = sadd.s32 %s307, %s305
      %s309 = smul.addr %s308, 4
      %s310 = scalar_lea.vmem %s3, %s309
      %p311 = scmp.lt.s32.totalorder %s21, 1
      %s312 = scalar_select %p311, %s21, 1
      %p313 = scmp.lt.s32.totalorder %s22, 0
      %s314 = scalar_select %p313, %s22, 0
      %s315 = sadd.s32 %s314, %s312
      %s316 = smul.addr %s315, 8
      %s317 = scalar_lea.vmem %s4, %s316
      %p318 = scmp.lt.s32.totalorder %s21, 1
      %s319 = scalar_select %p318, %s21, 1
      %p320 = scmp.lt.s32.totalorder %s22, 0
      %s321 = scalar_select %p320, %s22, 0
      %s322 = sadd.s32 %s321, %s319
      %s323 = smul.addr %s322, 8
      %s324 = scalar_lea.vmem %s5, %s323
      %v326 = vld [vmem:[%s291] sm:$0xf]
      %v327 = vld [vmem:[%s299] sm:$0xf]
      %v328 = vld [vmem:[%s299 + $0x4] sm:$0xf]
      %v329 = vld [vmem:[%s299 + $0x8] sm:$0xf]
      %v330 = vld [vmem:[%s299 + $0xc] sm:$0xf]
      %v331 = vld [vmem:[%s299 + $0x10] sm:$0xf]
      %v332 = vld [vmem:[%s299 + $0x14] sm:$0xf]
      %v333 = vld [vmem:[%s299 + $0x18] sm:$0xf]
      %v334 = vld [vmem:[%s299 + $0x1c] sm:$0xf]
      %v335 = vld [vmem:[%s299 + $0x20] sm:$0xf]
      %v336 = vld [vmem:[%s303] sm:$0xff]
      %338 = vset.pattern.permute.xlu0 0
      %339 = vperm.xlu0 %338, %v336
      %v340 = vpop.permute.xlu0 %339
      %v351 = vunpack.c.l.b16 %v327
      %v352 = vunpack.c.l.b16 %v328
      %v353 = vunpack.c.l.b16 %v329
      %v354 = vunpack.c.l.b16 %v330
      %v355 = vunpack.c.l.b16 %v331
      %v356 = vunpack.c.l.b16 %v332
      %v357 = vunpack.c.l.b16 %v333
      %v358 = vunpack.c.l.b16 %v334
      %v359 = vunpack.c.l.b16 %v335
      %v360 = vpack.c.b16 %v352, %v351
      %v361 = vpack.c.b16 %v354, %v353
      %v362 = vpack.c.b16 %v356, %v355
      %v363 = vpack.c.b16 %v358, %v357
      %v364 = vpack.c.b16 %v359, %v359
      %vm369 = vcmask 588800
      %v371 = vsel %vm369, %v326, 0
      %vm373 = vcmask 1043456
      %v375 = vsel %vm373, %v364, 0
      %377 = vmatprep.subr.bf16.mxu0 0
      %378 = vmatpush1.bf16.msra.mxu0 %v360
      %379 = vmatprep.subr.bf16.mxu0 0
      %380 = vmatpush1.bf16.msra.mxu0 %v361
      %381 = vmatprep.subr.bf16.mxu0 0
      %382 = vmatpush1.bf16.msra.mxu0 %v362
      %383 = vmatprep.subr.bf16.mxu0 0
      %384 = vmatpush1.bf16.msra.mxu0 %v363
      %385 = vmatprep.subr.bf16.mxu0 0
      %386 = vmatpush1.bf16.msra.mxu0 %v375
      %387 = vmatprep.subr.bf16.mxu0 0
      %388 = vmatpush1.bf16.msra.mxu0 0
      %389 = vmatprep.subr.bf16.mxu0 0
      %390 = vmatpush1.bf16.msra.mxu0 0
      %391 = vmatprep.subr.bf16.mxu0 0
      %392 = vmatpush1.bf16.msra.mxu0 0
      %393 = vmatprep.subr.bf16.mxu0 0
      %394 = vmatpush1.bf16.msra.mxu0 0
      %395 = vmatprep.subr.bf16.mxu0 0
      %396 = vmatpush1.bf16.msra.mxu0 0
      %397 = vmatprep.subr.bf16.mxu0 0
      %398 = vmatpush1.bf16.msra.mxu0 0
      %399 = vmatprep.subr.bf16.mxu0 0
      %400 = vmatpush1.bf16.msra.mxu0 0
      %401 = vmatprep.subr.bf16.mxu0 0
      %402 = vmatpush1.bf16.msra.mxu0 0
      %403 = vmatprep.subr.bf16.mxu0 0
      %404 = vmatpush1.bf16.msra.mxu0 0
      %405 = vmatprep.subr.bf16.mxu0 0
      %406 = vmatpush1.bf16.msra.mxu0 0
      %407 = vmatprep.subr.bf16.mxu0 0
      %408 = vmatpush1.bf16.msra.mxu0 0
      %409 = vmatprep.mubr.bf16.mxu0 0
      %410 = vmatmul.mubr.bf16.gmra.mrb[0].mxu0 %v371
      %v411 = vpop.f32.mrb[0].mxu0
      %v412 = vadd.f32 %v340, %v411
      %v413 = vpop.f32.mrb[0].mxu0
      %v414 = vpop.f32.mrb[0].mxu0
      %v415 = vpop.f32.mrb[0].mxu0
      %416 = vdwg.mxu0
      %417 = vadd.xlane.f32.xlu0 %v412
      %v418 = vpop.xlane.xlu0 %417
      %v419 = vmul.f32 %v412, %v412
      %420 = vadd.xlane.f32.xlu0 %v419
      %v421 = vpop.xlane.xlu0 %420
      %422 = vst [vmem:[%s317] sm:$0xff] %v418
      %423 = vst [vmem:[%s324] sm:$0xff] %v421
      %v424 = vpack.c.bf16 %v412, %v412
      %425 = vst [vmem:[%s310] sm:$0xf] %v424
      %p426 = scmp.lt.s32.totalorder %s21, 1
      %s427 = scalar_select %p426, %s21, 1
      %p428 = scmp.lt.s32.totalorder %s22, 0
      %s429 = scalar_select %p428, %s22, 0
      %s430 = sadd.s32 %s429, %s427
      %s431 = smul.addr %s430, 4
      %s432 = scalar_lea.vmem %s3, %s431
      %p433 = scmp.lt.s32.totalorder %s21, 1
      %s434 = scalar_select %p433, %s21, 1
      %p435 = scmp.lt.s32.totalorder %s22, 0
      %s436 = scalar_select %p435, %s22, 0
      %s437 = sadd.s32 %s436, %s434
      %s438 = smul.addr %s437, 8
      %s439 = scalar_lea.vmem %s4, %s438
      %p440 = scmp.lt.s32.totalorder %s21, 1
      %s441 = scalar_select %p440, %s21, 1
      %p442 = scmp.lt.s32.totalorder %s22, 0
      %s443 = scalar_select %p442, %s22, 0
      %s444 = sadd.s32 %s443, %s441
      %s445 = smul.addr %s444, 8
      %s446 = scalar_lea.vmem %s5, %s445
      // Predicated region
      $region33: #{skip2net_forward.27} parent=31 // pred_check
        %p447 = pneg %p129
      $region34: #{skip2net_forward.27} parent=31 // pred_check_branch
        %449 = sbr.rel (%p447) target = $region36
      $region35: #{skip2net_forward.27} parent=31 // pred_region
        _
      $region36: #{skip2net_forward.27} parent=31 // pred_fallthru
        _
      // Predicated region
      $region37: #{skip2net_forward.27} parent=31 // pred_check
        %p450 = pneg %p157
      $region38: #{skip2net_forward.27} parent=31 // pred_check_branch
        %452 = sbr.rel (%p450) target = $region40
      $region39: #{skip2net_forward.27} parent=31 // pred_region
        _
      $region40: #{skip2net_forward.27} parent=31 // pred_fallthru
        _
      // Predicated region
      $region41: #{skip2net_forward.27} parent=31 // pred_check
        %p453 = pneg %p185
      $region42: #{skip2net_forward.27} parent=31 // pred_check_branch
        %455 = sbr.rel (%p453) target = $region44
      $region43: #{skip2net_forward.27} parent=31 // pred_region
        _
      $region44: #{skip2net_forward.27} parent=31 // pred_fallthru
        _
    $region32: #{skip2net_forward.27} parent=5 // pred_fallthru
      _
    %p456 = scmp.le.s32.totalorder 2, %s12
    // Predicated region
    $region45: #{skip2net_forward.27} parent=5 // pred_check
      %p457 = pneg %p456
    $region46: #{skip2net_forward.27} parent=5 // pred_check_branch
      %459 = sbr.rel (%p457) target = $region48
    $region47: #{skip2net_forward.27} parent=5 // pred_region
      %s460 = ssub.s32 %s12, 2
      // Predicated region
      $region49: #{skip2net_forward.27} parent=47 // pred_check
        %p461 = pneg %p135
      $region50: #{skip2net_forward.27} parent=47 // pred_check_branch
        %463 = sbr.rel (%p461) target = $region52
      $region51: #{skip2net_forward.27} parent=47 // pred_region
        %p464 = scmp.lt.s32.totalorder %s23, 1
        %s465 = scalar_select %p464, %s23, 1
        %p466 = scmp.lt.s32.totalorder %s24, 0
        %s467 = scalar_select %p466, %s24, 0
        %s468 = sadd.s32 %s467, %s465
        %s469 = smul.addr %s468, 4
        %s470 = scalar_lea.vmem %s3, %s469
      $region52: #{skip2net_forward.27} parent=47 // pred_fallthru
        _
      // Predicated region
      $region53: #{skip2net_forward.27} parent=47 // pred_check
        %p471 = pneg %p163
      $region54: #{skip2net_forward.27} parent=47 // pred_check_branch
        %473 = sbr.rel (%p471) target = $region56
      $region55: #{skip2net_forward.27} parent=47 // pred_region
        %p474 = scmp.lt.s32.totalorder %s23, 1
        %s475 = scalar_select %p474, %s23, 1
        %p476 = scmp.lt.s32.totalorder %s24, 0
        %s477 = scalar_select %p476, %s24, 0
        %s478 = sadd.s32 %s477, %s475
        %s479 = smul.addr %s478, 8
        %s480 = scalar_lea.vmem %s4, %s479
      $region56: #{skip2net_forward.27} parent=47 // pred_fallthru
        _
      // Predicated region
      $region57: #{skip2net_forward.27} parent=47 // pred_check
        %p481 = pneg %p191
      $region58: #{skip2net_forward.27} parent=47 // pred_check_branch
        %483 = sbr.rel (%p481) target = $region60
      $region59: #{skip2net_forward.27} parent=47 // pred_region
        %p484 = scmp.lt.s32.totalorder %s23, 1
        %s485 = scalar_select %p484, %s23, 1
        %p486 = scmp.lt.s32.totalorder %s24, 0
        %s487 = scalar_select %p486, %s24, 0
        %s488 = sadd.s32 %s487, %s485
        %s489 = smul.addr %s488, 8
        %s490 = scalar_lea.vmem %s5, %s489
      $region60: #{skip2net_forward.27} parent=47 // pred_fallthru
        _
    $region48: #{skip2net_forward.27} parent=5 // pred_fallthru
      _
  $region6: #{skip2net_forward.27} parent=0 // loop_footer
    %s16 = sadd.s32 1, %s12
  $region7: #{skip2net_forward.27} parent=0 // loop_footer_branch
    %11 = sbr.rel target = $region3
  $region8: #{skip2net_forward.27} parent=0 // loop_exit
    _

// kernel: skip2net_forward.31
$region0: #{skip2net_forward.31}
  #allocation0 [shape = 'u32[]', space=smem, size = 0x4, offset = 0x4, fixed_abs, tag = 'smem constant byte address 0x4 - core index']
  #allocation1 [shape = 'u32[144,128]{1,0:T(1,128)}', space=vmem, size = 0x12000, scoped, tag = 'internal scratch']
  %s0 = inlined_call_operand.vmem [shape: bf16[2,8,8], index: 0, kind: input, shape index: {}]
  %s1 = inlined_call_operand.vmem [shape: bf16[2,8,128], index: 1, kind: input, shape index: {}]
  %s2 = inlined_call_operand.vmem [shape: f32[2,8,1], index: 2, kind: input, shape index: {}]
  %s3 = inlined_call_operand.vmem [shape: bf16[2,8,128], index: 3, kind: output, shape index: {0}]
  %s4 = inlined_call_operand.vmem [shape: f32[2,8,128], index: 4, kind: output, shape index: {1}]
  %s5 = inlined_call_operand.vmem [shape: f32[2,8,128], index: 5, kind: output, shape index: {2}]
  %6 = xla_tuple %s3, %s4, %s5
  %s7 = sld [smem:[#allocation0]]
  $region61: #{skip2net_forward.31} parent=0
    _
  %s9 = ssub.s32 1, %s7
  %s10 = scalar_select 0, %s9, %s7
  loop: start=0, step=1, limit=4
  $region2: #{skip2net_forward.31} parent=0 // loop_pre_header
    _
  $region3: #{skip2net_forward.31} parent=0 // loop_header
    %s12 = sphi 0, %s16
    %p13 = scmp.ge.s32.totalorder %s12, 4
    %s19 = sphi 0, %s31
    %s20 = sphi 0, %s27
    %s21 = sphi 0, %s19
    %s22 = sphi 0, %s20
    %s23 = sphi 0, %s21
    %s24 = sphi 0, %s22
    %s34 = sphi 0, %s36
    %s37 = sphi 0, %s34
    %s38 = sphi 0, %s37
    %s54 = sphi 0, %s38
    %s62 = sphi 0, %s64
    %s65 = sphi 0, %s62
    %s66 = sphi 0, %s65
    %s82 = sphi 0, %s66
    %s88 = sphi 0, %s90
    %s91 = sphi 0, %s88
    %s92 = sphi 0, %s91
    %s108 = sphi 0, %s92
    %s116 = sphi 0, %s118
    %s119 = sphi 0, %s116
    %s120 = sphi 0, %s119
    %s136 = sphi 0, %s120
    %s144 = sphi 0, %s146
    %s147 = sphi 0, %s144
    %s148 = sphi 0, %s147
    %s164 = sphi 0, %s148
    %s172 = sphi 0, %s174
    %s175 = sphi 0, %s172
    %s176 = sphi 0, %s175
    %s192 = sphi 0, %s176
  $region4: #{skip2net_forward.31} parent=0 // loop_header_branch
    %15 = sbr.rel (%p13) target = $region8
  $region5: #{skip2net_forward.31} parent=0 // loop_body
    %s17 = ssub.s32 %s12, 1
    %s18 = ssub.s32 %s12, 2
    %s25 = sadd.s32 1, %s20
    %p26 = scmp.ge.s32.totalorder %s25, 1
    %s27 = scalar_select %p26, 0, %s25
    %s28 = sadd.s32 1, %s19
    %s29 = scalar_select %p26, %s28, %s19
    %p30 = scmp.ge.s32.totalorder %s29, 2
    %s31 = scalar_select %p30, 0, %s29
    %s32 = ssub.s32 %s19, %s31
    %p33 = scmp.eq.s32.totalorder %s32, 0
    %s35 = sadd.s32 %s34, 1
    %s36 = scalar_select %p33, %s34, %s35
    %p39 = pneg %p33
    %p40 = scmp.eq.s32.totalorder %s12, 1
    %p41 = por %p39, %p40
    %p42 = scmp.ne.s32.totalorder %s34, %s37
    %p43 = scmp.eq.s32.totalorder %s12, 0
    %p44 = por %p42, %p43
    %p45 = scmp.ne.s32.totalorder %s34, %s37
    %p46 = scmp.eq.s32.totalorder %s17, 1
    %p47 = por %p45, %p46
    %p48 = scmp.ne.s32.totalorder %s37, %s38
    %p49 = scmp.eq.s32.totalorder %s17, 0
    %p50 = por %p48, %p49
    %p51 = scmp.ne.s32.totalorder %s37, %s38
    %p52 = scmp.eq.s32.totalorder %s18, 1
    %p53 = por %p51, %p52
    %p55 = scmp.ne.s32.totalorder %s38, %s54
    %p56 = scmp.eq.s32.totalorder %s18, 0
    %p57 = por %p55, %p56
    %s58 = ssub.s32 %s19, %s31
    %s59 = ssub.s32 %s20, %s27
    %s60 = sor.u32 %s58, %s59
    %p61 = scmp.eq.s32.totalorder %s60, 0
    %s63 = sadd.s32 %s62, 1
    %s64 = scalar_select %p61, %s62, %s63
    %p67 = pneg %p61
    %p68 = scmp.eq.s32.totalorder %s12, 1
    %p69 = por %p67, %p68
    %p70 = scmp.ne.s32.totalorder %s62, %s65
    %p71 = scmp.eq.s32.totalorder %s12, 0
    %p72 = por %p70, %p71
    %p73 = scmp.ne.s32.totalorder %s62, %s65
    %p74 = scmp.eq.s32.totalorder %s17, 1
    %p75 = por %p73, %p74
    %p76 = scmp.ne.s32.totalorder %s65, %s66
    %p77 = scmp.eq.s32.totalorder %s17, 0
    %p78 = por %p76, %p77
    %p79 = scmp.ne.s32.totalorder %s65, %s66
    %p80 = scmp.eq.s32.totalorder %s18, 1
    %p81 = por %p79, %p80
    %p83 = scmp.ne.s32.totalorder %s66, %s82
    %p84 = scmp.eq.s32.totalorder %s18, 0
    %p85 = por %p83, %p84
    %s86 = ssub.s32 %s19, %s31
    %p87 = scmp.eq.s32.totalorder %s86, 0
    %s89 = sadd.s32 %s88, 1
    %s90 = scalar_select %p87, %s88, %s89
    %p93 = pneg %p87
    %p94 = scmp.eq.s32.totalorder %s12, 1
    %p95 = por %p93, %p94
    %p96 = scmp.ne.s32.totalorder %s88, %s91
    %p97 = scmp.eq.s32.totalorder %s12, 0
    %p98 = por %p96, %p97
    %p99 = scmp.ne.s32.totalorder %s88, %s91
    %p100 = scmp.eq.s32.totalorder %s17, 1
    %p101 = por %p99, %p100
    %p102 = scmp.ne.s32.totalorder %s91, %s92
    %p103 = scmp.eq.s32.totalorder %s17, 0
    %p104 = por %p102, %p103
    %p105 = scmp.ne.s32.totalorder %s91, %s92
    %p106 = scmp.eq.s32.totalorder %s18, 1
    %p107 = por %p105, %p106
    %p109 = scmp.ne.s32.totalorder %s92, %s108
    %p110 = scmp.eq.s32.totalorder %s18, 0
    %p111 = por %p109, %p110
    %s112 = ssub.s32 %s19, %s31
    %s113 = ssub.s32 %s20, %s27
    %s114 = sor.u32 %s112, %s113
    %p115 = scmp.eq.s32.totalorder %s114, 0
    %s117 = sadd.s32 %s116, 1
    %s118 = scalar_select %p115, %s116, %s117
    %p121 = pneg %p115
    %p122 = scmp.eq.s32.totalorder %s12, 1
    %p123 = por %p121, %p122
    %p124 = scmp.ne.s32.totalorder %s116, %s119
    %p125 = scmp.eq.s32.totalorder %s12, 0
    %p126 = por %p124, %p125
    %p127 = scmp.ne.s32.totalorder %s116, %s119
    %p128 = scmp.eq.s32.totalorder %s17, 1
    %p129 = por %p127, %p128
    %p130 = scmp.ne.s32.totalorder %s119, %s120
    %p131 = scmp.eq.s32.totalorder %s17, 0
    %p132 = por %p130, %p131
    %p133 = scmp.ne.s32.totalorder %s119, %s120
    %p134 = scmp.eq.s32.totalorder %s18, 1
    %p135 = por %p133, %p134
    %p137 = scmp.ne.s32.totalorder %s120, %s136
    %p138 = scmp.eq.s32.totalorder %s18, 0
    %p139 = por %p137, %p138
    %s140 = ssub.s32 %s19, %s31
    %s141 = ssub.s32 %s20, %s27
    %s142 = sor.u32 %s140, %s141
    %p143 = scmp.eq.s32.totalorder %s142, 0
    %s145 = sadd.s32 %s144, 1
    %s146 = scalar_select %p143, %s144, %s145
    %p149 = pneg %p143
    %p150 = scmp.eq.s32.totalorder %s12, 1
    %p151 = por %p149, %p150
    %p152 = scmp.ne.s32.totalorder %s144, %s147
    %p153 = scmp.eq.s32.totalorder %s12, 0
    %p154 = por %p152, %p153
    %p155 = scmp.ne.s32.totalorder %s144, %s147
    %p156 = scmp.eq.s32.totalorder %s17, 1
    %p157 = por %p155, %p156
    %p158 = scmp.ne.s32.totalorder %s147, %s148
    %p159 = scmp.eq.s32.totalorder %s17, 0
    %p160 = por %p158, %p159
    %p161 = scmp.ne.s32.totalorder %s147, %s148
    %p162 = scmp.eq.s32.totalorder %s18, 1
    %p163 = por %p161, %p162
    %p165 = scmp.ne.s32.totalorder %s148, %s164
    %p166 = scmp.eq.s32.totalorder %s18, 0
    %p167 = por %p165, %p166
    %s168 = ssub.s32 %s19, %s31
    %s169 = ssub.s32 %s20, %s27
    %s170 = sor.u32 %s168, %s169
    %p171 = scmp.eq.s32.totalorder %s170, 0
    %s173 = sadd.s32 %s172, 1
    %s174 = scalar_select %p171, %s172, %s173
    %p177 = pneg %p171
    %p178 = scmp.eq.s32.totalorder %s12, 1
    %p179 = por %p177, %p178
    %p180 = scmp.ne.s32.totalorder %s172, %s175
    %p181 = scmp.eq.s32.totalorder %s12, 0
    %p182 = por %p180, %p181
    %p183 = scmp.ne.s32.totalorder %s172, %s175
    %p184 = scmp.eq.s32.totalorder %s17, 1
    %p185 = por %p183, %p184
    %p186 = scmp.ne.s32.totalorder %s175, %s176
    %p187 = scmp.eq.s32.totalorder %s17, 0
    %p188 = por %p186, %p187
    %p189 = scmp.ne.s32.totalorder %s175, %s176
    %p190 = scmp.eq.s32.totalorder %s18, 1
    %p191 = por %p189, %p190
    %p193 = scmp.ne.s32.totalorder %s176, %s192
    %p194 = scmp.eq.s32.totalorder %s18, 0
    %p195 = por %p193, %p194
    %p196 = scmp.le.s32.totalorder 1, %s12
    %p197 = scmp.lt.s32.totalorder %s12, 3
    %p198 = pnand %p196, %p197
    %p199 = pneg %p198
    // Predicated region
    $region9: #{skip2net_forward.31} parent=5 // pred_check
      _
    $region10: #{skip2net_forward.31} parent=5 // pred_check_branch
      %201 = sbr.rel (%p198) target = $region12
    $region11: #{skip2net_forward.31} parent=5 // pred_region
      %s202 = ssub.s32 %s12, 1
    $region12: #{skip2net_forward.31} parent=5 // pred_fallthru
      _
    %p203 = scmp.lt.s32.totalorder %s12, 2
    // Predicated region
    $region13: #{skip2net_forward.31} parent=5 // pred_check
      %p204 = pneg %p203
    $region14: #{skip2net_forward.31} parent=5 // pred_check_branch
      %206 = sbr.rel (%p204) target = $region16
    $region15: #{skip2net_forward.31} parent=5 // pred_region
      // Predicated region
      $region17: #{skip2net_forward.31} parent=15 // pred_check
        %p207 = pneg %p44
      $region18: #{skip2net_forward.31} parent=15 // pred_check_branch
        %209 = sbr.rel (%p207) target = $region20
      $region19: #{skip2net_forward.31} parent=15 // pred_region
        %p210 = scmp.lt.s32.totalorder %s19, 1
        %s211 = scalar_select %p210, %s19, 1
        %s212 = smul.addr %s211, 4
        %s213 = scalar_lea.vmem %s0, %s212
      $region20: #{skip2net_forward.31} parent=15 // pred_fallthru
        _
      // Predicated region
      $region21: #{skip2net_forward.31} parent=15 // pred_check
        %p214 = pneg %p72
      $region22: #{skip2net_forward.31} parent=15 // pred_check_branch
        %216 = sbr.rel (%p214) target = $region24
      $region23: #{skip2net_forward.31} parent=15 // pred_region
        %p217 = scmp.lt.s32.totalorder %s19, 1
        %s218 = scalar_select %p217, %s19, 1
        %p219 = scmp.lt.s32.totalorder %s20, 0
        %s220 = scalar_select %p219, %s20, 0
        %s221 = sadd.s32 %s220, %s218
        %s222 = smul.addr %s221, 4
        %s223 = scalar_lea.vmem %s1, %s222
      $region24: #{skip2net_forward.31} parent=15 // pred_fallthru
        _
      // Predicated region
      $region25: #{skip2net_forward.31} parent=15 // pred_check
        %p224 = pneg %p98
      $region26: #{skip2net_forward.31} parent=15 // pred_check_branch
        %226 = sbr.rel (%p224) target = $region28
      $region27: #{skip2net_forward.31} parent=15 // pred_region
        %p227 = scmp.lt.s32.totalorder %s19, 1
        %s228 = scalar_select %p227, %s19, 1
        %s229 = smul.addr %s228, 8
        %s230 = scalar_lea.vmem %s2, %s229
      $region28: #{skip2net_forward.31} parent=15 // pred_fallthru
        _
    $region16: #{skip2net_forward.31} parent=5 // pred_fallthru
      _
    %p231 = scmp.le.s32.totalorder 1, %s12
    %p232 = scmp.lt.s32.totalorder %s12, 3
    %p233 = pnand %p231, %p232
    %p234 = pneg %p233
    // Predicated region
    $region29: #{skip2net_forward.31} parent=5 // pred_check
      _
    $region30: #{skip2net_forward.31} parent=5 // pred_check_branch
      %236 = sbr.rel (%p233) target = $region32
    $region31: #{skip2net_forward.31} parent=5 // pred_region
      %s237 = ssub.s32 %s12, 1
      %p238 = scmp.lt.s32.totalorder %s21, 1
      %s239 = scalar_select %p238, %s21, 1
      %s240 = smul.addr %s239, 4
      %s241 = scalar_lea.vmem %s0, %s240
      %p242 = pneg %p50
      %p243 = pneg %p47
      %p244 = scmp.lt.s32.totalorder %s21, 1
      %s245 = scalar_select %p244, %s21, 1
      %p246 = scmp.lt.s32.totalorder %s22, 0
      %s247 = scalar_select %p246, %s22, 0
      %s248 = sadd.s32 %s247, %s245
      %s249 = smul.addr %s248, 4
      %s250 = scalar_lea.vmem %s1, %s249
      %p251 = pneg %p78
      %p252 = pneg %p75
      %p253 = scmp.lt.s32.totalorder %s21, 1
      %s254 = scalar_select %p253, %s21, 1
      %s255 = smul.addr %s254, 8
      %s256 = scalar_lea.vmem %s2, %s255
      %p257 = pneg %p104
      %p258 = pneg %p101
      %p259 = pneg %p132
      %p260 = pneg %p129
      %p261 = scmp.lt.s32.totalorder %s21, 1
      %s262 = scalar_select %p261, %s21, 1
      %p263 = scmp.lt.s32.totalorder %s22, 0
      %s264 = scalar_select %p263, %s22, 0
      %s265 = sadd.s32 %s264, %s262
      %s266 = smul.addr %s265, 4
      %s267 = scalar_lea.vmem %s3, %s266
      %p268 = pneg %p160
      %p269 = pneg %p157
      %p270 = scmp.lt.s32.totalorder %s21, 1
      %s271 = scalar_select %p270, %s21, 1
      %p272 = scmp.lt.s32.totalorder %s22, 0
      %s273 = scalar_select %p272, %s22, 0
      %s274 = sadd.s32 %s273, %s271
      %s275 = smul.addr %s274, 8
      %s276 = scalar_lea.vmem %s4, %s275
      %p277 = pneg %p188
      %p278 = pneg %p185
      %p279 = scmp.lt.s32.totalorder %s21, 1
      %s280 = scalar_select %p279, %s21, 1
      %p281 = scmp.lt.s32.totalorder %s22, 0
      %s282 = scalar_select %p281, %s22, 0
      %s283 = sadd.s32 %s282, %s280
      %s284 = smul.addr %s283, 8
      %s285 = scalar_lea.vmem %s5, %s284
      %p286 = scmp.lt.s32.totalorder %s21, 1
      %s287 = scalar_select %p286, %s21, 1
      %s288 = smul.addr %s287, 4
      %s289 = scalar_lea.vmem %s0, %s288
      %p290 = scmp.lt.s32.totalorder %s21, 1
      %s291 = scalar_select %p290, %s21, 1
      %p292 = scmp.lt.s32.totalorder %s22, 0
      %s293 = scalar_select %p292, %s22, 0
      %s294 = sadd.s32 %s293, %s291
      %s295 = smul.addr %s294, 4
      %s296 = scalar_lea.vmem %s1, %s295
      %p297 = scmp.lt.s32.totalorder %s21, 1
      %s298 = scalar_select %p297, %s21, 1
      %s299 = smul.addr %s298, 8
      %s300 = scalar_lea.vmem %s2, %s299
      %p301 = scmp.lt.s32.totalorder %s21, 1
      %s302 = scalar_select %p301, %s21, 1
      %p303 = scmp.lt.s32.totalorder %s22, 0
      %s304 = scalar_select %p303, %s22, 0
      %s305 = sadd.s32 %s304, %s302
      %s306 = smul.addr %s305, 4
      %s307 = scalar_lea.vmem %s3, %s306
      %p308 = scmp.lt.s32.totalorder %s21, 1
      %s309 = scalar_select %p308, %s21, 1
      %p310 = scmp.lt.s32.totalorder %s22, 0
      %s311 = scalar_select %p310, %s22, 0
      %s312 = sadd.s32 %s311, %s309
      %s313 = smul.addr %s312, 8
      %s314 = scalar_lea.vmem %s4, %s313
      %p315 = scmp.lt.s32.totalorder %s21, 1
      %s316 = scalar_select %p315, %s21, 1
      %p317 = scmp.lt.s32.totalorder %s22, 0
      %s318 = scalar_select %p317, %s22, 0
      %s319 = sadd.s32 %s318, %s316
      %s320 = smul.addr %s319, 8
      %s321 = scalar_lea.vmem %s5, %s320
      %v323 = vld [vmem:[%s289] sm:$0xf]
      %v324 = vld [vmem:[%s296] sm:$0xf]
      %v325 = vld [vmem:[%s300] sm:$0xff]
      %327 = vset.pattern.permute.xlu0 0
      %328 = vperm.xlu0 %327, %v325
      %v329 = vpop.permute.xlu0 %328
      %vm331 = vcmask 64512
      %v333 = vsel %vm331, %v323, 0
      %vm335 = vcmask 1043456
      %v337 = vsel %vm335, %v324, 0
      %339 = vmatprep.subr.bf16.mxu0 0
      %340 = vmatpush1.bf16.msra.mxu0 %v337
      %341 = vmatprep.subr.bf16.mxu0 0
      %342 = vmatpush1.bf16.msra.mxu0 0
      %343 = vmatprep.subr.bf16.mxu0 0
      %344 = vmatpush1.bf16.msra.mxu0 0
      %345 = vmatprep.subr.bf16.mxu0 0
      %346 = vmatpush1.bf16.msra.mxu0 0
      %347 = vmatprep.subr.bf16.mxu0 0
      %348 = vmatpush1.bf16.msra.mxu0 0
      %349 = vmatprep.subr.bf16.mxu0 0
      %350 = vmatpush1.bf16.msra.mxu0 0
      %351 = vmatprep.subr.bf16.mxu0 0
      %352 = vmatpush1.bf16.msra.mxu0 0
      %353 = vmatprep.subr.bf16.mxu0 0
      %354 = vmatpush1.bf16.msra.mxu0 0
      %355 = vmatprep.subr.bf16.mxu0 0
      %356 = vmatpush1.bf16.msra.mxu0 0
      %357 = vmatprep.subr.bf16.mxu0 0
      %358 = vmatpush1.bf16.msra.mxu0 0
      %359 = vmatprep.subr.bf16.mxu0 0
      %360 = vmatpush1.bf16.msra.mxu0 0
      %361 = vmatprep.subr.bf16.mxu0 0
      %362 = vmatpush1.bf16.msra.mxu0 0
      %363 = vmatprep.subr.bf16.mxu0 0
      %364 = vmatpush1.bf16.msra.mxu0 0
      %365 = vmatprep.subr.bf16.mxu0 0
      %366 = vmatpush1.bf16.msra.mxu0 0
      %367 = vmatprep.subr.bf16.mxu0 0
      %368 = vmatpush1.bf16.msra.mxu0 0
      %369 = vmatprep.subr.bf16.mxu0 0
      %370 = vmatpush1.bf16.msra.mxu0 0
      %371 = vmatprep.mubr.bf16.mxu0 0
      %372 = vmatmul.mubr.bf16.gmra.mrb[0].mxu0 %v333
      %v373 = vpop.f32.mrb[0].mxu0
      %v374 = vadd.f32 %v329, %v373
      %v375 = vpop.f32.mrb[0].mxu0
      %v376 = vpop.f32.mrb[0].mxu0
      %v377 = vpop.f32.mrb[0].mxu0
      %378 = vdwg.mxu0
      %379 = vadd.xlane.f32.xlu0 %v374
      %v380 = vpop.xlane.xlu0 %379
      %v381 = vmul.f32 %v374, %v374
      %382 = vadd.xlane.f32.xlu0 %v381
      %v383 = vpop.xlane.xlu0 %382
      %384 = vst [vmem:[%s314] sm:$0xff] %v380
      %385 = vst [vmem:[%s321] sm:$0xff] %v383
      %v386 = vpack.c.bf16 %v374, %v374
      %387 = vst [vmem:[%s307] sm:$0xf] %v386
      %p388 = scmp.lt.s32.totalorder %s21, 1
      %s389 = scalar_select %p388, %s21, 1
      %p390 = scmp.lt.s32.totalorder %s22, 0
      %s391 = scalar_select %p390, %s22, 0
      %s392 = sadd.s32 %s391, %s389
      %s393 = smul.addr %s392, 4
      %s394 = scalar_lea.vmem %s3, %s393
      %p395 = scmp.lt.s32.totalorder %s21, 1
      %s396 = scalar_select %p395, %s21, 1
      %p397 = scmp.lt.s32.totalorder %s22, 0
      %s398 = scalar_select %p397, %s22, 0
      %s399 = sadd.s32 %s398, %s396
      %s400 = smul.addr %s399, 8
      %s401 = scalar_lea.vmem %s4, %s400
      %p402 = scmp.lt.s32.totalorder %s21, 1
      %s403 = scalar_select %p402, %s21, 1
      %p404 = scmp.lt.s32.totalorder %s22, 0
      %s405 = scalar_select %p404, %s22, 0
      %s406 = sadd.s32 %s405, %s403
      %s407 = smul.addr %s406, 8
      %s408 = scalar_lea.vmem %s5, %s407
      // Predicated region
      $region33: #{skip2net_forward.31} parent=31 // pred_check
        %p409 = pneg %p129
      $region34: #{skip2net_forward.31} parent=31 // pred_check_branch
        %411 = sbr.rel (%p409) target = $region36
      $region35: #{skip2net_forward.31} parent=31 // pred_region
        _
      $region36: #{skip2net_forward.31} parent=31 // pred_fallthru
        _
      // Predicated region
      $region37: #{skip2net_forward.31} parent=31 // pred_check
        %p412 = pneg %p157
      $region38: #{skip2net_forward.31} parent=31 // pred_check_branch
        %414 = sbr.rel (%p412) target = $region40
      $region39: #{skip2net_forward.31} parent=31 // pred_region
        _
      $region40: #{skip2net_forward.31} parent=31 // pred_fallthru
        _
      // Predicated region
      $region41: #{skip2net_forward.31} parent=31 // pred_check
        %p415 = pneg %p185
      $region42: #{skip2net_forward.31} parent=31 // pred_check_branch
        %417 = sbr.rel (%p415) target = $region44
      $region43: #{skip2net_forward.31} parent=31 // pred_region
        _
      $region44: #{skip2net_forward.31} parent=31 // pred_fallthru
        _
    $region32: #{skip2net_forward.31} parent=5 // pred_fallthru
      _
    %p418 = scmp.le.s32.totalorder 2, %s12
    // Predicated region
    $region45: #{skip2net_forward.31} parent=5 // pred_check
      %p419 = pneg %p418
    $region46: #{skip2net_forward.31} parent=5 // pred_check_branch
      %421 = sbr.rel (%p419) target = $region48
    $region47: #{skip2net_forward.31} parent=5 // pred_region
      %s422 = ssub.s32 %s12, 2
      // Predicated region
      $region49: #{skip2net_forward.31} parent=47 // pred_check
        %p423 = pneg %p135
      $region50: #{skip2net_forward.31} parent=47 // pred_check_branch
        %425 = sbr.rel (%p423) target = $region52
      $region51: #{skip2net_forward.31} parent=47 // pred_region
        %p426 = scmp.lt.s32.totalorder %s23, 1
        %s427 = scalar_select %p426, %s23, 1
        %p428 = scmp.lt.s32.totalorder %s24, 0
        %s429 = scalar_select %p428, %s24, 0
        %s430 = sadd.s32 %s429, %s427
        %s431 = smul.addr %s430, 4
        %s432 = scalar_lea.vmem %s3, %s431
      $region52: #{skip2net_forward.31} parent=47 // pred_fallthru
        _
      // Predicated region
      $region53: #{skip2net_forward.31} parent=47 // pred_check
        %p433 = pneg %p163
      $region54: #{skip2net_forward.31} parent=47 // pred_check_branch
        %435 = sbr.rel (%p433) target = $region56
      $region55: #{skip2net_forward.31} parent=47 // pred_region
        %p436 = scmp.lt.s32.totalorder %s23, 1
        %s437 = scalar_select %p436, %s23, 1
        %p438 = scmp.lt.s32.totalorder %s24, 0
        %s439 = scalar_select %p438, %s24, 0
        %s440 = sadd.s32 %s439, %s437
        %s441 = smul.addr %s440, 8
        %s442 = scalar_lea.vmem %s4, %s441
      $region56: #{skip2net_forward.31} parent=47 // pred_fallthru
        _
      // Predicated region
      $region57: #{skip2net_forward.31} parent=47 // pred_check
        %p443 = pneg %p191
      $region58: #{skip2net_forward.31} parent=47 // pred_check_branch
        %445 = sbr.rel (%p443) target = $region60
      $region59: #{skip2net_forward.31} parent=47 // pred_region
        %p446 = scmp.lt.s32.totalorder %s23, 1
        %s447 = scalar_select %p446, %s23, 1
        %p448 = scmp.lt.s32.totalorder %s24, 0
        %s449 = scalar_select %p448, %s24, 0
        %s450 = sadd.s32 %s449, %s447
        %s451 = smul.addr %s450, 8
        %s452 = scalar_lea.vmem %s5, %s451
      $region60: #{skip2net_forward.31} parent=47 // pred_fallthru
        _
    $region48: #{skip2net_forward.31} parent=5 // pred_fallthru
      _
  $region6: #{skip2net_forward.31} parent=0 // loop_footer
    %s16 = sadd.s32 1, %s12
  $region7: #{skip2net_forward.31} parent=0 // loop_footer_branch
    %11 = sbr.rel target = $region3
  $region8: #{skip2net_forward.31} parent=0 // loop_exit
    _

// kernel: skip2net_forward.33
$region0: #{skip2net_forward.33}
  #allocation0 [shape = 'u32[]', space=smem, size = 0x4, offset = 0x4, fixed_abs, tag = 'smem constant byte address 0x4 - core index']
  #allocation1 [shape = 'u32[144,128]{1,0:T(1,128)}', space=vmem, size = 0x12000, scoped, tag = 'internal scratch']
  %s0 = inlined_call_operand.vmem [shape: bf16[2,8,72], index: 0, kind: input, shape index: {}]
  %s1 = inlined_call_operand.vmem [shape: bf16[2,72,128], index: 1, kind: input, shape index: {}]
  %s2 = inlined_call_operand.vmem [shape: f32[2,8,1], index: 2, kind: input, shape index: {}]
  %s3 = inlined_call_operand.vmem [shape: bf16[2,8,128], index: 3, kind: output, shape index: {0}]
  %s4 = inlined_call_operand.vmem [shape: f32[2,8,128], index: 4, kind: output, shape index: {1}]
  %s5 = inlined_call_operand.vmem [shape: f32[2,8,128], index: 5, kind: output, shape index: {2}]
  %6 = xla_tuple %s3, %s4, %s5
  %s7 = sld [smem:[#allocation0]]
  $region61: #{skip2net_forward.33} parent=0
    _
  %s9 = ssub.s32 1, %s7
  %s10 = scalar_select 0, %s9, %s7
  loop: start=0, step=1, limit=4
  $region2: #{skip2net_forward.33} parent=0 // loop_pre_header
    _
  $region3: #{skip2net_forward.33} parent=0 // loop_header
    %s12 = sphi 0, %s16
    %p13 = scmp.ge.s32.totalorder %s12, 4
    %s19 = sphi 0, %s31
    %s20 = sphi 0, %s27
    %s21 = sphi 0, %s19
    %s22 = sphi 0, %s20
    %s23 = sphi 0, %s21
    %s24 = sphi 0, %s22
    %s34 = sphi 0, %s36
    %s37 = sphi 0, %s34
    %s38 = sphi 0, %s37
    %s54 = sphi 0, %s38
    %s62 = sphi 0, %s64
    %s65 = sphi 0, %s62
    %s66 = sphi 0, %s65
    %s82 = sphi 0, %s66
    %s88 = sphi 0, %s90
    %s91 = sphi 0, %s88
    %s92 = sphi 0, %s91
    %s108 = sphi 0, %s92
    %s116 = sphi 0, %s118
    %s119 = sphi 0, %s116
    %s120 = sphi 0, %s119
    %s136 = sphi 0, %s120
    %s144 = sphi 0, %s146
    %s147 = sphi 0, %s144
    %s148 = sphi 0, %s147
    %s164 = sphi 0, %s148
    %s172 = sphi 0, %s174
    %s175 = sphi 0, %s172
    %s176 = sphi 0, %s175
    %s192 = sphi 0, %s176
  $region4: #{skip2net_forward.33} parent=0 // loop_header_branch
    %15 = sbr.rel (%p13) target = $region8
  $region5: #{skip2net_forward.33} parent=0 // loop_body
    %s17 = ssub.s32 %s12, 1
    %s18 = ssub.s32 %s12, 2
    %s25 = sadd.s32 1, %s20
    %p26 = scmp.ge.s32.totalorder %s25, 1
    %s27 = scalar_select %p26, 0, %s25
    %s28 = sadd.s32 1, %s19
    %s29 = scalar_select %p26, %s28, %s19
    %p30 = scmp.ge.s32.totalorder %s29, 2
    %s31 = scalar_select %p30, 0, %s29
    %s32 = ssub.s32 %s19, %s31
    %p33 = scmp.eq.s32.totalorder %s32, 0
    %s35 = sadd.s32 %s34, 1
    %s36 = scalar_select %p33, %s34, %s35
    %p39 = pneg %p33
    %p40 = scmp.eq.s32.totalorder %s12, 1
    %p41 = por %p39, %p40
    %p42 = scmp.ne.s32.totalorder %s34, %s37
    %p43 = scmp.eq.s32.totalorder %s12, 0
    %p44 = por %p42, %p43
    %p45 = scmp.ne.s32.totalorder %s34, %s37
    %p46 = scmp.eq.s32.totalorder %s17, 1
    %p47 = por %p45, %p46
    %p48 = scmp.ne.s32.totalorder %s37, %s38
    %p49 = scmp.eq.s32.totalorder %s17, 0
    %p50 = por %p48, %p49
    %p51 = scmp.ne.s32.totalorder %s37, %s38
    %p52 = scmp.eq.s32.totalorder %s18, 1
    %p53 = por %p51, %p52
    %p55 = scmp.ne.s32.totalorder %s38, %s54
    %p56 = scmp.eq.s32.totalorder %s18, 0
    %p57 = por %p55, %p56
    %s58 = ssub.s32 %s19, %s31
    %s59 = ssub.s32 %s20, %s27
    %s60 = sor.u32 %s58, %s59
    %p61 = scmp.eq.s32.totalorder %s60, 0
    %s63 = sadd.s32 %s62, 1
    %s64 = scalar_select %p61, %s62, %s63
    %p67 = pneg %p61
    %p68 = scmp.eq.s32.totalorder %s12, 1
    %p69 = por %p67, %p68
    %p70 = scmp.ne.s32.totalorder %s62, %s65
    %p71 = scmp.eq.s32.totalorder %s12, 0
    %p72 = por %p70, %p71
    %p73 = scmp.ne.s32.totalorder %s62, %s65
    %p74 = scmp.eq.s32.totalorder %s17, 1
    %p75 = por %p73, %p74
    %p76 = scmp.ne.s32.totalorder %s65, %s66
    %p77 = scmp.eq.s32.totalorder %s17, 0
    %p78 = por %p76, %p77
    %p79 = scmp.ne.s32.totalorder %s65, %s66
    %p80 = scmp.eq.s32.totalorder %s18, 1
    %p81 = por %p79, %p80
    %p83 = scmp.ne.s32.totalorder %s66, %s82
    %p84 = scmp.eq.s32.totalorder %s18, 0
    %p85 = por %p83, %p84
    %s86 = ssub.s32 %s19, %s31
    %p87 = scmp.eq.s32.totalorder %s86, 0
    %s89 = sadd.s32 %s88, 1
    %s90 = scalar_select %p87, %s88, %s89
    %p93 = pneg %p87
    %p94 = scmp.eq.s32.totalorder %s12, 1
    %p95 = por %p93, %p94
    %p96 = scmp.ne.s32.totalorder %s88, %s91
    %p97 = scmp.eq.s32.totalorder %s12, 0
    %p98 = por %p96, %p97
    %p99 = scmp.ne.s32.totalorder %s88, %s91
    %p100 = scmp.eq.s32.totalorder %s17, 1
    %p101 = por %p99, %p100
    %p102 = scmp.ne.s32.totalorder %s91, %s92
    %p103 = scmp.eq.s32.totalorder %s17, 0
    %p104 = por %p102, %p103
    %p105 = scmp.ne.s32.totalorder %s91, %s92
    %p106 = scmp.eq.s32.totalorder %s18, 1
    %p107 = por %p105, %p106
    %p109 = scmp.ne.s32.totalorder %s92, %s108
    %p110 = scmp.eq.s32.totalorder %s18, 0
    %p111 = por %p109, %p110
    %s112 = ssub.s32 %s19, %s31
    %s113 = ssub.s32 %s20, %s27
    %s114 = sor.u32 %s112, %s113
    %p115 = scmp.eq.s32.totalorder %s114, 0
    %s117 = sadd.s32 %s116, 1
    %s118 = scalar_select %p115, %s116, %s117
    %p121 = pneg %p115
    %p122 = scmp.eq.s32.totalorder %s12, 1
    %p123 = por %p121, %p122
    %p124 = scmp.ne.s32.totalorder %s116, %s119
    %p125 = scmp.eq.s32.totalorder %s12, 0
    %p126 = por %p124, %p125
    %p127 = scmp.ne.s32.totalorder %s116, %s119
    %p128 = scmp.eq.s32.totalorder %s17, 1
    %p129 = por %p127, %p128
    %p130 = scmp.ne.s32.totalorder %s119, %s120
    %p131 = scmp.eq.s32.totalorder %s17, 0
    %p132 = por %p130, %p131
    %p133 = scmp.ne.s32.totalorder %s119, %s120
    %p134 = scmp.eq.s32.totalorder %s18, 1
    %p135 = por %p133, %p134
    %p137 = scmp.ne.s32.totalorder %s120, %s136
    %p138 = scmp.eq.s32.totalorder %s18, 0
    %p139 = por %p137, %p138
    %s140 = ssub.s32 %s19, %s31
    %s141 = ssub.s32 %s20, %s27
    %s142 = sor.u32 %s140, %s141
    %p143 = scmp.eq.s32.totalorder %s142, 0
    %s145 = sadd.s32 %s144, 1
    %s146 = scalar_select %p143, %s144, %s145
    %p149 = pneg %p143
    %p150 = scmp.eq.s32.totalorder %s12, 1
    %p151 = por %p149, %p150
    %p152 = scmp.ne.s32.totalorder %s144, %s147
    %p153 = scmp.eq.s32.totalorder %s12, 0
    %p154 = por %p152, %p153
    %p155 = scmp.ne.s32.totalorder %s144, %s147
    %p156 = scmp.eq.s32.totalorder %s17, 1
    %p157 = por %p155, %p156
    %p158 = scmp.ne.s32.totalorder %s147, %s148
    %p159 = scmp.eq.s32.totalorder %s17, 0
    %p160 = por %p158, %p159
    %p161 = scmp.ne.s32.totalorder %s147, %s148
    %p162 = scmp.eq.s32.totalorder %s18, 1
    %p163 = por %p161, %p162
    %p165 = scmp.ne.s32.totalorder %s148, %s164
    %p166 = scmp.eq.s32.totalorder %s18, 0
    %p167 = por %p165, %p166
    %s168 = ssub.s32 %s19, %s31
    %s169 = ssub.s32 %s20, %s27
    %s170 = sor.u32 %s168, %s169
    %p171 = scmp.eq.s32.totalorder %s170, 0
    %s173 = sadd.s32 %s172, 1
    %s174 = scalar_select %p171, %s172, %s173
    %p177 = pneg %p171
    %p178 = scmp.eq.s32.totalorder %s12, 1
    %p179 = por %p177, %p178
    %p180 = scmp.ne.s32.totalorder %s172, %s175
    %p181 = scmp.eq.s32.totalorder %s12, 0
    %p182 = por %p180, %p181
    %p183 = scmp.ne.s32.totalorder %s172, %s175
    %p184 = scmp.eq.s32.totalorder %s17, 1
    %p185 = por %p183, %p184
    %p186 = scmp.ne.s32.totalorder %s175, %s176
    %p187 = scmp.eq.s32.totalorder %s17, 0
    %p188 = por %p186, %p187
    %p189 = scmp.ne.s32.totalorder %s175, %s176
    %p190 = scmp.eq.s32.totalorder %s18, 1
    %p191 = por %p189, %p190
    %p193 = scmp.ne.s32.totalorder %s176, %s192
    %p194 = scmp.eq.s32.totalorder %s18, 0
    %p195 = por %p193, %p194
    %p196 = scmp.le.s32.totalorder 1, %s12
    %p197 = scmp.lt.s32.totalorder %s12, 3
    %p198 = pnand %p196, %p197
    %p199 = pneg %p198
    // Predicated region
    $region9: #{skip2net_forward.33} parent=5 // pred_check
      _
    $region10: #{skip2net_forward.33} parent=5 // pred_check_branch
      %201 = sbr.rel (%p198) target = $region12
    $region11: #{skip2net_forward.33} parent=5 // pred_region
      %s202 = ssub.s32 %s12, 1
    $region12: #{skip2net_forward.33} parent=5 // pred_fallthru
      _
    %p203 = scmp.lt.s32.totalorder %s12, 2
    // Predicated region
    $region13: #{skip2net_forward.33} parent=5 // pred_check
      %p204 = pneg %p203
    $region14: #{skip2net_forward.33} parent=5 // pred_check_branch
      %206 = sbr.rel (%p204) target = $region16
    $region15: #{skip2net_forward.33} parent=5 // pred_region
      // Predicated region
      $region17: #{skip2net_forward.33} parent=15 // pred_check
        %p207 = pneg %p44
      $region18: #{skip2net_forward.33} parent=15 // pred_check_branch
        %209 = sbr.rel (%p207) target = $region20
      $region19: #{skip2net_forward.33} parent=15 // pred_region
        %p210 = scmp.lt.s32.totalorder %s19, 1
        %s211 = scalar_select %p210, %s19, 1
        %s212 = smul.addr %s211, 4
        %s213 = scalar_lea.vmem %s0, %s212
      $region20: #{skip2net_forward.33} parent=15 // pred_fallthru
        _
      // Predicated region
      $region21: #{skip2net_forward.33} parent=15 // pred_check
        %p214 = pneg %p72
      $region22: #{skip2net_forward.33} parent=15 // pred_check_branch
        %216 = sbr.rel (%p214) target = $region24
      $region23: #{skip2net_forward.33} parent=15 // pred_region
        %p217 = scmp.lt.s32.totalorder %s19, 1
        %s218 = scalar_select %p217, %s19, 1
        %p219 = scmp.lt.s32.totalorder %s20, 0
        %s220 = scalar_select %p219, %s20, 0
        %s221 = smul.addr %s218, 9
        %s222 = sadd.s32 %s220, %s221
        %s223 = smul.addr %s222, 4
        %s224 = scalar_lea.vmem %s1, %s223
      $region24: #{skip2net_forward.33} parent=15 // pred_fallthru
        _
      // Predicated region
      $region25: #{skip2net_forward.33} parent=15 // pred_check
        %p225 = pneg %p98
      $region26: #{skip2net_forward.33} parent=15 // pred_check_branch
        %227 = sbr.rel (%p225) target = $region28
      $region27: #{skip2net_forward.33} parent=15 // pred_region
        %p228 = scmp.lt.s32.totalorder %s19, 1
        %s229 = scalar_select %p228, %s19, 1
        %s230 = smul.addr %s229, 8
        %s231 = scalar_lea.vmem %s2, %s230
      $region28: #{skip2net_forward.33} parent=15 // pred_fallthru
        _
    $region16: #{skip2net_forward.33} parent=5 // pred_fallthru
      _
    %p232 = scmp.le.s32.totalorder 1, %s12
    %p233 = scmp.lt.s32.totalorder %s12, 3
    %p234 = pnand %p232, %p233
    %p235 = pneg %p234
    // Predicated region
    $region29: #{skip2net_forward.33} parent=5 // pred_check
      _
    $region30: #{skip2net_forward.33} parent=5 // pred_check_branch
      %237 = sbr.rel (%p234) target = $region32
    $region31: #{skip2net_forward.33} parent=5 // pred_region
      %s238 = ssub.s32 %s12, 1
      %p239 = scmp.lt.s32.totalorder %s21, 1
      %s240 = scalar_select %p239, %s21, 1
      %s241 = smul.addr %s240, 4
      %s242 = scalar_lea.vmem %s0, %s241
      %p243 = pneg %p50
      %p244 = pneg %p47
      %p245 = scmp.lt.s32.totalorder %s21, 1
      %s246 = scalar_select %p245, %s21, 1
      %p247 = scmp.lt.s32.totalorder %s22, 0
      %s248 = scalar_select %p247, %s22, 0
      %s249 = smul.addr %s246, 9
      %s250 = sadd.s32 %s248, %s249
      %s251 = smul.addr %s250, 4
      %s252 = scalar_lea.vmem %s1, %s251
      %p253 = pneg %p78
      %p254 = pneg %p75
      %p255 = scmp.lt.s32.totalorder %s21, 1
      %s256 = scalar_select %p255, %s21, 1
      %s257 = smul.addr %s256, 8
      %s258 = scalar_lea.vmem %s2, %s257
      %p259 = pneg %p104
      %p260 = pneg %p101
      %p261 = pneg %p132
      %p262 = pneg %p129
      %p263 = scmp.lt.s32.totalorder %s21, 1
      %s264 = scalar_select %p263, %s21, 1
      %p265 = scmp.lt.s32.totalorder %s22, 0
      %s266 = scalar_select %p265, %s22, 0
      %s267 = sadd.s32 %s266, %s264
      %s268 = smul.addr %s267, 4
      %s269 = scalar_lea.vmem %s3, %s268
      %p270 = pneg %p160
      %p271 = pneg %p157
      %p272 = scmp.lt.s32.totalorder %s21, 1
      %s273 = scalar_select %p272, %s21, 1
      %p274 = scmp.lt.s32.totalorder %s22, 0
      %s275 = scalar_select %p274, %s22, 0
      %s276 = sadd.s32 %s275, %s273
      %s277 = smul.addr %s276, 8
      %s278 = scalar_lea.vmem %s4, %s277
      %p279 = pneg %p188
      %p280 = pneg %p185
      %p281 = scmp.lt.s32.totalorder %s21, 1
      %s282 = scalar_select %p281, %s21, 1
      %p283 = scmp.lt.s32.totalorder %s22, 0
      %s284 = scalar_select %p283, %s22, 0
      %s285 = sadd.s32 %s284, %s282
      %s286 = smul.addr %s285, 8
      %s287 = scalar_lea.vmem %s5, %s286
      %p288 = scmp.lt.s32.totalorder %s21, 1
      %s289 = scalar_select %p288, %s21, 1
      %s290 = smul.addr %s289, 4
      %s291 = scalar_lea.vmem %s0, %s290
      %p292 = scmp.lt.s32.totalorder %s21, 1
      %s293 = scalar_select %p292, %s21, 1
      %p294 = scmp.lt.s32.totalorder %s22, 0
      %s295 = scalar_select %p294, %s22, 0
      %s296 = smul.addr %s293, 9
      %s297 = sadd.s32 %s295, %s296
      %s298 = smul.addr %s297, 4
      %s299 = scalar_lea.vmem %s1, %s298
      %p300 = scmp.lt.s32.totalorder %s21, 1
      %s301 = scalar_select %p300, %s21, 1
      %s302 = smul.addr %s301, 8
      %s303 = scalar_lea.vmem %s2, %s302
      %p304 = scmp.lt.s32.totalorder %s21, 1
      %s305 = scalar_select %p304, %s21, 1
      %p306 = scmp.lt.s32.totalorder %s22, 0
      %s307 = scalar_select %p306, %s22, 0
      %s308 = sadd.s32 %s307, %s305
      %s309 = smul.addr %s308, 4
      %s310 = scalar_lea.vmem %s3, %s309
      %p311 = scmp.lt.s32.totalorder %s21, 1
      %s312 = scalar_select %p311, %s21, 1
      %p313 = scmp.lt.s32.totalorder %s22, 0
      %s314 = scalar_select %p313, %s22, 0
      %s315 = sadd.s32 %s314, %s312
      %s316 = smul.addr %s315, 8
      %s317 = scalar_lea.vmem %s4, %s316
      %p318 = scmp.lt.s32.totalorder %s21, 1
      %s319 = scalar_select %p318, %s21, 1
      %p320 = scmp.lt.s32.totalorder %s22, 0
      %s321 = scalar_select %p320, %s22, 0
      %s322 = sadd.s32 %s321, %s319
      %s323 = smul.addr %s322, 8
      %s324 = scalar_lea.vmem %s5, %s323
      %v326 = vld [vmem:[%s291] sm:$0xf]
      %v327 = vld [vmem:[%s299] sm:$0xf]
      %v328 = vld [vmem:[%s299 + $0x4] sm:$0xf]
      %v329 = vld [vmem:[%s299 + $0x8] sm:$0xf]
      %v330 = vld [vmem:[%s299 + $0xc] sm:$0xf]
      %v331 = vld [vmem:[%s299 + $0x10] sm:$0xf]
      %v332 = vld [vmem:[%s299 + $0x14] sm:$0xf]
      %v333 = vld [vmem:[%s299 + $0x18] sm:$0xf]
      %v334 = vld [vmem:[%s299 + $0x1c] sm:$0xf]
      %v335 = vld [vmem:[%s299 + $0x20] sm:$0xf]
      %v336 = vld [vmem:[%s303] sm:$0xff]
      %338 = vset.pattern.permute.xlu0 0
      %339 = vperm.xlu0 %338, %v336
      %v340 = vpop.permute.xlu0 %339
      %v351 = vunpack.c.l.b16 %v327
      %v352 = vunpack.c.l.b16 %v328
      %v353 = vunpack.c.l.b16 %v329
      %v354 = vunpack.c.l.b16 %v330
      %v355 = vunpack.c.l.b16 %v331
      %v356 = vunpack.c.l.b16 %v332
      %v357 = vunpack.c.l.b16 %v333
      %v358 = vunpack.c.l.b16 %v334
      %v359 = vunpack.c.l.b16 %v335
      %v360 = vpack.c.b16 %v352, %v351
      %v361 = vpack.c.b16 %v354, %v353
      %v362 = vpack.c.b16 %v356, %v355
      %v363 = vpack.c.b16 %v358, %v357
      %v364 = vpack.c.b16 %v359, %v359
      %vm369 = vcmask 588800
      %v371 = vsel %vm369, %v326, 0
      %vm373 = vcmask 1043456
      %v375 = vsel %vm373, %v364, 0
      %377 = vmatprep.subr.bf16.mxu0 0
      %378 = vmatpush1.bf16.msra.mxu0 %v360
      %379 = vmatprep.subr.bf16.mxu0 0
      %380 = vmatpush1.bf16.msra.mxu0 %v361
      %381 = vmatprep.subr.bf16.mxu0 0
      %382 = vmatpush1.bf16.msra.mxu0 %v362
      %383 = vmatprep.subr.bf16.mxu0 0
      %384 = vmatpush1.bf16.msra.mxu0 %v363
      %385 = vmatprep.subr.bf16.mxu0 0
      %386 = vmatpush1.bf16.msra.mxu0 %v375
      %387 = vmatprep.subr.bf16.mxu0 0
      %388 = vmatpush1.bf16.msra.mxu0 0
      %389 = vmatprep.subr.bf16.mxu0 0
      %390 = vmatpush1.bf16.msra.mxu0 0
      %391 = vmatprep.subr.bf16.mxu0 0
      %392 = vmatpush1.bf16.msra.mxu0 0
      %393 = vmatprep.subr.bf16.mxu0 0
      %394 = vmatpush1.bf16.msra.mxu0 0
      %395 = vmatprep.subr.bf16.mxu0 0
      %396 = vmatpush1.bf16.msra.mxu0 0
      %397 = vmatprep.subr.bf16.mxu0 0
      %398 = vmatpush1.bf16.msra.mxu0 0
      %399 = vmatprep.subr.bf16.mxu0 0
      %400 = vmatpush1.bf16.msra.mxu0 0
      %401 = vmatprep.subr.bf16.mxu0 0
      %402 = vmatpush1.bf16.msra.mxu0 0
      %403 = vmatprep.subr.bf16.mxu0 0
      %404 = vmatpush1.bf16.msra.mxu0 0
      %405 = vmatprep.subr.bf16.mxu0 0
      %406 = vmatpush1.bf16.msra.mxu0 0
      %407 = vmatprep.subr.bf16.mxu0 0
      %408 = vmatpush1.bf16.msra.mxu0 0
      %409 = vmatprep.mubr.bf16.mxu0 0
      %410 = vmatmul.mubr.bf16.gmra.mrb[0].mxu0 %v371
      %v411 = vpop.f32.mrb[0].mxu0
      %v412 = vadd.f32 %v340, %v411
      %v413 = vpop.f32.mrb[0].mxu0
      %v414 = vpop.f32.mrb[0].mxu0
      %v415 = vpop.f32.mrb[0].mxu0
      %416 = vdwg.mxu0
      %s417 = smul.u32 %s22, 128
      %s418 = ssub.s32 32, %s417
      %v419 = vlaneseq
      %v420 = vand.u32 %v419, 127
      %v421 = vstv %s418
      %vm422 = vcmp.lt.s32.totalorder %v420, %v421
      %v423 = vsel %vm422, %v412, 0.0
      %424 = vadd.xlane.f32.xlu0 %v423
      %v425 = vpop.xlane.xlu0 %424
      %v426 = vmul.f32 %v423, %v423
      %427 = vadd.xlane.f32.xlu0 %v426
      %v428 = vpop.xlane.xlu0 %427
      %429 = vst [vmem:[%s317] sm:$0xff] %v425
      %430 = vst [vmem:[%s324] sm:$0xff] %v428
      %v431 = vpack.c.bf16 %v423, %v423
      %432 = vst [vmem:[%s310] sm:$0xf] %v431
      %p433 = scmp.lt.s32.totalorder %s21, 1
      %s434 = scalar_select %p433, %s21, 1
      %p435 = scmp.lt.s32.totalorder %s22, 0
      %s436 = scalar_select %p435, %s22, 0
      %s437 = sadd.s32 %s436, %s434
      %s438 = smul.addr %s437, 4
      %s439 = scalar_lea.vmem %s3, %s438
      %p440 = scmp.lt.s32.totalorder %s21, 1
      %s441 = scalar_select %p440, %s21, 1
      %p442 = scmp.lt.s32.totalorder %s22, 0
      %s443 = scalar_select %p442, %s22, 0
      %s444 = sadd.s32 %s443, %s441
      %s445 = smul.addr %s444, 8
      %s446 = scalar_lea.vmem %s4, %s445
      %p447 = scmp.lt.s32.totalorder %s21, 1
      %s448 = scalar_select %p447, %s21, 1
      %p449 = scmp.lt.s32.totalorder %s22, 0
      %s450 = scalar_select %p449, %s22, 0
      %s451 = sadd.s32 %s450, %s448
      %s452 = smul.addr %s451, 8
      %s453 = scalar_lea.vmem %s5, %s452
      // Predicated region
      $region33: #{skip2net_forward.33} parent=31 // pred_check
        %p454 = pneg %p129
      $region34: #{skip2net_forward.33} parent=31 // pred_check_branch
        %456 = sbr.rel (%p454) target = $region36
      $region35: #{skip2net_forward.33} parent=31 // pred_region
        _
      $region36: #{skip2net_forward.33} parent=31 // pred_fallthru
        _
      // Predicated region
      $region37: #{skip2net_forward.33} parent=31 // pred_check
        %p457 = pneg %p157
      $region38: #{skip2net_forward.33} parent=31 // pred_check_branch
        %459 = sbr.rel (%p457) target = $region40
      $region39: #{skip2net_forward.33} parent=31 // pred_region
        _
      $region40: #{skip2net_forward.33} parent=31 // pred_fallthru
        _
      // Predicated region
      $region41: #{skip2net_forward.33} parent=31 // pred_check
        %p460 = pneg %p185
      $region42: #{skip2net_forward.33} parent=31 // pred_check_branch
        %462 = sbr.rel (%p460) target = $region44
      $region43: #{skip2net_forward.33} parent=31 // pred_region
        _
      $region44: #{skip2net_forward.33} parent=31 // pred_fallthru
        _
    $region32: #{skip2net_forward.33} parent=5 // pred_fallthru
      _
    %p463 = scmp.le.s32.totalorder 2, %s12
    // Predicated region
    $region45: #{skip2net_forward.33} parent=5 // pred_check
      %p464 = pneg %p463
    $region46: #{skip2net_forward.33} parent=5 // pred_check_branch
      %466 = sbr.rel (%p464) target = $region48
    $region47: #{skip2net_forward.33} parent=5 // pred_region
      %s467 = ssub.s32 %s12, 2
      // Predicated region
      $region49: #{skip2net_forward.33} parent=47 // pred_check
        %p468 = pneg %p135
      $region50: #{skip2net_forward.33} parent=47 // pred_check_branch
        %470 = sbr.rel (%p468) target = $region52
      $region51: #{skip2net_forward.33} parent=47 // pred_region
        %p471 = scmp.lt.s32.totalorder %s23, 1
        %s472 = scalar_select %p471, %s23, 1
        %p473 = scmp.lt.s32.totalorder %s24, 0
        %s474 = scalar_select %p473, %s24, 0
        %s475 = sadd.s32 %s474, %s472
        %s476 = smul.addr %s475, 4
        %s477 = scalar_lea.vmem %s3, %s476
      $region52: #{skip2net_forward.33} parent=47 // pred_fallthru
        _
      // Predicated region
      $region53: #{skip2net_forward.33} parent=47 // pred_check
        %p478 = pneg %p163
      $region54: #{skip2net_forward.33} parent=47 // pred_check_branch
        %480 = sbr.rel (%p478) target = $region56
      $region55: #{skip2net_forward.33} parent=47 // pred_region
        %p481 = scmp.lt.s32.totalorder %s23, 1
        %s482 = scalar_select %p481, %s23, 1
        %p483 = scmp.lt.s32.totalorder %s24, 0
        %s484 = scalar_select %p483, %s24, 0
        %s485 = sadd.s32 %s484, %s482
        %s486 = smul.addr %s485, 8
        %s487 = scalar_lea.vmem %s4, %s486
      $region56: #{skip2net_forward.33} parent=47 // pred_fallthru
        _
      // Predicated region
      $region57: #{skip2net_forward.33} parent=47 // pred_check
        %p488 = pneg %p191
      $region58: #{skip2net_forward.33} parent=47 // pred_check_branch
        %490 = sbr.rel (%p488) target = $region60
      $region59: #{skip2net_forward.33} parent=47 // pred_region
        %p491 = scmp.lt.s32.totalorder %s23, 1
        %s492 = scalar_select %p491, %s23, 1
        %p493 = scmp.lt.s32.totalorder %s24, 0
        %s494 = scalar_select %p493, %s24, 0
        %s495 = sadd.s32 %s494, %s492
        %s496 = smul.addr %s495, 8
        %s497 = scalar_lea.vmem %s5, %s496
      $region60: #{skip2net_forward.33} parent=47 // pred_fallthru
        _
    $region48: #{skip2net_forward.33} parent=5 // pred_fallthru
      _
  $region6: #{skip2net_forward.33} parent=0 // loop_footer
    %s16 = sadd.s32 1, %s12
  $region7: #{skip2net_forward.33} parent=0 // loop_footer_branch
    %11 = sbr.rel target = $region3
  $region8: #{skip2net_forward.33} parent=0 // loop_exit
    _

// kernel: skip2net_forward.38
$region0: #{skip2net_forward.38}
  #allocation0 [shape = 'u32[]', space=smem, size = 0x4, offset = 0x4, fixed_abs, tag = 'smem constant byte address 0x4 - core index']
  #allocation1 [shape = 'u32[144,128]{1,0:T(1,128)}', space=vmem, size = 0x12000, scoped, tag = 'internal scratch']
  %s0 = inlined_call_operand.vmem [shape: bf16[2,16,128], index: 0, kind: input, shape index: {}]
  %s1 = inlined_call_operand.vmem [shape: f32[2,16,1], index: 1, kind: input, shape index: {}]
  %s2 = inlined_call_operand.vmem [shape: f32[2,16,1], index: 2, kind: input, shape index: {}]
  %s3 = inlined_call_operand.vmem [shape: bf16[2,16,128], index: 3, kind: output, shape index: {}]
  %s4 = sld [smem:[#allocation0]]
  $region45: #{skip2net_forward.38} parent=0
    _
  %s6 = ssub.s32 1, %s4
  %s7 = scalar_select 0, %s6, %s4
  loop: start=0, step=1, limit=4
  $region2: #{skip2net_forward.38} parent=0 // loop_pre_header
    _
  $region3: #{skip2net_forward.38} parent=0 // loop_header
    %s9 = sphi 0, %s13
    %p10 = scmp.ge.s32.totalorder %s9, 4
    %s16 = sphi 0, %s28
    %s17 = sphi 0, %s24
    %s18 = sphi 0, %s16
    %s19 = sphi 0, %s17
    %s20 = sphi 0, %s18
    %s21 = sphi 0, %s19
    %s33 = sphi 0, %s35
    %s36 = sphi 0, %s33
    %s37 = sphi 0, %s36
    %s53 = sphi 0, %s37
    %s59 = sphi 0, %s61
    %s62 = sphi 0, %s59
    %s63 = sphi 0, %s62
    %s79 = sphi 0, %s63
    %s85 = sphi 0, %s87
    %s88 = sphi 0, %s85
    %s89 = sphi 0, %s88
    %s105 = sphi 0, %s89
    %s113 = sphi 0, %s115
    %s116 = sphi 0, %s113
    %s117 = sphi 0, %s116
    %s133 = sphi 0, %s117
  $region4: #{skip2net_forward.38} parent=0 // loop_header_branch
    %12 = sbr.rel (%p10) target = $region8
  $region5: #{skip2net_forward.38} parent=0 // loop_body
    %s14 = ssub.s32 %s9, 1
    %s15 = ssub.s32 %s9, 2
    %s22 = sadd.s32 1, %s17
    %p23 = scmp.ge.s32.totalorder %s22, 1
    %s24 = scalar_select %p23, 0, %s22
    %s25 = sadd.s32 1, %s16
    %s26 = scalar_select %p23, %s25, %s16
    %p27 = scmp.ge.s32.totalorder %s26, 2
    %s28 = scalar_select %p27, 0, %s26
    %s29 = ssub.s32 %s16, %s28
    %s30 = ssub.s32 %s17, %s24
    %s31 = sor.u32 %s29, %s30
    %p32 = scmp.eq.s32.totalorder %s31, 0
    %s34 = sadd.s32 %s33, 1
    %s35 = scalar_select %p32, %s33, %s34
    %p38 = pneg %p32
    %p39 = scmp.eq.s32.totalorder %s9, 1
    %p40 = por %p38, %p39
    %p41 = scmp.ne.s32.totalorder %s33, %s36
    %p42 = scmp.eq.s32.totalorder %s9, 0
    %p43 = por %p41, %p42
    %p44 = scmp.ne.s32.totalorder %s33, %s36
    %p45 = scmp.eq.s32.totalorder %s14, 1
    %p46 = por %p44, %p45
    %p47 = scmp.ne.s32.totalorder %s36, %s37
    %p48 = scmp.eq.s32.totalorder %s14, 0
    %p49 = por %p47, %p48
    %p50 = scmp.ne.s32.totalorder %s36, %s37
    %p51 = scmp.eq.s32.totalorder %s15, 1
    %p52 = por %p50, %p51
    %p54 = scmp.ne.s32.totalorder %s37, %s53
    %p55 = scmp.eq.s32.totalorder %s15, 0
    %p56 = por %p54, %p55
    %s57 = ssub.s32 %s16, %s28
    %p58 = scmp.eq.s32.totalorder %s57, 0
    %s60 = sadd.s32 %s59, 1
    %s61 = scalar_select %p58, %s59, %s60
    %p64 = pneg %p58
    %p65 = scmp.eq.s32.totalorder %s9, 1
    %p66 = por %p64, %p65
    %p67 = scmp.ne.s32.totalorder %s59, %s62
    %p68 = scmp.eq.s32.totalorder %s9, 0
    %p69 = por %p67, %p68
    %p70 = scmp.ne.s32.totalorder %s59, %s62
    %p71 = scmp.eq.s32.totalorder %s14, 1
    %p72 = por %p70, %p71
    %p73 = scmp.ne.s32.totalorder %s62, %s63
    %p74 = scmp.eq.s32.totalorder %s14, 0
    %p75 = por %p73, %p74
    %p76 = scmp.ne.s32.totalorder %s62, %s63
    %p77 = scmp.eq.s32.totalorder %s15, 1
    %p78 = por %p76, %p77
    %p80 = scmp.ne.s32.totalorder %s63, %s79
    %p81 = scmp.eq.s32.totalorder %s15, 0
    %p82 = por %p80, %p81
    %s83 = ssub.s32 %s16, %s28
    %p84 = scmp.eq.s32.totalorder %s83, 0
    %s86 = sadd.s32 %s85, 1
    %s87 = scalar_select %p84, %s85, %s86
    %p90 = pneg %p84
    %p91 = scmp.eq.s32.totalorder %s9, 1
    %p92 = por %p90, %p91
    %p93 = scmp.ne.s32.totalorder %s85, %s88
    %p94 = scmp.eq.s32.totalorder %s9, 0
    %p95 = por %p93, %p94
    %p96 = scmp.ne.s32.totalorder %s85, %s88
    %p97 = scmp.eq.s32.totalorder %s14, 1
    %p98 = por %p96, %p97
    %p99 = scmp.ne.s32.totalorder %s88, %s89
    %p100 = scmp.eq.s32.totalorder %s14, 0
    %p101 = por %p99, %p100
    %p102 = scmp.ne.s32.totalorder %s88, %s89
    %p103 = scmp.eq.s32.totalorder %s15, 1
    %p104 = por %p102, %p103
    %p106 = scmp.ne.s32.totalorder %s89, %s105
    %p107 = scmp.eq.s32.totalorder %s15, 0
    %p108 = por %p106, %p107
    %s109 = ssub.s32 %s16, %s28
    %s110 = ssub.s32 %s17, %s24
    %s111 = sor.u32 %s109, %s110
    %p112 = scmp.eq.s32.totalorder %s111, 0
    %s114 = sadd.s32 %s113, 1
    %s115 = scalar_select %p112, %s113, %s114
    %p118 = pneg %p112
    %p119 = scmp.eq.s32.totalorder %s9, 1
    %p120 = por %p118, %p119
    %p121 = scmp.ne.s32.totalorder %s113, %s116
    %p122 = scmp.eq.s32.totalorder %s9, 0
    %p123 = por %p121, %p122
    %p124 = scmp.ne.s32.totalorder %s113, %s116
    %p125 = scmp.eq.s32.totalorder %s14, 1
    %p126 = por %p124, %p125
    %p127 = scmp.ne.s32.totalorder %s116, %s117
    %p128 = scmp.eq.s32.totalorder %s14, 0
    %p129 = por %p127, %p128
    %p130 = scmp.ne.s32.totalorder %s116, %s117
    %p131 = scmp.eq.s32.totalorder %s15, 1
    %p132 = por %p130, %p131
    %p134 = scmp.ne.s32.totalorder %s117, %s133
    %p135 = scmp.eq.s32.totalorder %s15, 0
    %p136 = por %p134, %p135
    %p137 = scmp.le.s32.totalorder 1, %s9
    %p138 = scmp.lt.s32.totalorder %s9, 3
    %p139 = pnand %p137, %p138
    %p140 = pneg %p139
    // Predicated region
    $region9: #{skip2net_forward.38} parent=5 // pred_check
      _
    $region10: #{skip2net_forward.38} parent=5 // pred_check_branch
      %142 = sbr.rel (%p139) target = $region12
    $region11: #{skip2net_forward.38} parent=5 // pred_region
      %s143 = ssub.s32 %s9, 1
    $region12: #{skip2net_forward.38} parent=5 // pred_fallthru
      _
    %p144 = scmp.lt.s32.totalorder %s9, 2
    // Predicated region
    $region13: #{skip2net_forward.38} parent=5 // pred_check
      %p145 = pneg %p144
    $region14: #{skip2net_forward.38} parent=5 // pred_check_branch
      %147 = sbr.rel (%p145) target = $region16
    $region15: #{skip2net_forward.38} parent=5 // pred_region
      // Predicated region
      $region17: #{skip2net_forward.38} parent=15 // pred_check
        %p148 = pneg %p43
      $region18: #{skip2net_forward.38} parent=15 // pred_check_branch
        %150 = sbr.rel (%p148) target = $region20
      $region19: #{skip2net_forward.38} parent=15 // pred_region
        %p151 = scmp.lt.s32.totalorder %s16, 1
        %s152 = scalar_select %p151, %s16, 1
        %p153 = scmp.lt.s32.totalorder %s17, 0
        %s154 = scalar_select %p153, %s17, 0
        %s155 = smul.addr %s152, 2
        %s156 = sadd.s32 %s154, %s155
        %s157 = smul.addr %s156, 4
        %s158 = scalar_lea.vmem %s0, %s157
      $region20: #{skip2net_forward.38} parent=15 // pred_fallthru
        _
      // Predicated region
      $region21: #{skip2net_forward.38} parent=15 // pred_check
        %p159 = pneg %p69
      $region22: #{skip2net_forward.38} parent=15 // pred_check_branch
        %161 = sbr.rel (%p159) target = $region24
      $region23: #{skip2net_forward.38} parent=15 // pred_region
        %p162 = scmp.lt.s32.totalorder %s16, 1
        %s163 = scalar_select %p162, %s16, 1
        %s164 = smul.addr %s163, 2
        %s165 = smul.addr %s164, 8
        %s166 = scalar_lea.vmem %s1, %s165
      $region24: #{skip2net_forward.38} parent=15 // pred_fallthru
        _
      // Predicated region
      $region25: #{skip2net_forward.38} parent=15 // pred_check
        %p167 = pneg %p95
      $region26: #{skip2net_forward.38} parent=15 // pred_check_branch
        %169 = sbr.rel (%p167) target = $region28
      $region27: #{skip2net_forward.38} parent=15 // pred_region
        %p170 = scmp.lt.s32.totalorder %s16, 1
        %s171 = scalar_select %p170, %s16, 1
        %s172 = smul.addr %s171, 2
        %s173 = smul.addr %s172, 8
        %s174 = scalar_lea.vmem %s2, %s173
      $region28: #{skip2net_forward.38} parent=15 // pred_fallthru
        _
    $region16: #{skip2net_forward.38} parent=5 // pred_fallthru
      _
    %p175 = scmp.le.s32.totalorder 1, %s9
    %p176 = scmp.lt.s32.totalorder %s9, 3
    %p177 = pnand %p175, %p176
    %p178 = pneg %p177
    // Predicated region
    $region29: #{skip2net_forward.38} parent=5 // pred_check
      _
    $region30: #{skip2net_forward.38} parent=5 // pred_check_branch
      %180 = sbr.rel (%p177) target = $region32
    $region31: #{skip2net_forward.38} parent=5 // pred_region
      %s181 = ssub.s32 %s9, 1
      %p182 = scmp.lt.s32.totalorder %s18, 1
      %s183 = scalar_select %p182, %s18, 1
      %p184 = scmp.lt.s32.totalorder %s19, 0
      %s185 = scalar_select %p184, %s19, 0
      %s186 = smul.addr %s183, 2
      %s187 = sadd.s32 %s185, %s186
      %s188 = smul.addr %s187, 4
      %s189 = scalar_lea.vmem %s0, %s188
      %p190 = pneg %p49
      %p191 = pneg %p46
      %p192 = scmp.lt.s32.totalorder %s18, 1
      %s193 = scalar_select %p192, %s18, 1
      %s194 = smul.addr %s193, 2
      %s195 = smul.addr %s194, 8
      %s196 = scalar_lea.vmem %s1, %s195
      %p197 = pneg %p75
      %p198 = pneg %p72
      %p199 = scmp.lt.s32.totalorder %s18, 1
      %s200 = scalar_select %p199, %s18, 1
      %s201 = smul.addr %s200, 2
      %s202 = smul.addr %s201, 8
      %s203 = scalar_lea.vmem %s2, %s202
      %p204 = pneg %p101
      %p205 = pneg %p98
      %p206 = pneg %p129
      %p207 = pneg %p126
      %p208 = scmp.lt.s32.totalorder %s18, 1
      %s209 = scalar_select %p208, %s18, 1
      %p210 = scmp.lt.s32.totalorder %s19, 0
      %s211 = scalar_select %p210, %s19, 0
      %s212 = smul.addr %s209, 2
      %s213 = sadd.s32 %s211, %s212
      %s214 = smul.addr %s213, 4
      %s215 = scalar_lea.vmem %s3, %s214
      %p216 = scmp.lt.s32.totalorder %s18, 1
      %s217 = scalar_select %p216, %s18, 1
      %p218 = scmp.lt.s32.totalorder %s19, 0
      %s219 = scalar_select %p218, %s19, 0
      %s220 = smul.addr %s217, 2
      %s221 = sadd.s32 %s219, %s220
      %s222 = smul.addr %s221, 4
      %s223 = scalar_lea.vmem %s0, %s222
      %p224 = scmp.lt.s32.totalorder %s18, 1
      %s225 = scalar_select %p224, %s18, 1
      %s226 = smul.addr %s225, 2
      %s227 = smul.addr %s226, 8
      %s228 = scalar_lea.vmem %s1, %s227
      %p229 = scmp.lt.s32.totalorder %s18, 1
      %s230 = scalar_select %p229, %s18, 1
      %s231 = smul.addr %s230, 2
      %s232 = smul.addr %s231, 8
      %s233 = scalar_lea.vmem %s2, %s232
      %p234 = scmp.lt.s32.totalorder %s18, 1
      %s235 = scalar_select %p234, %s18, 1
      %p236 = scmp.lt.s32.totalorder %s19, 0
      %s237 = scalar_select %p236, %s19, 0
      %s238 = smul.addr %s235, 2
      %s239 = sadd.s32 %s237, %s238
      %s240 = smul.addr %s239, 4
      %s241 = scalar_lea.vmem %s3, %s240
      %v242 = vld [vmem:[%s223] sm:$0xf]
      %v243 = vld [vmem:[%s223 + $0x4] sm:$0xf]
      %v244 = vunpack.c.l.bf16 %v242
      %v245 = vunpack.c.l.bf16 %v243
      %v246 = vld [vmem:[%s228] sm:$0xff]
      %v247 = vld [vmem:[%s228 + $0x8] sm:$0xff]
      %249 = vset.pattern.permute.xlu0 0
      %250 = vperm.xlu0 %249, %v246
      %v251 = vpop.permute.xlu0 %250
      %254 = vset.pattern.permute.xlu0 0
      %255 = vperm.xlu0 %254, %v247
      %v256 = vpop.permute.xlu0 %255
      %v258 = vmul.f32 %v244, %v251
      %v259 = vmul.f32 %v245, %v256
      %v260 = vld [vmem:[%s233] sm:$0xff]
      %v261 = vld [vmem:[%s233 + $0x8] sm:$0xff]
      %263 = vset.pattern.permute.xlu0 0
      %264 = vperm.xlu0 %263, %v260
      %v265 = vpop.permute.xlu0 %264
      %268 = vset.pattern.permute.xlu0 0
      %269 = vperm.xlu0 %268, %v261
      %v270 = vpop.permute.xlu0 %269
      %v272 = vadd.f32 %v258, %v265
      %v273 = vadd.f32 %v259, %v270
      %v274 = vpack.c.bf16 %v273, %v272
      %v276 = vunpack.c.l.b16 %v274
      %v277 = vunpack.c.h.b16 %v274
      %v278 = vpack.c.b16 %v276, %v276
      %v279 = vpack.c.b16 %v277, %v277
      %282 = vst [vmem:[%s241] sm:$0xf] %v278
      %283 = vst [vmem:[%s241 + $0x4] sm:$0xf] %v279
      %p284 = scmp.lt.s32.totalorder %s18, 1
      %s285 = scalar_select %p284, %s18, 1
      %p286 = scmp.lt.s32.totalorder %s19, 0
      %s287 = scalar_select %p286, %s19, 0
      %s288 = smul.addr %s285, 2
      %s289 = sadd.s32 %s287, %s288
      %s290 = smul.addr %s289, 4
      %s291 = scalar_lea.vmem %s3, %s290
      // Predicated region
      $region33: #{skip2net_forward.38} parent=31 // pred_check
        %p292 = pneg %p126
      $region34: #{skip2net_forward.38} parent=31 // pred_check_branch
        %294 = sbr.rel (%p292) target = $region36
      $region35: #{skip2net_forward.38} parent=31 // pred_region
        _
      $region36: #{skip2net_forward.38} parent=31 // pred_fallthru
        _
    $region32: #{skip2net_forward.38} parent=5 // pred_fallthru
      _
    %p295 = scmp.le.s32.totalorder 2, %s9
    // Predicated region
    $region37: #{skip2net_forward.38} parent=5 // pred_check
      %p296 = pneg %p295
    $region38: #{skip2net_forward.38} parent=5 // pred_check_branch
      %298 = sbr.rel (%p296) target = $region40
    $region39: #{skip2net_forward.38} parent=5 // pred_region
      %s299 = ssub.s32 %s9, 2
      // Predicated region
      $region41: #{skip2net_forward.38} parent=39 // pred_check
        %p300 = pneg %p132
      $region42: #{skip2net_forward.38} parent=39 // pred_check_branch
        %302 = sbr.rel (%p300) target = $region44
      $region43: #{skip2net_forward.38} parent=39 // pred_region
        %p303 = scmp.lt.s32.totalorder %s20, 1
        %s304 = scalar_select %p303, %s20, 1
        %p305 = scmp.lt.s32.totalorder %s21, 0
        %s306 = scalar_select %p305, %s21, 0
        %s307 = smul.addr %s304, 2
        %s308 = sadd.s32 %s306, %s307
        %s309 = smul.addr %s308, 4
        %s310 = scalar_lea.vmem %s3, %s309
      $region44: #{skip2net_forward.38} parent=39 // pred_fallthru
        _
    $region40: #{skip2net_forward.38} parent=5 // pred_fallthru
      _
  $region6: #{skip2net_forward.38} parent=0 // loop_footer
    %s13 = sadd.s32 1, %s9
  $region7: #{skip2net_forward.38} parent=0 // loop_footer_branch
    %8 = sbr.rel target = $region3
  $region8: #{skip2net_forward.38} parent=0 // loop_exit
    _

// kernel: skip2net_forward.37
$region0: #{skip2net_forward.37}
  #allocation0 [shape = 'u32[]', space=smem, size = 0x4, offset = 0x4, fixed_abs, tag = 'smem constant byte address 0x4 - core index']
  #allocation1 [shape = 'u32[144,128]{1,0:T(1,128)}', space=vmem, size = 0x12000, scoped, tag = 'internal scratch']
  %s0 = inlined_call_operand.vmem [shape: bf16[2,16,128], index: 0, kind: input, shape index: {}]
  %s1 = inlined_call_operand.vmem [shape: f32[2,16,128], index: 1, kind: output, shape index: {0}]
  %s2 = inlined_call_operand.vmem [shape: f32[2,16,128], index: 2, kind: output, shape index: {1}]
  %3 = xla_tuple %s1, %s2
  %s4 = sld [smem:[#allocation0]]
  $region45: #{skip2net_forward.37} parent=0
    _
  %s6 = ssub.s32 1, %s4
  %s7 = scalar_select 0, %s6, %s4
  loop: start=0, step=1, limit=4
  $region2: #{skip2net_forward.37} parent=0 // loop_pre_header
    _
  $region3: #{skip2net_forward.37} parent=0 // loop_header
    %s9 = sphi 0, %s13
    %p10 = scmp.ge.s32.totalorder %s9, 4
    %s16 = sphi 0, %s28
    %s17 = sphi 0, %s24
    %s18 = sphi 0, %s16
    %s19 = sphi 0, %s17
    %s20 = sphi 0, %s18
    %s21 = sphi 0, %s19
    %s33 = sphi 0, %s35
    %s36 = sphi 0, %s33
    %s37 = sphi 0, %s36
    %s53 = sphi 0, %s37
    %s61 = sphi 0, %s63
    %s64 = sphi 0, %s61
    %s65 = sphi 0, %s64
    %s81 = sphi 0, %s65
    %s89 = sphi 0, %s91
    %s92 = sphi 0, %s89
    %s93 = sphi 0, %s92
    %s109 = sphi 0, %s93
  $region4: #{skip2net_forward.37} parent=0 // loop_header_branch
    %12 = sbr.rel (%p10) target = $region8
  $region5: #{skip2net_forward.37} parent=0 // loop_body
    %s14 = ssub.s32 %s9, 1
    %s15 = ssub.s32 %s9, 2
    %s22 = sadd.s32 1, %s17
    %p23 = scmp.ge.s32.totalorder %s22, 1
    %s24 = scalar_select %p23, 0, %s22
    %s25 = sadd.s32 1, %s16
    %s26 = scalar_select %p23, %s25, %s16
    %p27 = scmp.ge.s32.totalorder %s26, 2
    %s28 = scalar_select %p27, 0, %s26
    %s29 = ssub.s32 %s16, %s28
    %s30 = ssub.s32 %s17, %s24
    %s31 = sor.u32 %s29, %s30
    %p32 = scmp.eq.s32.totalorder %s31, 0
    %s34 = sadd.s32 %s33, 1
    %s35 = scalar_select %p32, %s33, %s34
    %p38 = pneg %p32
    %p39 = scmp.eq.s32.totalorder %s9, 1
    %p40 = por %p38, %p39
    %p41 = scmp.ne.s32.totalorder %s33, %s36
    %p42 = scmp.eq.s32.totalorder %s9, 0
    %p43 = por %p41, %p42
    %p44 = scmp.ne.s32.totalorder %s33, %s36
    %p45 = scmp.eq.s32.totalorder %s14, 1
    %p46 = por %p44, %p45
    %p47 = scmp.ne.s32.totalorder %s36, %s37
    %p48 = scmp.eq.s32.totalorder %s14, 0
    %p49 = por %p47, %p48
    %p50 = scmp.ne.s32.totalorder %s36, %s37
    %p51 = scmp.eq.s32.totalorder %s15, 1
    %p52 = por %p50, %p51
    %p54 = scmp.ne.s32.totalorder %s37, %s53
    %p55 = scmp.eq.s32.totalorder %s15, 0
    %p56 = por %p54, %p55
    %s57 = ssub.s32 %s16, %s28
    %s58 = ssub.s32 %s17, %s24
    %s59 = sor.u32 %s57, %s58
    %p60 = scmp.eq.s32.totalorder %s59, 0
    %s62 = sadd.s32 %s61, 1
    %s63 = scalar_select %p60, %s61, %s62
    %p66 = pneg %p60
    %p67 = scmp.eq.s32.totalorder %s9, 1
    %p68 = por %p66, %p67
    %p69 = scmp.ne.s32.totalorder %s61, %s64
    %p70 = scmp.eq.s32.totalorder %s9, 0
    %p71 = por %p69, %p70
    %p72 = scmp.ne.s32.totalorder %s61, %s64
    %p73 = scmp.eq.s32.totalorder %s14, 1
    %p74 = por %p72, %p73
    %p75 = scmp.ne.s32.totalorder %s64, %s65
    %p76 = scmp.eq.s32.totalorder %s14, 0
    %p77 = por %p75, %p76
    %p78 = scmp.ne.s32.totalorder %s64, %s65
    %p79 = scmp.eq.s32.totalorder %s15, 1
    %p80 = por %p78, %p79
    %p82 = scmp.ne.s32.totalorder %s65, %s81
    %p83 = scmp.eq.s32.totalorder %s15, 0
    %p84 = por %p82, %p83
    %s85 = ssub.s32 %s16, %s28
    %s86 = ssub.s32 %s17, %s24
    %s87 = sor.u32 %s85, %s86
    %p88 = scmp.eq.s32.totalorder %s87, 0
    %s90 = sadd.s32 %s89, 1
    %s91 = scalar_select %p88, %s89, %s90
    %p94 = pneg %p88
    %p95 = scmp.eq.s32.totalorder %s9, 1
    %p96 = por %p94, %p95
    %p97 = scmp.ne.s32.totalorder %s89, %s92
    %p98 = scmp.eq.s32.totalorder %s9, 0
    %p99 = por %p97, %p98
    %p100 = scmp.ne.s32.totalorder %s89, %s92
    %p101 = scmp.eq.s32.totalorder %s14, 1
    %p102 = por %p100, %p101
    %p103 = scmp.ne.s32.totalorder %s92, %s93
    %p104 = scmp.eq.s32.totalorder %s14, 0
    %p105 = por %p103, %p104
    %p106 = scmp.ne.s32.totalorder %s92, %s93
    %p107 = scmp.eq.s32.totalorder %s15, 1
    %p108 = por %p106, %p107
    %p110 = scmp.ne.s32.totalorder %s93, %s109
    %p111 = scmp.eq.s32.totalorder %s15, 0
    %p112 = por %p110, %p111
    %p113 = scmp.le.s32.totalorder 1, %s9
    %p114 = scmp.lt.s32.totalorder %s9, 3
    %p115 = pnand %p113, %p114
    %p116 = pneg %p115
    // Predicated region
    $region9: #{skip2net_forward.37} parent=5 // pred_check
      _
    $region10: #{skip2net_forward.37} parent=5 // pred_check_branch
      %118 = sbr.rel (%p115) target = $region12
    $region11: #{skip2net_forward.37} parent=5 // pred_region
      %s119 = ssub.s32 %s9, 1
    $region12: #{skip2net_forward.37} parent=5 // pred_fallthru
      _
    %p120 = scmp.lt.s32.totalorder %s9, 2
    // Predicated region
    $region13: #{skip2net_forward.37} parent=5 // pred_check
      %p121 = pneg %p120
    $region14: #{skip2net_forward.37} parent=5 // pred_check_branch
      %123 = sbr.rel (%p121) target = $region16
    $region15: #{skip2net_forward.37} parent=5 // pred_region
      // Predicated region
      $region17: #{skip2net_forward.37} parent=15 // pred_check
        %p124 = pneg %p43
      $region18: #{skip2net_forward.37} parent=15 // pred_check_branch
        %126 = sbr.rel (%p124) target = $region20
      $region19: #{skip2net_forward.37} parent=15 // pred_region
        %p127 = scmp.lt.s32.totalorder %s16, 1
        %s128 = scalar_select %p127, %s16, 1
        %p129 = scmp.lt.s32.totalorder %s17, 0
        %s130 = scalar_select %p129, %s17, 0
        %s131 = smul.addr %s128, 2
        %s132 = sadd.s32 %s130, %s131
        %s133 = smul.addr %s132, 4
        %s134 = scalar_lea.vmem %s0, %s133
      $region20: #{skip2net_forward.37} parent=15 // pred_fallthru
        _
    $region16: #{skip2net_forward.37} parent=5 // pred_fallthru
      _
    %p135 = scmp.le.s32.totalorder 1, %s9
    %p136 = scmp.lt.s32.totalorder %s9, 3
    %p137 = pnand %p135, %p136
    %p138 = pneg %p137
    // Predicated region
    $region21: #{skip2net_forward.37} parent=5 // pred_check
      _
    $region22: #{skip2net_forward.37} parent=5 // pred_check_branch
      %140 = sbr.rel (%p137) target = $region24
    $region23: #{skip2net_forward.37} parent=5 // pred_region
      %s141 = ssub.s32 %s9, 1
      %p142 = scmp.lt.s32.totalorder %s18, 1
      %s143 = scalar_select %p142, %s18, 1
      %p144 = scmp.lt.s32.totalorder %s19, 0
      %s145 = scalar_select %p144, %s19, 0
      %s146 = smul.addr %s143, 2
      %s147 = sadd.s32 %s145, %s146
      %s148 = smul.addr %s147, 4
      %s149 = scalar_lea.vmem %s0, %s148
      %p150 = pneg %p49
      %p151 = pneg %p46
      %p152 = pneg %p77
      %p153 = pneg %p74
      %p154 = scmp.lt.s32.totalorder %s18, 1
      %s155 = scalar_select %p154, %s18, 1
      %p156 = scmp.lt.s32.totalorder %s19, 0
      %s157 = scalar_select %p156, %s19, 0
      %s158 = smul.addr %s155, 2
      %s159 = sadd.s32 %s157, %s158
      %s160 = smul.addr %s159, 8
      %s161 = scalar_lea.vmem %s1, %s160
      %p162 = pneg %p105
      %p163 = pneg %p102
      %p164 = scmp.lt.s32.totalorder %s18, 1
      %s165 = scalar_select %p164, %s18, 1
      %p166 = scmp.lt.s32.totalorder %s19, 0
      %s167 = scalar_select %p166, %s19, 0
      %s168 = smul.addr %s165, 2
      %s169 = sadd.s32 %s167, %s168
      %s170 = smul.addr %s169, 8
      %s171 = scalar_lea.vmem %s2, %s170
      %p172 = scmp.lt.s32.totalorder %s18, 1
      %s173 = scalar_select %p172, %s18, 1
      %p174 = scmp.lt.s32.totalorder %s19, 0
      %s175 = scalar_select %p174, %s19, 0
      %s176 = smul.addr %s173, 2
      %s177 = sadd.s32 %s175, %s176
      %s178 = smul.addr %s177, 4
      %s179 = scalar_lea.vmem %s0, %s178
      %p180 = scmp.lt.s32.totalorder %s18, 1
      %s181 = scalar_select %p180, %s18, 1
      %p182 = scmp.lt.s32.totalorder %s19, 0
      %s183 = scalar_select %p182, %s19, 0
      %s184 = smul.addr %s181, 2
      %s185 = sadd.s32 %s183, %s184
      %s186 = smul.addr %s185, 8
      %s187 = scalar_lea.vmem %s1, %s186
      %p188 = scmp.lt.s32.totalorder %s18, 1
      %s189 = scalar_select %p188, %s18, 1
      %p190 = scmp.lt.s32.totalorder %s19, 0
      %s191 = scalar_select %p190, %s19, 0
      %s192 = smul.addr %s189, 2
      %s193 = sadd.s32 %s191, %s192
      %s194 = smul.addr %s193, 8
      %s195 = scalar_lea.vmem %s2, %s194
      %v196 = vld [vmem:[%s179] sm:$0xf]
      %v197 = vld [vmem:[%s179 + $0x4] sm:$0xf]
      %v198 = vunpack.c.l.bf16 %v196
      %v199 = vunpack.c.l.bf16 %v197
      %200 = vadd.xlane.f32.xlu0 %v198
      %v201 = vpop.xlane.xlu0 %200
      %202 = vadd.xlane.f32.xlu0 %v199
      %v203 = vpop.xlane.xlu0 %202
      %204 = vst [vmem:[%s187] sm:$0xff] %v201
      %205 = vst [vmem:[%s187 + $0x8] sm:$0xff] %v203
      %v206 = vmul.f32 %v198, %v198
      %v207 = vmul.f32 %v199, %v199
      %208 = vadd.xlane.f32.xlu0 %v206
      %v209 = vpop.xlane.xlu0 %208
      %210 = vadd.xlane.f32.xlu0 %v207
      %v211 = vpop.xlane.xlu0 %210
      %212 = vst [vmem:[%s195] sm:$0xff] %v209
      %213 = vst [vmem:[%s195 + $0x8] sm:$0xff] %v211
      %p214 = scmp.lt.s32.totalorder %s18, 1
      %s215 = scalar_select %p214, %s18, 1
      %p216 = scmp.lt.s32.totalorder %s19, 0
      %s217 = scalar_select %p216, %s19, 0
      %s218 = smul.addr %s215, 2
      %s219 = sadd.s32 %s217, %s218
      %s220 = smul.addr %s219, 8
      %s221 = scalar_lea.vmem %s1, %s220
      %p222 = scmp.lt.s32.totalorder %s18, 1
      %s223 = scalar_select %p222, %s18, 1
      %p224 = scmp.lt.s32.totalorder %s19, 0
      %s225 = scalar_select %p224, %s19, 0
      %s226 = smul.addr %s223, 2
      %s227 = sadd.s32 %s225, %s226
      %s228 = smul.addr %s227, 8
      %s229 = scalar_lea.vmem %s2, %s228
      // Predicated region
      $region25: #{skip2net_forward.37} parent=23 // pred_check
        %p230 = pneg %p74
      $region26: #{skip2net_forward.37} parent=23 // pred_check_branch
        %232 = sbr.rel (%p230) target = $region28
      $region27: #{skip2net_forward.37} parent=23 // pred_region
        _
      $region28: #{skip2net_forward.37} parent=23 // pred_fallthru
        _
      // Predicated region
      $region29: #{skip2net_forward.37} parent=23 // pred_check
        %p233 = pneg %p102
      $region30: #{skip2net_forward.37} parent=23 // pred_check_branch
        %235 = sbr.rel (%p233) target = $region32
      $region31: #{skip2net_forward.37} parent=23 // pred_region
        _
      $region32: #{skip2net_forward.37} parent=23 // pred_fallthru
        _
    $region24: #{skip2net_forward.37} parent=5 // pred_fallthru
      _
    %p236 = scmp.le.s32.totalorder 2, %s9
    // Predicated region
    $region33: #{skip2net_forward.37} parent=5 // pred_check
      %p237 = pneg %p236
    $region34: #{skip2net_forward.37} parent=5 // pred_check_branch
      %239 = sbr.rel (%p237) target = $region36
    $region35: #{skip2net_forward.37} parent=5 // pred_region
      %s240 = ssub.s32 %s9, 2
      // Predicated region
      $region37: #{skip2net_forward.37} parent=35 // pred_check
        %p241 = pneg %p80
      $region38: #{skip2net_forward.37} parent=35 // pred_check_branch
        %243 = sbr.rel (%p241) target = $region40
      $region39: #{skip2net_forward.37} parent=35 // pred_region
        %p244 = scmp.lt.s32.totalorder %s20, 1
        %s245 = scalar_select %p244, %s20, 1
        %p246 = scmp.lt.s32.totalorder %s21, 0
        %s247 = scalar_select %p246, %s21, 0
        %s248 = smul.addr %s245, 2
        %s249 = sadd.s32 %s247, %s248
        %s250 = smul.addr %s249, 8
        %s251 = scalar_lea.vmem %s1, %s250
      $region40: #{skip2net_forward.37} parent=35 // pred_fallthru
        _
      // Predicated region
      $region41: #{skip2net_forward.37} parent=35 // pred_check
        %p252 = pneg %p108
      $region42: #{skip2net_forward.37} parent=35 // pred_check_branch
        %254 = sbr.rel (%p252) target = $region44
      $region43: #{skip2net_forward.37} parent=35 // pred_region
        %p255 = scmp.lt.s32.totalorder %s20, 1
        %s256 = scalar_select %p255, %s20, 1
        %p257 = scmp.lt.s32.totalorder %s21, 0
        %s258 = scalar_select %p257, %s21, 0
        %s259 = smul.addr %s256, 2
        %s260 = sadd.s32 %s258, %s259
        %s261 = smul.addr %s260, 8
        %s262 = scalar_lea.vmem %s2, %s261
      $region44: #{skip2net_forward.37} parent=35 // pred_fallthru
        _
    $region36: #{skip2net_forward.37} parent=5 // pred_fallthru
      _
  $region6: #{skip2net_forward.37} parent=0 // loop_footer
    %s13 = sadd.s32 1, %s9
  $region7: #{skip2net_forward.37} parent=0 // loop_footer_branch
    %8 = sbr.rel target = $region3
  $region8: #{skip2net_forward.37} parent=0 // loop_exit
    _

// kernel: skip2net_forward.39
$region0: #{skip2net_forward.39}
  #allocation0 [shape = 'u32[]', space=smem, size = 0x4, offset = 0x4, fixed_abs, tag = 'smem constant byte address 0x4 - core index']
  #allocation1 [shape = 'u32[144,128]{1,0:T(1,128)}', space=vmem, size = 0x12000, scoped, tag = 'internal scratch']
  %s0 = inlined_call_operand.vmem [shape: bf16[2,8,144], index: 0, kind: input, shape index: {}]
  %s1 = inlined_call_operand.vmem [shape: bf16[2,144,128], index: 1, kind: input, shape index: {}]
  %s2 = inlined_call_operand.vmem [shape: f32[2,8,1], index: 2, kind: input, shape index: {}]
  %s3 = inlined_call_operand.vmem [shape: bf16[2,8,128], index: 3, kind: output, shape index: {0}]
  %s4 = inlined_call_operand.vmem [shape: f32[2,8,128], index: 4, kind: output, shape index: {1}]
  %s5 = inlined_call_operand.vmem [shape: f32[2,8,128], index: 5, kind: output, shape index: {2}]
  %6 = xla_tuple %s3, %s4, %s5
  %s7 = sld [smem:[#allocation0]]
  $region61: #{skip2net_forward.39} parent=0
    _
  %s9 = ssub.s32 1, %s7
  %s10 = scalar_select 0, %s9, %s7
  loop: start=0, step=1, limit=4
  $region2: #{skip2net_forward.39} parent=0 // loop_pre_header
    _
  $region3: #{skip2net_forward.39} parent=0 // loop_header
    %s12 = sphi 0, %s16
    %p13 = scmp.ge.s32.totalorder %s12, 4
    %s19 = sphi 0, %s31
    %s20 = sphi 0, %s27
    %s21 = sphi 0, %s19
    %s22 = sphi 0, %s20
    %s23 = sphi 0, %s21
    %s24 = sphi 0, %s22
    %s34 = sphi 0, %s36
    %s37 = sphi 0, %s34
    %s38 = sphi 0, %s37
    %s54 = sphi 0, %s38
    %s62 = sphi 0, %s64
    %s65 = sphi 0, %s62
    %s66 = sphi 0, %s65
    %s82 = sphi 0, %s66
    %s88 = sphi 0, %s90
    %s91 = sphi 0, %s88
    %s92 = sphi 0, %s91
    %s108 = sphi 0, %s92
    %s116 = sphi 0, %s118
    %s119 = sphi 0, %s116
    %s120 = sphi 0, %s119
    %s136 = sphi 0, %s120
    %s144 = sphi 0, %s146
    %s147 = sphi 0, %s144
    %s148 = sphi 0, %s147
    %s164 = sphi 0, %s148
    %s172 = sphi 0, %s174
    %s175 = sphi 0, %s172
    %s176 = sphi 0, %s175
    %s192 = sphi 0, %s176
  $region4: #{skip2net_forward.39} parent=0 // loop_header_branch
    %15 = sbr.rel (%p13) target = $region8
  $region5: #{skip2net_forward.39} parent=0 // loop_body
    %s17 = ssub.s32 %s12, 1
    %s18 = ssub.s32 %s12, 2
    %s25 = sadd.s32 1, %s20
    %p26 = scmp.ge.s32.totalorder %s25, 1
    %s27 = scalar_select %p26, 0, %s25
    %s28 = sadd.s32 1, %s19
    %s29 = scalar_select %p26, %s28, %s19
    %p30 = scmp.ge.s32.totalorder %s29, 2
    %s31 = scalar_select %p30, 0, %s29
    %s32 = ssub.s32 %s19, %s31
    %p33 = scmp.eq.s32.totalorder %s32, 0
    %s35 = sadd.s32 %s34, 1
    %s36 = scalar_select %p33, %s34, %s35
    %p39 = pneg %p33
    %p40 = scmp.eq.s32.totalorder %s12, 1
    %p41 = por %p39, %p40
    %p42 = scmp.ne.s32.totalorder %s34, %s37
    %p43 = scmp.eq.s32.totalorder %s12, 0
    %p44 = por %p42, %p43
    %p45 = scmp.ne.s32.totalorder %s34, %s37
    %p46 = scmp.eq.s32.totalorder %s17, 1
    %p47 = por %p45, %p46
    %p48 = scmp.ne.s32.totalorder %s37, %s38
    %p49 = scmp.eq.s32.totalorder %s17, 0
    %p50 = por %p48, %p49
    %p51 = scmp.ne.s32.totalorder %s37, %s38
    %p52 = scmp.eq.s32.totalorder %s18, 1
    %p53 = por %p51, %p52
    %p55 = scmp.ne.s32.totalorder %s38, %s54
    %p56 = scmp.eq.s32.totalorder %s18, 0
    %p57 = por %p55, %p56
    %s58 = ssub.s32 %s19, %s31
    %s59 = ssub.s32 %s20, %s27
    %s60 = sor.u32 %s58, %s59
    %p61 = scmp.eq.s32.totalorder %s60, 0
    %s63 = sadd.s32 %s62, 1
    %s64 = scalar_select %p61, %s62, %s63
    %p67 = pneg %p61
    %p68 = scmp.eq.s32.totalorder %s12, 1
    %p69 = por %p67, %p68
    %p70 = scmp.ne.s32.totalorder %s62, %s65
    %p71 = scmp.eq.s32.totalorder %s12, 0
    %p72 = por %p70, %p71
    %p73 = scmp.ne.s32.totalorder %s62, %s65
    %p74 = scmp.eq.s32.totalorder %s17, 1
    %p75 = por %p73, %p74
    %p76 = scmp.ne.s32.totalorder %s65, %s66
    %p77 = scmp.eq.s32.totalorder %s17, 0
    %p78 = por %p76, %p77
    %p79 = scmp.ne.s32.totalorder %s65, %s66
    %p80 = scmp.eq.s32.totalorder %s18, 1
    %p81 = por %p79, %p80
    %p83 = scmp.ne.s32.totalorder %s66, %s82
    %p84 = scmp.eq.s32.totalorder %s18, 0
    %p85 = por %p83, %p84
    %s86 = ssub.s32 %s19, %s31
    %p87 = scmp.eq.s32.totalorder %s86, 0
    %s89 = sadd.s32 %s88, 1
    %s90 = scalar_select %p87, %s88, %s89
    %p93 = pneg %p87
    %p94 = scmp.eq.s32.totalorder %s12, 1
    %p95 = por %p93, %p94
    %p96 = scmp.ne.s32.totalorder %s88, %s91
    %p97 = scmp.eq.s32.totalorder %s12, 0
    %p98 = por %p96, %p97
    %p99 = scmp.ne.s32.totalorder %s88, %s91
    %p100 = scmp.eq.s32.totalorder %s17, 1
    %p101 = por %p99, %p100
    %p102 = scmp.ne.s32.totalorder %s91, %s92
    %p103 = scmp.eq.s32.totalorder %s17, 0
    %p104 = por %p102, %p103
    %p105 = scmp.ne.s32.totalorder %s91, %s92
    %p106 = scmp.eq.s32.totalorder %s18, 1
    %p107 = por %p105, %p106
    %p109 = scmp.ne.s32.totalorder %s92, %s108
    %p110 = scmp.eq.s32.totalorder %s18, 0
    %p111 = por %p109, %p110
    %s112 = ssub.s32 %s19, %s31
    %s113 = ssub.s32 %s20, %s27
    %s114 = sor.u32 %s112, %s113
    %p115 = scmp.eq.s32.totalorder %s114, 0
    %s117 = sadd.s32 %s116, 1
    %s118 = scalar_select %p115, %s116, %s117
    %p121 = pneg %p115
    %p122 = scmp.eq.s32.totalorder %s12, 1
    %p123 = por %p121, %p122
    %p124 = scmp.ne.s32.totalorder %s116, %s119
    %p125 = scmp.eq.s32.totalorder %s12, 0
    %p126 = por %p124, %p125
    %p127 = scmp.ne.s32.totalorder %s116, %s119
    %p128 = scmp.eq.s32.totalorder %s17, 1
    %p129 = por %p127, %p128
    %p130 = scmp.ne.s32.totalorder %s119, %s120
    %p131 = scmp.eq.s32.totalorder %s17, 0
    %p132 = por %p130, %p131
    %p133 = scmp.ne.s32.totalorder %s119, %s120
    %p134 = scmp.eq.s32.totalorder %s18, 1
    %p135 = por %p133, %p134
    %p137 = scmp.ne.s32.totalorder %s120, %s136
    %p138 = scmp.eq.s32.totalorder %s18, 0
    %p139 = por %p137, %p138
    %s140 = ssub.s32 %s19, %s31
    %s141 = ssub.s32 %s20, %s27
    %s142 = sor.u32 %s140, %s141
    %p143 = scmp.eq.s32.totalorder %s142, 0
    %s145 = sadd.s32 %s144, 1
    %s146 = scalar_select %p143, %s144, %s145
    %p149 = pneg %p143
    %p150 = scmp.eq.s32.totalorder %s12, 1
    %p151 = por %p149, %p150
    %p152 = scmp.ne.s32.totalorder %s144, %s147
    %p153 = scmp.eq.s32.totalorder %s12, 0
    %p154 = por %p152, %p153
    %p155 = scmp.ne.s32.totalorder %s144, %s147
    %p156 = scmp.eq.s32.totalorder %s17, 1
    %p157 = por %p155, %p156
    %p158 = scmp.ne.s32.totalorder %s147, %s148
    %p159 = scmp.eq.s32.totalorder %s17, 0
    %p160 = por %p158, %p159
    %p161 = scmp.ne.s32.totalorder %s147, %s148
    %p162 = scmp.eq.s32.totalorder %s18, 1
    %p163 = por %p161, %p162
    %p165 = scmp.ne.s32.totalorder %s148, %s164
    %p166 = scmp.eq.s32.totalorder %s18, 0
    %p167 = por %p165, %p166
    %s168 = ssub.s32 %s19, %s31
    %s169 = ssub.s32 %s20, %s27
    %s170 = sor.u32 %s168, %s169
    %p171 = scmp.eq.s32.totalorder %s170, 0
    %s173 = sadd.s32 %s172, 1
    %s174 = scalar_select %p171, %s172, %s173
    %p177 = pneg %p171
    %p178 = scmp.eq.s32.totalorder %s12, 1
    %p179 = por %p177, %p178
    %p180 = scmp.ne.s32.totalorder %s172, %s175
    %p181 = scmp.eq.s32.totalorder %s12, 0
    %p182 = por %p180, %p181
    %p183 = scmp.ne.s32.totalorder %s172, %s175
    %p184 = scmp.eq.s32.totalorder %s17, 1
    %p185 = por %p183, %p184
    %p186 = scmp.ne.s32.totalorder %s175, %s176
    %p187 = scmp.eq.s32.totalorder %s17, 0
    %p188 = por %p186, %p187
    %p189 = scmp.ne.s32.totalorder %s175, %s176
    %p190 = scmp.eq.s32.totalorder %s18, 1
    %p191 = por %p189, %p190
    %p193 = scmp.ne.s32.totalorder %s176, %s192
    %p194 = scmp.eq.s32.totalorder %s18, 0
    %p195 = por %p193, %p194
    %p196 = scmp.le.s32.totalorder 1, %s12
    %p197 = scmp.lt.s32.totalorder %s12, 3
    %p198 = pnand %p196, %p197
    %p199 = pneg %p198
    // Predicated region
    $region9: #{skip2net_forward.39} parent=5 // pred_check
      _
    $region10: #{skip2net_forward.39} parent=5 // pred_check_branch
      %201 = sbr.rel (%p198) target = $region12
    $region11: #{skip2net_forward.39} parent=5 // pred_region
      %s202 = ssub.s32 %s12, 1
    $region12: #{skip2net_forward.39} parent=5 // pred_fallthru
      _
    %p203 = scmp.lt.s32.totalorder %s12, 2
    // Predicated region
    $region13: #{skip2net_forward.39} parent=5 // pred_check
      %p204 = pneg %p203
    $region14: #{skip2net_forward.39} parent=5 // pred_check_branch
      %206 = sbr.rel (%p204) target = $region16
    $region15: #{skip2net_forward.39} parent=5 // pred_region
      // Predicated region
      $region17: #{skip2net_forward.39} parent=15 // pred_check
        %p207 = pneg %p44
      $region18: #{skip2net_forward.39} parent=15 // pred_check_branch
        %209 = sbr.rel (%p207) target = $region20
      $region19: #{skip2net_forward.39} parent=15 // pred_region
        %p210 = scmp.lt.s32.totalorder %s19, 1
        %s211 = scalar_select %p210, %s19, 1
        %s212 = smul.addr %s211, 2
        %s213 = smul.addr %s212, 4
        %s214 = scalar_lea.vmem %s0, %s213
      $region20: #{skip2net_forward.39} parent=15 // pred_fallthru
        _
      // Predicated region
      $region21: #{skip2net_forward.39} parent=15 // pred_check
        %p215 = pneg %p72
      $region22: #{skip2net_forward.39} parent=15 // pred_check_branch
        %217 = sbr.rel (%p215) target = $region24
      $region23: #{skip2net_forward.39} parent=15 // pred_region
        %p218 = scmp.lt.s32.totalorder %s19, 1
        %s219 = scalar_select %p218, %s19, 1
        %p220 = scmp.lt.s32.totalorder %s20, 0
        %s221 = scalar_select %p220, %s20, 0
        %s222 = smul.addr %s219, 18
        %s223 = sadd.s32 %s221, %s222
        %s224 = smul.addr %s223, 4
        %s225 = scalar_lea.vmem %s1, %s224
      $region24: #{skip2net_forward.39} parent=15 // pred_fallthru
        _
      // Predicated region
      $region25: #{skip2net_forward.39} parent=15 // pred_check
        %p226 = pneg %p98
      $region26: #{skip2net_forward.39} parent=15 // pred_check_branch
        %228 = sbr.rel (%p226) target = $region28
      $region27: #{skip2net_forward.39} parent=15 // pred_region
        %p229 = scmp.lt.s32.totalorder %s19, 1
        %s230 = scalar_select %p229, %s19, 1
        %s231 = smul.addr %s230, 8
        %s232 = scalar_lea.vmem %s2, %s231
      $region28: #{skip2net_forward.39} parent=15 // pred_fallthru
        _
    $region16: #{skip2net_forward.39} parent=5 // pred_fallthru
      _
    %p233 = scmp.le.s32.totalorder 1, %s12
    %p234 = scmp.lt.s32.totalorder %s12, 3
    %p235 = pnand %p233, %p234
    %p236 = pneg %p235
    // Predicated region
    $region29: #{skip2net_forward.39} parent=5 // pred_check
      _
    $region30: #{skip2net_forward.39} parent=5 // pred_check_branch
      %238 = sbr.rel (%p235) target = $region32
    $region31: #{skip2net_forward.39} parent=5 // pred_region
      %s239 = ssub.s32 %s12, 1
      %p240 = scmp.lt.s32.totalorder %s21, 1
      %s241 = scalar_select %p240, %s21, 1
      %s242 = smul.addr %s241, 2
      %s243 = smul.addr %s242, 4
      %s244 = scalar_lea.vmem %s0, %s243
      %p245 = pneg %p50
      %p246 = pneg %p47
      %p247 = scmp.lt.s32.totalorder %s21, 1
      %s248 = scalar_select %p247, %s21, 1
      %p249 = scmp.lt.s32.totalorder %s22, 0
      %s250 = scalar_select %p249, %s22, 0
      %s251 = smul.addr %s248, 18
      %s252 = sadd.s32 %s250, %s251
      %s253 = smul.addr %s252, 4
      %s254 = scalar_lea.vmem %s1, %s253
      %p255 = pneg %p78
      %p256 = pneg %p75
      %p257 = scmp.lt.s32.totalorder %s21, 1
      %s258 = scalar_select %p257, %s21, 1
      %s259 = smul.addr %s258, 8
      %s260 = scalar_lea.vmem %s2, %s259
      %p261 = pneg %p104
      %p262 = pneg %p101
      %p263 = pneg %p132
      %p264 = pneg %p129
      %p265 = scmp.lt.s32.totalorder %s21, 1
      %s266 = scalar_select %p265, %s21, 1
      %p267 = scmp.lt.s32.totalorder %s22, 0
      %s268 = scalar_select %p267, %s22, 0
      %s269 = sadd.s32 %s268, %s266
      %s270 = smul.addr %s269, 4
      %s271 = scalar_lea.vmem %s3, %s270
      %p272 = pneg %p160
      %p273 = pneg %p157
      %p274 = scmp.lt.s32.totalorder %s21, 1
      %s275 = scalar_select %p274, %s21, 1
      %p276 = scmp.lt.s32.totalorder %s22, 0
      %s277 = scalar_select %p276, %s22, 0
      %s278 = sadd.s32 %s277, %s275
      %s279 = smul.addr %s278, 8
      %s280 = scalar_lea.vmem %s4, %s279
      %p281 = pneg %p188
      %p282 = pneg %p185
      %p283 = scmp.lt.s32.totalorder %s21, 1
      %s284 = scalar_select %p283, %s21, 1
      %p285 = scmp.lt.s32.totalorder %s22, 0
      %s286 = scalar_select %p285, %s22, 0
      %s287 = sadd.s32 %s286, %s284
      %s288 = smul.addr %s287, 8
      %s289 = scalar_lea.vmem %s5, %s288
      %p290 = scmp.lt.s32.totalorder %s21, 1
      %s291 = scalar_select %p290, %s21, 1
      %s292 = smul.addr %s291, 2
      %s293 = smul.addr %s292, 4
      %s294 = scalar_lea.vmem %s0, %s293
      %p295 = scmp.lt.s32.totalorder %s21, 1
      %s296 = scalar_select %p295, %s21, 1
      %p297 = scmp.lt.s32.totalorder %s22, 0
      %s298 = scalar_select %p297, %s22, 0
      %s299 = smul.addr %s296, 18
      %s300 = sadd.s32 %s298, %s299
      %s301 = smul.addr %s300, 4
      %s302 = scalar_lea.vmem %s1, %s301
      %p303 = scmp.lt.s32.totalorder %s21, 1
      %s304 = scalar_select %p303, %s21, 1
      %s305 = smul.addr %s304, 8
      %s306 = scalar_lea.vmem %s2, %s305
      %p307 = scmp.lt.s32.totalorder %s21, 1
      %s308 = scalar_select %p307, %s21, 1
      %p309 = scmp.lt.s32.totalorder %s22, 0
      %s310 = scalar_select %p309, %s22, 0
      %s311 = sadd.s32 %s310, %s308
      %s312 = smul.addr %s311, 4
      %s313 = scalar_lea.vmem %s3, %s312
      %p314 = scmp.lt.s32.totalorder %s21, 1
      %s315 = scalar_select %p314, %s21, 1
      %p316 = scmp.lt.s32.totalorder %s22, 0
      %s317 = scalar_select %p316, %s22, 0
      %s318 = sadd.s32 %s317, %s315
      %s319 = smul.addr %s318, 8
      %s320 = scalar_lea.vmem %s4, %s319
      %p321 = scmp.lt.s32.totalorder %s21, 1
      %s322 = scalar_select %p321, %s21, 1
      %p323 = scmp.lt.s32.totalorder %s22, 0
      %s324 = scalar_select %p323, %s22, 0
      %s325 = sadd.s32 %s324, %s322
      %s326 = smul.addr %s325, 8
      %s327 = scalar_lea.vmem %s5, %s326
      %v329 = vld [vmem:[%s294] sm:$0xff]
      %v330 = vld [vmem:[%s302] sm:$0xf]
      %v331 = vld [vmem:[%s302 + $0x4] sm:$0xf]
      %v332 = vld [vmem:[%s302 + $0x8] sm:$0xf]
      %v333 = vld [vmem:[%s302 + $0xc] sm:$0xf]
      %v334 = vld [vmem:[%s302 + $0x10] sm:$0xf]
      %v335 = vld [vmem:[%s302 + $0x14] sm:$0xf]
      %v336 = vld [vmem:[%s302 + $0x18] sm:$0xf]
      %v337 = vld [vmem:[%s302 + $0x1c] sm:$0xf]
      %v338 = vld [vmem:[%s302 + $0x20] sm:$0xf]
      %v339 = vld [vmem:[%s302 + $0x24] sm:$0xf]
      %v340 = vld [vmem:[%s302 + $0x28] sm:$0xf]
      %v341 = vld [vmem:[%s302 + $0x2c] sm:$0xf]
      %v342 = vld [vmem:[%s302 + $0x30] sm:$0xf]
      %v343 = vld [vmem:[%s302 + $0x34] sm:$0xf]
      %v344 = vld [vmem:[%s302 + $0x38] sm:$0xf]
      %v345 = vld [vmem:[%s302 + $0x3c] sm:$0xf]
      %v346 = vld [vmem:[%s302 + $0x40] sm:$0xf]
      %v347 = vld [vmem:[%s302 + $0x44] sm:$0xf]
      %v348 = vld [vmem:[%s306] sm:$0xff]
      %350 = vset.pattern.permute.xlu0 0
      %351 = vperm.xlu0 %350, %v348
      %v352 = vpop.permute.xlu0 %351
      %v355 = vunpack.c.l.b16 %v329
      %v356 = vunpack.c.h.b16 %v329
      %v357 = vpack.c.b16 %v355, %v355
      %v358 = vpack.c.b16 %v356, %v356
      %v378 = vunpack.c.l.b16 %v330
      %v379 = vunpack.c.l.b16 %v331
      %v380 = vunpack.c.l.b16 %v332
      %v381 = vunpack.c.l.b16 %v333
      %v382 = vunpack.c.l.b16 %v334
      %v383 = vunpack.c.l.b16 %v335
      %v384 = vunpack.c.l.b16 %v336
      %v385 = vunpack.c.l.b16 %v337
      %v386 = vunpack.c.l.b16 %v338
      %v387 = vunpack.c.l.b16 %v339
      %v388 = vunpack.c.l.b16 %v340
      %v389 = vunpack.c.l.b16 %v341
      %v390 = vunpack.c.l.b16 %v342
      %v391 = vunpack.c.l.b16 %v343
      %v392 = vunpack.c.l.b16 %v344
      %v393 = vunpack.c.l.b16 %v345
      %v394 = vunpack.c.l.b16 %v346
      %v395 = vunpack.c.l.b16 %v347
      %v396 = vpack.c.b16 %v379, %v378
      %v397 = vpack.c.b16 %v381, %v380
      %v398 = vpack.c.b16 %v383, %v382
      %v399 = vpack.c.b16 %v385, %v384
      %v400 = vpack.c.b16 %v387, %v386
      %v401 = vpack.c.b16 %v389, %v388
      %v402 = vpack.c.b16 %v391, %v390
      %v403 = vpack.c.b16 %v393, %v392
      %v404 = vpack.c.b16 %v395, %v394
      %vm414 = vcmask 130048
      %v416 = vsel %vm414, %v358, 0
      %418 = vmatprep.subr.bf16.mxu0 0
      %419 = vmatpush1.bf16.msra.mxu0 %v396
      %420 = vmatprep.subr.bf16.mxu0 0
      %421 = vmatpush1.bf16.msra.mxu0 %v397
      %422 = vmatprep.subr.bf16.mxu0 0
      %423 = vmatpush1.bf16.msra.mxu0 %v398
      %424 = vmatprep.subr.bf16.mxu0 0
      %425 = vmatpush1.bf16.msra.mxu0 %v399
      %426 = vmatprep.subr.bf16.mxu0 0
      %427 = vmatpush1.bf16.msra.mxu0 %v400
      %428 = vmatprep.subr.bf16.mxu0 0
      %429 = vmatpush1.bf16.msra.mxu0 %v401
      %430 = vmatprep.subr.bf16.mxu0 0
      %431 = vmatpush1.bf16.msra.mxu0 %v402
      %432 = vmatprep.subr.bf16.mxu0 0
      %433 = vmatpush1.bf16.msra.mxu0 %v403
      %434 = vmatprep.subr.bf16.mxu0 0
      %435 = vmatpush1.bf16.msra.mxu0 %v404
      %436 = vmatprep.subr.bf16.mxu0 0
      %437 = vmatpush1.bf16.msra.mxu0 0
      %438 = vmatprep.subr.bf16.mxu0 0
      %439 = vmatpush1.bf16.msra.mxu0 0
      %440 = vmatprep.subr.bf16.mxu0 0
      %441 = vmatpush1.bf16.msra.mxu0 0
      %442 = vmatprep.subr.bf16.mxu0 0
      %443 = vmatpush1.bf16.msra.mxu0 0
      %444 = vmatprep.subr.bf16.mxu0 0
      %445 = vmatpush1.bf16.msra.mxu0 0
      %446 = vmatprep.subr.bf16.mxu0 0
      %447 = vmatpush1.bf16.msra.mxu0 0
      %448 = vmatprep.subr.bf16.mxu0 0
      %449 = vmatpush1.bf16.msra.mxu0 0
      %450 = vmatprep.mubr.bf16.mxu0 %v416
      %451 = vmatmul.mubr.bf16.gmra.mrb[0].mxu0 %v357
      %v452 = vpop.f32.mrb[0].mxu0
      %v453 = vadd.f32 %v352, %v452
      %v454 = vpop.f32.mrb[0].mxu0
      %v455 = vpop.f32.mrb[0].mxu0
      %v456 = vpop.f32.mrb[0].mxu0
      %457 = vdwg.mxu0
      %458 = vadd.xlane.f32.xlu0 %v453
      %v459 = vpop.xlane.xlu0 %458
      %v460 = vmul.f32 %v453, %v453
      %461 = vadd.xlane.f32.xlu0 %v460
      %v462 = vpop.xlane.xlu0 %461
      %463 = vst [vmem:[%s320] sm:$0xff] %v459
      %464 = vst [vmem:[%s327] sm:$0xff] %v462
      %v465 = vpack.c.bf16 %v453, %v453
      %466 = vst [vmem:[%s313] sm:$0xf] %v465
      %p467 = scmp.lt.s32.totalorder %s21, 1
      %s468 = scalar_select %p467, %s21, 1
      %p469 = scmp.lt.s32.totalorder %s22, 0
      %s470 = scalar_select %p469, %s22, 0
      %s471 = sadd.s32 %s470, %s468
      %s472 = smul.addr %s471, 4
      %s473 = scalar_lea.vmem %s3, %s472
      %p474 = scmp.lt.s32.totalorder %s21, 1
      %s475 = scalar_select %p474, %s21, 1
      %p476 = scmp.lt.s32.totalorder %s22, 0
      %s477 = scalar_select %p476, %s22, 0
      %s478 = sadd.s32 %s477, %s475
      %s479 = smul.addr %s478, 8
      %s480 = scalar_lea.vmem %s4, %s479
      %p481 = scmp.lt.s32.totalorder %s21, 1
      %s482 = scalar_select %p481, %s21, 1
      %p483 = scmp.lt.s32.totalorder %s22, 0
      %s484 = scalar_select %p483, %s22, 0
      %s485 = sadd.s32 %s484, %s482
      %s486 = smul.addr %s485, 8
      %s487 = scalar_lea.vmem %s5, %s486
      // Predicated region
      $region33: #{skip2net_forward.39} parent=31 // pred_check
        %p488 = pneg %p129
      $region34: #{skip2net_forward.39} parent=31 // pred_check_branch
        %490 = sbr.rel (%p488) target = $region36
      $region35: #{skip2net_forward.39} parent=31 // pred_region
        _
      $region36: #{skip2net_forward.39} parent=31 // pred_fallthru
        _
      // Predicated region
      $region37: #{skip2net_forward.39} parent=31 // pred_check
        %p491 = pneg %p157
      $region38: #{skip2net_forward.39} parent=31 // pred_check_branch
        %493 = sbr.rel (%p491) target = $region40
      $region39: #{skip2net_forward.39} parent=31 // pred_region
        _
      $region40: #{skip2net_forward.39} parent=31 // pred_fallthru
        _
      // Predicated region
      $region41: #{skip2net_forward.39} parent=31 // pred_check
        %p494 = pneg %p185
      $region42: #{skip2net_forward.39} parent=31 // pred_check_branch
        %496 = sbr.rel (%p494) target = $region44
      $region43: #{skip2net_forward.39} parent=31 // pred_region
        _
      $region44: #{skip2net_forward.39} parent=31 // pred_fallthru
        _
    $region32: #{skip2net_forward.39} parent=5 // pred_fallthru
      _
    %p497 = scmp.le.s32.totalorder 2, %s12
    // Predicated region
    $region45: #{skip2net_forward.39} parent=5 // pred_check
      %p498 = pneg %p497
    $region46: #{skip2net_forward.39} parent=5 // pred_check_branch
      %500 = sbr.rel (%p498) target = $region48
    $region47: #{skip2net_forward.39} parent=5 // pred_region
      %s501 = ssub.s32 %s12, 2
      // Predicated region
      $region49: #{skip2net_forward.39} parent=47 // pred_check
        %p502 = pneg %p135
      $region50: #{skip2net_forward.39} parent=47 // pred_check_branch
        %504 = sbr.rel (%p502) target = $region52
      $region51: #{skip2net_forward.39} parent=47 // pred_region
        %p505 = scmp.lt.s32.totalorder %s23, 1
        %s506 = scalar_select %p505, %s23, 1
        %p507 = scmp.lt.s32.totalorder %s24, 0
        %s508 = scalar_select %p507, %s24, 0
        %s509 = sadd.s32 %s508, %s506
        %s510 = smul.addr %s509, 4
        %s511 = scalar_lea.vmem %s3, %s510
      $region52: #{skip2net_forward.39} parent=47 // pred_fallthru
        _
      // Predicated region
      $region53: #{skip2net_forward.39} parent=47 // pred_check
        %p512 = pneg %p163
      $region54: #{skip2net_forward.39} parent=47 // pred_check_branch
        %514 = sbr.rel (%p512) target = $region56
      $region55: #{skip2net_forward.39} parent=47 // pred_region
        %p515 = scmp.lt.s32.totalorder %s23, 1
        %s516 = scalar_select %p515, %s23, 1
        %p517 = scmp.lt.s32.totalorder %s24, 0
        %s518 = scalar_select %p517, %s24, 0
        %s519 = sadd.s32 %s518, %s516
        %s520 = smul.addr %s519, 8
        %s521 = scalar_lea.vmem %s4, %s520
      $region56: #{skip2net_forward.39} parent=47 // pred_fallthru
        _
      // Predicated region
      $region57: #{skip2net_forward.39} parent=47 // pred_check
        %p522 = pneg %p191
      $region58: #{skip2net_forward.39} parent=47 // pred_check_branch
        %524 = sbr.rel (%p522) target = $region60
      $region59: #{skip2net_forward.39} parent=47 // pred_region
        %p525 = scmp.lt.s32.totalorder %s23, 1
        %s526 = scalar_select %p525, %s23, 1
        %p527 = scmp.lt.s32.totalorder %s24, 0
        %s528 = scalar_select %p527, %s24, 0
        %s529 = sadd.s32 %s528, %s526
        %s530 = smul.addr %s529, 8
        %s531 = scalar_lea.vmem %s5, %s530
      $region60: #{skip2net_forward.39} parent=47 // pred_fallthru
        _
    $region48: #{skip2net_forward.39} parent=5 // pred_fallthru
      _
  $region6: #{skip2net_forward.39} parent=0 // loop_footer
    %s16 = sadd.s32 1, %s12
  $region7: #{skip2net_forward.39} parent=0 // loop_footer_branch
    %11 = sbr.rel target = $region3
  $region8: #{skip2net_forward.39} parent=0 // loop_exit
    _

// kernel: skip2net_forward.25
$region0: #{skip2net_forward.25}
  #allocation0 [shape = 'u32[]', space=smem, size = 0x4, offset = 0x4, fixed_abs, tag = 'smem constant byte address 0x4 - core index']
  #allocation1 [shape = 'u32[144,128]{1,0:T(1,128)}', space=vmem, size = 0x12000, scoped, tag = 'internal scratch']
  %s0 = inlined_call_operand.vmem [shape: bf16[2,8,8], index: 0, kind: input, shape index: {}]
  %s1 = inlined_call_operand.vmem [shape: bf16[2,8,512], index: 1, kind: input, shape index: {}]
  %s2 = inlined_call_operand.vmem [shape: f32[2,8,1], index: 2, kind: input, shape index: {}]
  %s3 = inlined_call_operand.vmem [shape: bf16[2,8,512], index: 3, kind: output, shape index: {0}]
  %s4 = inlined_call_operand.vmem [shape: f32[2,8,256], index: 4, kind: output, shape index: {1}]
  %s5 = inlined_call_operand.vmem [shape: f32[2,8,256], index: 5, kind: output, shape index: {2}]
  %6 = xla_tuple %s3, %s4, %s5
  %s7 = sld [smem:[#allocation0]]
  $region61: #{skip2net_forward.25} parent=0
    _
  %s9 = ssub.s32 1, %s7
  %s10 = scalar_select 0, %s9, %s7
  loop: start=0, step=1, limit=6
  $region2: #{skip2net_forward.25} parent=0 // loop_pre_header
    _
  $region3: #{skip2net_forward.25} parent=0 // loop_header
    %s12 = sphi 0, %s16
    %p13 = scmp.ge.s32.totalorder %s12, 6
    %s19 = sphi 0, %s31
    %s20 = sphi 0, %s27
    %s21 = sphi 0, %s19
    %s22 = sphi 0, %s20
    %s23 = sphi 0, %s21
    %s24 = sphi 0, %s22
    %s34 = sphi 0, %s36
    %s37 = sphi 0, %s34
    %s38 = sphi 0, %s37
    %s54 = sphi 0, %s38
    %s62 = sphi 0, %s64
    %s65 = sphi 0, %s62
    %s66 = sphi 0, %s65
    %s82 = sphi 0, %s66
    %s88 = sphi 0, %s90
    %s91 = sphi 0, %s88
    %s92 = sphi 0, %s91
    %s108 = sphi 0, %s92
    %s116 = sphi 0, %s118
    %s119 = sphi 0, %s116
    %s120 = sphi 0, %s119
    %s136 = sphi 0, %s120
    %s144 = sphi 0, %s146
    %s147 = sphi 0, %s144
    %s148 = sphi 0, %s147
    %s164 = sphi 0, %s148
    %s172 = sphi 0, %s174
    %s175 = sphi 0, %s172
    %s176 = sphi 0, %s175
    %s192 = sphi 0, %s176
  $region4: #{skip2net_forward.25} parent=0 // loop_header_branch
    %15 = sbr.rel (%p13) target = $region8
  $region5: #{skip2net_forward.25} parent=0 // loop_body
    %s17 = ssub.s32 %s12, 1
    %s18 = ssub.s32 %s12, 2
    %s25 = sadd.s32 1, %s20
    %p26 = scmp.ge.s32.totalorder %s25, 2
    %s27 = scalar_select %p26, 0, %s25
    %s28 = sadd.s32 1, %s19
    %s29 = scalar_select %p26, %s28, %s19
    %p30 = scmp.ge.s32.totalorder %s29, 2
    %s31 = scalar_select %p30, 0, %s29
    %s32 = ssub.s32 %s19, %s31
    %p33 = scmp.eq.s32.totalorder %s32, 0
    %s35 = sadd.s32 %s34, 1
    %s36 = scalar_select %p33, %s34, %s35
    %p39 = pneg %p33
    %p40 = scmp.eq.s32.totalorder %s12, 3
    %p41 = por %p39, %p40
    %p42 = scmp.ne.s32.totalorder %s34, %s37
    %p43 = scmp.eq.s32.totalorder %s12, 0
    %p44 = por %p42, %p43
    %p45 = scmp.ne.s32.totalorder %s34, %s37
    %p46 = scmp.eq.s32.totalorder %s17, 3
    %p47 = por %p45, %p46
    %p48 = scmp.ne.s32.totalorder %s37, %s38
    %p49 = scmp.eq.s32.totalorder %s17, 0
    %p50 = por %p48, %p49
    %p51 = scmp.ne.s32.totalorder %s37, %s38
    %p52 = scmp.eq.s32.totalorder %s18, 3
    %p53 = por %p51, %p52
    %p55 = scmp.ne.s32.totalorder %s38, %s54
    %p56 = scmp.eq.s32.totalorder %s18, 0
    %p57 = por %p55, %p56
    %s58 = ssub.s32 %s19, %s31
    %s59 = ssub.s32 %s20, %s27
    %s60 = sor.u32 %s58, %s59
    %p61 = scmp.eq.s32.totalorder %s60, 0
    %s63 = sadd.s32 %s62, 1
    %s64 = scalar_select %p61, %s62, %s63
    %p67 = pneg %p61
    %p68 = scmp.eq.s32.totalorder %s12, 3
    %p69 = por %p67, %p68
    %p70 = scmp.ne.s32.totalorder %s62, %s65
    %p71 = scmp.eq.s32.totalorder %s12, 0
    %p72 = por %p70, %p71
    %p73 = scmp.ne.s32.totalorder %s62, %s65
    %p74 = scmp.eq.s32.totalorder %s17, 3
    %p75 = por %p73, %p74
    %p76 = scmp.ne.s32.totalorder %s65, %s66
    %p77 = scmp.eq.s32.totalorder %s17, 0
    %p78 = por %p76, %p77
    %p79 = scmp.ne.s32.totalorder %s65, %s66
    %p80 = scmp.eq.s32.totalorder %s18, 3
    %p81 = por %p79, %p80
    %p83 = scmp.ne.s32.totalorder %s66, %s82
    %p84 = scmp.eq.s32.totalorder %s18, 0
    %p85 = por %p83, %p84
    %s86 = ssub.s32 %s19, %s31
    %p87 = scmp.eq.s32.totalorder %s86, 0
    %s89 = sadd.s32 %s88, 1
    %s90 = scalar_select %p87, %s88, %s89
    %p93 = pneg %p87
    %p94 = scmp.eq.s32.totalorder %s12, 3
    %p95 = por %p93, %p94
    %p96 = scmp.ne.s32.totalorder %s88, %s91
    %p97 = scmp.eq.s32.totalorder %s12, 0
    %p98 = por %p96, %p97
    %p99 = scmp.ne.s32.totalorder %s88, %s91
    %p100 = scmp.eq.s32.totalorder %s17, 3
    %p101 = por %p99, %p100
    %p102 = scmp.ne.s32.totalorder %s91, %s92
    %p103 = scmp.eq.s32.totalorder %s17, 0
    %p104 = por %p102, %p103
    %p105 = scmp.ne.s32.totalorder %s91, %s92
    %p106 = scmp.eq.s32.totalorder %s18, 3
    %p107 = por %p105, %p106
    %p109 = scmp.ne.s32.totalorder %s92, %s108
    %p110 = scmp.eq.s32.totalorder %s18, 0
    %p111 = por %p109, %p110
    %s112 = ssub.s32 %s19, %s31
    %s113 = ssub.s32 %s20, %s27
    %s114 = sor.u32 %s112, %s113
    %p115 = scmp.eq.s32.totalorder %s114, 0
    %s117 = sadd.s32 %s116, 1
    %s118 = scalar_select %p115, %s116, %s117
    %p121 = pneg %p115
    %p122 = scmp.eq.s32.totalorder %s12, 3
    %p123 = por %p121, %p122
    %p124 = scmp.ne.s32.totalorder %s116, %s119
    %p125 = scmp.eq.s32.totalorder %s12, 0
    %p126 = por %p124, %p125
    %p127 = scmp.ne.s32.totalorder %s116, %s119
    %p128 = scmp.eq.s32.totalorder %s17, 3
    %p129 = por %p127, %p128
    %p130 = scmp.ne.s32.totalorder %s119, %s120
    %p131 = scmp.eq.s32.totalorder %s17, 0
    %p132 = por %p130, %p131
    %p133 = scmp.ne.s32.totalorder %s119, %s120
    %p134 = scmp.eq.s32.totalorder %s18, 3
    %p135 = por %p133, %p134
    %p137 = scmp.ne.s32.totalorder %s120, %s136
    %p138 = scmp.eq.s32.totalorder %s18, 0
    %p139 = por %p137, %p138
    %s140 = ssub.s32 %s19, %s31
    %s141 = ssub.s32 %s20, %s27
    %s142 = sor.u32 %s140, %s141
    %p143 = scmp.eq.s32.totalorder %s142, 0
    %s145 = sadd.s32 %s144, 1
    %s146 = scalar_select %p143, %s144, %s145
    %p149 = pneg %p143
    %p150 = scmp.eq.s32.totalorder %s12, 3
    %p151 = por %p149, %p150
    %p152 = scmp.ne.s32.totalorder %s144, %s147
    %p153 = scmp.eq.s32.totalorder %s12, 0
    %p154 = por %p152, %p153
    %p155 = scmp.ne.s32.totalorder %s144, %s147
    %p156 = scmp.eq.s32.totalorder %s17, 3
    %p157 = por %p155, %p156
    %p158 = scmp.ne.s32.totalorder %s147, %s148
    %p159 = scmp.eq.s32.totalorder %s17, 0
    %p160 = por %p158, %p159
    %p161 = scmp.ne.s32.totalorder %s147, %s148
    %p162 = scmp.eq.s32.totalorder %s18, 3
    %p163 = por %p161, %p162
    %p165 = scmp.ne.s32.totalorder %s148, %s164
    %p166 = scmp.eq.s32.totalorder %s18, 0
    %p167 = por %p165, %p166
    %s168 = ssub.s32 %s19, %s31
    %s169 = ssub.s32 %s20, %s27
    %s170 = sor.u32 %s168, %s169
    %p171 = scmp.eq.s32.totalorder %s170, 0
    %s173 = sadd.s32 %s172, 1
    %s174 = scalar_select %p171, %s172, %s173
    %p177 = pneg %p171
    %p178 = scmp.eq.s32.totalorder %s12, 3
    %p179 = por %p177, %p178
    %p180 = scmp.ne.s32.totalorder %s172, %s175
    %p181 = scmp.eq.s32.totalorder %s12, 0
    %p182 = por %p180, %p181
    %p183 = scmp.ne.s32.totalorder %s172, %s175
    %p184 = scmp.eq.s32.totalorder %s17, 3
    %p185 = por %p183, %p184
    %p186 = scmp.ne.s32.totalorder %s175, %s176
    %p187 = scmp.eq.s32.totalorder %s17, 0
    %p188 = por %p186, %p187
    %p189 = scmp.ne.s32.totalorder %s175, %s176
    %p190 = scmp.eq.s32.totalorder %s18, 3
    %p191 = por %p189, %p190
    %p193 = scmp.ne.s32.totalorder %s176, %s192
    %p194 = scmp.eq.s32.totalorder %s18, 0
    %p195 = por %p193, %p194
    %p196 = scmp.le.s32.totalorder 1, %s12
    %p197 = scmp.lt.s32.totalorder %s12, 5
    %p198 = pnand %p196, %p197
    %p199 = pneg %p198
    // Predicated region
    $region9: #{skip2net_forward.25} parent=5 // pred_check
      _
    $region10: #{skip2net_forward.25} parent=5 // pred_check_branch
      %201 = sbr.rel (%p198) target = $region12
    $region11: #{skip2net_forward.25} parent=5 // pred_region
      %s202 = ssub.s32 %s12, 1
    $region12: #{skip2net_forward.25} parent=5 // pred_fallthru
      _
    %p203 = scmp.lt.s32.totalorder %s12, 4
    // Predicated region
    $region13: #{skip2net_forward.25} parent=5 // pred_check
      %p204 = pneg %p203
    $region14: #{skip2net_forward.25} parent=5 // pred_check_branch
      %206 = sbr.rel (%p204) target = $region16
    $region15: #{skip2net_forward.25} parent=5 // pred_region
      // Predicated region
      $region17: #{skip2net_forward.25} parent=15 // pred_check
        %p207 = pneg %p44
      $region18: #{skip2net_forward.25} parent=15 // pred_check_branch
        %209 = sbr.rel (%p207) target = $region20
      $region19: #{skip2net_forward.25} parent=15 // pred_region
        %p210 = scmp.lt.s32.totalorder %s19, 1
        %s211 = scalar_select %p210, %s19, 1
        %s212 = smul.addr %s211, 4
        %s213 = scalar_lea.vmem %s0, %s212
      $region20: #{skip2net_forward.25} parent=15 // pred_fallthru
        _
      // Predicated region
      $region21: #{skip2net_forward.25} parent=15 // pred_check
        %p214 = pneg %p72
      $region22: #{skip2net_forward.25} parent=15 // pred_check_branch
        %216 = sbr.rel (%p214) target = $region24
      $region23: #{skip2net_forward.25} parent=15 // pred_region
        %s217 = smul.u32 2, %s20
        %p218 = scmp.lt.s32.totalorder %s19, 1
        %s219 = scalar_select %p218, %s19, 1
        %p220 = scmp.lt.s32.totalorder %s217, 3
        %s221 = scalar_select %p220, %s217, 3
        %s222 = smul.addr %s219, 4
        %s223 = sadd.s32 %s221, %s222
        %s224 = smul.addr %s223, 4
        %s225 = scalar_lea.vmem %s1, %s224
        %s226 = smul.u32 2, %s20
      $region24: #{skip2net_forward.25} parent=15 // pred_fallthru
        _
      // Predicated region
      $region25: #{skip2net_forward.25} parent=15 // pred_check
        %p227 = pneg %p98
      $region26: #{skip2net_forward.25} parent=15 // pred_check_branch
        %229 = sbr.rel (%p227) target = $region28
      $region27: #{skip2net_forward.25} parent=15 // pred_region
        %p230 = scmp.lt.s32.totalorder %s19, 1
        %s231 = scalar_select %p230, %s19, 1
        %s232 = smul.addr %s231, 8
        %s233 = scalar_lea.vmem %s2, %s232
      $region28: #{skip2net_forward.25} parent=15 // pred_fallthru
        _
    $region16: #{skip2net_forward.25} parent=5 // pred_fallthru
      _
    %p234 = scmp.le.s32.totalorder 1, %s12
    %p235 = scmp.lt.s32.totalorder %s12, 5
    %p236 = pnand %p234, %p235
    %p237 = pneg %p236
    // Predicated region
    $region29: #{skip2net_forward.25} parent=5 // pred_check
      _
    $region30: #{skip2net_forward.25} parent=5 // pred_check_branch
      %239 = sbr.rel (%p236) target = $region32
    $region31: #{skip2net_forward.25} parent=5 // pred_region
      %s240 = ssub.s32 %s12, 1
      %p241 = scmp.lt.s32.totalorder %s21, 1
      %s242 = scalar_select %p241, %s21, 1
      %s243 = smul.addr %s242, 4
      %s244 = scalar_lea.vmem %s0, %s243
      %p245 = pneg %p50
      %p246 = pneg %p47
      %s247 = smul.u32 2, %s22
      %p248 = scmp.lt.s32.totalorder %s21, 1
      %s249 = scalar_select %p248, %s21, 1
      %p250 = scmp.lt.s32.totalorder %s247, 3
      %s251 = scalar_select %p250, %s247, 3
      %s252 = smul.addr %s249, 4
      %s253 = sadd.s32 %s251, %s252
      %s254 = smul.addr %s253, 4
      %s255 = scalar_lea.vmem %s1, %s254
      %p256 = pneg %p78
      %p257 = pneg %p75
      %p258 = scmp.lt.s32.totalorder %s21, 1
      %s259 = scalar_select %p258, %s21, 1
      %s260 = smul.addr %s259, 8
      %s261 = scalar_lea.vmem %s2, %s260
      %p262 = pneg %p104
      %p263 = pneg %p101
      %p264 = pneg %p132
      %p265 = pneg %p129
      %s266 = smul.u32 2, %s22
      %p267 = scmp.lt.s32.totalorder %s21, 1
      %s268 = scalar_select %p267, %s21, 1
      %p269 = scmp.lt.s32.totalorder %s266, 3
      %s270 = scalar_select %p269, %s266, 3
      %s271 = smul.addr %s268, 4
      %s272 = sadd.s32 %s270, %s271
      %s273 = smul.addr %s272, 4
      %s274 = scalar_lea.vmem %s3, %s273
      %p275 = pneg %p160
      %p276 = pneg %p157
      %p277 = scmp.lt.s32.totalorder %s21, 1
      %s278 = scalar_select %p277, %s21, 1
      %p279 = scmp.lt.s32.totalorder %s22, 1
      %s280 = scalar_select %p279, %s22, 1
      %s281 = smul.addr %s278, 2
      %s282 = sadd.s32 %s280, %s281
      %s283 = smul.addr %s282, 8
      %s284 = scalar_lea.vmem %s4, %s283
      %p285 = pneg %p188
      %p286 = pneg %p185
      %p287 = scmp.lt.s32.totalorder %s21, 1
      %s288 = scalar_select %p287, %s21, 1
      %p289 = scmp.lt.s32.totalorder %s22, 1
      %s290 = scalar_select %p289, %s22, 1
      %s291 = smul.addr %s288, 2
      %s292 = sadd.s32 %s290, %s291
      %s293 = smul.addr %s292, 8
      %s294 = scalar_lea.vmem %s5, %s293
      %p295 = scmp.lt.s32.totalorder %s21, 1
      %s296 = scalar_select %p295, %s21, 1
      %s297 = smul.addr %s296, 4
      %s298 = scalar_lea.vmem %s0, %s297
      %s299 = smul.u32 2, %s22
      %p300 = scmp.lt.s32.totalorder %s21, 1
      %s301 = scalar_select %p300, %s21, 1
      %p302 = scmp.lt.s32.totalorder %s299, 3
      %s303 = scalar_select %p302, %s299, 3
      %s304 = smul.addr %s301, 4
      %s305 = sadd.s32 %s303, %s304
      %s306 = smul.addr %s305, 4
      %s307 = scalar_lea.vmem %s1, %s306
      %s308 = smul.u32 2, %s22
      %p309 = scmp.lt.s32.totalorder %s21, 1
      %s310 = scalar_select %p309, %s21, 1
      %s311 = smul.addr %s310, 8
      %s312 = scalar_lea.vmem %s2, %s311
      %s313 = smul.u32 2, %s22
      %p314 = scmp.lt.s32.totalorder %s21, 1
      %s315 = scalar_select %p314, %s21, 1
      %p316 = scmp.lt.s32.totalorder %s313, 3
      %s317 = scalar_select %p316, %s313, 3
      %s318 = smul.addr %s315, 4
      %s319 = sadd.s32 %s317, %s318
      %s320 = smul.addr %s319, 4
      %s321 = scalar_lea.vmem %s3, %s320
      %s322 = smul.u32 2, %s22
      %p323 = scmp.lt.s32.totalorder %s21, 1
      %s324 = scalar_select %p323, %s21, 1
      %p325 = scmp.lt.s32.totalorder %s22, 1
      %s326 = scalar_select %p325, %s22, 1
      %s327 = smul.addr %s324, 2
      %s328 = sadd.s32 %s326, %s327
      %s329 = smul.addr %s328, 8
      %s330 = scalar_lea.vmem %s4, %s329
      %p331 = scmp.lt.s32.totalorder %s21, 1
      %s332 = scalar_select %p331, %s21, 1
      %p333 = scmp.lt.s32.totalorder %s22, 1
      %s334 = scalar_select %p333, %s22, 1
      %s335 = smul.addr %s332, 2
      %s336 = sadd.s32 %s334, %s335
      %s337 = smul.addr %s336, 8
      %s338 = scalar_lea.vmem %s5, %s337
      %v340 = vld [vmem:[%s298] sm:$0xf]
      %v341 = vld [vmem:[%s307] sm:$0xff]
      %v342 = vld [vmem:[%s312] sm:$0xff]
      %344 = vset.pattern.permute.xlu0 0
      %345 = vperm.xlu0 %344, %v342
      %v346 = vpop.permute.xlu0 %345
      %v349 = vunpack.c.l.b16 %v341
      %v350 = vunpack.c.h.b16 %v341
      %v351 = vpack.c.b16 %v349, %v349
      %v352 = vpack.c.b16 %v350, %v350
      %vm353 = vcmask 64512
      %v355 = vsel %vm353, %v340, 0
      %vm357 = vcmask 1043456
      %v359 = vsel %vm357, %v351, 0
      %v362 = vsel %vm357, %v352, 0
      %364 = vmatprep.subr.bf16.mxu0 %v362
      %365 = vmatpush1.bf16.msra.mxu0 %v359
      %366 = vmatprep.subr.bf16.mxu0 0
      %367 = vmatpush1.bf16.msra.mxu0 0
      %368 = vmatprep.subr.bf16.mxu0 0
      %369 = vmatpush1.bf16.msra.mxu0 0
      %370 = vmatprep.subr.bf16.mxu0 0
      %371 = vmatpush1.bf16.msra.mxu0 0
      %372 = vmatprep.subr.bf16.mxu0 0
      %373 = vmatpush1.bf16.msra.mxu0 0
      %374 = vmatprep.subr.bf16.mxu0 0
      %375 = vmatpush1.bf16.msra.mxu0 0
      %376 = vmatprep.subr.bf16.mxu0 0
      %377 = vmatpush1.bf16.msra.mxu0 0
      %378 = vmatprep.subr.bf16.mxu0 0
      %379 = vmatpush1.bf16.msra.mxu0 0
      %380 = vmatprep.subr.bf16.mxu0 0
      %381 = vmatpush1.bf16.msra.mxu0 0
      %382 = vmatprep.subr.bf16.mxu0 0
      %383 = vmatpush1.bf16.msra.mxu0 0
      %384 = vmatprep.subr.bf16.mxu0 0
      %385 = vmatpush1.bf16.msra.mxu0 0
      %386 = vmatprep.subr.bf16.mxu0 0
      %387 = vmatpush1.bf16.msra.mxu0 0
      %388 = vmatprep.subr.bf16.mxu0 0
      %389 = vmatpush1.bf16.msra.mxu0 0
      %390 = vmatprep.subr.bf16.mxu0 0
      %391 = vmatpush1.bf16.msra.mxu0 0
      %392 = vmatprep.subr.bf16.mxu0 0
      %393 = vmatpush1.bf16.msra.mxu0 0
      %394 = vmatprep.subr.bf16.mxu0 0
      %395 = vmatpush1.bf16.msra.mxu0 0
      %396 = vmatprep.mubr.bf16.mxu0 0
      %397 = vmatmul.mubr.bf16.gmra.mrb[0].mxu0 %v355
      %v398 = vpop.f32.mrb[0].mxu0
      %v399 = vadd.f32 %v346, %v398
      %v400 = vpop.f32.mrb[0].mxu0
      %v401 = vadd.f32 %v346, %v400
      %v402 = vpop.f32.mrb[0].mxu0
      %v403 = vpop.f32.mrb[0].mxu0
      %404 = vdwg.mxu0
      %v405 = vadd.f32 %v399, %v401
      %406 = vadd.xlane.f32.xlu0 %v405
      %v407 = vpop.xlane.xlu0 %406
      %v408 = vmul.f32 %v399, %v399
      %v409 = vmul.f32 %v401, %v401
      %v410 = vadd.f32 %v408, %v409
      %411 = vadd.xlane.f32.xlu0 %v410
      %v412 = vpop.xlane.xlu0 %411
      %413 = vst [vmem:[%s330] sm:$0xff] %v407
      %414 = vst [vmem:[%s338] sm:$0xff] %v412
      %v415 = vpack.c.bf16 %v399, %v399
      %v416 = vpack.c.bf16 %v401, %v401
      %v419 = vunpack.c.l.b16 %v415
      %v420 = vunpack.c.l.b16 %v416
      %v421 = vpack.c.b16 %v420, %v419
      %423 = vst [vmem:[%s321] sm:$0xff] %v421
      %s424 = smul.u32 2, %s22
      %p425 = scmp.lt.s32.totalorder %s21, 1
      %s426 = scalar_select %p425, %s21, 1
      %p427 = scmp.lt.s32.totalorder %s424, 3
      %s428 = scalar_select %p427, %s424, 3
      %s429 = smul.addr %s426, 4
      %s430 = sadd.s32 %s428, %s429
      %s431 = smul.addr %s430, 4
      %s432 = scalar_lea.vmem %s3, %s431
      %p433 = scmp.lt.s32.totalorder %s21, 1
      %s434 = scalar_select %p433, %s21, 1
      %p435 = scmp.lt.s32.totalorder %s22, 1
      %s436 = scalar_select %p435, %s22, 1
      %s437 = smul.addr %s434, 2
      %s438 = sadd.s32 %s436, %s437
      %s439 = smul.addr %s438, 8
      %s440 = scalar_lea.vmem %s4, %s439
      %p441 = scmp.lt.s32.totalorder %s21, 1
      %s442 = scalar_select %p441, %s21, 1
      %p443 = scmp.lt.s32.totalorder %s22, 1
      %s444 = scalar_select %p443, %s22, 1
      %s445 = smul.addr %s442, 2
      %s446 = sadd.s32 %s444, %s445
      %s447 = smul.addr %s446, 8
      %s448 = scalar_lea.vmem %s5, %s447
      // Predicated region
      $region33: #{skip2net_forward.25} parent=31 // pred_check
        %p449 = pneg %p129
      $region34: #{skip2net_forward.25} parent=31 // pred_check_branch
        %451 = sbr.rel (%p449) target = $region36
      $region35: #{skip2net_forward.25} parent=31 // pred_region
        %s452 = smul.u32 2, %s22
      $region36: #{skip2net_forward.25} parent=31 // pred_fallthru
        _
      // Predicated region
      $region37: #{skip2net_forward.25} parent=31 // pred_check
        %p453 = pneg %p157
      $region38: #{skip2net_forward.25} parent=31 // pred_check_branch
        %455 = sbr.rel (%p453) target = $region40
      $region39: #{skip2net_forward.25} parent=31 // pred_region
        _
      $region40: #{skip2net_forward.25} parent=31 // pred_fallthru
        _
      // Predicated region
      $region41: #{skip2net_forward.25} parent=31 // pred_check
        %p456 = pneg %p185
      $region42: #{skip2net_forward.25} parent=31 // pred_check_branch
        %458 = sbr.rel (%p456) target = $region44
      $region43: #{skip2net_forward.25} parent=31 // pred_region
        _
      $region44: #{skip2net_forward.25} parent=31 // pred_fallthru
        _
    $region32: #{skip2net_forward.25} parent=5 // pred_fallthru
      _
    %p459 = scmp.le.s32.totalorder 2, %s12
    // Predicated region
    $region45: #{skip2net_forward.25} parent=5 // pred_check
      %p460 = pneg %p459
    $region46: #{skip2net_forward.25} parent=5 // pred_check_branch
      %462 = sbr.rel (%p460) target = $region48
    $region47: #{skip2net_forward.25} parent=5 // pred_region
      %s463 = ssub.s32 %s12, 2
      // Predicated region
      $region49: #{skip2net_forward.25} parent=47 // pred_check
        %p464 = pneg %p135
      $region50: #{skip2net_forward.25} parent=47 // pred_check_branch
        %466 = sbr.rel (%p464) target = $region52
      $region51: #{skip2net_forward.25} parent=47 // pred_region
        %s467 = smul.u32 2, %s24
        %p468 = scmp.lt.s32.totalorder %s23, 1
        %s469 = scalar_select %p468, %s23, 1
        %p470 = scmp.lt.s32.totalorder %s467, 3
        %s471 = scalar_select %p470, %s467, 3
        %s472 = smul.addr %s469, 4
        %s473 = sadd.s32 %s471, %s472
        %s474 = smul.addr %s473, 4
        %s475 = scalar_lea.vmem %s3, %s474
      $region52: #{skip2net_forward.25} parent=47 // pred_fallthru
        _
      // Predicated region
      $region53: #{skip2net_forward.25} parent=47 // pred_check
        %p476 = pneg %p163
      $region54: #{skip2net_forward.25} parent=47 // pred_check_branch
        %478 = sbr.rel (%p476) target = $region56
      $region55: #{skip2net_forward.25} parent=47 // pred_region
        %p479 = scmp.lt.s32.totalorder %s23, 1
        %s480 = scalar_select %p479, %s23, 1
        %p481 = scmp.lt.s32.totalorder %s24, 1
        %s482 = scalar_select %p481, %s24, 1
        %s483 = smul.addr %s480, 2
        %s484 = sadd.s32 %s482, %s483
        %s485 = smul.addr %s484, 8
        %s486 = scalar_lea.vmem %s4, %s485
      $region56: #{skip2net_forward.25} parent=47 // pred_fallthru
        _
      // Predicated region
      $region57: #{skip2net_forward.25} parent=47 // pred_check
        %p487 = pneg %p191
      $region58: #{skip2net_forward.25} parent=47 // pred_check_branch
        %489 = sbr.rel (%p487) target = $region60
      $region59: #{skip2net_forward.25} parent=47 // pred_region
        %p490 = scmp.lt.s32.totalorder %s23, 1
        %s491 = scalar_select %p490, %s23, 1
        %p492 = scmp.lt.s32.totalorder %s24, 1
        %s493 = scalar_select %p492, %s24, 1
        %s494 = smul.addr %s491, 2
        %s495 = sadd.s32 %s493, %s494
        %s496 = smul.addr %s495, 8
        %s497 = scalar_lea.vmem %s5, %s496
      $region60: #{skip2net_forward.25} parent=47 // pred_fallthru
        _
    $region48: #{skip2net_forward.25} parent=5 // pred_fallthru
      _
  $region6: #{skip2net_forward.25} parent=0 // loop_footer
    %s16 = sadd.s32 1, %s12
  $region7: #{skip2net_forward.25} parent=0 // loop_footer_branch
    %11 = sbr.rel target = $region3
  $region8: #{skip2net_forward.25} parent=0 // loop_exit
    _

// kernel: skip2net_forward.26
$region0: #{skip2net_forward.26}
  #allocation0 [shape = 'u32[]', space=smem, size = 0x4, offset = 0x4, fixed_abs, tag = 'smem constant byte address 0x4 - core index']
  #allocation1 [shape = 'u32[144,128]{1,0:T(1,128)}', space=vmem, size = 0x12000, scoped, tag = 'internal scratch']
  %s0 = inlined_call_operand.vmem [shape: bf16[2,8,512], index: 0, kind: input, shape index: {}]
  %s1 = inlined_call_operand.vmem [shape: f32[2,8,1], index: 1, kind: input, shape index: {}]
  %s2 = inlined_call_operand.vmem [shape: f32[2,8,1], index: 2, kind: input, shape index: {}]
  %s3 = inlined_call_operand.vmem [shape: bf16[2,8,512], index: 3, kind: output, shape index: {}]
  %s4 = sld [smem:[#allocation0]]
  $region45: #{skip2net_forward.26} parent=0
    _
  %s6 = ssub.s32 1, %s4
  %s7 = scalar_select 0, %s6, %s4
  loop: start=0, step=1, limit=6
  $region2: #{skip2net_forward.26} parent=0 // loop_pre_header
    _
  $region3: #{skip2net_forward.26} parent=0 // loop_header
    %s9 = sphi 0, %s13
    %p10 = scmp.ge.s32.totalorder %s9, 6
    %s16 = sphi 0, %s28
    %s17 = sphi 0, %s24
    %s18 = sphi 0, %s16
    %s19 = sphi 0, %s17
    %s20 = sphi 0, %s18
    %s21 = sphi 0, %s19
    %s33 = sphi 0, %s35
    %s36 = sphi 0, %s33
    %s37 = sphi 0, %s36
    %s53 = sphi 0, %s37
    %s59 = sphi 0, %s61
    %s62 = sphi 0, %s59
    %s63 = sphi 0, %s62
    %s79 = sphi 0, %s63
    %s85 = sphi 0, %s87
    %s88 = sphi 0, %s85
    %s89 = sphi 0, %s88
    %s105 = sphi 0, %s89
    %s113 = sphi 0, %s115
    %s116 = sphi 0, %s113
    %s117 = sphi 0, %s116
    %s133 = sphi 0, %s117
  $region4: #{skip2net_forward.26} parent=0 // loop_header_branch
    %12 = sbr.rel (%p10) target = $region8
  $region5: #{skip2net_forward.26} parent=0 // loop_body
    %s14 = ssub.s32 %s9, 1
    %s15 = ssub.s32 %s9, 2
    %s22 = sadd.s32 1, %s17
    %p23 = scmp.ge.s32.totalorder %s22, 2
    %s24 = scalar_select %p23, 0, %s22
    %s25 = sadd.s32 1, %s16
    %s26 = scalar_select %p23, %s25, %s16
    %p27 = scmp.ge.s32.totalorder %s26, 2
    %s28 = scalar_select %p27, 0, %s26
    %s29 = ssub.s32 %s16, %s28
    %s30 = ssub.s32 %s17, %s24
    %s31 = sor.u32 %s29, %s30
    %p32 = scmp.eq.s32.totalorder %s31, 0
    %s34 = sadd.s32 %s33, 1
    %s35 = scalar_select %p32, %s33, %s34
    %p38 = pneg %p32
    %p39 = scmp.eq.s32.totalorder %s9, 3
    %p40 = por %p38, %p39
    %p41 = scmp.ne.s32.totalorder %s33, %s36
    %p42 = scmp.eq.s32.totalorder %s9, 0
    %p43 = por %p41, %p42
    %p44 = scmp.ne.s32.totalorder %s33, %s36
    %p45 = scmp.eq.s32.totalorder %s14, 3
    %p46 = por %p44, %p45
    %p47 = scmp.ne.s32.totalorder %s36, %s37
    %p48 = scmp.eq.s32.totalorder %s14, 0
    %p49 = por %p47, %p48
    %p50 = scmp.ne.s32.totalorder %s36, %s37
    %p51 = scmp.eq.s32.totalorder %s15, 3
    %p52 = por %p50, %p51
    %p54 = scmp.ne.s32.totalorder %s37, %s53
    %p55 = scmp.eq.s32.totalorder %s15, 0
    %p56 = por %p54, %p55
    %s57 = ssub.s32 %s16, %s28
    %p58 = scmp.eq.s32.totalorder %s57, 0
    %s60 = sadd.s32 %s59, 1
    %s61 = scalar_select %p58, %s59, %s60
    %p64 = pneg %p58
    %p65 = scmp.eq.s32.totalorder %s9, 3
    %p66 = por %p64, %p65
    %p67 = scmp.ne.s32.totalorder %s59, %s62
    %p68 = scmp.eq.s32.totalorder %s9, 0
    %p69 = por %p67, %p68
    %p70 = scmp.ne.s32.totalorder %s59, %s62
    %p71 = scmp.eq.s32.totalorder %s14, 3
    %p72 = por %p70, %p71
    %p73 = scmp.ne.s32.totalorder %s62, %s63
    %p74 = scmp.eq.s32.totalorder %s14, 0
    %p75 = por %p73, %p74
    %p76 = scmp.ne.s32.totalorder %s62, %s63
    %p77 = scmp.eq.s32.totalorder %s15, 3
    %p78 = por %p76, %p77
    %p80 = scmp.ne.s32.totalorder %s63, %s79
    %p81 = scmp.eq.s32.totalorder %s15, 0
    %p82 = por %p80, %p81
    %s83 = ssub.s32 %s16, %s28
    %p84 = scmp.eq.s32.totalorder %s83, 0
    %s86 = sadd.s32 %s85, 1
    %s87 = scalar_select %p84, %s85, %s86
    %p90 = pneg %p84
    %p91 = scmp.eq.s32.totalorder %s9, 3
    %p92 = por %p90, %p91
    %p93 = scmp.ne.s32.totalorder %s85, %s88
    %p94 = scmp.eq.s32.totalorder %s9, 0
    %p95 = por %p93, %p94
    %p96 = scmp.ne.s32.totalorder %s85, %s88
    %p97 = scmp.eq.s32.totalorder %s14, 3
    %p98 = por %p96, %p97
    %p99 = scmp.ne.s32.totalorder %s88, %s89
    %p100 = scmp.eq.s32.totalorder %s14, 0
    %p101 = por %p99, %p100
    %p102 = scmp.ne.s32.totalorder %s88, %s89
    %p103 = scmp.eq.s32.totalorder %s15, 3
    %p104 = por %p102, %p103
    %p106 = scmp.ne.s32.totalorder %s89, %s105
    %p107 = scmp.eq.s32.totalorder %s15, 0
    %p108 = por %p106, %p107
    %s109 = ssub.s32 %s16, %s28
    %s110 = ssub.s32 %s17, %s24
    %s111 = sor.u32 %s109, %s110
    %p112 = scmp.eq.s32.totalorder %s111, 0
    %s114 = sadd.s32 %s113, 1
    %s115 = scalar_select %p112, %s113, %s114
    %p118 = pneg %p112
    %p119 = scmp.eq.s32.totalorder %s9, 3
    %p120 = por %p118, %p119
    %p121 = scmp.ne.s32.totalorder %s113, %s116
    %p122 = scmp.eq.s32.totalorder %s9, 0
    %p123 = por %p121, %p122
    %p124 = scmp.ne.s32.totalorder %s113, %s116
    %p125 = scmp.eq.s32.totalorder %s14, 3
    %p126 = por %p124, %p125
    %p127 = scmp.ne.s32.totalorder %s116, %s117
    %p128 = scmp.eq.s32.totalorder %s14, 0
    %p129 = por %p127, %p128
    %p130 = scmp.ne.s32.totalorder %s116, %s117
    %p131 = scmp.eq.s32.totalorder %s15, 3
    %p132 = por %p130, %p131
    %p134 = scmp.ne.s32.totalorder %s117, %s133
    %p135 = scmp.eq.s32.totalorder %s15, 0
    %p136 = por %p134, %p135
    %p137 = scmp.le.s32.totalorder 1, %s9
    %p138 = scmp.lt.s32.totalorder %s9, 5
    %p139 = pnand %p137, %p138
    %p140 = pneg %p139
    // Predicated region
    $region9: #{skip2net_forward.26} parent=5 // pred_check
      _
    $region10: #{skip2net_forward.26} parent=5 // pred_check_branch
      %142 = sbr.rel (%p139) target = $region12
    $region11: #{skip2net_forward.26} parent=5 // pred_region
      %s143 = ssub.s32 %s9, 1
    $region12: #{skip2net_forward.26} parent=5 // pred_fallthru
      _
    %p144 = scmp.lt.s32.totalorder %s9, 4
    // Predicated region
    $region13: #{skip2net_forward.26} parent=5 // pred_check
      %p145 = pneg %p144
    $region14: #{skip2net_forward.26} parent=5 // pred_check_branch
      %147 = sbr.rel (%p145) target = $region16
    $region15: #{skip2net_forward.26} parent=5 // pred_region
      // Predicated region
      $region17: #{skip2net_forward.26} parent=15 // pred_check
        %p148 = pneg %p43
      $region18: #{skip2net_forward.26} parent=15 // pred_check_branch
        %150 = sbr.rel (%p148) target = $region20
      $region19: #{skip2net_forward.26} parent=15 // pred_region
        %s151 = smul.u32 2, %s17
        %p152 = scmp.lt.s32.totalorder %s16, 1
        %s153 = scalar_select %p152, %s16, 1
        %p154 = scmp.lt.s32.totalorder %s151, 3
        %s155 = scalar_select %p154, %s151, 3
        %s156 = smul.addr %s153, 4
        %s157 = sadd.s32 %s155, %s156
        %s158 = smul.addr %s157, 4
        %s159 = scalar_lea.vmem %s0, %s158
        %s160 = smul.u32 2, %s17
      $region20: #{skip2net_forward.26} parent=15 // pred_fallthru
        _
      // Predicated region
      $region21: #{skip2net_forward.26} parent=15 // pred_check
        %p161 = pneg %p69
      $region22: #{skip2net_forward.26} parent=15 // pred_check_branch
        %163 = sbr.rel (%p161) target = $region24
      $region23: #{skip2net_forward.26} parent=15 // pred_region
        %p164 = scmp.lt.s32.totalorder %s16, 1
        %s165 = scalar_select %p164, %s16, 1
        %s166 = smul.addr %s165, 8
        %s167 = scalar_lea.vmem %s1, %s166
      $region24: #{skip2net_forward.26} parent=15 // pred_fallthru
        _
      // Predicated region
      $region25: #{skip2net_forward.26} parent=15 // pred_check
        %p168 = pneg %p95
      $region26: #{skip2net_forward.26} parent=15 // pred_check_branch
        %170 = sbr.rel (%p168) target = $region28
      $region27: #{skip2net_forward.26} parent=15 // pred_region
        %p171 = scmp.lt.s32.totalorder %s16, 1
        %s172 = scalar_select %p171, %s16, 1
        %s173 = smul.addr %s172, 8
        %s174 = scalar_lea.vmem %s2, %s173
      $region28: #{skip2net_forward.26} parent=15 // pred_fallthru
        _
    $region16: #{skip2net_forward.26} parent=5 // pred_fallthru
      _
    %p175 = scmp.le.s32.totalorder 1, %s9
    %p176 = scmp.lt.s32.totalorder %s9, 5
    %p177 = pnand %p175, %p176
    %p178 = pneg %p177
    // Predicated region
    $region29: #{skip2net_forward.26} parent=5 // pred_check
      _
    $region30: #{skip2net_forward.26} parent=5 // pred_check_branch
      %180 = sbr.rel (%p177) target = $region32
    $region31: #{skip2net_forward.26} parent=5 // pred_region
      %s181 = ssub.s32 %s9, 1
      %s182 = smul.u32 2, %s19
      %p183 = scmp.lt.s32.totalorder %s18, 1
      %s184 = scalar_select %p183, %s18, 1
      %p185 = scmp.lt.s32.totalorder %s182, 3
      %s186 = scalar_select %p185, %s182, 3
      %s187 = smul.addr %s184, 4
      %s188 = sadd.s32 %s186, %s187
      %s189 = smul.addr %s188, 4
      %s190 = scalar_lea.vmem %s0, %s189
      %p191 = pneg %p49
      %p192 = pneg %p46
      %p193 = scmp.lt.s32.totalorder %s18, 1
      %s194 = scalar_select %p193, %s18, 1
      %s195 = smul.addr %s194, 8
      %s196 = scalar_lea.vmem %s1, %s195
      %p197 = pneg %p75
      %p198 = pneg %p72
      %p199 = scmp.lt.s32.totalorder %s18, 1
      %s200 = scalar_select %p199, %s18, 1
      %s201 = smul.addr %s200, 8
      %s202 = scalar_lea.vmem %s2, %s201
      %p203 = pneg %p101
      %p204 = pneg %p98
      %p205 = pneg %p129
      %p206 = pneg %p126
      %s207 = smul.u32 2, %s19
      %p208 = scmp.lt.s32.totalorder %s18, 1
      %s209 = scalar_select %p208, %s18, 1
      %p210 = scmp.lt.s32.totalorder %s207, 3
      %s211 = scalar_select %p210, %s207, 3
      %s212 = smul.addr %s209, 4
      %s213 = sadd.s32 %s211, %s212
      %s214 = smul.addr %s213, 4
      %s215 = scalar_lea.vmem %s3, %s214
      %s216 = smul.u32 2, %s19
      %p217 = scmp.lt.s32.totalorder %s18, 1
      %s218 = scalar_select %p217, %s18, 1
      %p219 = scmp.lt.s32.totalorder %s216, 3
      %s220 = scalar_select %p219, %s216, 3
      %s221 = smul.addr %s218, 4
      %s222 = sadd.s32 %s220, %s221
      %s223 = smul.addr %s222, 4
      %s224 = scalar_lea.vmem %s0, %s223
      %s225 = smul.u32 2, %s19
      %p226 = scmp.lt.s32.totalorder %s18, 1
      %s227 = scalar_select %p226, %s18, 1
      %s228 = smul.addr %s227, 8
      %s229 = scalar_lea.vmem %s1, %s228
      %p230 = scmp.lt.s32.totalorder %s18, 1
      %s231 = scalar_select %p230, %s18, 1
      %s232 = smul.addr %s231, 8
      %s233 = scalar_lea.vmem %s2, %s232
      %s234 = smul.u32 2, %s19
      %p235 = scmp.lt.s32.totalorder %s18, 1
      %s236 = scalar_select %p235, %s18, 1
      %p237 = scmp.lt.s32.totalorder %s234, 3
      %s238 = scalar_select %p237, %s234, 3
      %s239 = smul.addr %s236, 4
      %s240 = sadd.s32 %s238, %s239
      %s241 = smul.addr %s240, 4
      %s242 = scalar_lea.vmem %s3, %s241
      %s243 = smul.u32 2, %s19
      %v244 = vld [vmem:[%s224] sm:$0xff]
      %v245 = vunpack.c.l.bf16 %v244
      %v246 = vunpack.c.h.bf16 %v244
      %v247 = vld [vmem:[%s229] sm:$0xff]
      %249 = vset.pattern.permute.xlu0 0
      %250 = vperm.xlu0 %249, %v247
      %v251 = vpop.permute.xlu0 %250
      %v253 = vmul.f32 %v245, %v251
      %v254 = vmul.f32 %v246, %v251
      %v255 = vld [vmem:[%s233] sm:$0xff]
      %257 = vset.pattern.permute.xlu0 0
      %258 = vperm.xlu0 %257, %v255
      %v259 = vpop.permute.xlu0 %258
      %v261 = vadd.f32 %v253, %v259
      %v262 = vadd.f32 %v254, %v259
      %vm263 = vcmp.ge.f32.partialorder %v261, 0.0
      %vm264 = vcmp.ge.f32.partialorder %v262, 0.0
      %v265 = vmul.f32 %v261, 0.2
      %v266 = vmul.f32 %v262, 0.2
      %v267 = vsel %vm263, %v261, %v265
      %v268 = vsel %vm264, %v262, %v266
      %v269 = vpack.c.bf16 %v267, %v267
      %v270 = vpack.c.bf16 %v268, %v268
      %v273 = vunpack.c.l.b16 %v269
      %v274 = vunpack.c.l.b16 %v270
      %v275 = vpack.c.b16 %v274, %v273
      %277 = vst [vmem:[%s242] sm:$0xff] %v275
      %s278 = smul.u32 2, %s19
      %p279 = scmp.lt.s32.totalorder %s18, 1
      %s280 = scalar_select %p279, %s18, 1
      %p281 = scmp.lt.s32.totalorder %s278, 3
      %s282 = scalar_select %p281, %s278, 3
      %s283 = smul.addr %s280, 4
      %s284 = sadd.s32 %s282, %s283
      %s285 = smul.addr %s284, 4
      %s286 = scalar_lea.vmem %s3, %s285
      // Predicated region
      $region33: #{skip2net_forward.26} parent=31 // pred_check
        %p287 = pneg %p126
      $region34: #{skip2net_forward.26} parent=31 // pred_check_branch
        %289 = sbr.rel (%p287) target = $region36
      $region35: #{skip2net_forward.26} parent=31 // pred_region
        %s290 = smul.u32 2, %s19
      $region36: #{skip2net_forward.26} parent=31 // pred_fallthru
        _
    $region32: #{skip2net_forward.26} parent=5 // pred_fallthru
      _
    %p291 = scmp.le.s32.totalorder 2, %s9
    // Predicated region
    $region37: #{skip2net_forward.26} parent=5 // pred_check
      %p292 = pneg %p291
    $region38: #{skip2net_forward.26} parent=5 // pred_check_branch
      %294 = sbr.rel (%p292) target = $region40
    $region39: #{skip2net_forward.26} parent=5 // pred_region
      %s295 = ssub.s32 %s9, 2
      // Predicated region
      $region41: #{skip2net_forward.26} parent=39 // pred_check
        %p296 = pneg %p132
      $region42: #{skip2net_forward.26} parent=39 // pred_check_branch
        %298 = sbr.rel (%p296) target = $region44
      $region43: #{skip2net_forward.26} parent=39 // pred_region
        %s299 = smul.u32 2, %s21
        %p300 = scmp.lt.s32.totalorder %s20, 1
        %s301 = scalar_select %p300, %s20, 1
        %p302 = scmp.lt.s32.totalorder %s299, 3
        %s303 = scalar_select %p302, %s299, 3
        %s304 = smul.addr %s301, 4
        %s305 = sadd.s32 %s303, %s304
        %s306 = smul.addr %s305, 4
        %s307 = scalar_lea.vmem %s3, %s306
      $region44: #{skip2net_forward.26} parent=39 // pred_fallthru
        _
    $region40: #{skip2net_forward.26} parent=5 // pred_fallthru
      _
  $region6: #{skip2net_forward.26} parent=0 // loop_footer
    %s13 = sadd.s32 1, %s9
  $region7: #{skip2net_forward.26} parent=0 // loop_footer_branch
    %8 = sbr.rel target = $region3
  $region8: #{skip2net_forward.26} parent=0 // loop_exit
    _

// kernel: skip2net_forward.43
$region0: #{skip2net_forward.43}
  #allocation0 [shape = 'u32[]', space=smem, size = 0x4, offset = 0x4, fixed_abs, tag = 'smem constant byte address 0x4 - core index']
  #allocation1 [shape = 'u32[144,128]{1,0:T(1,128)}', space=vmem, size = 0x12000, scoped, tag = 'internal scratch']
  %s0 = inlined_call_operand.vmem [shape: bf16[2,16,512], index: 0, kind: input, shape index: {}]
  %s1 = inlined_call_operand.vmem [shape: f32[2,16,256], index: 1, kind: output, shape index: {0}]
  %s2 = inlined_call_operand.vmem [shape: f32[2,16,256], index: 2, kind: output, shape index: {1}]
  %3 = xla_tuple %s1, %s2
  %s4 = sld [smem:[#allocation0]]
  $region151: #{skip2net_forward.43} parent=0
    _
  %s6 = ssub.s32 1, %s4
  %s7 = scalar_select 0, %s6, %s4
  $region1: #{skip2net_forward.43} parent=0
    #allocation2 [shape = 'u8[16384]{0}', space=vmem, size = 0x4000, scoped, tag = 'input window, operand 0']
    #allocation3 [shape = 'u8[16384]{0}', space=vmem, size = 0x4000, scoped, tag = 'output window, operand 0']
    #allocation4 [shape = 'u8[16384]{0}', space=vmem, size = 0x4000, scoped, tag = 'output window, operand 1']
    loop: start=0, step=1, limit=6
    $region2: #{skip2net_forward.43} parent=1 // loop_pre_header
      _
    $region3: #{skip2net_forward.43} parent=1 // loop_header
      %s9 = sphi 0, %s13
      %p10 = scmp.ge.s32.totalorder %s9, 6
      %s16 = sphi 0, %s28
      %s17 = sphi 0, %s24
      %s18 = sphi 0, %s16
      %s19 = sphi 0, %s17
      %s20 = sphi 0, %s18
      %s21 = sphi 0, %s19
      %s33 = sphi 0, %s35
      %s36 = sphi 0, %s33
      %s37 = sphi 0, %s36
      %s53 = sphi 0, %s37
      %s61 = sphi 0, %s63
      %s64 = sphi 0, %s61
      %s65 = sphi 0, %s64
      %s81 = sphi 0, %s65
      %s89 = sphi 0, %s91
      %s92 = sphi 0, %s89
      %s93 = sphi 0, %s92
      %s109 = sphi 0, %s93
    $region4: #{skip2net_forward.43} parent=1 // loop_header_branch
      %12 = sbr.rel (%p10) target = $region8
    $region5: #{skip2net_forward.43} parent=1 // loop_body
      %s14 = ssub.s32 %s9, 1
      %s15 = ssub.s32 %s9, 2
      %s22 = sadd.s32 1, %s17
      %p23 = scmp.ge.s32.totalorder %s22, 2
      %s24 = scalar_select %p23, 0, %s22
      %s25 = sadd.s32 1, %s16
      %s26 = scalar_select %p23, %s25, %s16
      %p27 = scmp.ge.s32.totalorder %s26, 2
      %s28 = scalar_select %p27, 0, %s26
      %s29 = ssub.s32 %s16, %s28
      %s30 = ssub.s32 %s17, %s24
      %s31 = sor.u32 %s29, %s30
      %p32 = scmp.eq.s32.totalorder %s31, 0
      %s34 = sadd.s32 %s33, 1
      %s35 = scalar_select %p32, %s33, %s34
      %p38 = pneg %p32
      %p39 = scmp.eq.s32.totalorder %s9, 3
      %p40 = por %p38, %p39
      %p41 = scmp.ne.s32.totalorder %s33, %s36
      %p42 = scmp.eq.s32.totalorder %s9, 0
      %p43 = por %p41, %p42
      %p44 = scmp.ne.s32.totalorder %s33, %s36
      %p45 = scmp.eq.s32.totalorder %s14, 3
      %p46 = por %p44, %p45
      %p47 = scmp.ne.s32.totalorder %s36, %s37
      %p48 = scmp.eq.s32.totalorder %s14, 0
      %p49 = por %p47, %p48
      %p50 = scmp.ne.s32.totalorder %s36, %s37
      %p51 = scmp.eq.s32.totalorder %s15, 3
      %p52 = por %p50, %p51
      %p54 = scmp.ne.s32.totalorder %s37, %s53
      %p55 = scmp.eq.s32.totalorder %s15, 0
      %p56 = por %p54, %p55
      %s57 = ssub.s32 %s16, %s28
      %s58 = ssub.s32 %s17, %s24
      %s59 = sor.u32 %s57, %s58
      %p60 = scmp.eq.s32.totalorder %s59, 0
      %s62 = sadd.s32 %s61, 1
      %s63 = scalar_select %p60, %s61, %s62
      %p66 = pneg %p60
      %p67 = scmp.eq.s32.totalorder %s9, 3
      %p68 = por %p66, %p67
      %p69 = scmp.ne.s32.totalorder %s61, %s64
      %p70 = scmp.eq.s32.totalorder %s9, 0
      %p71 = por %p69, %p70
      %p72 = scmp.ne.s32.totalorder %s61, %s64
      %p73 = scmp.eq.s32.totalorder %s14, 3
      %p74 = por %p72, %p73
      %p75 = scmp.ne.s32.totalorder %s64, %s65
      %p76 = scmp.eq.s32.totalorder %s14, 0
      %p77 = por %p75, %p76
      %p78 = scmp.ne.s32.totalorder %s64, %s65
      %p79 = scmp.eq.s32.totalorder %s15, 3
      %p80 = por %p78, %p79
      %p82 = scmp.ne.s32.totalorder %s65, %s81
      %p83 = scmp.eq.s32.totalorder %s15, 0
      %p84 = por %p82, %p83
      %s85 = ssub.s32 %s16, %s28
      %s86 = ssub.s32 %s17, %s24
      %s87 = sor.u32 %s85, %s86
      %p88 = scmp.eq.s32.totalorder %s87, 0
      %s90 = sadd.s32 %s89, 1
      %s91 = scalar_select %p88, %s89, %s90
      %p94 = pneg %p88
      %p95 = scmp.eq.s32.totalorder %s9, 3
      %p96 = por %p94, %p95
      %p97 = scmp.ne.s32.totalorder %s89, %s92
      %p98 = scmp.eq.s32.totalorder %s9, 0
      %p99 = por %p97, %p98
      %p100 = scmp.ne.s32.totalorder %s89, %s92
      %p101 = scmp.eq.s32.totalorder %s14, 3
      %p102 = por %p100, %p101
      %p103 = scmp.ne.s32.totalorder %s92, %s93
      %p104 = scmp.eq.s32.totalorder %s14, 0
      %p105 = por %p103, %p104
      %p106 = scmp.ne.s32.totalorder %s92, %s93
      %p107 = scmp.eq.s32.totalorder %s15, 3
      %p108 = por %p106, %p107
      %p110 = scmp.ne.s32.totalorder %s93, %s109
      %p111 = scmp.eq.s32.totalorder %s15, 0
      %p112 = por %p110, %p111
      %p113 = scmp.le.s32.totalorder 1, %s9
      %p114 = scmp.lt.s32.totalorder %s9, 5
      %p115 = pnand %p113, %p114
      %p116 = pneg %p115
      // Predicated region
      $region9: #{skip2net_forward.43} parent=5 // pred_check
        _
      $region10: #{skip2net_forward.43} parent=5 // pred_check_branch
        %118 = sbr.rel (%p115) target = $region12
      $region11: #{skip2net_forward.43} parent=5 // pred_region
        %s119 = ssub.s32 %s9, 1
      $region12: #{skip2net_forward.43} parent=5 // pred_fallthru
        _
      %p120 = scmp.lt.s32.totalorder %s9, 4
      // Predicated region
      $region13: #{skip2net_forward.43} parent=5 // pred_check
        %p121 = pneg %p120
      $region14: #{skip2net_forward.43} parent=5 // pred_check_branch
        %123 = sbr.rel (%p121) target = $region16
      $region15: #{skip2net_forward.43} parent=5 // pred_region
        // Predicated region
        $region17: #{skip2net_forward.43} parent=15 // pred_check
          %p124 = pneg %p43
        $region18: #{skip2net_forward.43} parent=15 // pred_check_branch
          %126 = sbr.rel (%p124) target = $region20
        $region19: #{skip2net_forward.43} parent=15 // pred_region
          %s127 = sand.u32 %s33, 1
          %s128 = sand.u32 %s33, 1
          %s129 = smul.addr %s128, 16
          %s130 = scalar_lea.vmem [#allocation2], %s129
          %s131 = smul.u32 2, %s17
          %s132 = smul.addr %s16, 8
          %s133 = sadd.s32 %s131, %s132
          %s134 = smul.addr %s133, 4
          %s135 = scalar_lea.vmem %s0, %s134
          // Predicated region
          $region21: #{skip2net_forward.43} parent=19 // pred_check
            _
          $region22: #{skip2net_forward.43} parent=19 // pred_check_branch
            %137 = sbr.rel (0) target = $region24
          $region23: #{skip2net_forward.43} parent=19 // pred_region
            // Predicated region
            $region25: #{skip2net_forward.43} parent=23 // pred_check
              _
            $region26: #{skip2net_forward.43} parent=23 // pred_check_branch
              %139 = sbr.rel (0) target = $region28
            $region27: #{skip2net_forward.43} parent=23 // pred_region
              // Predicated region
              $region40: #{skip2net_forward.43} parent=27 // pred_check
                _
              $region41: #{skip2net_forward.43} parent=27 // pred_check_branch
                %156 = sbr.rel (0) target = $region43
              $region42: #{skip2net_forward.43} parent=27 // pred_region
                loop: start=0, step=1, limit=1
                $region44: #{skip2net_forward.43} parent=42 // loop_pre_header
                  _
                $region45: #{skip2net_forward.43} parent=42 // loop_header
                  %s158 = sphi 0, %s162
                  %p159 = scmp.ge.s32.totalorder %s158, 1
                  %s163 = sphi %s135, %s135
                  %s164 = sphi %s130, %s130
                $region46: #{skip2net_forward.43} parent=42 // loop_header_branch
                  %161 = sbr.rel (%p159) target = $region50
                $region47: #{skip2net_forward.43} parent=42 // loop_body
                  %v165 = vld [vmem:[%s163] sm:$0xff]
                  %166 = vst [vmem:[%s164] sm:$0xff] %v165
                  %v167 = vld [vmem:[%s163 + $0x10] sm:$0xff]
                  %168 = vst [vmem:[%s164 + $0x8] sm:$0xff] %v167
                $region48: #{skip2net_forward.43} parent=42 // loop_footer
                  %s162 = sadd.s32 1, %s158
                $region49: #{skip2net_forward.43} parent=42 // loop_footer_branch
                  %157 = sbr.rel target = $region45
                $region50: #{skip2net_forward.43} parent=42 // loop_exit
                  _
              $region43: #{skip2net_forward.43} parent=27 // pred_fallthru
                _
              // Predicated region
              $region51: #{skip2net_forward.43} parent=27 // pred_check
                _
              $region52: #{skip2net_forward.43} parent=27 // pred_check_branch
                %170 = sbr.rel target = $region54
              $region53: #{skip2net_forward.43} parent=27 // pred_region
                _
              $region54: #{skip2net_forward.43} parent=27 // pred_fallthru
                _
            $region28: #{skip2net_forward.43} parent=23 // pred_fallthru
              _
            // Predicated region
            $region29: #{skip2net_forward.43} parent=23 // pred_check
              _
            $region30: #{skip2net_forward.43} parent=23 // pred_check_branch
              %141 = sbr.rel target = $region32
            $region31: #{skip2net_forward.43} parent=23 // pred_region
              loop: start=0, step=1, limit=1
              $region33: #{skip2net_forward.43} parent=31 // loop_pre_header
                _
              $region34: #{skip2net_forward.43} parent=31 // loop_header
                %s144 = sphi 0, %s148
                %p145 = scmp.ge.s32.totalorder %s144, 1
                %s149 = sphi %s135, %s135
                %s150 = sphi %s130, %s130
              $region35: #{skip2net_forward.43} parent=31 // loop_header_branch
                %147 = sbr.rel (%p145) target = $region39
              $region36: #{skip2net_forward.43} parent=31 // loop_body
                %v151 = vld [vmem:[%s149] sm:$0xff]
                %152 = vst [vmem:[%s150] sm:$0xff] %v151
                %v153 = vld [vmem:[%s149 + $0x10] sm:$0xff]
                %154 = vst [vmem:[%s150 + $0x8] sm:$0xff] %v153
              $region37: #{skip2net_forward.43} parent=31 // loop_footer
                %s148 = sadd.s32 1, %s144
              $region38: #{skip2net_forward.43} parent=31 // loop_footer_branch
                %143 = sbr.rel target = $region34
              $region39: #{skip2net_forward.43} parent=31 // loop_exit
                _
            $region32: #{skip2net_forward.43} parent=23 // pred_fallthru
              _
          $region24: #{skip2net_forward.43} parent=19 // pred_fallthru
            _
          %171 = vnop
        $region20: #{skip2net_forward.43} parent=15 // pred_fallthru
          _
      $region16: #{skip2net_forward.43} parent=5 // pred_fallthru
        _
      %p172 = scmp.le.s32.totalorder 1, %s9
      %p173 = scmp.lt.s32.totalorder %s9, 5
      %p174 = pnand %p172, %p173
      %p175 = pneg %p174
      // Predicated region
      $region55: #{skip2net_forward.43} parent=5 // pred_check
        _
      $region56: #{skip2net_forward.43} parent=5 // pred_check_branch
        %177 = sbr.rel (%p174) target = $region58
      $region57: #{skip2net_forward.43} parent=5 // pred_region
        %s178 = ssub.s32 %s9, 1
        %s179 = sand.u32 %s36, 1
        %s180 = sand.u32 %s36, 1
        %s181 = smul.addr %s180, 16
        %s182 = scalar_lea.vmem [#allocation2], %s181
        // Predicated region
        $region59: #{skip2net_forward.43} parent=57 // pred_check
          %p183 = pneg %p49
        $region60: #{skip2net_forward.43} parent=57 // pred_check_branch
          %185 = sbr.rel (%p183) target = $region62
        $region61: #{skip2net_forward.43} parent=57 // pred_region
          _
        $region62: #{skip2net_forward.43} parent=57 // pred_fallthru
          _
        %s186 = sand.u32 %s36, 1
        %s187 = sand.u32 %s36, 1
        %s188 = smul.addr %s187, 16
        %s189 = scalar_lea.vmem [#allocation2], %s188
        %p190 = pneg %p49
        %p191 = pneg %p46
        %p192 = pneg %p77
        %p193 = pneg %p74
        %s194 = sand.u32 %s64, 1
        %s195 = sand.u32 %s64, 1
        %s196 = smul.addr %s195, 16
        %s197 = scalar_lea.vmem [#allocation3], %s196
        %p198 = pneg %p105
        %p199 = pneg %p102
        %s200 = sand.u32 %s92, 1
        %s201 = sand.u32 %s92, 1
        %s202 = smul.addr %s201, 16
        %s203 = scalar_lea.vmem [#allocation4], %s202
        %s204 = smul.u32 2, %s19
        %v205 = vld [vmem:[%s182] sm:$0xff]
        %v206 = vld [vmem:[%s182 + $0x8] sm:$0xff]
        %v207 = vunpack.c.l.bf16 %v205
        %v208 = vunpack.c.h.bf16 %v205
        %v209 = vunpack.c.l.bf16 %v206
        %v210 = vunpack.c.h.bf16 %v206
        %v211 = vadd.f32 %v207, %v208
        %212 = vadd.xlane.f32.xlu0 %v211
        %v213 = vpop.xlane.xlu0 %212
        %v214 = vadd.f32 %v209, %v210
        %215 = vadd.xlane.f32.xlu0 %v214
        %v216 = vpop.xlane.xlu0 %215
        %217 = vst [vmem:[%s197] sm:$0xff] %v213
        %218 = vst [vmem:[%s197 + $0x8] sm:$0xff] %v216
        %v219 = vmul.f32 %v207, %v207
        %v220 = vmul.f32 %v208, %v208
        %v221 = vmul.f32 %v209, %v209
        %v222 = vmul.f32 %v210, %v210
        %v223 = vadd.f32 %v219, %v220
        %224 = vadd.xlane.f32.xlu0 %v223
        %v225 = vpop.xlane.xlu0 %224
        %v226 = vadd.f32 %v221, %v222
        %227 = vadd.xlane.f32.xlu0 %v226
        %v228 = vpop.xlane.xlu0 %227
        %229 = vst [vmem:[%s203] sm:$0xff] %v225
        %230 = vst [vmem:[%s203 + $0x8] sm:$0xff] %v228
        %s231 = sand.u32 %s64, 1
        %s232 = sand.u32 %s64, 1
        %s233 = smul.addr %s232, 16
        %s234 = scalar_lea.vmem [#allocation3], %s233
        %s235 = sand.u32 %s92, 1
        %s236 = sand.u32 %s92, 1
        %s237 = smul.addr %s236, 16
        %s238 = scalar_lea.vmem [#allocation4], %s237
        // Predicated region
        $region63: #{skip2net_forward.43} parent=57 // pred_check
          %p239 = pneg %p74
        $region64: #{skip2net_forward.43} parent=57 // pred_check_branch
          %241 = sbr.rel (%p239) target = $region66
        $region65: #{skip2net_forward.43} parent=57 // pred_region
          %s242 = smul.addr %s18, 4
          %s243 = sadd.s32 %s19, %s242
          %s244 = smul.addr %s243, 8
          %s245 = scalar_lea.vmem %s1, %s244
          // Predicated region
          $region67: #{skip2net_forward.43} parent=65 // pred_check
            _
          $region68: #{skip2net_forward.43} parent=65 // pred_check_branch
            %247 = sbr.rel (0) target = $region70
          $region69: #{skip2net_forward.43} parent=65 // pred_region
            // Predicated region
            $region71: #{skip2net_forward.43} parent=69 // pred_check
              _
            $region72: #{skip2net_forward.43} parent=69 // pred_check_branch
              %249 = sbr.rel (0) target = $region74
            $region73: #{skip2net_forward.43} parent=69 // pred_region
              // Predicated region
              $region86: #{skip2net_forward.43} parent=73 // pred_check
                _
              $region87: #{skip2net_forward.43} parent=73 // pred_check_branch
                %266 = sbr.rel (0) target = $region89
              $region88: #{skip2net_forward.43} parent=73 // pred_region
                loop: start=0, step=1, limit=1
                $region90: #{skip2net_forward.43} parent=88 // loop_pre_header
                  _
                $region91: #{skip2net_forward.43} parent=88 // loop_header
                  %s268 = sphi 0, %s272
                  %p269 = scmp.ge.s32.totalorder %s268, 1
                  %s273 = sphi %s234, %s234
                  %s274 = sphi %s245, %s245
                $region92: #{skip2net_forward.43} parent=88 // loop_header_branch
                  %271 = sbr.rel (%p269) target = $region96
                $region93: #{skip2net_forward.43} parent=88 // loop_body
                  %v275 = vld [vmem:[%s273] sm:$0xff]
                  %276 = vst [vmem:[%s274] sm:$0xff] %v275
                  %v277 = vld [vmem:[%s273 + $0x8] sm:$0xff]
                  %278 = vst [vmem:[%s274 + $0x10] sm:$0xff] %v277
                $region94: #{skip2net_forward.43} parent=88 // loop_footer
                  %s272 = sadd.s32 1, %s268
                $region95: #{skip2net_forward.43} parent=88 // loop_footer_branch
                  %267 = sbr.rel target = $region91
                $region96: #{skip2net_forward.43} parent=88 // loop_exit
                  _
              $region89: #{skip2net_forward.43} parent=73 // pred_fallthru
                _
              // Predicated region
              $region97: #{skip2net_forward.43} parent=73 // pred_check
                _
              $region98: #{skip2net_forward.43} parent=73 // pred_check_branch
                %280 = sbr.rel target = $region100
              $region99: #{skip2net_forward.43} parent=73 // pred_region
                _
              $region100: #{skip2net_forward.43} parent=73 // pred_fallthru
                _
            $region74: #{skip2net_forward.43} parent=69 // pred_fallthru
              _
            // Predicated region
            $region75: #{skip2net_forward.43} parent=69 // pred_check
              _
            $region76: #{skip2net_forward.43} parent=69 // pred_check_branch
              %251 = sbr.rel target = $region78
            $region77: #{skip2net_forward.43} parent=69 // pred_region
              loop: start=0, step=1, limit=1
              $region79: #{skip2net_forward.43} parent=77 // loop_pre_header
                _
              $region80: #{skip2net_forward.43} parent=77 // loop_header
                %s254 = sphi 0, %s258
                %p255 = scmp.ge.s32.totalorder %s254, 1
                %s259 = sphi %s234, %s234
                %s260 = sphi %s245, %s245
              $region81: #{skip2net_forward.43} parent=77 // loop_header_branch
                %257 = sbr.rel (%p255) target = $region85
              $region82: #{skip2net_forward.43} parent=77 // loop_body
                %v261 = vld [vmem:[%s259] sm:$0xff]
                %262 = vst [vmem:[%s260] sm:$0xff] %v261
                %v263 = vld [vmem:[%s259 + $0x8] sm:$0xff]
                %264 = vst [vmem:[%s260 + $0x10] sm:$0xff] %v263
              $region83: #{skip2net_forward.43} parent=77 // loop_footer
                %s258 = sadd.s32 1, %s254
              $region84: #{skip2net_forward.43} parent=77 // loop_footer_branch
                %253 = sbr.rel target = $region80
              $region85: #{skip2net_forward.43} parent=77 // loop_exit
                _
            $region78: #{skip2net_forward.43} parent=69 // pred_fallthru
              _
          $region70: #{skip2net_forward.43} parent=65 // pred_fallthru
            _
          %281 = vnop
        $region66: #{skip2net_forward.43} parent=57 // pred_fallthru
          _
        // Predicated region
        $region101: #{skip2net_forward.43} parent=57 // pred_check
          %p282 = pneg %p102
        $region102: #{skip2net_forward.43} parent=57 // pred_check_branch
          %284 = sbr.rel (%p282) target = $region104
        $region103: #{skip2net_forward.43} parent=57 // pred_region
          %s285 = smul.addr %s18, 4
          %s286 = sadd.s32 %s19, %s285
          %s287 = smul.addr %s286, 8
          %s288 = scalar_lea.vmem %s2, %s287
          // Predicated region
          $region105: #{skip2net_forward.43} parent=103 // pred_check
            _
          $region106: #{skip2net_forward.43} parent=103 // pred_check_branch
            %290 = sbr.rel (0) target = $region108
          $region107: #{skip2net_forward.43} parent=103 // pred_region
            // Predicated region
            $region109: #{skip2net_forward.43} parent=107 // pred_check
              _
            $region110: #{skip2net_forward.43} parent=107 // pred_check_branch
              %292 = sbr.rel (0) target = $region112
            $region111: #{skip2net_forward.43} parent=107 // pred_region
              // Predicated region
              $region124: #{skip2net_forward.43} parent=111 // pred_check
                _
              $region125: #{skip2net_forward.43} parent=111 // pred_check_branch
                %309 = sbr.rel (0) target = $region127
              $region126: #{skip2net_forward.43} parent=111 // pred_region
                loop: start=0, step=1, limit=1
                $region128: #{skip2net_forward.43} parent=126 // loop_pre_header
                  _
                $region129: #{skip2net_forward.43} parent=126 // loop_header
                  %s311 = sphi 0, %s315
                  %p312 = scmp.ge.s32.totalorder %s311, 1
                  %s316 = sphi %s238, %s238
                  %s317 = sphi %s288, %s288
                $region130: #{skip2net_forward.43} parent=126 // loop_header_branch
                  %314 = sbr.rel (%p312) target = $region134
                $region131: #{skip2net_forward.43} parent=126 // loop_body
                  %v318 = vld [vmem:[%s316] sm:$0xff]
                  %319 = vst [vmem:[%s317] sm:$0xff] %v318
                  %v320 = vld [vmem:[%s316 + $0x8] sm:$0xff]
                  %321 = vst [vmem:[%s317 + $0x10] sm:$0xff] %v320
                $region132: #{skip2net_forward.43} parent=126 // loop_footer
                  %s315 = sadd.s32 1, %s311
                $region133: #{skip2net_forward.43} parent=126 // loop_footer_branch
                  %310 = sbr.rel target = $region129
                $region134: #{skip2net_forward.43} parent=126 // loop_exit
                  _
              $region127: #{skip2net_forward.43} parent=111 // pred_fallthru
                _
              // Predicated region
              $region135: #{skip2net_forward.43} parent=111 // pred_check
                _
              $region136: #{skip2net_forward.43} parent=111 // pred_check_branch
                %323 = sbr.rel target = $region138
              $region137: #{skip2net_forward.43} parent=111 // pred_region
                _
              $region138: #{skip2net_forward.43} parent=111 // pred_fallthru
                _
            $region112: #{skip2net_forward.43} parent=107 // pred_fallthru
              _
            // Predicated region
            $region113: #{skip2net_forward.43} parent=107 // pred_check
              _
            $region114: #{skip2net_forward.43} parent=107 // pred_check_branch
              %294 = sbr.rel target = $region116
            $region115: #{skip2net_forward.43} parent=107 // pred_region
              loop: start=0, step=1, limit=1
              $region117: #{skip2net_forward.43} parent=115 // loop_pre_header
                _
              $region118: #{skip2net_forward.43} parent=115 // loop_header
                %s297 = sphi 0, %s301
                %p298 = scmp.ge.s32.totalorder %s297, 1
                %s302 = sphi %s238, %s238
                %s303 = sphi %s288, %s288
              $region119: #{skip2net_forward.43} parent=115 // loop_header_branch
                %300 = sbr.rel (%p298) target = $region123
              $region120: #{skip2net_forward.43} parent=115 // loop_body
                %v304 = vld [vmem:[%s302] sm:$0xff]
                %305 = vst [vmem:[%s303] sm:$0xff] %v304
                %v306 = vld [vmem:[%s302 + $0x8] sm:$0xff]
                %307 = vst [vmem:[%s303 + $0x10] sm:$0xff] %v306
              $region121: #{skip2net_forward.43} parent=115 // loop_footer
                %s301 = sadd.s32 1, %s297
              $region122: #{skip2net_forward.43} parent=115 // loop_footer_branch
                %296 = sbr.rel target = $region118
              $region123: #{skip2net_forward.43} parent=115 // loop_exit
                _
            $region116: #{skip2net_forward.43} parent=107 // pred_fallthru
              _
          $region108: #{skip2net_forward.43} parent=103 // pred_fallthru
            _
          %324 = vnop
        $region104: #{skip2net_forward.43} parent=57 // pred_fallthru
          _
      $region58: #{skip2net_forward.43} parent=5 // pred_fallthru
        _
      %p325 = scmp.le.s32.totalorder 2, %s9
      // Predicated region
      $region139: #{skip2net_forward.43} parent=5 // pred_check
        %p326 = pneg %p325
      $region140: #{skip2net_forward.43} parent=5 // pred_check_branch
        %328 = sbr.rel (%p326) target = $region142
      $region141: #{skip2net_forward.43} parent=5 // pred_region
        %s329 = ssub.s32 %s9, 2
        // Predicated region
        $region143: #{skip2net_forward.43} parent=141 // pred_check
          %p330 = pneg %p80
        $region144: #{skip2net_forward.43} parent=141 // pred_check_branch
          %332 = sbr.rel (%p330) target = $region146
        $region145: #{skip2net_forward.43} parent=141 // pred_region
          %s333 = sand.u32 %s65, 1
          %s334 = sand.u32 %s65, 1
          %s335 = smul.addr %s334, 16
          %s336 = scalar_lea.vmem [#allocation3], %s335
        $region146: #{skip2net_forward.43} parent=141 // pred_fallthru
          _
        // Predicated region
        $region147: #{skip2net_forward.43} parent=141 // pred_check
          %p337 = pneg %p108
        $region148: #{skip2net_forward.43} parent=141 // pred_check_branch
          %339 = sbr.rel (%p337) target = $region150
        $region149: #{skip2net_forward.43} parent=141 // pred_region
          %s340 = sand.u32 %s93, 1
          %s341 = sand.u32 %s93, 1
          %s342 = smul.addr %s341, 16
          %s343 = scalar_lea.vmem [#allocation4], %s342
        $region150: #{skip2net_forward.43} parent=141 // pred_fallthru
          _
      $region142: #{skip2net_forward.43} parent=5 // pred_fallthru
        _
    $region6: #{skip2net_forward.43} parent=1 // loop_footer
      %s13 = sadd.s32 1, %s9
    $region7: #{skip2net_forward.43} parent=1 // loop_footer_branch
      %8 = sbr.rel target = $region3
    $region8: #{skip2net_forward.43} parent=1 // loop_exit
      _

// kernel: skip2net_forward.44
$region0: #{skip2net_forward.44}
  #allocation0 [shape = 'u32[]', space=smem, size = 0x4, offset = 0x4, fixed_abs, tag = 'smem constant byte address 0x4 - core index']
  #allocation1 [shape = 'u32[144,128]{1,0:T(1,128)}', space=vmem, size = 0x12000, scoped, tag = 'internal scratch']
  %s0 = inlined_call_operand.vmem [shape: bf16[2,16,512], index: 0, kind: input, shape index: {}]
  %s1 = inlined_call_operand.vmem [shape: f32[2,16,1], index: 1, kind: input, shape index: {}]
  %s2 = inlined_call_operand.vmem [shape: f32[2,16,1], index: 2, kind: input, shape index: {}]
  %s3 = inlined_call_operand.vmem [shape: bf16[2,16,512], index: 3, kind: output, shape index: {}]
  %s4 = sld [smem:[#allocation0]]
  $region117: #{skip2net_forward.44} parent=0
    _
  %s6 = ssub.s32 1, %s4
  %s7 = scalar_select 0, %s6, %s4
  $region1: #{skip2net_forward.44} parent=0
    #allocation2 [shape = 'u8[16384]{0}', space=vmem, size = 0x4000, scoped, tag = 'input window, operand 0']
    #allocation3 [shape = 'u8[16384]{0}', space=vmem, size = 0x4000, scoped, tag = 'output window, operand 0']
    loop: start=0, step=1, limit=6
    $region2: #{skip2net_forward.44} parent=1 // loop_pre_header
      _
    $region3: #{skip2net_forward.44} parent=1 // loop_header
      %s9 = sphi 0, %s13
      %p10 = scmp.ge.s32.totalorder %s9, 6
      %s16 = sphi 0, %s28
      %s17 = sphi 0, %s24
      %s18 = sphi 0, %s16
      %s19 = sphi 0, %s17
      %s20 = sphi 0, %s18
      %s21 = sphi 0, %s19
      %s33 = sphi 0, %s35
      %s36 = sphi 0, %s33
      %s37 = sphi 0, %s36
      %s53 = sphi 0, %s37
      %s59 = sphi 0, %s61
      %s62 = sphi 0, %s59
      %s63 = sphi 0, %s62
      %s79 = sphi 0, %s63
      %s85 = sphi 0, %s87
      %s88 = sphi 0, %s85
      %s89 = sphi 0, %s88
      %s105 = sphi 0, %s89
      %s113 = sphi 0, %s115
      %s116 = sphi 0, %s113
      %s117 = sphi 0, %s116
      %s133 = sphi 0, %s117
    $region4: #{skip2net_forward.44} parent=1 // loop_header_branch
      %12 = sbr.rel (%p10) target = $region8
    $region5: #{skip2net_forward.44} parent=1 // loop_body
      %s14 = ssub.s32 %s9, 1
      %s15 = ssub.s32 %s9, 2
      %s22 = sadd.s32 1, %s17
      %p23 = scmp.ge.s32.totalorder %s22, 2
      %s24 = scalar_select %p23, 0, %s22
      %s25 = sadd.s32 1, %s16
      %s26 = scalar_select %p23, %s25, %s16
      %p27 = scmp.ge.s32.totalorder %s26, 2
      %s28 = scalar_select %p27, 0, %s26
      %s29 = ssub.s32 %s16, %s28
      %s30 = ssub.s32 %s17, %s24
      %s31 = sor.u32 %s29, %s30
      %p32 = scmp.eq.s32.totalorder %s31, 0
      %s34 = sadd.s32 %s33, 1
      %s35 = scalar_select %p32, %s33, %s34
      %p38 = pneg %p32
      %p39 = scmp.eq.s32.totalorder %s9, 3
      %p40 = por %p38, %p39
      %p41 = scmp.ne.s32.totalorder %s33, %s36
      %p42 = scmp.eq.s32.totalorder %s9, 0
      %p43 = por %p41, %p42
      %p44 = scmp.ne.s32.totalorder %s33, %s36
      %p45 = scmp.eq.s32.totalorder %s14, 3
      %p46 = por %p44, %p45
      %p47 = scmp.ne.s32.totalorder %s36, %s37
      %p48 = scmp.eq.s32.totalorder %s14, 0
      %p49 = por %p47, %p48
      %p50 = scmp.ne.s32.totalorder %s36, %s37
      %p51 = scmp.eq.s32.totalorder %s15, 3
      %p52 = por %p50, %p51
      %p54 = scmp.ne.s32.totalorder %s37, %s53
      %p55 = scmp.eq.s32.totalorder %s15, 0
      %p56 = por %p54, %p55
      %s57 = ssub.s32 %s16, %s28
      %p58 = scmp.eq.s32.totalorder %s57, 0
      %s60 = sadd.s32 %s59, 1
      %s61 = scalar_select %p58, %s59, %s60
      %p64 = pneg %p58
      %p65 = scmp.eq.s32.totalorder %s9, 3
      %p66 = por %p64, %p65
      %p67 = scmp.ne.s32.totalorder %s59, %s62
      %p68 = scmp.eq.s32.totalorder %s9, 0
      %p69 = por %p67, %p68
      %p70 = scmp.ne.s32.totalorder %s59, %s62
      %p71 = scmp.eq.s32.totalorder %s14, 3
      %p72 = por %p70, %p71
      %p73 = scmp.ne.s32.totalorder %s62, %s63
      %p74 = scmp.eq.s32.totalorder %s14, 0
      %p75 = por %p73, %p74
      %p76 = scmp.ne.s32.totalorder %s62, %s63
      %p77 = scmp.eq.s32.totalorder %s15, 3
      %p78 = por %p76, %p77
      %p80 = scmp.ne.s32.totalorder %s63, %s79
      %p81 = scmp.eq.s32.totalorder %s15, 0
      %p82 = por %p80, %p81
      %s83 = ssub.s32 %s16, %s28
      %p84 = scmp.eq.s32.totalorder %s83, 0
      %s86 = sadd.s32 %s85, 1
      %s87 = scalar_select %p84, %s85, %s86
      %p90 = pneg %p84
      %p91 = scmp.eq.s32.totalorder %s9, 3
      %p92 = por %p90, %p91
      %p93 = scmp.ne.s32.totalorder %s85, %s88
      %p94 = scmp.eq.s32.totalorder %s9, 0
      %p95 = por %p93, %p94
      %p96 = scmp.ne.s32.totalorder %s85, %s88
      %p97 = scmp.eq.s32.totalorder %s14, 3
      %p98 = por %p96, %p97
      %p99 = scmp.ne.s32.totalorder %s88, %s89
      %p100 = scmp.eq.s32.totalorder %s14, 0
      %p101 = por %p99, %p100
      %p102 = scmp.ne.s32.totalorder %s88, %s89
      %p103 = scmp.eq.s32.totalorder %s15, 3
      %p104 = por %p102, %p103
      %p106 = scmp.ne.s32.totalorder %s89, %s105
      %p107 = scmp.eq.s32.totalorder %s15, 0
      %p108 = por %p106, %p107
      %s109 = ssub.s32 %s16, %s28
      %s110 = ssub.s32 %s17, %s24
      %s111 = sor.u32 %s109, %s110
      %p112 = scmp.eq.s32.totalorder %s111, 0
      %s114 = sadd.s32 %s113, 1
      %s115 = scalar_select %p112, %s113, %s114
      %p118 = pneg %p112
      %p119 = scmp.eq.s32.totalorder %s9, 3
      %p120 = por %p118, %p119
      %p121 = scmp.ne.s32.totalorder %s113, %s116
      %p122 = scmp.eq.s32.totalorder %s9, 0
      %p123 = por %p121, %p122
      %p124 = scmp.ne.s32.totalorder %s113, %s116
      %p125 = scmp.eq.s32.totalorder %s14, 3
      %p126 = por %p124, %p125
      %p127 = scmp.ne.s32.totalorder %s116, %s117
      %p128 = scmp.eq.s32.totalorder %s14, 0
      %p129 = por %p127, %p128
      %p130 = scmp.ne.s32.totalorder %s116, %s117
      %p131 = scmp.eq.s32.totalorder %s15, 3
      %p132 = por %p130, %p131
      %p134 = scmp.ne.s32.totalorder %s117, %s133
      %p135 = scmp.eq.s32.totalorder %s15, 0
      %p136 = por %p134, %p135
      %p137 = scmp.le.s32.totalorder 1, %s9
      %p138 = scmp.lt.s32.totalorder %s9, 5
      %p139 = pnand %p137, %p138
      %p140 = pneg %p139
      // Predicated region
      $region9: #{skip2net_forward.44} parent=5 // pred_check
        _
      $region10: #{skip2net_forward.44} parent=5 // pred_check_branch
        %142 = sbr.rel (%p139) target = $region12
      $region11: #{skip2net_forward.44} parent=5 // pred_region
        %s143 = ssub.s32 %s9, 1
      $region12: #{skip2net_forward.44} parent=5 // pred_fallthru
        _
      %p144 = scmp.lt.s32.totalorder %s9, 4
      // Predicated region
      $region13: #{skip2net_forward.44} parent=5 // pred_check
        %p145 = pneg %p144
      $region14: #{skip2net_forward.44} parent=5 // pred_check_branch
        %147 = sbr.rel (%p145) target = $region16
      $region15: #{skip2net_forward.44} parent=5 // pred_region
        // Predicated region
        $region17: #{skip2net_forward.44} parent=15 // pred_check
          %p148 = pneg %p43
        $region18: #{skip2net_forward.44} parent=15 // pred_check_branch
          %150 = sbr.rel (%p148) target = $region20
        $region19: #{skip2net_forward.44} parent=15 // pred_region
          %s151 = sand.u32 %s33, 1
          %s152 = sand.u32 %s33, 1
          %s153 = smul.addr %s152, 16
          %s154 = scalar_lea.vmem [#allocation2], %s153
          %s155 = smul.u32 2, %s17
          %s156 = smul.addr %s16, 8
          %s157 = sadd.s32 %s155, %s156
          %s158 = smul.addr %s157, 4
          %s159 = scalar_lea.vmem %s0, %s158
          // Predicated region
          $region21: #{skip2net_forward.44} parent=19 // pred_check
            _
          $region22: #{skip2net_forward.44} parent=19 // pred_check_branch
            %161 = sbr.rel (0) target = $region24
          $region23: #{skip2net_forward.44} parent=19 // pred_region
            // Predicated region
            $region25: #{skip2net_forward.44} parent=23 // pred_check
              _
            $region26: #{skip2net_forward.44} parent=23 // pred_check_branch
              %163 = sbr.rel (0) target = $region28
            $region27: #{skip2net_forward.44} parent=23 // pred_region
              // Predicated region
              $region40: #{skip2net_forward.44} parent=27 // pred_check
                _
              $region41: #{skip2net_forward.44} parent=27 // pred_check_branch
                %180 = sbr.rel (0) target = $region43
              $region42: #{skip2net_forward.44} parent=27 // pred_region
                loop: start=0, step=1, limit=1
                $region44: #{skip2net_forward.44} parent=42 // loop_pre_header
                  _
                $region45: #{skip2net_forward.44} parent=42 // loop_header
                  %s182 = sphi 0, %s186
                  %p183 = scmp.ge.s32.totalorder %s182, 1
                  %s187 = sphi %s159, %s159
                  %s188 = sphi %s154, %s154
                $region46: #{skip2net_forward.44} parent=42 // loop_header_branch
                  %185 = sbr.rel (%p183) target = $region50
                $region47: #{skip2net_forward.44} parent=42 // loop_body
                  %v189 = vld [vmem:[%s187] sm:$0xff]
                  %190 = vst [vmem:[%s188] sm:$0xff] %v189
                  %v191 = vld [vmem:[%s187 + $0x10] sm:$0xff]
                  %192 = vst [vmem:[%s188 + $0x8] sm:$0xff] %v191
                $region48: #{skip2net_forward.44} parent=42 // loop_footer
                  %s186 = sadd.s32 1, %s182
                $region49: #{skip2net_forward.44} parent=42 // loop_footer_branch
                  %181 = sbr.rel target = $region45
                $region50: #{skip2net_forward.44} parent=42 // loop_exit
                  _
              $region43: #{skip2net_forward.44} parent=27 // pred_fallthru
                _
              // Predicated region
              $region51: #{skip2net_forward.44} parent=27 // pred_check
                _
              $region52: #{skip2net_forward.44} parent=27 // pred_check_branch
                %194 = sbr.rel target = $region54
              $region53: #{skip2net_forward.44} parent=27 // pred_region
                _
              $region54: #{skip2net_forward.44} parent=27 // pred_fallthru
                _
            $region28: #{skip2net_forward.44} parent=23 // pred_fallthru
              _
            // Predicated region
            $region29: #{skip2net_forward.44} parent=23 // pred_check
              _
            $region30: #{skip2net_forward.44} parent=23 // pred_check_branch
              %165 = sbr.rel target = $region32
            $region31: #{skip2net_forward.44} parent=23 // pred_region
              loop: start=0, step=1, limit=1
              $region33: #{skip2net_forward.44} parent=31 // loop_pre_header
                _
              $region34: #{skip2net_forward.44} parent=31 // loop_header
                %s168 = sphi 0, %s172
                %p169 = scmp.ge.s32.totalorder %s168, 1
                %s173 = sphi %s159, %s159
                %s174 = sphi %s154, %s154
              $region35: #{skip2net_forward.44} parent=31 // loop_header_branch
                %171 = sbr.rel (%p169) target = $region39
              $region36: #{skip2net_forward.44} parent=31 // loop_body
                %v175 = vld [vmem:[%s173] sm:$0xff]
                %176 = vst [vmem:[%s174] sm:$0xff] %v175
                %v177 = vld [vmem:[%s173 + $0x10] sm:$0xff]
                %178 = vst [vmem:[%s174 + $0x8] sm:$0xff] %v177
              $region37: #{skip2net_forward.44} parent=31 // loop_footer
                %s172 = sadd.s32 1, %s168
              $region38: #{skip2net_forward.44} parent=31 // loop_footer_branch
                %167 = sbr.rel target = $region34
              $region39: #{skip2net_forward.44} parent=31 // loop_exit
                _
            $region32: #{skip2net_forward.44} parent=23 // pred_fallthru
              _
          $region24: #{skip2net_forward.44} parent=19 // pred_fallthru
            _
          %195 = vnop
        $region20: #{skip2net_forward.44} parent=15 // pred_fallthru
          _
        // Predicated region
        $region55: #{skip2net_forward.44} parent=15 // pred_check
          %p196 = pneg %p69
        $region56: #{skip2net_forward.44} parent=15 // pred_check_branch
          %198 = sbr.rel (%p196) target = $region58
        $region57: #{skip2net_forward.44} parent=15 // pred_region
          %p199 = scmp.lt.s32.totalorder %s16, 1
          %s200 = scalar_select %p199, %s16, 1
          %s201 = smul.addr %s200, 2
          %s202 = smul.addr %s201, 8
          %s203 = scalar_lea.vmem %s1, %s202
        $region58: #{skip2net_forward.44} parent=15 // pred_fallthru
          _
        // Predicated region
        $region59: #{skip2net_forward.44} parent=15 // pred_check
          %p204 = pneg %p95
        $region60: #{skip2net_forward.44} parent=15 // pred_check_branch
          %206 = sbr.rel (%p204) target = $region62
        $region61: #{skip2net_forward.44} parent=15 // pred_region
          %p207 = scmp.lt.s32.totalorder %s16, 1
          %s208 = scalar_select %p207, %s16, 1
          %s209 = smul.addr %s208, 2
          %s210 = smul.addr %s209, 8
          %s211 = scalar_lea.vmem %s2, %s210
        $region62: #{skip2net_forward.44} parent=15 // pred_fallthru
          _
      $region16: #{skip2net_forward.44} parent=5 // pred_fallthru
        _
      %p212 = scmp.le.s32.totalorder 1, %s9
      %p213 = scmp.lt.s32.totalorder %s9, 5
      %p214 = pnand %p212, %p213
      %p215 = pneg %p214
      // Predicated region
      $region63: #{skip2net_forward.44} parent=5 // pred_check
        _
      $region64: #{skip2net_forward.44} parent=5 // pred_check_branch
        %217 = sbr.rel (%p214) target = $region66
      $region65: #{skip2net_forward.44} parent=5 // pred_region
        %s218 = ssub.s32 %s9, 1
        %s219 = sand.u32 %s36, 1
        %s220 = sand.u32 %s36, 1
        %s221 = smul.addr %s220, 16
        %s222 = scalar_lea.vmem [#allocation2], %s221
        // Predicated region
        $region67: #{skip2net_forward.44} parent=65 // pred_check
          %p223 = pneg %p49
        $region68: #{skip2net_forward.44} parent=65 // pred_check_branch
          %225 = sbr.rel (%p223) target = $region70
        $region69: #{skip2net_forward.44} parent=65 // pred_region
          _
        $region70: #{skip2net_forward.44} parent=65 // pred_fallthru
          _
        %s226 = sand.u32 %s36, 1
        %s227 = sand.u32 %s36, 1
        %s228 = smul.addr %s227, 16
        %s229 = scalar_lea.vmem [#allocation2], %s228
        %p230 = pneg %p49
        %p231 = pneg %p46
        %p232 = scmp.lt.s32.totalorder %s18, 1
        %s233 = scalar_select %p232, %s18, 1
        %s234 = smul.addr %s233, 2
        %s235 = smul.addr %s234, 8
        %s236 = scalar_lea.vmem %s1, %s235
        %p237 = pneg %p75
        %p238 = pneg %p72
        %p239 = scmp.lt.s32.totalorder %s18, 1
        %s240 = scalar_select %p239, %s18, 1
        %s241 = smul.addr %s240, 2
        %s242 = smul.addr %s241, 8
        %s243 = scalar_lea.vmem %s2, %s242
        %p244 = pneg %p101
        %p245 = pneg %p98
        %p246 = pneg %p129
        %p247 = pneg %p126
        %s248 = sand.u32 %s116, 1
        %s249 = sand.u32 %s116, 1
        %s250 = smul.addr %s249, 16
        %s251 = scalar_lea.vmem [#allocation3], %s250
        %s252 = smul.u32 2, %s19
        %p253 = scmp.lt.s32.totalorder %s18, 1
        %s254 = scalar_select %p253, %s18, 1
        %s255 = smul.addr %s254, 2
        %s256 = smul.addr %s255, 8
        %s257 = scalar_lea.vmem %s1, %s256
        %p258 = scmp.lt.s32.totalorder %s18, 1
        %s259 = scalar_select %p258, %s18, 1
        %s260 = smul.addr %s259, 2
        %s261 = smul.addr %s260, 8
        %s262 = scalar_lea.vmem %s2, %s261
        %s263 = smul.u32 2, %s19
        %v264 = vld [vmem:[%s222] sm:$0xff]
        %v265 = vld [vmem:[%s222 + $0x8] sm:$0xff]
        %v266 = vunpack.c.l.bf16 %v264
        %v267 = vunpack.c.h.bf16 %v264
        %v268 = vunpack.c.l.bf16 %v265
        %v269 = vunpack.c.h.bf16 %v265
        %v270 = vld [vmem:[%s257] sm:$0xff]
        %v271 = vld [vmem:[%s257 + $0x8] sm:$0xff]
        %273 = vset.pattern.permute.xlu0 0
        %274 = vperm.xlu0 %273, %v270
        %v275 = vpop.permute.xlu0 %274
        %278 = vset.pattern.permute.xlu0 0
        %279 = vperm.xlu0 %278, %v271
        %v280 = vpop.permute.xlu0 %279
        %v282 = vmul.f32 %v266, %v275
        %v283 = vmul.f32 %v267, %v275
        %v284 = vmul.f32 %v268, %v280
        %v285 = vmul.f32 %v269, %v280
        %v286 = vld [vmem:[%s262] sm:$0xff]
        %v287 = vld [vmem:[%s262 + $0x8] sm:$0xff]
        %289 = vset.pattern.permute.xlu0 0
        %290 = vperm.xlu0 %289, %v286
        %v291 = vpop.permute.xlu0 %290
        %294 = vset.pattern.permute.xlu0 0
        %295 = vperm.xlu0 %294, %v287
        %v296 = vpop.permute.xlu0 %295
        %v298 = vadd.f32 %v282, %v291
        %v299 = vadd.f32 %v283, %v291
        %v300 = vadd.f32 %v284, %v296
        %v301 = vadd.f32 %v285, %v296
        %v302 = vpack.c.bf16 %v300, %v298
        %v303 = vpack.c.bf16 %v301, %v299
        %v306 = vunpack.c.l.b16 %v302
        %v307 = vunpack.c.l.b16 %v303
        %v308 = vunpack.c.h.b16 %v302
        %v309 = vunpack.c.h.b16 %v303
        %v310 = vpack.c.b16 %v307, %v306
        %v311 = vpack.c.b16 %v309, %v308
        %314 = vst [vmem:[%s251] sm:$0xff] %v310
        %315 = vst [vmem:[%s251 + $0x8] sm:$0xff] %v311
        %s316 = sand.u32 %s116, 1
        %s317 = sand.u32 %s116, 1
        %s318 = smul.addr %s317, 16
        %s319 = scalar_lea.vmem [#allocation3], %s318
        // Predicated region
        $region71: #{skip2net_forward.44} parent=65 // pred_check
          %p320 = pneg %p126
        $region72: #{skip2net_forward.44} parent=65 // pred_check_branch
          %322 = sbr.rel (%p320) target = $region74
        $region73: #{skip2net_forward.44} parent=65 // pred_region
          %s323 = smul.u32 2, %s19
          %s324 = smul.addr %s18, 8
          %s325 = sadd.s32 %s323, %s324
          %s326 = smul.addr %s325, 4
          %s327 = scalar_lea.vmem %s3, %s326
          // Predicated region
          $region75: #{skip2net_forward.44} parent=73 // pred_check
            _
          $region76: #{skip2net_forward.44} parent=73 // pred_check_branch
            %329 = sbr.rel (0) target = $region78
          $region77: #{skip2net_forward.44} parent=73 // pred_region
            // Predicated region
            $region79: #{skip2net_forward.44} parent=77 // pred_check
              _
            $region80: #{skip2net_forward.44} parent=77 // pred_check_branch
              %331 = sbr.rel (0) target = $region82
            $region81: #{skip2net_forward.44} parent=77 // pred_region
              // Predicated region
              $region94: #{skip2net_forward.44} parent=81 // pred_check
                _
              $region95: #{skip2net_forward.44} parent=81 // pred_check_branch
                %348 = sbr.rel (0) target = $region97
              $region96: #{skip2net_forward.44} parent=81 // pred_region
                loop: start=0, step=1, limit=1
                $region98: #{skip2net_forward.44} parent=96 // loop_pre_header
                  _
                $region99: #{skip2net_forward.44} parent=96 // loop_header
                  %s350 = sphi 0, %s354
                  %p351 = scmp.ge.s32.totalorder %s350, 1
                  %s355 = sphi %s319, %s319
                  %s356 = sphi %s327, %s327
                $region100: #{skip2net_forward.44} parent=96 // loop_header_branch
                  %353 = sbr.rel (%p351) target = $region104
                $region101: #{skip2net_forward.44} parent=96 // loop_body
                  %v357 = vld [vmem:[%s355] sm:$0xff]
                  %358 = vst [vmem:[%s356] sm:$0xff] %v357
                  %v359 = vld [vmem:[%s355 + $0x8] sm:$0xff]
                  %360 = vst [vmem:[%s356 + $0x10] sm:$0xff] %v359
                $region102: #{skip2net_forward.44} parent=96 // loop_footer
                  %s354 = sadd.s32 1, %s350
                $region103: #{skip2net_forward.44} parent=96 // loop_footer_branch
                  %349 = sbr.rel target = $region99
                $region104: #{skip2net_forward.44} parent=96 // loop_exit
                  _
              $region97: #{skip2net_forward.44} parent=81 // pred_fallthru
                _
              // Predicated region
              $region105: #{skip2net_forward.44} parent=81 // pred_check
                _
              $region106: #{skip2net_forward.44} parent=81 // pred_check_branch
                %362 = sbr.rel target = $region108
              $region107: #{skip2net_forward.44} parent=81 // pred_region
                _
              $region108: #{skip2net_forward.44} parent=81 // pred_fallthru
                _
            $region82: #{skip2net_forward.44} parent=77 // pred_fallthru
              _
            // Predicated region
            $region83: #{skip2net_forward.44} parent=77 // pred_check
              _
            $region84: #{skip2net_forward.44} parent=77 // pred_check_branch
              %333 = sbr.rel target = $region86
            $region85: #{skip2net_forward.44} parent=77 // pred_region
              loop: start=0, step=1, limit=1
              $region87: #{skip2net_forward.44} parent=85 // loop_pre_header
                _
              $region88: #{skip2net_forward.44} parent=85 // loop_header
                %s336 = sphi 0, %s340
                %p337 = scmp.ge.s32.totalorder %s336, 1
                %s341 = sphi %s319, %s319
                %s342 = sphi %s327, %s327
              $region89: #{skip2net_forward.44} parent=85 // loop_header_branch
                %339 = sbr.rel (%p337) target = $region93
              $region90: #{skip2net_forward.44} parent=85 // loop_body
                %v343 = vld [vmem:[%s341] sm:$0xff]
                %344 = vst [vmem:[%s342] sm:$0xff] %v343
                %v345 = vld [vmem:[%s341 + $0x8] sm:$0xff]
                %346 = vst [vmem:[%s342 + $0x10] sm:$0xff] %v345
              $region91: #{skip2net_forward.44} parent=85 // loop_footer
                %s340 = sadd.s32 1, %s336
              $region92: #{skip2net_forward.44} parent=85 // loop_footer_branch
                %335 = sbr.rel target = $region88
              $region93: #{skip2net_forward.44} parent=85 // loop_exit
                _
            $region86: #{skip2net_forward.44} parent=77 // pred_fallthru
              _
          $region78: #{skip2net_forward.44} parent=73 // pred_fallthru
            _
          %363 = vnop
        $region74: #{skip2net_forward.44} parent=65 // pred_fallthru
          _
      $region66: #{skip2net_forward.44} parent=5 // pred_fallthru
        _
      %p364 = scmp.le.s32.totalorder 2, %s9
      // Predicated region
      $region109: #{skip2net_forward.44} parent=5 // pred_check
        %p365 = pneg %p364
      $region110: #{skip2net_forward.44} parent=5 // pred_check_branch
        %367 = sbr.rel (%p365) target = $region112
      $region111: #{skip2net_forward.44} parent=5 // pred_region
        %s368 = ssub.s32 %s9, 2
        // Predicated region
        $region113: #{skip2net_forward.44} parent=111 // pred_check
          %p369 = pneg %p132
        $region114: #{skip2net_forward.44} parent=111 // pred_check_branch
          %371 = sbr.rel (%p369) target = $region116
        $region115: #{skip2net_forward.44} parent=111 // pred_region
          %s372 = sand.u32 %s117, 1
          %s373 = sand.u32 %s117, 1
          %s374 = smul.addr %s373, 16
          %s375 = scalar_lea.vmem [#allocation3], %s374
        $region116: #{skip2net_forward.44} parent=111 // pred_fallthru
          _
      $region112: #{skip2net_forward.44} parent=5 // pred_fallthru
        _
    $region6: #{skip2net_forward.44} parent=1 // loop_footer
      %s13 = sadd.s32 1, %s9
    $region7: #{skip2net_forward.44} parent=1 // loop_footer_branch
      %8 = sbr.rel target = $region3
    $region8: #{skip2net_forward.44} parent=1 // loop_exit
      _

// kernel: skip2net_forward.45
$region0: #{skip2net_forward.45}
  #allocation0 [shape = 'u32[]', space=smem, size = 0x4, offset = 0x4, fixed_abs, tag = 'smem constant byte address 0x4 - core index']
  #allocation1 [shape = 'u32[144,128]{1,0:T(1,128)}', space=vmem, size = 0x12000, scoped, tag = 'internal scratch']
  %s0 = inlined_call_operand.vmem [shape: bf16[2,8,144], index: 0, kind: input, shape index: {}]
  %s1 = inlined_call_operand.vmem [shape: bf16[2,144,512], index: 1, kind: input, shape index: {}]
  %s2 = inlined_call_operand.vmem [shape: f32[2,8,1], index: 2, kind: input, shape index: {}]
  %s3 = inlined_call_operand.vmem [shape: bf16[2,8,512], index: 3, kind: output, shape index: {0}]
  %s4 = inlined_call_operand.vmem [shape: f32[2,8,256], index: 4, kind: output, shape index: {1}]
  %s5 = inlined_call_operand.vmem [shape: f32[2,8,256], index: 5, kind: output, shape index: {2}]
  %6 = xla_tuple %s3, %s4, %s5
  %s7 = sld [smem:[#allocation0]]
  $region99: #{skip2net_forward.45} parent=0
    _
  %s9 = ssub.s32 1, %s7
  %s10 = scalar_select 0, %s9, %s7
  $region1: #{skip2net_forward.45} parent=0
    #allocation2 [shape = 'u8[147456]{0}', space=vmem, size = 0x24000, scoped, tag = 'input window, operand 1']
    loop: start=0, step=1, limit=6
    $region2: #{skip2net_forward.45} parent=1 // loop_pre_header
      _
    $region3: #{skip2net_forward.45} parent=1 // loop_header
      %s12 = sphi 0, %s16
      %p13 = scmp.ge.s32.totalorder %s12, 6
      %s19 = sphi 0, %s31
      %s20 = sphi 0, %s27
      %s21 = sphi 0, %s19
      %s22 = sphi 0, %s20
      %s23 = sphi 0, %s21
      %s24 = sphi 0, %s22
      %s34 = sphi 0, %s36
      %s37 = sphi 0, %s34
      %s38 = sphi 0, %s37
      %s54 = sphi 0, %s38
      %s62 = sphi 0, %s64
      %s65 = sphi 0, %s62
      %s66 = sphi 0, %s65
      %s82 = sphi 0, %s66
      %s88 = sphi 0, %s90
      %s91 = sphi 0, %s88
      %s92 = sphi 0, %s91
      %s108 = sphi 0, %s92
      %s116 = sphi 0, %s118
      %s119 = sphi 0, %s116
      %s120 = sphi 0, %s119
      %s136 = sphi 0, %s120
      %s144 = sphi 0, %s146
      %s147 = sphi 0, %s144
      %s148 = sphi 0, %s147
      %s164 = sphi 0, %s148
      %s172 = sphi 0, %s174
      %s175 = sphi 0, %s172
      %s176 = sphi 0, %s175
      %s192 = sphi 0, %s176
    $region4: #{skip2net_forward.45} parent=1 // loop_header_branch
      %15 = sbr.rel (%p13) target = $region8
    $region5: #{skip2net_forward.45} parent=1 // loop_body
      %s17 = ssub.s32 %s12, 1
      %s18 = ssub.s32 %s12, 2
      %s25 = sadd.s32 1, %s20
      %p26 = scmp.ge.s32.totalorder %s25, 2
      %s27 = scalar_select %p26, 0, %s25
      %s28 = sadd.s32 1, %s19
      %s29 = scalar_select %p26, %s28, %s19
      %p30 = scmp.ge.s32.totalorder %s29, 2
      %s31 = scalar_select %p30, 0, %s29
      %s32 = ssub.s32 %s19, %s31
      %p33 = scmp.eq.s32.totalorder %s32, 0
      %s35 = sadd.s32 %s34, 1
      %s36 = scalar_select %p33, %s34, %s35
      %p39 = pneg %p33
      %p40 = scmp.eq.s32.totalorder %s12, 3
      %p41 = por %p39, %p40
      %p42 = scmp.ne.s32.totalorder %s34, %s37
      %p43 = scmp.eq.s32.totalorder %s12, 0
      %p44 = por %p42, %p43
      %p45 = scmp.ne.s32.totalorder %s34, %s37
      %p46 = scmp.eq.s32.totalorder %s17, 3
      %p47 = por %p45, %p46
      %p48 = scmp.ne.s32.totalorder %s37, %s38
      %p49 = scmp.eq.s32.totalorder %s17, 0
      %p50 = por %p48, %p49
      %p51 = scmp.ne.s32.totalorder %s37, %s38
      %p52 = scmp.eq.s32.totalorder %s18, 3
      %p53 = por %p51, %p52
      %p55 = scmp.ne.s32.totalorder %s38, %s54
      %p56 = scmp.eq.s32.totalorder %s18, 0
      %p57 = por %p55, %p56
      %s58 = ssub.s32 %s19, %s31
      %s59 = ssub.s32 %s20, %s27
      %s60 = sor.u32 %s58, %s59
      %p61 = scmp.eq.s32.totalorder %s60, 0
      %s63 = sadd.s32 %s62, 1
      %s64 = scalar_select %p61, %s62, %s63
      %p67 = pneg %p61
      %p68 = scmp.eq.s32.totalorder %s12, 3
      %p69 = por %p67, %p68
      %p70 = scmp.ne.s32.totalorder %s62, %s65
      %p71 = scmp.eq.s32.totalorder %s12, 0
      %p72 = por %p70, %p71
      %p73 = scmp.ne.s32.totalorder %s62, %s65
      %p74 = scmp.eq.s32.totalorder %s17, 3
      %p75 = por %p73, %p74
      %p76 = scmp.ne.s32.totalorder %s65, %s66
      %p77 = scmp.eq.s32.totalorder %s17, 0
      %p78 = por %p76, %p77
      %p79 = scmp.ne.s32.totalorder %s65, %s66
      %p80 = scmp.eq.s32.totalorder %s18, 3
      %p81 = por %p79, %p80
      %p83 = scmp.ne.s32.totalorder %s66, %s82
      %p84 = scmp.eq.s32.totalorder %s18, 0
      %p85 = por %p83, %p84
      %s86 = ssub.s32 %s19, %s31
      %p87 = scmp.eq.s32.totalorder %s86, 0
      %s89 = sadd.s32 %s88, 1
      %s90 = scalar_select %p87, %s88, %s89
      %p93 = pneg %p87
      %p94 = scmp.eq.s32.totalorder %s12, 3
      %p95 = por %p93, %p94
      %p96 = scmp.ne.s32.totalorder %s88, %s91
      %p97 = scmp.eq.s32.totalorder %s12, 0
      %p98 = por %p96, %p97
      %p99 = scmp.ne.s32.totalorder %s88, %s91
      %p100 = scmp.eq.s32.totalorder %s17, 3
      %p101 = por %p99, %p100
      %p102 = scmp.ne.s32.totalorder %s91, %s92
      %p103 = scmp.eq.s32.totalorder %s17, 0
      %p104 = por %p102, %p103
      %p105 = scmp.ne.s32.totalorder %s91, %s92
      %p106 = scmp.eq.s32.totalorder %s18, 3
      %p107 = por %p105, %p106
      %p109 = scmp.ne.s32.totalorder %s92, %s108
      %p110 = scmp.eq.s32.totalorder %s18, 0
      %p111 = por %p109, %p110
      %s112 = ssub.s32 %s19, %s31
      %s113 = ssub.s32 %s20, %s27
      %s114 = sor.u32 %s112, %s113
      %p115 = scmp.eq.s32.totalorder %s114, 0
      %s117 = sadd.s32 %s116, 1
      %s118 = scalar_select %p115, %s116, %s117
      %p121 = pneg %p115
      %p122 = scmp.eq.s32.totalorder %s12, 3
      %p123 = por %p121, %p122
      %p124 = scmp.ne.s32.totalorder %s116, %s119
      %p125 = scmp.eq.s32.totalorder %s12, 0
      %p126 = por %p124, %p125
      %p127 = scmp.ne.s32.totalorder %s116, %s119
      %p128 = scmp.eq.s32.totalorder %s17, 3
      %p129 = por %p127, %p128
      %p130 = scmp.ne.s32.totalorder %s119, %s120
      %p131 = scmp.eq.s32.totalorder %s17, 0
      %p132 = por %p130, %p131
      %p133 = scmp.ne.s32.totalorder %s119, %s120
      %p134 = scmp.eq.s32.totalorder %s18, 3
      %p135 = por %p133, %p134
      %p137 = scmp.ne.s32.totalorder %s120, %s136
      %p138 = scmp.eq.s32.totalorder %s18, 0
      %p139 = por %p137, %p138
      %s140 = ssub.s32 %s19, %s31
      %s141 = ssub.s32 %s20, %s27
      %s142 = sor.u32 %s140, %s141
      %p143 = scmp.eq.s32.totalorder %s142, 0
      %s145 = sadd.s32 %s144, 1
      %s146 = scalar_select %p143, %s144, %s145
      %p149 = pneg %p143
      %p150 = scmp.eq.s32.totalorder %s12, 3
      %p151 = por %p149, %p150
      %p152 = scmp.ne.s32.totalorder %s144, %s147
      %p153 = scmp.eq.s32.totalorder %s12, 0
      %p154 = por %p152, %p153
      %p155 = scmp.ne.s32.totalorder %s144, %s147
      %p156 = scmp.eq.s32.totalorder %s17, 3
      %p157 = por %p155, %p156
      %p158 = scmp.ne.s32.totalorder %s147, %s148
      %p159 = scmp.eq.s32.totalorder %s17, 0
      %p160 = por %p158, %p159
      %p161 = scmp.ne.s32.totalorder %s147, %s148
      %p162 = scmp.eq.s32.totalorder %s18, 3
      %p163 = por %p161, %p162
      %p165 = scmp.ne.s32.totalorder %s148, %s164
      %p166 = scmp.eq.s32.totalorder %s18, 0
      %p167 = por %p165, %p166
      %s168 = ssub.s32 %s19, %s31
      %s169 = ssub.s32 %s20, %s27
      %s170 = sor.u32 %s168, %s169
      %p171 = scmp.eq.s32.totalorder %s170, 0
      %s173 = sadd.s32 %s172, 1
      %s174 = scalar_select %p171, %s172, %s173
      %p177 = pneg %p171
      %p178 = scmp.eq.s32.totalorder %s12, 3
      %p179 = por %p177, %p178
      %p180 = scmp.ne.s32.totalorder %s172, %s175
      %p181 = scmp.eq.s32.totalorder %s12, 0
      %p182 = por %p180, %p181
      %p183 = scmp.ne.s32.totalorder %s172, %s175
      %p184 = scmp.eq.s32.totalorder %s17, 3
      %p185 = por %p183, %p184
      %p186 = scmp.ne.s32.totalorder %s175, %s176
      %p187 = scmp.eq.s32.totalorder %s17, 0
      %p188 = por %p186, %p187
      %p189 = scmp.ne.s32.totalorder %s175, %s176
      %p190 = scmp.eq.s32.totalorder %s18, 3
      %p191 = por %p189, %p190
      %p193 = scmp.ne.s32.totalorder %s176, %s192
      %p194 = scmp.eq.s32.totalorder %s18, 0
      %p195 = por %p193, %p194
      %p196 = scmp.le.s32.totalorder 1, %s12
      %p197 = scmp.lt.s32.totalorder %s12, 5
      %p198 = pnand %p196, %p197
      %p199 = pneg %p198
      // Predicated region
      $region9: #{skip2net_forward.45} parent=5 // pred_check
        _
      $region10: #{skip2net_forward.45} parent=5 // pred_check_branch
        %201 = sbr.rel (%p198) target = $region12
      $region11: #{skip2net_forward.45} parent=5 // pred_region
        %s202 = ssub.s32 %s12, 1
      $region12: #{skip2net_forward.45} parent=5 // pred_fallthru
        _
      %p203 = scmp.lt.s32.totalorder %s12, 4
      // Predicated region
      $region13: #{skip2net_forward.45} parent=5 // pred_check
        %p204 = pneg %p203
      $region14: #{skip2net_forward.45} parent=5 // pred_check_branch
        %206 = sbr.rel (%p204) target = $region16
      $region15: #{skip2net_forward.45} parent=5 // pred_region
        // Predicated region
        $region17: #{skip2net_forward.45} parent=15 // pred_check
          %p207 = pneg %p44
        $region18: #{skip2net_forward.45} parent=15 // pred_check_branch
          %209 = sbr.rel (%p207) target = $region20
        $region19: #{skip2net_forward.45} parent=15 // pred_region
          %p210 = scmp.lt.s32.totalorder %s19, 1
          %s211 = scalar_select %p210, %s19, 1
          %s212 = smul.addr %s211, 2
          %s213 = smul.addr %s212, 4
          %s214 = scalar_lea.vmem %s0, %s213
        $region20: #{skip2net_forward.45} parent=15 // pred_fallthru
          _
        // Predicated region
        $region21: #{skip2net_forward.45} parent=15 // pred_check
          %p215 = pneg %p72
        $region22: #{skip2net_forward.45} parent=15 // pred_check_branch
          %217 = sbr.rel (%p215) target = $region24
        $region23: #{skip2net_forward.45} parent=15 // pred_region
          %s218 = sand.u32 %s62, 1
          %s219 = sand.u32 %s62, 1
          %s220 = smul.addr %s219, 144
          %s221 = scalar_lea.vmem [#allocation2], %s220
          %s222 = smul.u32 2, %s20
          %s223 = smul.addr %s19, 72
          %s224 = sadd.s32 %s222, %s223
          %s225 = smul.addr %s224, 4
          %s226 = scalar_lea.vmem %s1, %s225
          // Predicated region
          $region25: #{skip2net_forward.45} parent=23 // pred_check
            _
          $region26: #{skip2net_forward.45} parent=23 // pred_check_branch
            %228 = sbr.rel (0) target = $region28
          $region27: #{skip2net_forward.45} parent=23 // pred_region
            // Predicated region
            $region29: #{skip2net_forward.45} parent=27 // pred_check
              _
            $region30: #{skip2net_forward.45} parent=27 // pred_check_branch
              %230 = sbr.rel (0) target = $region32
            $region31: #{skip2net_forward.45} parent=27 // pred_region
              // Predicated region
              $region44: #{skip2net_forward.45} parent=31 // pred_check
                _
              $region45: #{skip2net_forward.45} parent=31 // pred_check_branch
                %279 = sbr.rel (0) target = $region47
              $region46: #{skip2net_forward.45} parent=31 // pred_region
                loop: start=0, step=1, limit=1
                $region48: #{skip2net_forward.45} parent=46 // loop_pre_header
                  _
                $region49: #{skip2net_forward.45} parent=46 // loop_header
                  %s281 = sphi 0, %s285
                  %p282 = scmp.ge.s32.totalorder %s281, 1
                  %s286 = sphi %s226, %s226
                  %s287 = sphi %s221, %s221
                $region50: #{skip2net_forward.45} parent=46 // loop_header_branch
                  %284 = sbr.rel (%p282) target = $region54
                $region51: #{skip2net_forward.45} parent=46 // loop_body
                  %v288 = vld [vmem:[%s286] sm:$0xff]
                  %289 = vst [vmem:[%s287] sm:$0xff] %v288
                  %v290 = vld [vmem:[%s286 + $0x10] sm:$0xff]
                  %291 = vst [vmem:[%s287 + $0x8] sm:$0xff] %v290
                  %v292 = vld [vmem:[%s286 + $0x20] sm:$0xff]
                  %293 = vst [vmem:[%s287 + $0x10] sm:$0xff] %v292
                  %v294 = vld [vmem:[%s286 + $0x30] sm:$0xff]
                  %295 = vst [vmem:[%s287 + $0x18] sm:$0xff] %v294
                  %v296 = vld [vmem:[%s286 + $0x40] sm:$0xff]
                  %297 = vst [vmem:[%s287 + $0x20] sm:$0xff] %v296
                  %v298 = vld [vmem:[%s286 + $0x50] sm:$0xff]
                  %299 = vst [vmem:[%s287 + $0x28] sm:$0xff] %v298
                  %v300 = vld [vmem:[%s286 + $0x60] sm:$0xff]
                  %301 = vst [vmem:[%s287 + $0x30] sm:$0xff] %v300
                  %v302 = vld [vmem:[%s286 + $0x70] sm:$0xff]
                  %303 = vst [vmem:[%s287 + $0x38] sm:$0xff] %v302
                  %v304 = vld [vmem:[%s286 + $0x80] sm:$0xff]
                  %305 = vst [vmem:[%s287 + $0x40] sm:$0xff] %v304
                  %v306 = vld [vmem:[%s286 + $0x90] sm:$0xff]
                  %307 = vst [vmem:[%s287 + $0x48] sm:$0xff] %v306
                  %v308 = vld [vmem:[%s286 + $0xa0] sm:$0xff]
                  %309 = vst [vmem:[%s287 + $0x50] sm:$0xff] %v308
                  %v310 = vld [vmem:[%s286 + $0xb0] sm:$0xff]
                  %311 = vst [vmem:[%s287 + $0x58] sm:$0xff] %v310
                  %v312 = vld [vmem:[%s286 + $0xc0] sm:$0xff]
                  %313 = vst [vmem:[%s287 + $0x60] sm:$0xff] %v312
                  %v314 = vld [vmem:[%s286 + $0xd0] sm:$0xff]
                  %315 = vst [vmem:[%s287 + $0x68] sm:$0xff] %v314
                  %v316 = vld [vmem:[%s286 + $0xe0] sm:$0xff]
                  %317 = vst [vmem:[%s287 + $0x70] sm:$0xff] %v316
                  %v318 = vld [vmem:[%s286 + $0xf0] sm:$0xff]
                  %319 = vst [vmem:[%s287 + $0x78] sm:$0xff] %v318
                  %v320 = vld [vmem:[%s286 + $0x100] sm:$0xff]
                  %321 = vst [vmem:[%s287 + $0x80] sm:$0xff] %v320
                  %v322 = vld [vmem:[%s286 + $0x110] sm:$0xff]
                  %323 = vst [vmem:[%s287 + $0x88] sm:$0xff] %v322
                $region52: #{skip2net_forward.45} parent=46 // loop_footer
                  %s285 = sadd.s32 1, %s281
                $region53: #{skip2net_forward.45} parent=46 // loop_footer_branch
                  %280 = sbr.rel target = $region49
                $region54: #{skip2net_forward.45} parent=46 // loop_exit
                  _
              $region47: #{skip2net_forward.45} parent=31 // pred_fallthru
                _
              // Predicated region
              $region55: #{skip2net_forward.45} parent=31 // pred_check
                _
              $region56: #{skip2net_forward.45} parent=31 // pred_check_branch
                %325 = sbr.rel target = $region58
              $region57: #{skip2net_forward.45} parent=31 // pred_region
                _
              $region58: #{skip2net_forward.45} parent=31 // pred_fallthru
                _
            $region32: #{skip2net_forward.45} parent=27 // pred_fallthru
              _
            // Predicated region
            $region33: #{skip2net_forward.45} parent=27 // pred_check
              _
            $region34: #{skip2net_forward.45} parent=27 // pred_check_branch
              %232 = sbr.rel target = $region36
            $region35: #{skip2net_forward.45} parent=27 // pred_region
              loop: start=0, step=1, limit=1
              $region37: #{skip2net_forward.45} parent=35 // loop_pre_header
                _
              $region38: #{skip2net_forward.45} parent=35 // loop_header
                %s235 = sphi 0, %s239
                %p236 = scmp.ge.s32.totalorder %s235, 1
                %s240 = sphi %s226, %s226
                %s241 = sphi %s221, %s221
              $region39: #{skip2net_forward.45} parent=35 // loop_header_branch
                %238 = sbr.rel (%p236) target = $region43
              $region40: #{skip2net_forward.45} parent=35 // loop_body
                %v242 = vld [vmem:[%s240] sm:$0xff]
                %243 = vst [vmem:[%s241] sm:$0xff] %v242
                %v244 = vld [vmem:[%s240 + $0x10] sm:$0xff]
                %245 = vst [vmem:[%s241 + $0x8] sm:$0xff] %v244
                %v246 = vld [vmem:[%s240 + $0x20] sm:$0xff]
                %247 = vst [vmem:[%s241 + $0x10] sm:$0xff] %v246
                %v248 = vld [vmem:[%s240 + $0x30] sm:$0xff]
                %249 = vst [vmem:[%s241 + $0x18] sm:$0xff] %v248
                %v250 = vld [vmem:[%s240 + $0x40] sm:$0xff]
                %251 = vst [vmem:[%s241 + $0x20] sm:$0xff] %v250
                %v252 = vld [vmem:[%s240 + $0x50] sm:$0xff]
                %253 = vst [vmem:[%s241 + $0x28] sm:$0xff] %v252
                %v254 = vld [vmem:[%s240 + $0x60] sm:$0xff]
                %255 = vst [vmem:[%s241 + $0x30] sm:$0xff] %v254
                %v256 = vld [vmem:[%s240 + $0x70] sm:$0xff]
                %257 = vst [vmem:[%s241 + $0x38] sm:$0xff] %v256
                %v258 = vld [vmem:[%s240 + $0x80] sm:$0xff]
                %259 = vst [vmem:[%s241 + $0x40] sm:$0xff] %v258
                %v260 = vld [vmem:[%s240 + $0x90] sm:$0xff]
                %261 = vst [vmem:[%s241 + $0x48] sm:$0xff] %v260
                %v262 = vld [vmem:[%s240 + $0xa0] sm:$0xff]
                %263 = vst [vmem:[%s241 + $0x50] sm:$0xff] %v262
                %v264 = vld [vmem:[%s240 + $0xb0] sm:$0xff]
                %265 = vst [vmem:[%s241 + $0x58] sm:$0xff] %v264
                %v266 = vld [vmem:[%s240 + $0xc0] sm:$0xff]
                %267 = vst [vmem:[%s241 + $0x60] sm:$0xff] %v266
                %v268 = vld [vmem:[%s240 + $0xd0] sm:$0xff]
                %269 = vst [vmem:[%s241 + $0x68] sm:$0xff] %v268
                %v270 = vld [vmem:[%s240 + $0xe0] sm:$0xff]
                %271 = vst [vmem:[%s241 + $0x70] sm:$0xff] %v270
                %v272 = vld [vmem:[%s240 + $0xf0] sm:$0xff]
                %273 = vst [vmem:[%s241 + $0x78] sm:$0xff] %v272
                %v274 = vld [vmem:[%s240 + $0x100] sm:$0xff]
                %275 = vst [vmem:[%s241 + $0x80] sm:$0xff] %v274
                %v276 = vld [vmem:[%s240 + $0x110] sm:$0xff]
                %277 = vst [vmem:[%s241 + $0x88] sm:$0xff] %v276
              $region41: #{skip2net_forward.45} parent=35 // loop_footer
                %s239 = sadd.s32 1, %s235
              $region42: #{skip2net_forward.45} parent=35 // loop_footer_branch
                %234 = sbr.rel target = $region38
              $region43: #{skip2net_forward.45} parent=35 // loop_exit
                _
            $region36: #{skip2net_forward.45} parent=27 // pred_fallthru
              _
          $region28: #{skip2net_forward.45} parent=23 // pred_fallthru
            _
          %326 = vnop
        $region24: #{skip2net_forward.45} parent=15 // pred_fallthru
          _
        // Predicated region
        $region59: #{skip2net_forward.45} parent=15 // pred_check
          %p327 = pneg %p98
        $region60: #{skip2net_forward.45} parent=15 // pred_check_branch
          %329 = sbr.rel (%p327) target = $region62
        $region61: #{skip2net_forward.45} parent=15 // pred_region
          %p330 = scmp.lt.s32.totalorder %s19, 1
          %s331 = scalar_select %p330, %s19, 1
          %s332 = smul.addr %s331, 8
          %s333 = scalar_lea.vmem %s2, %s332
        $region62: #{skip2net_forward.45} parent=15 // pred_fallthru
          _
      $region16: #{skip2net_forward.45} parent=5 // pred_fallthru
        _
      %p334 = scmp.le.s32.totalorder 1, %s12
      %p335 = scmp.lt.s32.totalorder %s12, 5
      %p336 = pnand %p334, %p335
      %p337 = pneg %p336
      // Predicated region
      $region63: #{skip2net_forward.45} parent=5 // pred_check
        _
      $region64: #{skip2net_forward.45} parent=5 // pred_check_branch
        %339 = sbr.rel (%p336) target = $region66
      $region65: #{skip2net_forward.45} parent=5 // pred_region
        %s340 = ssub.s32 %s12, 1
        %s341 = sand.u32 %s65, 1
        %s342 = sand.u32 %s65, 1
        %s343 = smul.addr %s342, 144
        %s344 = scalar_lea.vmem [#allocation2], %s343
        // Predicated region
        $region67: #{skip2net_forward.45} parent=65 // pred_check
          %p345 = pneg %p78
        $region68: #{skip2net_forward.45} parent=65 // pred_check_branch
          %347 = sbr.rel (%p345) target = $region70
        $region69: #{skip2net_forward.45} parent=65 // pred_region
          _
        $region70: #{skip2net_forward.45} parent=65 // pred_fallthru
          _
        %p348 = scmp.lt.s32.totalorder %s21, 1
        %s349 = scalar_select %p348, %s21, 1
        %s350 = smul.addr %s349, 2
        %s351 = smul.addr %s350, 4
        %s352 = scalar_lea.vmem %s0, %s351
        %p353 = pneg %p50
        %p354 = pneg %p47
        %s355 = sand.u32 %s65, 1
        %s356 = sand.u32 %s65, 1
        %s357 = smul.addr %s356, 144
        %s358 = scalar_lea.vmem [#allocation2], %s357
        %p359 = pneg %p78
        %p360 = pneg %p75
        %p361 = scmp.lt.s32.totalorder %s21, 1
        %s362 = scalar_select %p361, %s21, 1
        %s363 = smul.addr %s362, 8
        %s364 = scalar_lea.vmem %s2, %s363
        %p365 = pneg %p104
        %p366 = pneg %p101
        %p367 = pneg %p132
        %p368 = pneg %p129
        %s369 = smul.u32 2, %s22
        %p370 = scmp.lt.s32.totalorder %s21, 1
        %s371 = scalar_select %p370, %s21, 1
        %p372 = scmp.lt.s32.totalorder %s369, 3
        %s373 = scalar_select %p372, %s369, 3
        %s374 = smul.addr %s371, 4
        %s375 = sadd.s32 %s373, %s374
        %s376 = smul.addr %s375, 4
        %s377 = scalar_lea.vmem %s3, %s376
        %p378 = pneg %p160
        %p379 = pneg %p157
        %p380 = scmp.lt.s32.totalorder %s21, 1
        %s381 = scalar_select %p380, %s21, 1
        %p382 = scmp.lt.s32.totalorder %s22, 1
        %s383 = scalar_select %p382, %s22, 1
        %s384 = smul.addr %s381, 2
        %s385 = sadd.s32 %s383, %s384
        %s386 = smul.addr %s385, 8
        %s387 = scalar_lea.vmem %s4, %s386
        %p388 = pneg %p188
        %p389 = pneg %p185
        %p390 = scmp.lt.s32.totalorder %s21, 1
        %s391 = scalar_select %p390, %s21, 1
        %p392 = scmp.lt.s32.totalorder %s22, 1
        %s393 = scalar_select %p392, %s22, 1
        %s394 = smul.addr %s391, 2
        %s395 = sadd.s32 %s393, %s394
        %s396 = smul.addr %s395, 8
        %s397 = scalar_lea.vmem %s5, %s396
        %p398 = scmp.lt.s32.totalorder %s21, 1
        %s399 = scalar_select %p398, %s21, 1
        %s400 = smul.addr %s399, 2
        %s401 = smul.addr %s400, 4
        %s402 = scalar_lea.vmem %s0, %s401
        %s403 = smul.u32 2, %s22
        %p404 = scmp.lt.s32.totalorder %s21, 1
        %s405 = scalar_select %p404, %s21, 1
        %s406 = smul.addr %s405, 8
        %s407 = scalar_lea.vmem %s2, %s406
        %s408 = smul.u32 2, %s22
        %p409 = scmp.lt.s32.totalorder %s21, 1
        %s410 = scalar_select %p409, %s21, 1
        %p411 = scmp.lt.s32.totalorder %s408, 3
        %s412 = scalar_select %p411, %s408, 3
        %s413 = smul.addr %s410, 4
        %s414 = sadd.s32 %s412, %s413
        %s415 = smul.addr %s414, 4
        %s416 = scalar_lea.vmem %s3, %s415
        %s417 = smul.u32 2, %s22
        %p418 = scmp.lt.s32.totalorder %s21, 1
        %s419 = scalar_select %p418, %s21, 1
        %p420 = scmp.lt.s32.totalorder %s22, 1
        %s421 = scalar_select %p420, %s22, 1
        %s422 = smul.addr %s419, 2
        %s423 = sadd.s32 %s421, %s422
        %s424 = smul.addr %s423, 8
        %s425 = scalar_lea.vmem %s4, %s424
        %p426 = scmp.lt.s32.totalorder %s21, 1
        %s427 = scalar_select %p426, %s21, 1
        %p428 = scmp.lt.s32.totalorder %s22, 1
        %s429 = scalar_select %p428, %s22, 1
        %s430 = smul.addr %s427, 2
        %s431 = sadd.s32 %s429, %s430
        %s432 = smul.addr %s431, 8
        %s433 = scalar_lea.vmem %s5, %s432
        %v435 = vld [vmem:[%s402] sm:$0xff]
        %v436 = vld [vmem:[%s344] sm:$0xff]
        %v437 = vld [vmem:[%s344 + $0x8] sm:$0xff]
        %v438 = vld [vmem:[%s344 + $0x10] sm:$0xff]
        %v439 = vld [vmem:[%s344 + $0x18] sm:$0xff]
        %v440 = vld [vmem:[%s344 + $0x20] sm:$0xff]
        %v441 = vld [vmem:[%s344 + $0x28] sm:$0xff]
        %v442 = vld [vmem:[%s344 + $0x30] sm:$0xff]
        %v443 = vld [vmem:[%s344 + $0x38] sm:$0xff]
        %v444 = vld [vmem:[%s344 + $0x40] sm:$0xff]
        %v445 = vld [vmem:[%s344 + $0x48] sm:$0xff]
        %v446 = vld [vmem:[%s344 + $0x50] sm:$0xff]
        %v447 = vld [vmem:[%s344 + $0x58] sm:$0xff]
        %v448 = vld [vmem:[%s344 + $0x60] sm:$0xff]
        %v449 = vld [vmem:[%s344 + $0x68] sm:$0xff]
        %v450 = vld [vmem:[%s344 + $0x70] sm:$0xff]
        %v451 = vld [vmem:[%s344 + $0x78] sm:$0xff]
        %v452 = vld [vmem:[%s344 + $0x80] sm:$0xff]
        %v453 = vld [vmem:[%s344 + $0x88] sm:$0xff]
        %v454 = vld [vmem:[%s407] sm:$0xff]
        %456 = vset.pattern.permute.xlu0 0
        %457 = vperm.xlu0 %456, %v454
        %v458 = vpop.permute.xlu0 %457
        %v461 = vunpack.c.l.b16 %v435
        %v462 = vunpack.c.h.b16 %v435
        %v463 = vpack.c.b16 %v461, %v461
        %v464 = vpack.c.b16 %v462, %v462
        %v484 = vunpack.c.l.b16 %v436
        %v485 = vunpack.c.h.b16 %v436
        %v486 = vunpack.c.l.b16 %v437
        %v487 = vunpack.c.h.b16 %v437
        %v488 = vunpack.c.l.b16 %v438
        %v489 = vunpack.c.h.b16 %v438
        %v490 = vunpack.c.l.b16 %v439
        %v491 = vunpack.c.h.b16 %v439
        %v492 = vunpack.c.l.b16 %v440
        %v493 = vunpack.c.h.b16 %v440
        %v494 = vunpack.c.l.b16 %v441
        %v495 = vunpack.c.h.b16 %v441
        %v496 = vunpack.c.l.b16 %v442
        %v497 = vunpack.c.h.b16 %v442
        %v498 = vunpack.c.l.b16 %v443
        %v499 = vunpack.c.h.b16 %v443
        %v500 = vunpack.c.l.b16 %v444
        %v501 = vunpack.c.h.b16 %v444
        %v502 = vunpack.c.l.b16 %v445
        %v503 = vunpack.c.h.b16 %v445
        %v504 = vunpack.c.l.b16 %v446
        %v505 = vunpack.c.h.b16 %v446
        %v506 = vunpack.c.l.b16 %v447
        %v507 = vunpack.c.h.b16 %v447
        %v508 = vunpack.c.l.b16 %v448
        %v509 = vunpack.c.h.b16 %v448
        %v510 = vunpack.c.l.b16 %v449
        %v511 = vunpack.c.h.b16 %v449
        %v512 = vunpack.c.l.b16 %v450
        %v513 = vunpack.c.h.b16 %v450
        %v514 = vunpack.c.l.b16 %v451
        %v515 = vunpack.c.h.b16 %v451
        %v516 = vunpack.c.l.b16 %v452
        %v517 = vunpack.c.h.b16 %v452
        %v518 = vunpack.c.l.b16 %v453
        %v519 = vunpack.c.h.b16 %v453
        %v520 = vpack.c.b16 %v486, %v484
        %v521 = vpack.c.b16 %v487, %v485
        %v522 = vpack.c.b16 %v490, %v488
        %v523 = vpack.c.b16 %v491, %v489
        %v524 = vpack.c.b16 %v494, %v492
        %v525 = vpack.c.b16 %v495, %v493
        %v526 = vpack.c.b16 %v498, %v496
        %v527 = vpack.c.b16 %v499, %v497
        %v528 = vpack.c.b16 %v502, %v500
        %v529 = vpack.c.b16 %v503, %v501
        %v530 = vpack.c.b16 %v506, %v504
        %v531 = vpack.c.b16 %v507, %v505
        %v532 = vpack.c.b16 %v510, %v508
        %v533 = vpack.c.b16 %v511, %v509
        %v534 = vpack.c.b16 %v514, %v512
        %v535 = vpack.c.b16 %v515, %v513
        %v536 = vpack.c.b16 %v518, %v516
        %v537 = vpack.c.b16 %v519, %v517
        %vm556 = vcmask 130048
        %v558 = vsel %vm556, %v464, 0
        %560 = vmatprep.subr.bf16.mxu0 %v521
        %561 = vmatpush1.bf16.msra.mxu0 %v520
        %562 = vmatprep.subr.bf16.mxu0 %v523
        %563 = vmatpush1.bf16.msra.mxu0 %v522
        %564 = vmatprep.subr.bf16.mxu0 %v525
        %565 = vmatpush1.bf16.msra.mxu0 %v524
        %566 = vmatprep.subr.bf16.mxu0 %v527
        %567 = vmatpush1.bf16.msra.mxu0 %v526
        %568 = vmatprep.subr.bf16.mxu0 %v529
        %569 = vmatpush1.bf16.msra.mxu0 %v528
        %570 = vmatprep.subr.bf16.mxu0 %v531
        %571 = vmatpush1.bf16.msra.mxu0 %v530
        %572 = vmatprep.subr.bf16.mxu0 %v533
        %573 = vmatpush1.bf16.msra.mxu0 %v532
        %574 = vmatprep.subr.bf16.mxu0 %v535
        %575 = vmatpush1.bf16.msra.mxu0 %v534
        %576 = vmatprep.subr.bf16.mxu0 %v537
        %577 = vmatpush1.bf16.msra.mxu0 %v536
        %578 = vmatprep.subr.bf16.mxu0 0
        %579 = vmatpush1.bf16.msra.mxu0 0
        %580 = vmatprep.subr.bf16.mxu0 0
        %581 = vmatpush1.bf16.msra.mxu0 0
        %582 = vmatprep.subr.bf16.mxu0 0
        %583 = vmatpush1.bf16.msra.mxu0 0
        %584 = vmatprep.subr.bf16.mxu0 0
        %585 = vmatpush1.bf16.msra.mxu0 0
        %586 = vmatprep.subr.bf16.mxu0 0
        %587 = vmatpush1.bf16.msra.mxu0 0
        %588 = vmatprep.subr.bf16.mxu0 0
        %589 = vmatpush1.bf16.msra.mxu0 0
        %590 = vmatprep.subr.bf16.mxu0 0
        %591 = vmatpush1.bf16.msra.mxu0 0
        %592 = vmatprep.mubr.bf16.mxu0 %v558
        %593 = vmatmul.mubr.bf16.gmra.mrb[0].mxu0 %v463
        %v594 = vpop.f32.mrb[0].mxu0
        %v595 = vadd.f32 %v458, %v594
        %v596 = vpop.f32.mrb[0].mxu0
        %v597 = vadd.f32 %v458, %v596
        %v598 = vpop.f32.mrb[0].mxu0
        %v599 = vpop.f32.mrb[0].mxu0
        %600 = vdwg.mxu0
        %v601 = vadd.f32 %v595, %v597
        %602 = vadd.xlane.f32.xlu0 %v601
        %v603 = vpop.xlane.xlu0 %602
        %v604 = vmul.f32 %v595, %v595
        %v605 = vmul.f32 %v597, %v597
        %v606 = vadd.f32 %v604, %v605
        %607 = vadd.xlane.f32.xlu0 %v606
        %v608 = vpop.xlane.xlu0 %607
        %609 = vst [vmem:[%s425] sm:$0xff] %v603
        %610 = vst [vmem:[%s433] sm:$0xff] %v608
        %v611 = vpack.c.bf16 %v595, %v595
        %v612 = vpack.c.bf16 %v597, %v597
        %v615 = vunpack.c.l.b16 %v611
        %v616 = vunpack.c.l.b16 %v612
        %v617 = vpack.c.b16 %v616, %v615
        %619 = vst [vmem:[%s416] sm:$0xff] %v617
        %s620 = smul.u32 2, %s22
        %p621 = scmp.lt.s32.totalorder %s21, 1
        %s622 = scalar_select %p621, %s21, 1
        %p623 = scmp.lt.s32.totalorder %s620, 3
        %s624 = scalar_select %p623, %s620, 3
        %s625 = smul.addr %s622, 4
        %s626 = sadd.s32 %s624, %s625
        %s627 = smul.addr %s626, 4
        %s628 = scalar_lea.vmem %s3, %s627
        %p629 = scmp.lt.s32.totalorder %s21, 1
        %s630 = scalar_select %p629, %s21, 1
        %p631 = scmp.lt.s32.totalorder %s22, 1
        %s632 = scalar_select %p631, %s22, 1
        %s633 = smul.addr %s630, 2
        %s634 = sadd.s32 %s632, %s633
        %s635 = smul.addr %s634, 8
        %s636 = scalar_lea.vmem %s4, %s635
        %p637 = scmp.lt.s32.totalorder %s21, 1
        %s638 = scalar_select %p637, %s21, 1
        %p639 = scmp.lt.s32.totalorder %s22, 1
        %s640 = scalar_select %p639, %s22, 1
        %s641 = smul.addr %s638, 2
        %s642 = sadd.s32 %s640, %s641
        %s643 = smul.addr %s642, 8
        %s644 = scalar_lea.vmem %s5, %s643
        // Predicated region
        $region71: #{skip2net_forward.45} parent=65 // pred_check
          %p645 = pneg %p129
        $region72: #{skip2net_forward.45} parent=65 // pred_check_branch
          %647 = sbr.rel (%p645) target = $region74
        $region73: #{skip2net_forward.45} parent=65 // pred_region
          %s648 = smul.u32 2, %s22
        $region74: #{skip2net_forward.45} parent=65 // pred_fallthru
          _
        // Predicated region
        $region75: #{skip2net_forward.45} parent=65 // pred_check
          %p649 = pneg %p157
        $region76: #{skip2net_forward.45} parent=65 // pred_check_branch
          %651 = sbr.rel (%p649) target = $region78
        $region77: #{skip2net_forward.45} parent=65 // pred_region
          _
        $region78: #{skip2net_forward.45} parent=65 // pred_fallthru
          _
        // Predicated region
        $region79: #{skip2net_forward.45} parent=65 // pred_check
          %p652 = pneg %p185
        $region80: #{skip2net_forward.45} parent=65 // pred_check_branch
          %654 = sbr.rel (%p652) target = $region82
        $region81: #{skip2net_forward.45} parent=65 // pred_region
          _
        $region82: #{skip2net_forward.45} parent=65 // pred_fallthru
          _
      $region66: #{skip2net_forward.45} parent=5 // pred_fallthru
        _
      %p655 = scmp.le.s32.totalorder 2, %s12
      // Predicated region
      $region83: #{skip2net_forward.45} parent=5 // pred_check
        %p656 = pneg %p655
      $region84: #{skip2net_forward.45} parent=5 // pred_check_branch
        %658 = sbr.rel (%p656) target = $region86
      $region85: #{skip2net_forward.45} parent=5 // pred_region
        %s659 = ssub.s32 %s12, 2
        // Predicated region
        $region87: #{skip2net_forward.45} parent=85 // pred_check
          %p660 = pneg %p135
        $region88: #{skip2net_forward.45} parent=85 // pred_check_branch
          %662 = sbr.rel (%p660) target = $region90
        $region89: #{skip2net_forward.45} parent=85 // pred_region
          %s663 = smul.u32 2, %s24
          %p664 = scmp.lt.s32.totalorder %s23, 1
          %s665 = scalar_select %p664, %s23, 1
          %p666 = scmp.lt.s32.totalorder %s663, 3
          %s667 = scalar_select %p666, %s663, 3
          %s668 = smul.addr %s665, 4
          %s669 = sadd.s32 %s667, %s668
          %s670 = smul.addr %s669, 4
          %s671 = scalar_lea.vmem %s3, %s670
        $region90: #{skip2net_forward.45} parent=85 // pred_fallthru
          _
        // Predicated region
        $region91: #{skip2net_forward.45} parent=85 // pred_check
          %p672 = pneg %p163
        $region92: #{skip2net_forward.45} parent=85 // pred_check_branch
          %674 = sbr.rel (%p672) target = $region94
        $region93: #{skip2net_forward.45} parent=85 // pred_region
          %p675 = scmp.lt.s32.totalorder %s23, 1
          %s676 = scalar_select %p675, %s23, 1
          %p677 = scmp.lt.s32.totalorder %s24, 1
          %s678 = scalar_select %p677, %s24, 1
          %s679 = smul.addr %s676, 2
          %s680 = sadd.s32 %s678, %s679
          %s681 = smul.addr %s680, 8
          %s682 = scalar_lea.vmem %s4, %s681
        $region94: #{skip2net_forward.45} parent=85 // pred_fallthru
          _
        // Predicated region
        $region95: #{skip2net_forward.45} parent=85 // pred_check
          %p683 = pneg %p191
        $region96: #{skip2net_forward.45} parent=85 // pred_check_branch
          %685 = sbr.rel (%p683) target = $region98
        $region97: #{skip2net_forward.45} parent=85 // pred_region
          %p686 = scmp.lt.s32.totalorder %s23, 1
          %s687 = scalar_select %p686, %s23, 1
          %p688 = scmp.lt.s32.totalorder %s24, 1
          %s689 = scalar_select %p688, %s24, 1
          %s690 = smul.addr %s687, 2
          %s691 = sadd.s32 %s689, %s690
          %s692 = smul.addr %s691, 8
          %s693 = scalar_lea.vmem %s5, %s692
        $region98: #{skip2net_forward.45} parent=85 // pred_fallthru
          _
      $region86: #{skip2net_forward.45} parent=5 // pred_fallthru
        _
    $region6: #{skip2net_forward.45} parent=1 // loop_footer
      %s16 = sadd.s32 1, %s12
    $region7: #{skip2net_forward.45} parent=1 // loop_footer_branch
      %11 = sbr.rel target = $region3
    $region8: #{skip2net_forward.45} parent=1 // loop_exit
      _

// kernel: skip2net_forward.49
$region0: #{skip2net_forward.49}
  #allocation0 [shape = 'u32[]', space=smem, size = 0x4, offset = 0x4, fixed_abs, tag = 'smem constant byte address 0x4 - core index']
  #allocation1 [shape = 'u32[144,128]{1,0:T(1,128)}', space=vmem, size = 0x12000, scoped, tag = 'internal scratch']
  %s0 = inlined_call_operand.vmem [shape: bf16[2,8,8], index: 0, kind: input, shape index: {}]
  %s1 = inlined_call_operand.vmem [shape: bf16[2,8,512], index: 1, kind: input, shape index: {}]
  %s2 = inlined_call_operand.vmem [shape: f32[2,8,1], index: 2, kind: input, shape index: {}]
  %s3 = inlined_call_operand.vmem [shape: bf16[2,8,512], index: 3, kind: output, shape index: {0}]
  %s4 = inlined_call_operand.hbm [shape: f32[2,8,256], index: 4, kind: output, shape index: {1}]
  %s5 = inlined_call_operand.hbm [shape: f32[2,8,256], index: 5, kind: output, shape index: {2}]
  %6 = xla_tuple %s3, %s4, %s5
  %s7 = sld [smem:[#allocation0]]
  $region61: #{skip2net_forward.49} parent=0
    _
  %s9 = ssub.s32 1, %s7
  %s10 = scalar_select 0, %s9, %s7
  $region1: #{skip2net_forward.49} parent=0
    #allocation2 [shape = 'u8[8192]{0}', space=vmem, size = 0x2000, scoped, tag = 'output window, operand 1']
    #allocation3 [shape = 's32[2]{0}', space=sflag, size = 0x8, scoped, tag = 'scoped memory for skip2net_forward.49']
    #allocation4 [shape = 'u8[8192]{0}', space=vmem, size = 0x2000, scoped, tag = 'output window, operand 2']
    #allocation5 [shape = 's32[2]{0}', space=sflag, size = 0x8, scoped, tag = 'scoped memory for skip2net_forward.49']
    %11 = vsyncpa [#allocation3], 0
    %s12 = scalar_lea.sflag [#allocation3], 1
    %13 = vsyncpa %s12, 0
    %14 = vsyncpa [#allocation5], 0
    %s15 = scalar_lea.sflag [#allocation5], 1
    %16 = vsyncpa %s15, 0
    loop: start=0, step=1, limit=6
    $region2: #{skip2net_forward.49} parent=1 // loop_pre_header
      _
    $region3: #{skip2net_forward.49} parent=1 // loop_header
      %s18 = sphi 0, %s22
      %p19 = scmp.ge.s32.totalorder %s18, 6
      %s25 = sphi 0, %s37
      %s26 = sphi 0, %s33
      %s27 = sphi 0, %s25
      %s28 = sphi 0, %s26
      %s29 = sphi 0, %s27
      %s30 = sphi 0, %s28
      %s40 = sphi 0, %s42
      %s43 = sphi 0, %s40
      %s44 = sphi 0, %s43
      %s60 = sphi 0, %s44
      %s68 = sphi 0, %s70
      %s71 = sphi 0, %s68
      %s72 = sphi 0, %s71
      %s88 = sphi 0, %s72
      %s94 = sphi 0, %s96
      %s97 = sphi 0, %s94
      %s98 = sphi 0, %s97
      %s114 = sphi 0, %s98
      %s122 = sphi 0, %s124
      %s125 = sphi 0, %s122
      %s126 = sphi 0, %s125
      %s142 = sphi 0, %s126
      %s150 = sphi 0, %s152
      %s153 = sphi 0, %s150
      %s154 = sphi 0, %s153
      %s170 = sphi 0, %s154
      %s178 = sphi 0, %s180
      %s181 = sphi 0, %s178
      %s182 = sphi 0, %s181
      %s198 = sphi 0, %s182
    $region4: #{skip2net_forward.49} parent=1 // loop_header_branch
      %21 = sbr.rel (%p19) target = $region8
    $region5: #{skip2net_forward.49} parent=1 // loop_body
      %s23 = ssub.s32 %s18, 1
      %s24 = ssub.s32 %s18, 2
      %s31 = sadd.s32 1, %s26
      %p32 = scmp.ge.s32.totalorder %s31, 2
      %s33 = scalar_select %p32, 0, %s31
      %s34 = sadd.s32 1, %s25
      %s35 = scalar_select %p32, %s34, %s25
      %p36 = scmp.ge.s32.totalorder %s35, 2
      %s37 = scalar_select %p36, 0, %s35
      %s38 = ssub.s32 %s25, %s37
      %p39 = scmp.eq.s32.totalorder %s38, 0
      %s41 = sadd.s32 %s40, 1
      %s42 = scalar_select %p39, %s40, %s41
      %p45 = pneg %p39
      %p46 = scmp.eq.s32.totalorder %s18, 3
      %p47 = por %p45, %p46
      %p48 = scmp.ne.s32.totalorder %s40, %s43
      %p49 = scmp.eq.s32.totalorder %s18, 0
      %p50 = por %p48, %p49
      %p51 = scmp.ne.s32.totalorder %s40, %s43
      %p52 = scmp.eq.s32.totalorder %s23, 3
      %p53 = por %p51, %p52
      %p54 = scmp.ne.s32.totalorder %s43, %s44
      %p55 = scmp.eq.s32.totalorder %s23, 0
      %p56 = por %p54, %p55
      %p57 = scmp.ne.s32.totalorder %s43, %s44
      %p58 = scmp.eq.s32.totalorder %s24, 3
      %p59 = por %p57, %p58
      %p61 = scmp.ne.s32.totalorder %s44, %s60
      %p62 = scmp.eq.s32.totalorder %s24, 0
      %p63 = por %p61, %p62
      %s64 = ssub.s32 %s25, %s37
      %s65 = ssub.s32 %s26, %s33
      %s66 = sor.u32 %s64, %s65
      %p67 = scmp.eq.s32.totalorder %s66, 0
      %s69 = sadd.s32 %s68, 1
      %s70 = scalar_select %p67, %s68, %s69
      %p73 = pneg %p67
      %p74 = scmp.eq.s32.totalorder %s18, 3
      %p75 = por %p73, %p74
      %p76 = scmp.ne.s32.totalorder %s68, %s71
      %p77 = scmp.eq.s32.totalorder %s18, 0
      %p78 = por %p76, %p77
      %p79 = scmp.ne.s32.totalorder %s68, %s71
      %p80 = scmp.eq.s32.totalorder %s23, 3
      %p81 = por %p79, %p80
      %p82 = scmp.ne.s32.totalorder %s71, %s72
      %p83 = scmp.eq.s32.totalorder %s23, 0
      %p84 = por %p82, %p83
      %p85 = scmp.ne.s32.totalorder %s71, %s72
      %p86 = scmp.eq.s32.totalorder %s24, 3
      %p87 = por %p85, %p86
      %p89 = scmp.ne.s32.totalorder %s72, %s88
      %p90 = scmp.eq.s32.totalorder %s24, 0
      %p91 = por %p89, %p90
      %s92 = ssub.s32 %s25, %s37
      %p93 = scmp.eq.s32.totalorder %s92, 0
      %s95 = sadd.s32 %s94, 1
      %s96 = scalar_select %p93, %s94, %s95
      %p99 = pneg %p93
      %p100 = scmp.eq.s32.totalorder %s18, 3
      %p101 = por %p99, %p100
      %p102 = scmp.ne.s32.totalorder %s94, %s97
      %p103 = scmp.eq.s32.totalorder %s18, 0
      %p104 = por %p102, %p103
      %p105 = scmp.ne.s32.totalorder %s94, %s97
      %p106 = scmp.eq.s32.totalorder %s23, 3
      %p107 = por %p105, %p106
      %p108 = scmp.ne.s32.totalorder %s97, %s98
      %p109 = scmp.eq.s32.totalorder %s23, 0
      %p110 = por %p108, %p109
      %p111 = scmp.ne.s32.totalorder %s97, %s98
      %p112 = scmp.eq.s32.totalorder %s24, 3
      %p113 = por %p111, %p112
      %p115 = scmp.ne.s32.totalorder %s98, %s114
      %p116 = scmp.eq.s32.totalorder %s24, 0
      %p117 = por %p115, %p116
      %s118 = ssub.s32 %s25, %s37
      %s119 = ssub.s32 %s26, %s33
      %s120 = sor.u32 %s118, %s119
      %p121 = scmp.eq.s32.totalorder %s120, 0
      %s123 = sadd.s32 %s122, 1
      %s124 = scalar_select %p121, %s122, %s123
      %p127 = pneg %p121
      %p128 = scmp.eq.s32.totalorder %s18, 3
      %p129 = por %p127, %p128
      %p130 = scmp.ne.s32.totalorder %s122, %s125
      %p131 = scmp.eq.s32.totalorder %s18, 0
      %p132 = por %p130, %p131
      %p133 = scmp.ne.s32.totalorder %s122, %s125
      %p134 = scmp.eq.s32.totalorder %s23, 3
      %p135 = por %p133, %p134
      %p136 = scmp.ne.s32.totalorder %s125, %s126
      %p137 = scmp.eq.s32.totalorder %s23, 0
      %p138 = por %p136, %p137
      %p139 = scmp.ne.s32.totalorder %s125, %s126
      %p140 = scmp.eq.s32.totalorder %s24, 3
      %p141 = por %p139, %p140
      %p143 = scmp.ne.s32.totalorder %s126, %s142
      %p144 = scmp.eq.s32.totalorder %s24, 0
      %p145 = por %p143, %p144
      %s146 = ssub.s32 %s25, %s37
      %s147 = ssub.s32 %s26, %s33
      %s148 = sor.u32 %s146, %s147
      %p149 = scmp.eq.s32.totalorder %s148, 0
      %s151 = sadd.s32 %s150, 1
      %s152 = scalar_select %p149, %s150, %s151
      %p155 = pneg %p149
      %p156 = scmp.eq.s32.totalorder %s18, 3
      %p157 = por %p155, %p156
      %p158 = scmp.ne.s32.totalorder %s150, %s153
      %p159 = scmp.eq.s32.totalorder %s18, 0
      %p160 = por %p158, %p159
      %p161 = scmp.ne.s32.totalorder %s150, %s153
      %p162 = scmp.eq.s32.totalorder %s23, 3
      %p163 = por %p161, %p162
      %p164 = scmp.ne.s32.totalorder %s153, %s154
      %p165 = scmp.eq.s32.totalorder %s23, 0
      %p166 = por %p164, %p165
      %p167 = scmp.ne.s32.totalorder %s153, %s154
      %p168 = scmp.eq.s32.totalorder %s24, 3
      %p169 = por %p167, %p168
      %p171 = scmp.ne.s32.totalorder %s154, %s170
      %p172 = scmp.eq.s32.totalorder %s24, 0
      %p173 = por %p171, %p172
      %s174 = ssub.s32 %s25, %s37
      %s175 = ssub.s32 %s26, %s33
      %s176 = sor.u32 %s174, %s175
      %p177 = scmp.eq.s32.totalorder %s176, 0
      %s179 = sadd.s32 %s178, 1
      %s180 = scalar_select %p177, %s178, %s179
      %p183 = pneg %p177
      %p184 = scmp.eq.s32.totalorder %s18, 3
      %p185 = por %p183, %p184
      %p186 = scmp.ne.s32.totalorder %s178, %s181
      %p187 = scmp.eq.s32.totalorder %s18, 0
      %p188 = por %p186, %p187
      %p189 = scmp.ne.s32.totalorder %s178, %s181
      %p190 = scmp.eq.s32.totalorder %s23, 3
      %p191 = por %p189, %p190
      %p192 = scmp.ne.s32.totalorder %s181, %s182
      %p193 = scmp.eq.s32.totalorder %s23, 0
      %p194 = por %p192, %p193
      %p195 = scmp.ne.s32.totalorder %s181, %s182
      %p196 = scmp.eq.s32.totalorder %s24, 3
      %p197 = por %p195, %p196
      %p199 = scmp.ne.s32.totalorder %s182, %s198
      %p200 = scmp.eq.s32.totalorder %s24, 0
      %p201 = por %p199, %p200
      %p202 = scmp.le.s32.totalorder 1, %s18
      %p203 = scmp.lt.s32.totalorder %s18, 5
      %p204 = pnand %p202, %p203
      %p205 = pneg %p204
      // Predicated region
      $region9: #{skip2net_forward.49} parent=5 // pred_check
        _
      $region10: #{skip2net_forward.49} parent=5 // pred_check_branch
        %207 = sbr.rel (%p204) target = $region12
      $region11: #{skip2net_forward.49} parent=5 // pred_region
        %s208 = ssub.s32 %s18, 1
      $region12: #{skip2net_forward.49} parent=5 // pred_fallthru
        _
      %p209 = scmp.lt.s32.totalorder %s18, 4
      // Predicated region
      $region13: #{skip2net_forward.49} parent=5 // pred_check
        %p210 = pneg %p209
      $region14: #{skip2net_forward.49} parent=5 // pred_check_branch
        %212 = sbr.rel (%p210) target = $region16
      $region15: #{skip2net_forward.49} parent=5 // pred_region
        // Predicated region
        $region17: #{skip2net_forward.49} parent=15 // pred_check
          %p213 = pneg %p50
        $region18: #{skip2net_forward.49} parent=15 // pred_check_branch
          %215 = sbr.rel (%p213) target = $region20
        $region19: #{skip2net_forward.49} parent=15 // pred_region
          %p216 = scmp.lt.s32.totalorder %s25, 1
          %s217 = scalar_select %p216, %s25, 1
          %s218 = smul.addr %s217, 4
          %s219 = scalar_lea.vmem %s0, %s218
        $region20: #{skip2net_forward.49} parent=15 // pred_fallthru
          _
        // Predicated region
        $region21: #{skip2net_forward.49} parent=15 // pred_check
          %p220 = pneg %p78
        $region22: #{skip2net_forward.49} parent=15 // pred_check_branch
          %222 = sbr.rel (%p220) target = $region24
        $region23: #{skip2net_forward.49} parent=15 // pred_region
          %s223 = smul.u32 2, %s26
          %p224 = scmp.lt.s32.totalorder %s25, 1
          %s225 = scalar_select %p224, %s25, 1
          %p226 = scmp.lt.s32.totalorder %s223, 3
          %s227 = scalar_select %p226, %s223, 3
          %s228 = smul.addr %s225, 4
          %s229 = sadd.s32 %s227, %s228
          %s230 = smul.addr %s229, 4
          %s231 = scalar_lea.vmem %s1, %s230
          %s232 = smul.u32 2, %s26
        $region24: #{skip2net_forward.49} parent=15 // pred_fallthru
          _
        // Predicated region
        $region25: #{skip2net_forward.49} parent=15 // pred_check
          %p233 = pneg %p104
        $region26: #{skip2net_forward.49} parent=15 // pred_check_branch
          %235 = sbr.rel (%p233) target = $region28
        $region27: #{skip2net_forward.49} parent=15 // pred_region
          %p236 = scmp.lt.s32.totalorder %s25, 1
          %s237 = scalar_select %p236, %s25, 1
          %s238 = smul.addr %s237, 8
          %s239 = scalar_lea.vmem %s2, %s238
        $region28: #{skip2net_forward.49} parent=15 // pred_fallthru
          _
      $region16: #{skip2net_forward.49} parent=5 // pred_fallthru
        _
      %p240 = scmp.le.s32.totalorder 1, %s18
      %p241 = scmp.lt.s32.totalorder %s18, 5
      %p242 = pnand %p240, %p241
      %p243 = pneg %p242
      // Predicated region
      $region29: #{skip2net_forward.49} parent=5 // pred_check
        _
      $region30: #{skip2net_forward.49} parent=5 // pred_check_branch
        %245 = sbr.rel (%p242) target = $region32
      $region31: #{skip2net_forward.49} parent=5 // pred_region
        %s246 = ssub.s32 %s18, 1
        %p247 = scmp.lt.s32.totalorder %s27, 1
        %s248 = scalar_select %p247, %s27, 1
        %s249 = smul.addr %s248, 4
        %s250 = scalar_lea.vmem %s0, %s249
        %p251 = pneg %p56
        %p252 = pneg %p53
        %s253 = smul.u32 2, %s28
        %p254 = scmp.lt.s32.totalorder %s27, 1
        %s255 = scalar_select %p254, %s27, 1
        %p256 = scmp.lt.s32.totalorder %s253, 3
        %s257 = scalar_select %p256, %s253, 3
        %s258 = smul.addr %s255, 4
        %s259 = sadd.s32 %s257, %s258
        %s260 = smul.addr %s259, 4
        %s261 = scalar_lea.vmem %s1, %s260
        %p262 = pneg %p84
        %p263 = pneg %p81
        %p264 = scmp.lt.s32.totalorder %s27, 1
        %s265 = scalar_select %p264, %s27, 1
        %s266 = smul.addr %s265, 8
        %s267 = scalar_lea.vmem %s2, %s266
        %p268 = pneg %p110
        %p269 = pneg %p107
        %p270 = pneg %p138
        %p271 = pneg %p135
        %s272 = smul.u32 2, %s28
        %p273 = scmp.lt.s32.totalorder %s27, 1
        %s274 = scalar_select %p273, %s27, 1
        %p275 = scmp.lt.s32.totalorder %s272, 3
        %s276 = scalar_select %p275, %s272, 3
        %s277 = smul.addr %s274, 4
        %s278 = sadd.s32 %s276, %s277
        %s279 = smul.addr %s278, 4
        %s280 = scalar_lea.vmem %s3, %s279
        %p281 = pneg %p166
        %p282 = pneg %p163
        %s283 = sand.u32 %s153, 1
        %s284 = scalar_lea.sflag [#allocation3], %s283
        %s285 = sand.u32 %s153, 1
        %s286 = smul.addr %s285, 8
        %s287 = scalar_lea.vmem [#allocation2], %s286
        %p288 = pneg %p194
        %p289 = pneg %p191
        %s290 = sand.u32 %s181, 1
        %s291 = scalar_lea.sflag [#allocation5], %s290
        %s292 = sand.u32 %s181, 1
        %s293 = smul.addr %s292, 8
        %s294 = scalar_lea.vmem [#allocation4], %s293
        %p295 = scmp.lt.s32.totalorder %s27, 1
        %s296 = scalar_select %p295, %s27, 1
        %s297 = smul.addr %s296, 4
        %s298 = scalar_lea.vmem %s0, %s297
        %s299 = smul.u32 2, %s28
        %p300 = scmp.lt.s32.totalorder %s27, 1
        %s301 = scalar_select %p300, %s27, 1
        %p302 = scmp.lt.s32.totalorder %s299, 3
        %s303 = scalar_select %p302, %s299, 3
        %s304 = smul.addr %s301, 4
        %s305 = sadd.s32 %s303, %s304
        %s306 = smul.addr %s305, 4
        %s307 = scalar_lea.vmem %s1, %s306
        %s308 = smul.u32 2, %s28
        %p309 = scmp.lt.s32.totalorder %s27, 1
        %s310 = scalar_select %p309, %s27, 1
        %s311 = smul.addr %s310, 8
        %s312 = scalar_lea.vmem %s2, %s311
        %s313 = smul.u32 2, %s28
        %p314 = scmp.lt.s32.totalorder %s27, 1
        %s315 = scalar_select %p314, %s27, 1
        %p316 = scmp.lt.s32.totalorder %s313, 3
        %s317 = scalar_select %p316, %s313, 3
        %s318 = smul.addr %s315, 4
        %s319 = sadd.s32 %s317, %s318
        %s320 = smul.addr %s319, 4
        %s321 = scalar_lea.vmem %s3, %s320
        %s322 = smul.u32 2, %s28
        %v324 = vld [vmem:[%s298] sm:$0xf]
        %v325 = vld [vmem:[%s307] sm:$0xff]
        %v326 = vld [vmem:[%s312] sm:$0xff]
        %328 = vset.pattern.permute.xlu0 0
        %329 = vperm.xlu0 %328, %v326
        %v330 = vpop.permute.xlu0 %329
        %v333 = vunpack.c.l.b16 %v325
        %v334 = vunpack.c.h.b16 %v325
        %v335 = vpack.c.b16 %v333, %v333
        %v336 = vpack.c.b16 %v334, %v334
        %vm337 = vcmask 64512
        %v339 = vsel %vm337, %v324, 0
        %vm341 = vcmask 1043456
        %v343 = vsel %vm341, %v335, 0
        %v346 = vsel %vm341, %v336, 0
        %348 = vmatprep.subr.bf16.mxu0 %v346
        %349 = vmatpush1.bf16.msra.mxu0 %v343
        %350 = vmatprep.subr.bf16.mxu0 0
        %351 = vmatpush1.bf16.msra.mxu0 0
        %352 = vmatprep.subr.bf16.mxu0 0
        %353 = vmatpush1.bf16.msra.mxu0 0
        %354 = vmatprep.subr.bf16.mxu0 0
        %355 = vmatpush1.bf16.msra.mxu0 0
        %356 = vmatprep.subr.bf16.mxu0 0
        %357 = vmatpush1.bf16.msra.mxu0 0
        %358 = vmatprep.subr.bf16.mxu0 0
        %359 = vmatpush1.bf16.msra.mxu0 0
        %360 = vmatprep.subr.bf16.mxu0 0
        %361 = vmatpush1.bf16.msra.mxu0 0
        %362 = vmatprep.subr.bf16.mxu0 0
        %363 = vmatpush1.bf16.msra.mxu0 0
        %364 = vmatprep.subr.bf16.mxu0 0
        %365 = vmatpush1.bf16.msra.mxu0 0
        %366 = vmatprep.subr.bf16.mxu0 0
        %367 = vmatpush1.bf16.msra.mxu0 0
        %368 = vmatprep.subr.bf16.mxu0 0
        %369 = vmatpush1.bf16.msra.mxu0 0
        %370 = vmatprep.subr.bf16.mxu0 0
        %371 = vmatpush1.bf16.msra.mxu0 0
        %372 = vmatprep.subr.bf16.mxu0 0
        %373 = vmatpush1.bf16.msra.mxu0 0
        %374 = vmatprep.subr.bf16.mxu0 0
        %375 = vmatpush1.bf16.msra.mxu0 0
        %376 = vmatprep.subr.bf16.mxu0 0
        %377 = vmatpush1.bf16.msra.mxu0 0
        %378 = vmatprep.subr.bf16.mxu0 0
        %379 = vmatpush1.bf16.msra.mxu0 0
        %380 = vmatprep.mubr.bf16.mxu0 0
        %381 = vmatmul.mubr.bf16.gmra.mrb[0].mxu0 %v339
        %v382 = vpop.f32.mrb[0].mxu0
        %v383 = vadd.f32 %v330, %v382
        %v384 = vpop.f32.mrb[0].mxu0
        %v385 = vadd.f32 %v330, %v384
        %v386 = vpop.f32.mrb[0].mxu0
        %v387 = vpop.f32.mrb[0].mxu0
        %388 = vdwg.mxu0
        %v389 = vadd.f32 %v383, %v385
        %390 = vadd.xlane.f32.xlu0 %v389
        %v391 = vpop.xlane.xlu0 %390
        %v392 = vmul.f32 %v383, %v383
        %v393 = vmul.f32 %v385, %v385
        %v394 = vadd.f32 %v392, %v393
        %395 = vadd.xlane.f32.xlu0 %v394
        %v396 = vpop.xlane.xlu0 %395
        %397 = vst [vmem:[%s287] sm:$0xff] %v391
        %398 = vst [vmem:[%s294] sm:$0xff] %v396
        %v399 = vxor.u32 %v383, 2147483648
        %v400 = vxor.u32 %v385, 2147483648
        %v401 = vmul.f32 %v399, 1.442695
        %v402 = vpow.pop %v401
        %v403 = vmul.f32 %v400, 1.442695
        %v404 = vpow.pop %v403
        %v405 = vadd.f32 %v402, 1.0
        %v406 = vadd.f32 %v404, 1.0
        %v407 = vrcp.pop %v405
        %v408 = vmul.f32 1.0, %v407
        %v409 = vrcp.pop %v406
        %v410 = vmul.f32 1.0, %v409
        %v411 = vpack.c.bf16 %v408, %v408
        %v412 = vpack.c.bf16 %v410, %v410
        %v415 = vunpack.c.l.b16 %v411
        %v416 = vunpack.c.l.b16 %v412
        %v417 = vpack.c.b16 %v416, %v415
        %419 = vst [vmem:[%s321] sm:$0xff] %v417
        %s420 = smul.u32 2, %s28
        %p421 = scmp.lt.s32.totalorder %s27, 1
        %s422 = scalar_select %p421, %s27, 1
        %p423 = scmp.lt.s32.totalorder %s420, 3
        %s424 = scalar_select %p423, %s420, 3
        %s425 = smul.addr %s422, 4
        %s426 = sadd.s32 %s424, %s425
        %s427 = smul.addr %s426, 4
        %s428 = scalar_lea.vmem %s3, %s427
        %s429 = sand.u32 %s153, 1
        %s430 = scalar_lea.sflag [#allocation3], %s429
        %s431 = sand.u32 %s153, 1
        %s432 = smul.addr %s431, 8
        %s433 = scalar_lea.vmem [#allocation2], %s432
        %s434 = sand.u32 %s181, 1
        %s435 = scalar_lea.sflag [#allocation5], %s434
        %s436 = sand.u32 %s181, 1
        %s437 = smul.addr %s436, 8
        %s438 = scalar_lea.vmem [#allocation4], %s437
        // Predicated region
        $region33: #{skip2net_forward.49} parent=31 // pred_check
          %p439 = pneg %p135
        $region34: #{skip2net_forward.49} parent=31 // pred_check_branch
          %441 = sbr.rel (%p439) target = $region36
        $region35: #{skip2net_forward.49} parent=31 // pred_region
          %s442 = smul.u32 2, %s28
        $region36: #{skip2net_forward.49} parent=31 // pred_fallthru
          _
        // Predicated region
        $region37: #{skip2net_forward.49} parent=31 // pred_check
          %p443 = pneg %p163
        $region38: #{skip2net_forward.49} parent=31 // pred_check_branch
          %445 = sbr.rel (%p443) target = $region40
        $region39: #{skip2net_forward.49} parent=31 // pred_region
          %s447 = ssub.s32 128, 128
          %448 = vsyncadd %s430, %s447
          %s449 = smul.addr %s27, 2
          %s450 = sadd.s32 %s28, %s449
          %s451 = smul.addr %s450, 128
          %s452 = scalar_lea.hbm %s4, %s451
          %s454 = sshll.u32 %s433, 4
          %s455 = int_to_ptr.vmem [resolvable:$true] %s454
          %457 = dma.vmem_to_hbm [thread:$0]  %s455, 128, %s452, %s430
        $region40: #{skip2net_forward.49} parent=31 // pred_fallthru
          _
        // Predicated region
        $region41: #{skip2net_forward.49} parent=31 // pred_check
          %p458 = pneg %p191
        $region42: #{skip2net_forward.49} parent=31 // pred_check_branch
          %460 = sbr.rel (%p458) target = $region44
        $region43: #{skip2net_forward.49} parent=31 // pred_region
          %s462 = ssub.s32 128, 128
          %463 = vsyncadd %s435, %s462
          %s464 = smul.addr %s27, 2
          %s465 = sadd.s32 %s28, %s464
          %s466 = smul.addr %s465, 128
          %s467 = scalar_lea.hbm %s5, %s466
          %s469 = sshll.u32 %s438, 4
          %s470 = int_to_ptr.vmem [resolvable:$true] %s469
          %472 = dma.vmem_to_hbm [thread:$0]  %s470, 128, %s467, %s435
        $region44: #{skip2net_forward.49} parent=31 // pred_fallthru
          _
      $region32: #{skip2net_forward.49} parent=5 // pred_fallthru
        _
      %p473 = scmp.le.s32.totalorder 2, %s18
      // Predicated region
      $region45: #{skip2net_forward.49} parent=5 // pred_check
        %p474 = pneg %p473
      $region46: #{skip2net_forward.49} parent=5 // pred_check_branch
        %476 = sbr.rel (%p474) target = $region48
      $region47: #{skip2net_forward.49} parent=5 // pred_region
        %s477 = ssub.s32 %s18, 2
        // Predicated region
        $region49: #{skip2net_forward.49} parent=47 // pred_check
          %p478 = pneg %p141
        $region50: #{skip2net_forward.49} parent=47 // pred_check_branch
          %480 = sbr.rel (%p478) target = $region52
        $region51: #{skip2net_forward.49} parent=47 // pred_region
          %s481 = smul.u32 2, %s30
          %p482 = scmp.lt.s32.totalorder %s29, 1
          %s483 = scalar_select %p482, %s29, 1
          %p484 = scmp.lt.s32.totalorder %s481, 3
          %s485 = scalar_select %p484, %s481, 3
          %s486 = smul.addr %s483, 4
          %s487 = sadd.s32 %s485, %s486
          %s488 = smul.addr %s487, 4
          %s489 = scalar_lea.vmem %s3, %s488
        $region52: #{skip2net_forward.49} parent=47 // pred_fallthru
          _
        // Predicated region
        $region53: #{skip2net_forward.49} parent=47 // pred_check
          %p490 = pneg %p169
        $region54: #{skip2net_forward.49} parent=47 // pred_check_branch
          %492 = sbr.rel (%p490) target = $region56
        $region55: #{skip2net_forward.49} parent=47 // pred_region
          %s493 = sand.u32 %s154, 1
          %s494 = scalar_lea.sflag [#allocation3], %s493
          %s495 = sand.u32 %s154, 1
          %s496 = smul.addr %s495, 8
          %s497 = scalar_lea.vmem [#allocation2], %s496
          %498 = dma.done %s494, 128
        $region56: #{skip2net_forward.49} parent=47 // pred_fallthru
          _
        // Predicated region
        $region57: #{skip2net_forward.49} parent=47 // pred_check
          %p499 = pneg %p197
        $region58: #{skip2net_forward.49} parent=47 // pred_check_branch
          %501 = sbr.rel (%p499) target = $region60
        $region59: #{skip2net_forward.49} parent=47 // pred_region
          %s502 = sand.u32 %s182, 1
          %s503 = scalar_lea.sflag [#allocation5], %s502
          %s504 = sand.u32 %s182, 1
          %s505 = smul.addr %s504, 8
          %s506 = scalar_lea.vmem [#allocation4], %s505
          %507 = dma.done %s503, 128
        $region60: #{skip2net_forward.49} parent=47 // pred_fallthru
          _
      $region48: #{skip2net_forward.49} parent=5 // pred_fallthru
        _
    $region6: #{skip2net_forward.49} parent=1 // loop_footer
      %s22 = sadd.s32 1, %s18
    $region7: #{skip2net_forward.49} parent=1 // loop_footer_branch
      %17 = sbr.rel target = $region3
    $region8: #{skip2net_forward.49} parent=1 // loop_exit
      _
    %508 = vsyncpa [#allocation3], 1
    %s509 = scalar_lea.sflag [#allocation3], 1
    %510 = vsyncpa %s509, 1
    %511 = vsyncpa [#allocation5], 1
    %s512 = scalar_lea.sflag [#allocation5], 1
    %513 = vsyncpa %s512, 1

</llo_original>
